<compile_context>
chip_gen: v5e
topology: v5e:2x2
jax: 0.10.0
libtpu: 0.0.40
codegen_flags: <defaults>
</compile_context>

<pallas_src>
import functools

import jax
import jax.numpy as jnp
from jax.experimental import pallas as pl
from jax.experimental.pallas import tpu as pltpu

_VMEM_LIMIT = 40 * 1024 * 1024   # leave headroom on v7x's 64 MiB/TC


def _round_up(x, m):
    return ((x + m - 1) // m) * m


def _pick_tile(dim, target, align):
    """Largest tile <= target that divides dim and is align-multiple; else full dim."""
    if dim <= target:
        return dim
    t = (target // align) * align
    while t >= align:
        if dim % t == 0:
            return t
        t -= align
    return dim


def _choose_head_group(H, dh, S):
    """(heads per attention grid step, column-sliced qkv?).

    For the column-blocked slicing of the fused (B*S, 3*H*dh) qkv matrix the block
    width hg*dh must be a 128-lane multiple; the per-group f32 score footprint is
    capped at ~2 MiB (re-derived for v7x's 64 MiB VMEM)."""
    cap = max(1, (2 * 1024 * 1024) // max(1, S * S * 4))
    valid = [g for g in range(1, H + 1) if H % g == 0 and (g * dh) % 128 == 0]
    if valid:
        within = [g for g in valid if g <= cap]
        return (max(within) if within else min(valid)), True
    # tiny-model fallback: all heads per step, q/k/v split in XLA (full-dim blocks)
    return H, False


# ----------------------------------------------------------------------------
# Plain tiled matmul:  y = x @ w   (bf16 operands, f32 accumulation, bf16 out)
# ----------------------------------------------------------------------------

def _matmul_kernel(x_ref, w_ref, o_ref):
    o_ref[...] = jnp.dot(x_ref[...], w_ref[...],
                         preferred_element_type=jnp.float32).astype(o_ref.dtype)


def _matmul_acc_kernel(x_ref, w_ref, o_ref, acc_ref):
    @pl.when(pl.program_id(2) == 0)
    def _():
        acc_ref[...] = jnp.zeros_like(acc_ref)

    acc_ref[...] += jnp.dot(x_ref[...], w_ref[...],
                            preferred_element_type=jnp.float32)

    @pl.when(pl.program_id(2) == pl.num_programs(2) - 1)
    def _():
        o_ref[...] = acc_ref[...].astype(o_ref.dtype)


def matmul_bf16(x, w, tm=256, tn=256, tk=1024):
    M, K = x.shape
    N = w.shape[1]
    x = x.astype(jnp.bfloat16)
    w = w.astype(jnp.bfloat16)
    tm = min(tm, _round_up(M, 8))
    Mp = _round_up(M, tm)
    if Mp != M:
        x = jnp.pad(x, ((0, Mp - M), (0, 0)))
    tn = _pick_tile(N, tn, 128)
    tk = _pick_tile(K, tk, 128)   # TODO(synk): pad awkward K/N instead of full-dim fallback
    if tk == K:
        # full-K contraction: no reduction grid axis, no accumulator scratch
        out = pl.pallas_call(
            _matmul_kernel,
            out_shape=jax.ShapeDtypeStruct((Mp, N), jnp.bfloat16),
            grid=(Mp // tm, N // tn),
            in_specs=[pl.BlockSpec((tm, K), lambda i, j: (i, 0)),
                      pl.BlockSpec((K, tn), lambda i, j: (0, j))],
            out_specs=pl.BlockSpec((tm, tn), lambda i, j: (i, j)),
            compiler_params=pltpu.CompilerParams(
                dimension_semantics=("parallel", "parallel"),
                vmem_limit_bytes=_VMEM_LIMIT),
        )(x, w)
    else:
        out = pl.pallas_call(
            _matmul_acc_kernel,
            out_shape=jax.ShapeDtypeStruct((Mp, N), jnp.bfloat16),
            grid=(Mp // tm, N // tn, K // tk),
            in_specs=[pl.BlockSpec((tm, tk), lambda i, j, k: (i, k)),
                      pl.BlockSpec((tk, tn), lambda i, j, k: (k, j))],
            out_specs=pl.BlockSpec((tm, tn), lambda i, j, k: (i, j)),
            scratch_shapes=[pltpu.VMEM((tm, tn), jnp.float32)],
            compiler_params=pltpu.CompilerParams(
                dimension_semantics=("parallel", "parallel", "arbitrary"),
                vmem_limit_bytes=_VMEM_LIMIT),
        )(x, w)
    return out[:M] if Mp != M else out


# ----------------------------------------------------------------------------
# Fused: output projection + residual + post-LayerNorm  (full-K, single pass)
#   out = LN(x @ w + res)
# ----------------------------------------------------------------------------

def _proj_res_ln_kernel(x_ref, w_ref, res_ref, g_ref, beta_ref, o_ref, *, eps):
    y = jnp.dot(x_ref[...], w_ref[...], preferred_element_type=jnp.float32)
    y = y + res_ref[...].astype(jnp.float32)
    mu = jnp.mean(y, axis=-1, keepdims=True)
    yc = y - mu
    var = jnp.mean(yc * yc, axis=-1, keepdims=True)
    o_ref[...] = (yc * jax.lax.rsqrt(var + eps) * g_ref[...]
                  + beta_ref[...]).astype(o_ref.dtype)


def proj_residual_ln(x, w, res, g, beta, eps=1e-12, tm=256):
    M, K = x.shape
    D = w.shape[1]
    x = x.astype(jnp.bfloat16)
    w = w.astype(jnp.bfloat16)
    res = res.astype(jnp.bfloat16)
    tm = min(tm, _round_up(M, 8))
    Mp = _round_up(M, tm)
    if Mp != M:
        x = jnp.pad(x, ((0, Mp - M), (0, 0)))
        res = jnp.pad(res, ((0, Mp - M), (0, 0)))
    out = pl.pallas_call(
        functools.partial(_proj_res_ln_kernel, eps=eps),
        out_shape=jax.ShapeDtypeStruct((Mp, D), jnp.bfloat16),
        grid=(Mp // tm,),
        in_specs=[pl.BlockSpec((tm, K), lambda i: (i, 0)),
                  pl.BlockSpec((K, D), lambda i: (0, 0)),
                  pl.BlockSpec((tm, D), lambda i: (i, 0)),
                  pl.BlockSpec((1, D), lambda i: (0, 0)),
                  pl.BlockSpec((1, D), lambda i: (0, 0))],
        out_specs=pl.BlockSpec((tm, D), lambda i: (i, 0)),
        compiler_params=pltpu.CompilerParams(
            dimension_semantics=("parallel",),
            vmem_limit_bytes=_VMEM_LIMIT),
    )(x, w, res, g.reshape(1, D), beta.reshape(1, D))
    return out[:M] if Mp != M else out


# ----------------------------------------------------------------------------
# Fused: FFN (ff1 + gelu + ff2) + residual + post-LayerNorm
#   out = LN(gelu(h @ w1 + b1) @ w2 + b2 + h)
# d_inner is the reduction grid axis; the (tm, tdi) intermediate stays in VMEM.
# h is bf16 (no per-K-step cast needed).
# ----------------------------------------------------------------------------

def _ffn_res_ln_kernel(h_ref, w1_ref, b1_ref, w2_ref, b2_ref, g_ref, beta_ref,
                       o_ref, acc_ref, *, eps):
    @pl.when(pl.program_id(1) == 0)
    def _():
        acc_ref[...] = jnp.zeros_like(acc_ref)

    mid = jnp.dot(h_ref[...], w1_ref[...], preferred_element_type=jnp.float32)
    # TODO(synk): HF XLNet uses exact erf-GELU; tanh approx for robust lowering.
    mid = jax.nn.gelu(mid + b1_ref[...], approximate=True)
    acc_ref[...] += jnp.dot(mid.astype(jnp.bfloat16), w2_ref[...],
                            preferred_element_type=jnp.float32)

    @pl.when(pl.program_id(1) == pl.num_programs(1) - 1)
    def _():
        y = acc_ref[...] + b2_ref[...] + h_ref[...].astype(jnp.float32)
        mu = jnp.mean(y, axis=-1, keepdims=True)
        yc = y - mu
        var = jnp.mean(yc * yc, axis=-1, keepdims=True)
        o_ref[...] = (yc * jax.lax.rsqrt(var + eps) * g_ref[...]
                      + beta_ref[...]).astype(o_ref.dtype)


def ffn_residual_ln(h, w1, b1, w2, b2, g, beta, eps=1e-12, tm=256, tdi=512):
    M, D = h.shape
    DI = w1.shape[1]
    h = h.astype(jnp.bfloat16)
    w1 = w1.astype(jnp.bfloat16)
    w2 = w2.astype(jnp.bfloat16)
    tm = min(tm, _round_up(M, 8))
    Mp = _round_up(M, tm)
    if Mp != M:
        h = jnp.pad(h, ((0, Mp - M), (0, 0)))
    tdi = _pick_tile(DI, tdi, 128)
    out = pl.pallas_call(
        functools.partial(_ffn_res_ln_kernel, eps=eps),
        out_shape=jax.ShapeDtypeStruct((Mp, D), jnp.bfloat16),
        grid=(Mp // tm, DI // tdi),
        in_specs=[pl.BlockSpec((tm, D), lambda i, j: (i, 0)),
                  pl.BlockSpec((D, tdi), lambda i, j: (0, j)),
                  pl.BlockSpec((1, tdi), lambda i, j: (0, j)),
                  pl.BlockSpec((tdi, D), lambda i, j: (j, 0)),
                  pl.BlockSpec((1, D), lambda i, j: (0, 0)),
                  pl.BlockSpec((1, D), lambda i, j: (0, 0)),
                  pl.BlockSpec((1, D), lambda i, j: (0, 0))],
        out_specs=pl.BlockSpec((tm, D), lambda i, j: (i, 0)),
        scratch_shapes=[pltpu.VMEM((tm, D), jnp.float32)],
        compiler_params=pltpu.CompilerParams(
            dimension_semantics=("parallel", "arbitrary"),
            vmem_limit_bytes=_VMEM_LIMIT),
    )(h, w1, b1.reshape(1, DI), w2, b2.reshape(1, D),
      g.reshape(1, D), beta.reshape(1, D))
    return out[:M] if Mp != M else out


# ----------------------------------------------------------------------------
# Fused XLNet relative attention (content stream), per (batch, head-group):
#   AC  = (q + r_w_bias) . k^T
#   BD  = rel_shift((q + r_r_bias) . kr^T)      (rel-shift = strided XLU roll)
#   out = softmax((AC + BD) * scale + mask_bias) @ v
# q/k/v head-group blocks come straight from the fused qkv matrix (column blocks);
# the output is written lane-dense as (B, S, H*dh).
# ----------------------------------------------------------------------------

def _attn_kernel(q_ref, k_ref, v_ref, kr_ref, rwb_ref, rrb_ref, mb_ref, o_ref,
                 *, scale, hg, dh, tq):
    S = q_ref.shape[1]
    for q0 in range(0, S, tq):                       # static query tiling
        mb_t = mb_ref[0, pl.ds(q0, tq), :].astype(jnp.float32)        # (tq, S)
        outs = []
        for hh in range(hg):                         # static per-head loop
            c = pl.ds(hh * dh, dh)
            q_h = q_ref[0, pl.ds(q0, tq), c].astype(jnp.float32)      # (tq, dh)
            k_h = k_ref[0, :, c]                                      # (S, dh) bf16
            v_h = v_ref[0, :, c]                                      # (S, dh) bf16
            kr_h = kr_ref[:, c]                                       # (2S, dh) bf16
            rwb_h = rwb_ref[:, c].astype(jnp.float32)                 # (1, dh)
            rrb_h = rrb_ref[:, c].astype(jnp.float32)

            qw = (q_h + rwb_h).astype(jnp.bfloat16)
            qr = (q_h + rrb_h).astype(jnp.bfloat16)

            ac = jax.lax.dot_general(qw, k_h, (((1,), (1,)), ((), ())),
                                     preferred_element_type=jnp.float32)   # (tq, S)
            bd_full = jax.lax.dot_general(qr, kr_h, (((1,), (1,)), ((), ())),
                                          preferred_element_type=jnp.float32)  # (tq, 2S)
            # XLNet rel-shift: bd[i, j] = bd_full[i, S - (q0 + i) + j]; done in
            # VMEM with a per-sublane (stride=1) lane rotation on the XLU.
            bd = pltpu.roll(bd_full, shift=S + q0, axis=1,
                            stride=1, stride_axis=0)[:, :S]

            score = (ac + bd) * scale + mb_t
            m = jnp.max(score, axis=-1, keepdims=True)
            p = jnp.exp(score - m)
            l = jnp.sum(p, axis=-1, keepdims=True)
            prob = (p * pl.reciprocal(l, approx=True)).astype(jnp.bfloat16)
            outs.append(jax.lax.dot_general(prob, v_h, (((1,), (0,)), ((), ())),
                                            preferred_element_type=jnp.float32))
        o_tile = outs[0] if hg == 1 else jnp.concatenate(outs, axis=-1)
        o_ref[0, pl.ds(q0, tq), :] = o_tile.astype(o_ref.dtype)


def rel_attention(qkv, kr, rwb, rrb, mask_bias, B, S, H, dh, scale):
    hg, sliced = _choose_head_group(H, dh, S)
    G = H // hg
    hcols = hg * dh
    if sliced:
        # column-blocked slices of the fused qkv matrix (no HBM copies)
        qkv3 = qkv.reshape(B, S, 3 * H * dh)
        q_in, k_in, v_in = qkv3, qkv3, qkv3
        q_map = lambda b, g: (b, 0, g)
        k_map = lambda b, g, G=G: (b, 0, G + g)
        v_map = lambda b, g, G=G: (b, 0, 2 * G + g)
    else:
        # tiny-model fallback: split in XLA, all heads per step
        qkv4 = qkv.reshape(B, S, 3, H * dh)
        q_in, k_in, v_in = qkv4[:, :, 0, :], qkv4[:, :, 1, :], qkv4[:, :, 2, :]
        q_map = k_map = v_map = (lambda b, g: (b, 0, g))
    tq = _pick_tile(S, 256, 8)

    out = pl.pallas_call(
        functools.partial(_attn_kernel, scale=scale, hg=hg, dh=dh, tq=tq),
        out_shape=jax.ShapeDtypeStruct((B, S, H * dh), jnp.bfloat16),
        grid=(B, G),
        in_specs=[
            pl.BlockSpec((1, S, hcols), q_map),
            pl.BlockSpec((1, S, hcols), k_map),
            pl.BlockSpec((1, S, hcols), v_map),
            pl.BlockSpec((2 * S, hcols), lambda b, g: (0, g)),
            pl.BlockSpec((1, hcols), lambda b, g: (0, g)),
            pl.BlockSpec((1, hcols), lambda b, g: (0, g)),
            pl.BlockSpec((1, S, S), lambda b, g: (b, 0, 0)),
        ],
        out_specs=pl.BlockSpec((1, S, hcols), lambda b, g: (b, 0, g)),
        compiler_params=pltpu.CompilerParams(
            dimension_semantics=("parallel", "parallel"),
            vmem_limit_bytes=_VMEM_LIMIT),
    )(q_in, k_in, v_in, kr, rwb, rrb, mask_bias)
    return out.reshape(B * S, H * dh)


# ----------------------------------------------------------------------------
# Parameters (deterministic synthetic init — NOT a checkpoint load)
# ----------------------------------------------------------------------------

def init_params(key, cfg):
    D, H, dh = cfg["d_model"], cfg["n_head"], cfg["d_head"]
    DI, V, L, C = cfg["d_inner"], cfg["vocab"], cfg["n_layer"], cfg["num_labels"]

    def nrm(k, shape, scale=0.02):
        return scale * jax.random.normal(k, shape, jnp.float32)

    keys = jax.random.split(key, 3 + L)
    params = {
        "word_emb": nrm(keys[0], (V, D)),
        "summary_w": nrm(keys[1], (D, D)),
        "summary_b": jnp.zeros((D,), jnp.float32),
        "logits_w": nrm(keys[2], (D, C)),
        "logits_b": jnp.zeros((C,), jnp.float32),
        "layers": [],
    }
    for li in range(L):
        lk = jax.random.split(keys[3 + li], 9)
        params["layers"].append({
            # fused Q/K/V projection (one HBM read of h instead of three)
            "qkv_w": jnp.concatenate([nrm(lk[0], (D, H * dh)),
                                      nrm(lk[1], (D, H * dh)),
                                      nrm(lk[2], (D, H * dh))], axis=1),
            "r_w": nrm(lk[3], (D, H * dh)),
            "o_w": nrm(lk[4], (H * dh, D)),
            "r_w_bias": nrm(lk[5], (H, dh)),
            "r_r_bias": nrm(lk[6], (H, dh)),
            "ln1_g": jnp.ones((D,), jnp.float32),
            "ln1_b": jnp.zeros((D,), jnp.float32),
            "ff1_w": nrm(lk[7], (D, DI)),
            "ff1_b": jnp.zeros((DI,), jnp.float32),
            "ff2_w": nrm(lk[8], (DI, D)),
            "ff2_b": jnp.zeros((D,), jnp.float32),
            "ln2_g": jnp.ones((D,), jnp.float32),
            "ln2_b": jnp.zeros((D,), jnp.float32),
        })
    return params


# ----------------------------------------------------------------------------
# Forward pass:  (loss, logits) = XLNetModel(input_ids, attention_mask, labels)
# ----------------------------------------------------------------------------

def xlnet_forward(params, input_ids, attention_mask, labels, cfg):
    B, S = input_ids.shape
    D, H, dh = cfg["d_model"], cfg["n_head"], cfg["d_head"]
    scale = 1.0 / (dh ** 0.5)

    # word embedding (dropout = identity in eval); activations stay bf16 between kernels
    h = jnp.take(params["word_emb"], input_ids, axis=0).reshape(B * S, D)
    h = h.astype(jnp.bfloat16)

    # relative sinusoidal positional encoding: pos_seq = [S, S-1, ..., -S+1]
    pos_seq = jnp.arange(S, -S, -1, dtype=jnp.float32)                   # (2S,)
    inv_freq = 1.0 / (10000.0 ** (jnp.arange(0, D, 2, dtype=jnp.float32) / D))
    sin_inp = pos_seq[:, None] * inv_freq[None, :]                       # (2S, D/2)
    pos_emb = jnp.concatenate([jnp.sin(sin_inp), jnp.cos(sin_inp)], -1)  # (2S, D)

    # content-stream mask folded once into an additive bias:
    # key j masked iff pad(j) and j != i  =>  bias = -1e30 there, 0 elsewhere
    if attention_mask is not None:
        eye = jnp.eye(S, dtype=bool)
        pad = (attention_mask == 0.0)[:, None, :]                        # (B,1,S)
        mask_bias = jnp.where(pad & (~eye)[None], -1e30, 0.0)            # (B,S,S)
    else:
        mask_bias = jnp.zeros((B, S, S), jnp.float32)
    mask_bias = mask_bias.astype(jnp.bfloat16)

    for lp in params["layers"]:
        # ---- XLNetRelativeAttention (content stream, no mems / segments) ----
        qkv = matmul_bf16(h, lp["qkv_w"])                  # (B*S, 3*H*dh) bf16
        kr = matmul_bf16(pos_emb, lp["r_w"])               # (2S, H*dh)    bf16

        attn = rel_attention(qkv, kr,
                             lp["r_w_bias"].reshape(1, H * dh),
                             lp["r_r_bias"].reshape(1, H * dh),
                             mask_bias, B, S, H, dh, scale)  # (B*S, H*dh) bf16

        # fused: o-projection + residual + post-LN
        h = proj_residual_ln(attn, lp["o_w"], h, lp["ln1_g"], lp["ln1_b"])

        # fused: FFN(gelu) + residual + post-LN
        h = ffn_residual_ln(h, lp["ff1_w"], lp["ff1_b"], lp["ff2_w"], lp["ff2_b"],
                            lp["ln2_g"], lp["ln2_b"])

    hidden = h.reshape(B, S, D).astype(jnp.float32)

    # SequenceSummary(summary_type="last", proj + tanh) + logits + loss:
    # negligible (B,D)x(D,D)/(D,C) work, kept in plain XLA (avoids 1-program
    # pallas_call overhead and an idle second TC on v7x).
    last = hidden[:, -1, :]                                              # (B, D)
    summ = jnp.tanh(last @ params["summary_w"] + params["summary_b"])
    logits = summ @ params["logits_w"] + params["logits_b"]              # (B, C)

    loss = None
    if labels is not None:
        logz = jax.nn.logsumexp(logits, axis=-1)
        picked = jnp.take_along_axis(logits, labels[:, None], axis=-1)[:, 0]
        loss = jnp.mean(logz - picked)
    return loss, logits


# ----------------------------------------------------------------------------
# Demo
# ----------------------------------------------------------------------------

if __name__ == "__main__":
    # Small but TPU-layout-friendly shapes: H*dh = 128 lanes, 2S = 128 for the
    # in-kernel rel-shift roll.  (Real XLNet-base: D=768, H=12, dh=64, DI=3072.)
    cfg = dict(vocab=128, d_model=128, n_head=4, d_head=32, d_inner=256,
               n_layer=2, num_labels=2)
    B, S = 2, 64

    root = jax.random.PRNGKey(0)
    k_param, k_ids = jax.random.split(root)
    params = init_params(k_param, cfg)

    input_ids = jax.random.randint(k_ids, (B, S), 0, cfg["vocab"], dtype=jnp.int32)
    attention_mask = jnp.ones((B, S), jnp.float32)
    attention_mask = attention_mask.at[0, -16:].set(0.0)   # pad tail of batch 0
    labels = jnp.array([0, 1], dtype=jnp.int32)

    run = jax.jit(lambda ids, am, lbl: xlnet_forward(params, ids, am, lbl, cfg))
    loss, logits = run(input_ids, attention_mask, labels)
    jax.block_until_ready((loss, logits))

    assert logits.shape == (B, cfg["num_labels"])
    assert loss.shape == ()
    assert bool(jnp.isfinite(loss)) and bool(jnp.all(jnp.isfinite(logits)))
    print("KERNEL_OK")
</pallas_src>

<mosaic_0001>
module attributes {stable_mosaic.version = 11 : i64} {
  func.func @_matmul_kernel(%arg0: i32, %arg1: i32, %arg2: memref<128x128xbf16, #tpu.memory_space<vmem>>, %arg3: memref<128x128xbf16, #tpu.memory_space<vmem>>, %arg4: memref<128x128xbf16, #tpu.memory_space<vmem>>) attributes {dimension_semantics = [#tpu.dimension_semantics<parallel>, #tpu.dimension_semantics<parallel>], iteration_bounds = array<i64: 1, 1>, scalar_prefetch = 0 : i64, scratch_operands = 0 : i64, tpu.core_type = #tpu.core_type<tc>, window_params = [{transform_indices = @transform_0, window_bounds = array<i64: 128, 128>}, {transform_indices = @transform_1, window_bounds = array<i64: 128, 128>}, {transform_indices = @transform_2, window_bounds = array<i64: 128, 128>}]} {
    %c0 = arith.constant 0 : index
    %c0_0 = arith.constant 0 : index
    %0 = vector.load %arg2[%c0, %c0_0] : memref<128x128xbf16, #tpu.memory_space<vmem>>, vector<128x128xbf16>
    %c0_1 = arith.constant 0 : index
    %c0_2 = arith.constant 0 : index
    %1 = vector.load %arg3[%c0_1, %c0_2] : memref<128x128xbf16, #tpu.memory_space<vmem>>, vector<128x128xbf16>
    %cst = arith.constant dense<0.000000e+00> : vector<128x128xf32>
    %2 = tpu.matmul %0, %1, %cst {dimension_numbers = #tpu.dot_dimension_numbers<[1], [0], [0], [1], [0, 0, 1, 1], [], []>} : vector<128x128xbf16>, vector<128x128xbf16>, vector<128x128xf32> -> vector<128x128xf32>
    %3 = arith.truncf %2 : vector<128x128xf32> to vector<128x128xbf16>
    %c0_3 = arith.constant 0 : index
    %c0_4 = arith.constant 0 : index
    %4 = vector.load %arg4[%c0_3, %c0_4] : memref<128x128xbf16, #tpu.memory_space<vmem>>, vector<128x128xbf16>
    tpu.vector_store %arg4[%c0_3, %c0_4], %3 {strides = array<i32>} : memref<128x128xbf16, #tpu.memory_space<vmem>>, vector<128x128xbf16>,
    return
  }
  func.func @transform_0(%arg0: i32, %arg1: i32) -> (i32, i32) {
    %c0_i32 = arith.constant 0 : i32
    %c0_i32_0 = arith.constant 0 : i32
    return %arg0, %c0_i32 : i32, i32
  }
  func.func @transform_1(%arg0: i32, %arg1: i32) -> (i32, i32) {
    %c0_i32 = arith.constant 0 : i32
    %c0_i32_0 = arith.constant 0 : i32
    return %c0_i32, %arg1 : i32, i32
  }
  func.func @transform_2(%arg0: i32, %arg1: i32) -> (i32, i32) {
    %c0_i32 = arith.constant 0 : i32
    return %arg0, %arg1 : i32, i32
  }
}

module attributes {stable_mosaic.version = 11 : i64} {
  func.func @_matmul_kernel(%arg0: i32, %arg1: i32, %arg2: memref<128x128xbf16, #tpu.memory_space<vmem>>, %arg3: memref<128x128xbf16, #tpu.memory_space<vmem>>, %arg4: memref<128x128xbf16, #tpu.memory_space<vmem>>) attributes {dimension_semantics = [#tpu.dimension_semantics<parallel>, #tpu.dimension_semantics<parallel>], iteration_bounds = array<i64: 1, 3>, scalar_prefetch = 0 : i64, scratch_operands = 0 : i64, tpu.core_type = #tpu.core_type<tc>, window_params = [{transform_indices = @transform_0, window_bounds = array<i64: 128, 128>}, {transform_indices = @transform_1, window_bounds = array<i64: 128, 128>}, {transform_indices = @transform_2, window_bounds = array<i64: 128, 128>}]} {
    %c0 = arith.constant 0 : index
    %c0_0 = arith.constant 0 : index
    %0 = vector.load %arg2[%c0, %c0_0] : memref<128x128xbf16, #tpu.memory_space<vmem>>, vector<128x128xbf16>
    %c0_1 = arith.constant 0 : index
    %c0_2 = arith.constant 0 : index
    %1 = vector.load %arg3[%c0_1, %c0_2] : memref<128x128xbf16, #tpu.memory_space<vmem>>, vector<128x128xbf16>
    %cst = arith.constant dense<0.000000e+00> : vector<128x128xf32>
    %2 = tpu.matmul %0, %1, %cst {dimension_numbers = #tpu.dot_dimension_numbers<[1], [0], [0], [1], [0, 0, 1, 1], [], []>} : vector<128x128xbf16>, vector<128x128xbf16>, vector<128x128xf32> -> vector<128x128xf32>
    %3 = arith.truncf %2 : vector<128x128xf32> to vector<128x128xbf16>
    %c0_3 = arith.constant 0 : index
    %c0_4 = arith.constant 0 : index
    %4 = vector.load %arg4[%c0_3, %c0_4] : memref<128x128xbf16, #tpu.memory_space<vmem>>, vector<128x128xbf16>
    tpu.vector_store %arg4[%c0_3, %c0_4], %3 {strides = array<i32>} : memref<128x128xbf16, #tpu.memory_space<vmem>>, vector<128x128xbf16>,
    return
  }
  func.func @transform_0(%arg0: i32, %arg1: i32) -> (i32, i32) {
    %c0_i32 = arith.constant 0 : i32
    %c0_i32_0 = arith.constant 0 : i32
    return %arg0, %c0_i32 : i32, i32
  }
  func.func @transform_1(%arg0: i32, %arg1: i32) -> (i32, i32) {
    %c0_i32 = arith.constant 0 : i32
    %c0_i32_0 = arith.constant 0 : i32
    return %c0_i32, %arg1 : i32, i32
  }
  func.func @transform_2(%arg0: i32, %arg1: i32) -> (i32, i32) {
    %c0_i32 = arith.constant 0 : i32
    return %arg0, %arg1 : i32, i32
  }
}

module attributes {stable_mosaic.version = 11 : i64} {
  func.func @_attn_kernel(%arg0: i32, %arg1: i32, %arg2: memref<1x64x128xbf16, #tpu.memory_space<vmem>>, %arg3: memref<1x64x128xbf16, #tpu.memory_space<vmem>>, %arg4: memref<1x64x128xbf16, #tpu.memory_space<vmem>>, %arg5: memref<128x128xbf16, #tpu.memory_space<vmem>>, %arg6: memref<1x128xf32, #tpu.memory_space<vmem>>, %arg7: memref<1x128xf32, #tpu.memory_space<vmem>>, %arg8: memref<1x64x64xbf16, #tpu.memory_space<vmem>>, %arg9: memref<1x64x128xbf16, #tpu.memory_space<vmem>>) attributes {dimension_semantics = [#tpu.dimension_semantics<parallel>, #tpu.dimension_semantics<parallel>], iteration_bounds = array<i64: 2, 1>, scalar_prefetch = 0 : i64, scratch_operands = 0 : i64, tpu.core_type = #tpu.core_type<tc>, window_params = [{transform_indices = @transform_0, window_bounds = array<i64: 1, 64, 128>}, {transform_indices = @transform_1, window_bounds = array<i64: 1, 64, 128>}, {transform_indices = @transform_2, window_bounds = array<i64: 1, 64, 128>}, {transform_indices = @transform_3, window_bounds = array<i64: 128, 128>}, {transform_indices = @transform_4, window_bounds = array<i64: 1, 128>}, {transform_indices = @transform_5, window_bounds = array<i64: 1, 128>}, {transform_indices = @transform_6, window_bounds = array<i64: 1, 64, 64>}, {transform_indices = @transform_7, window_bounds = array<i64: 1, 64, 128>}]} {
    %c0 = arith.constant 0 : index
    %c0_0 = arith.constant 0 : index
    %c0_1 = arith.constant 0 : index
    %0 = vector.load %arg8[%c0, %c0_0, %c0_1] : memref<1x64x64xbf16, #tpu.memory_space<vmem>>, vector<1x64x64xbf16>
    %1 = vector.shape_cast %0 : vector<1x64x64xbf16> to vector<64x64xbf16>
    %2 = arith.extf %1 : vector<64x64xbf16> to vector<64x64xf32>
    %c0_2 = arith.constant 0 : index
    %c0_3 = arith.constant 0 : index
    %c0_4 = arith.constant 0 : index
    %3 = vector.load %arg2[%c0_2, %c0_3, %c0_4] : memref<1x64x128xbf16, #tpu.memory_space<vmem>>, vector<1x64x32xbf16>
    %4 = vector.shape_cast %3 : vector<1x64x32xbf16> to vector<64x32xbf16>
    %5 = arith.extf %4 : vector<64x32xbf16> to vector<64x32xf32>
    %c0_5 = arith.constant 0 : index
    %c0_6 = arith.constant 0 : index
    %c0_7 = arith.constant 0 : index
    %6 = vector.load %arg3[%c0_5, %c0_6, %c0_7] : memref<1x64x128xbf16, #tpu.memory_space<vmem>>, vector<1x64x32xbf16>
    %7 = vector.shape_cast %6 : vector<1x64x32xbf16> to vector<64x32xbf16>
    %c0_8 = arith.constant 0 : index
    %c0_9 = arith.constant 0 : index
    %c0_10 = arith.constant 0 : index
    %8 = vector.load %arg4[%c0_8, %c0_9, %c0_10] : memref<1x64x128xbf16, #tpu.memory_space<vmem>>, vector<1x64x32xbf16>
    %9 = vector.shape_cast %8 : vector<1x64x32xbf16> to vector<64x32xbf16>
    %c0_11 = arith.constant 0 : index
    %c0_12 = arith.constant 0 : index
    %10 = vector.load %arg5[%c0_11, %c0_12] : memref<128x128xbf16, #tpu.memory_space<vmem>>, vector<128x32xbf16>
    %c0_13 = arith.constant 0 : index
    %c0_14 = arith.constant 0 : index
    %11 = vector.load %arg6[%c0_13, %c0_14] : memref<1x128xf32, #tpu.memory_space<vmem>>, vector<1x32xf32>
    %c0_15 = arith.constant 0 : index
    %c0_16 = arith.constant 0 : index
    %12 = vector.load %arg7[%c0_15, %c0_16] : memref<1x128xf32, #tpu.memory_space<vmem>>, vector<1x32xf32>
    %13 = vector.broadcast %11 : vector<1x32xf32> to vector<64x32xf32>
    %14 = arith.addf %5, %13 : vector<64x32xf32>
    %15 = arith.truncf %14 : vector<64x32xf32> to vector<64x32xbf16>
    %16 = vector.broadcast %12 : vector<1x32xf32> to vector<64x32xf32>
    %17 = arith.addf %5, %16 : vector<64x32xf32>
    %18 = arith.truncf %17 : vector<64x32xf32> to vector<64x32xbf16>
    %cst = arith.constant dense<0.000000e+00> : vector<64x64xf32>
    %19 = tpu.matmul %15, %7, %cst {dimension_numbers = #tpu.dot_dimension_numbers<[1], [1], [0], [0], [0, 0, 1, 0], [], []>} : vector<64x32xbf16>, vector<64x32xbf16>, vector<64x64xf32> -> vector<64x64xf32>
    %cst_17 = arith.constant dense<0.000000e+00> : vector<64x128xf32>
    %20 = tpu.matmul %18, %10, %cst_17 {dimension_numbers = #tpu.dot_dimension_numbers<[1], [1], [0], [0], [0, 0, 1, 0], [], []>} : vector<64x32xbf16>, vector<128x32xbf16>, vector<64x128xf32> -> vector<64x128xf32>
    %c64_i32 = arith.constant 64 : i32
    %21 = tpu.dynamic_rotate %20 by %c64_i32 dim 1 {stride = 1 : si32, stride_dimension = 0 : si32} : vector<64x128xf32>, i32 -> vector<64x128xf32>
    %22 = vector.extract_strided_slice %21 {offsets = [0, 0], sizes = [64, 64], strides = [1, 1]} : vector<64x128xf32> to vector<64x64xf32>
    %23 = arith.addf %19, %22 : vector<64x64xf32>
    %cst_18 = arith.constant 0.176776692 : f32
    %24 = vector.broadcast %cst_18 : f32 to vector<64x64xf32>
    %25 = arith.mulf %23, %24 : vector<64x64xf32>
    %26 = arith.addf %25, %2 : vector<64x64xf32>
    %cst_19 = arith.constant dense<0xFF800000> : vector<64xf32>
    %27 = vector.multi_reduction <maximumf>, %26, %cst_19 [1] : vector<64x64xf32> to vector<64xf32>
    %28 = vector.shape_cast %27 : vector<64xf32> to vector<64x1xf32>
    %29 = vector.broadcast %28 : vector<64x1xf32> to vector<64x64xf32>
    %30 = arith.subf %26, %29 : vector<64x64xf32>
    %31 = math.exp %30 : vector<64x64xf32>
    %cst_20 = arith.constant dense<0.000000e+00> : vector<64xf32>
    %32 = vector.multi_reduction <add>, %31, %cst_20 [1] : vector<64x64xf32> to vector<64xf32>
    %33 = vector.shape_cast %32 : vector<64xf32> to vector<64x1xf32>
    %34 = tpu.reciprocal %33 {approx = true} : vector<64x1xf32> -> vector<64x1xf32>
    %35 = vector.broadcast %34 : vector<64x1xf32> to vector<64x64xf32>
    %36 = arith.mulf %31, %35 : vector<64x64xf32>
    %37 = arith.truncf %36 : vector<64x64xf32> to vector<64x64xbf16>
    %cst_21 = arith.constant dense<0.000000e+00> : vector<64x32xf32>
    %38 = tpu.matmul %37, %9, %cst_21 {dimension_numbers = #tpu.dot_dimension_numbers<[1], [0], [0], [1], [0, 0, 1, 1], [], []>} : vector<64x64xbf16>, vector<64x32xbf16>, vector<64x32xf32> -> vector<64x32xf32>
    %c0_22 = arith.constant 0 : index
    %c0_23 = arith.constant 0 : index
    %c32 = arith.constant 32 : index
    %39 = vector.load %arg2[%c0_22, %c0_23, %c32] : memref<1x64x128xbf16, #tpu.memory_space<vmem>>, vector<1x64x32xbf16>
    %40 = vector.shape_cast %39 : vector<1x64x32xbf16> to vector<64x32xbf16>
    %41 = arith.extf %40 : vector<64x32xbf16> to vector<64x32xf32>
    %c0_24 = arith.constant 0 : index
    %c0_25 = arith.constant 0 : index
    %c32_26 = arith.constant 32 : index
    %42 = vector.load %arg3[%c0_24, %c0_25, %c32_26] : memref<1x64x128xbf16, #tpu.memory_space<vmem>>, vector<1x64x32xbf16>
    %43 = vector.shape_cast %42 : vector<1x64x32xbf16> to vector<64x32xbf16>
    %c0_27 = arith.constant 0 : index
    %c0_28 = arith.constant 0 : index
    %c32_29 = arith.constant 32 : index
    %44 = vector.load %arg4[%c0_27, %c0_28, %c32_29] : memref<1x64x128xbf16, #tpu.memory_space<vmem>>, vector<1x64x32xbf16>
    %45 = vector.shape_cast %44 : vector<1x64x32xbf16> to vector<64x32xbf16>
    %c0_30 = arith.constant 0 : index
    %c32_31 = arith.constant 32 : index
    %46 = vector.load %arg5[%c0_30, %c32_31] : memref<128x128xbf16, #tpu.memory_space<vmem>>, vector<128x32xbf16>
    %c0_32 = arith.constant 0 : index
    %c32_33 = arith.constant 32 : index
    %47 = vector.load %arg6[%c0_32, %c32_33] : memref<1x128xf32, #tpu.memory_space<vmem>>, vector<1x32xf32>
    %c0_34 = arith.constant 0 : index
    %c32_35 = arith.constant 32 : index
    %48 = vector.load %arg7[%c0_34, %c32_35] : memref<1x128xf32, #tpu.memory_space<vmem>>, vector<1x32xf32>
    %49 = vector.broadcast %47 : vector<1x32xf32> to vector<64x32xf32>
    %50 = arith.addf %41, %49 : vector<64x32xf32>
    %51 = arith.truncf %50 : vector<64x32xf32> to vector<64x32xbf16>
    %52 = vector.broadcast %48 : vector<1x32xf32> to vector<64x32xf32>
    %53 = arith.addf %41, %52 : vector<64x32xf32>
    %54 = arith.truncf %53 : vector<64x32xf32> to vector<64x32xbf16>
    %cst_36 = arith.constant dense<0.000000e+00> : vector<64x64xf32>
    %55 = tpu.matmul %51, %43, %cst_36 {dimension_numbers = #tpu.dot_dimension_numbers<[1], [1], [0], [0], [0, 0, 1, 0], [], []>} : vector<64x32xbf16>, vector<64x32xbf16>, vector<64x64xf32> -> vector<64x64xf32>
    %cst_37 = arith.constant dense<0.000000e+00> : vector<64x128xf32>
    %56 = tpu.matmul %54, %46, %cst_37 {dimension_numbers = #tpu.dot_dimension_numbers<[1], [1], [0], [0], [0, 0, 1, 0], [], []>} : vector<64x32xbf16>, vector<128x32xbf16>, vector<64x128xf32> -> vector<64x128xf32>
    %c64_i32_38 = arith.constant 64 : i32
    %57 = tpu.dynamic_rotate %56 by %c64_i32_38 dim 1 {stride = 1 : si32, stride_dimension = 0 : si32} : vector<64x128xf32>, i32 -> vector<64x128xf32>
    %58 = vector.extract_strided_slice %57 {offsets = [0, 0], sizes = [64, 64], strides = [1, 1]} : vector<64x128xf32> to vector<64x64xf32>
    %59 = arith.addf %55, %58 : vector<64x64xf32>
    %cst_39 = arith.constant 0.176776692 : f32
    %60 = vector.broadcast %cst_39 : f32 to vector<64x64xf32>
    %61 = arith.mulf %59, %60 : vector<64x64xf32>
    %62 = arith.addf %61, %2 : vector<64x64xf32>
    %cst_40 = arith.constant dense<0xFF800000> : vector<64xf32>
    %63 = vector.multi_reduction <maximumf>, %62, %cst_40 [1] : vector<64x64xf32> to vector<64xf32>
    %64 = vector.shape_cast %63 : vector<64xf32> to vector<64x1xf32>
    %65 = vector.broadcast %64 : vector<64x1xf32> to vector<64x64xf32>
    %66 = arith.subf %62, %65 : vector<64x64xf32>
    %67 = math.exp %66 : vector<64x64xf32>
    %cst_41 = arith.constant dense<0.000000e+00> : vector<64xf32>
    %68 = vector.multi_reduction <add>, %67, %cst_41 [1] : vector<64x64xf32> to vector<64xf32>
    %69 = vector.shape_cast %68 : vector<64xf32> to vector<64x1xf32>
    %70 = tpu.reciprocal %69 {approx = true} : vector<64x1xf32> -> vector<64x1xf32>
    %71 = vector.broadcast %70 : vector<64x1xf32> to vector<64x64xf32>
    %72 = arith.mulf %67, %71 : vector<64x64xf32>
    %73 = arith.truncf %72 : vector<64x64xf32> to vector<64x64xbf16>
    %cst_42 = arith.constant dense<0.000000e+00> : vector<64x32xf32>
    %74 = tpu.matmul %73, %45, %cst_42 {dimension_numbers = #tpu.dot_dimension_numbers<[1], [0], [0], [1], [0, 0, 1, 1], [], []>} : vector<64x64xbf16>, vector<64x32xbf16>, vector<64x32xf32> -> vector<64x32xf32>
    %c0_43 = arith.constant 0 : index
    %c0_44 = arith.constant 0 : index
    %c64 = arith.constant 64 : index
    %75 = vector.load %arg2[%c0_43, %c0_44, %c64] : memref<1x64x128xbf16, #tpu.memory_space<vmem>>, vector<1x64x32xbf16>
    %76 = vector.shape_cast %75 : vector<1x64x32xbf16> to vector<64x32xbf16>
    %77 = arith.extf %76 : vector<64x32xbf16> to vector<64x32xf32>
    %c0_45 = arith.constant 0 : index
    %c0_46 = arith.constant 0 : index
    %c64_47 = arith.constant 64 : index
    %78 = vector.load %arg3[%c0_45, %c0_46, %c64_47] : memref<1x64x128xbf16, #tpu.memory_space<vmem>>, vector<1x64x32xbf16>
    %79 = vector.shape_cast %78 : vector<1x64x32xbf16> to vector<64x32xbf16>
    %c0_48 = arith.constant 0 : index
    %c0_49 = arith.constant 0 : index
    %c64_50 = arith.constant 64 : index
    %80 = vector.load %arg4[%c0_48, %c0_49, %c64_50] : memref<1x64x128xbf16, #tpu.memory_space<vmem>>, vector<1x64x32xbf16>
    %81 = vector.shape_cast %80 : vector<1x64x32xbf16> to vector<64x32xbf16>
    %c0_51 = arith.constant 0 : index
    %c64_52 = arith.constant 64 : index
    %82 = vector.load %arg5[%c0_51, %c64_52] : memref<128x128xbf16, #tpu.memory_space<vmem>>, vector<128x32xbf16>
    %c0_53 = arith.constant 0 : index
    %c64_54 = arith.constant 64 : index
    %83 = vector.load %arg6[%c0_53, %c64_54] : memref<1x128xf32, #tpu.memory_space<vmem>>, vector<1x32xf32>
    %c0_55 = arith.constant 0 : index
    %c64_56 = arith.constant 64 : index
    %84 = vector.load %arg7[%c0_55, %c64_56] : memref<1x128xf32, #tpu.memory_space<vmem>>, vector<1x32xf32>
    %85 = vector.broadcast %83 : vector<1x32xf32> to vector<64x32xf32>
    %86 = arith.addf %77, %85 : vector<64x32xf32>
    %87 = arith.truncf %86 : vector<64x32xf32> to vector<64x32xbf16>
    %88 = vector.broadcast %84 : vector<1x32xf32> to vector<64x32xf32>
    %89 = arith.addf %77, %88 : vector<64x32xf32>
    %90 = arith.truncf %89 : vector<64x32xf32> to vector<64x32xbf16>
    %cst_57 = arith.constant dense<0.000000e+00> : vector<64x64xf32>
    %91 = tpu.matmul %87, %79, %cst_57 {dimension_numbers = #tpu.dot_dimension_numbers<[1], [1], [0], [0], [0, 0, 1, 0], [], []>} : vector<64x32xbf16>, vector<64x32xbf16>, vector<64x64xf32> -> vector<64x64xf32>
    %cst_58 = arith.constant dense<0.000000e+00> : vector<64x128xf32>
    %92 = tpu.matmul %90, %82, %cst_58 {dimension_numbers = #tpu.dot_dimension_numbers<[1], [1], [0], [0], [0, 0, 1, 0], [], []>} : vector<64x32xbf16>, vector<128x32xbf16>, vector<64x128xf32> -> vector<64x128xf32>
    %c64_i32_59 = arith.constant 64 : i32
    %93 = tpu.dynamic_rotate %92 by %c64_i32_59 dim 1 {stride = 1 : si32, stride_dimension = 0 : si32} : vector<64x128xf32>, i32 -> vector<64x128xf32>
    %94 = vector.extract_strided_slice %93 {offsets = [0, 0], sizes = [64, 64], strides = [1, 1]} : vector<64x128xf32> to vector<64x64xf32>
    %95 = arith.addf %91, %94 : vector<64x64xf32>
    %cst_60 = arith.constant 0.176776692 : f32
    %96 = vector.broadcast %cst_60 : f32 to vector<64x64xf32>
    %97 = arith.mulf %95, %96 : vector<64x64xf32>
    %98 = arith.addf %97, %2 : vector<64x64xf32>
    %cst_61 = arith.constant dense<0xFF800000> : vector<64xf32>
    %99 = vector.multi_reduction <maximumf>, %98, %cst_61 [1] : vector<64x64xf32> to vector<64xf32>
    %100 = vector.shape_cast %99 : vector<64xf32> to vector<64x1xf32>
    %101 = vector.broadcast %100 : vector<64x1xf32> to vector<64x64xf32>
    %102 = arith.subf %98, %101 : vector<64x64xf32>
    %103 = math.exp %102 : vector<64x64xf32>
    %cst_62 = arith.constant dense<0.000000e+00> : vector<64xf32>
    %104 = vector.multi_reduction <add>, %103, %cst_62 [1] : vector<64x64xf32> to vector<64xf32>
    %105 = vector.shape_cast %104 : vector<64xf32> to vector<64x1xf32>
    %106 = tpu.reciprocal %105 {approx = true} : vector<64x1xf32> -> vector<64x1xf32>
    %107 = vector.broadcast %106 : vector<64x1xf32> to vector<64x64xf32>
    %108 = arith.mulf %103, %107 : vector<64x64xf32>
    %109 = arith.truncf %108 : vector<64x64xf32> to vector<64x64xbf16>
    %cst_63 = arith.constant dense<0.000000e+00> : vector<64x32xf32>
    %110 = tpu.matmul %109, %81, %cst_63 {dimension_numbers = #tpu.dot_dimension_numbers<[1], [0], [0], [1], [0, 0, 1, 1], [], []>} : vector<64x64xbf16>, vector<64x32xbf16>, vector<64x32xf32> -> vector<64x32xf32>
    %c0_64 = arith.constant 0 : index
    %c0_65 = arith.constant 0 : index
    %c96 = arith.constant 96 : index
    %111 = vector.load %arg2[%c0_64, %c0_65, %c96] : memref<1x64x128xbf16, #tpu.memory_space<vmem>>, vector<1x64x32xbf16>
    %112 = vector.shape_cast %111 : vector<1x64x32xbf16> to vector<64x32xbf16>
    %113 = arith.extf %112 : vector<64x32xbf16> to vector<64x32xf32>
    %c0_66 = arith.constant 0 : index
    %c0_67 = arith.constant 0 : index
    %c96_68 = arith.constant 96 : index
    %114 = vector.load %arg3[%c0_66, %c0_67, %c96_68] : memref<1x64x128xbf16, #tpu.memory_space<vmem>>, vector<1x64x32xbf16>
    %115 = vector.shape_cast %114 : vector<1x64x32xbf16> to vector<64x32xbf16>
    %c0_69 = arith.constant 0 : index
    %c0_70 = arith.constant 0 : index
    %c96_71 = arith.constant 96 : index
    %116 = vector.load %arg4[%c0_69, %c0_70, %c96_71] : memref<1x64x128xbf16, #tpu.memory_space<vmem>>, vector<1x64x32xbf16>
    %117 = vector.shape_cast %116 : vector<1x64x32xbf16> to vector<64x32xbf16>
    %c0_72 = arith.constant 0 : index
    %c96_73 = arith.constant 96 : index
    %118 = vector.load %arg5[%c0_72, %c96_73] : memref<128x128xbf16, #tpu.memory_space<vmem>>, vector<128x32xbf16>
    %c0_74 = arith.constant 0 : index
    %c96_75 = arith.constant 96 : index
    %119 = vector.load %arg6[%c0_74, %c96_75] : memref<1x128xf32, #tpu.memory_space<vmem>>, vector<1x32xf32>
    %c0_76 = arith.constant 0 : index
    %c96_77 = arith.constant 96 : index
    %120 = vector.load %arg7[%c0_76, %c96_77] : memref<1x128xf32, #tpu.memory_space<vmem>>, vector<1x32xf32>
    %121 = vector.broadcast %119 : vector<1x32xf32> to vector<64x32xf32>
    %122 = arith.addf %113, %121 : vector<64x32xf32>
    %123 = arith.truncf %122 : vector<64x32xf32> to vector<64x32xbf16>
    %124 = vector.broadcast %120 : vector<1x32xf32> to vector<64x32xf32>
    %125 = arith.addf %113, %124 : vector<64x32xf32>
    %126 = arith.truncf %125 : vector<64x32xf32> to vector<64x32xbf16>
    %cst_78 = arith.constant dense<0.000000e+00> : vector<64x64xf32>
    %127 = tpu.matmul %123, %115, %cst_78 {dimension_numbers = #tpu.dot_dimension_numbers<[1], [1], [0], [0], [0, 0, 1, 0], [], []>} : vector<64x32xbf16>, vector<64x32xbf16>, vector<64x64xf32> -> vector<64x64xf32>
    %cst_79 = arith.constant dense<0.000000e+00> : vector<64x128xf32>
    %128 = tpu.matmul %126, %118, %cst_79 {dimension_numbers = #tpu.dot_dimension_numbers<[1], [1], [0], [0], [0, 0, 1, 0], [], []>} : vector<64x32xbf16>, vector<128x32xbf16>, vector<64x128xf32> -> vector<64x128xf32>
    %c64_i32_80 = arith.constant 64 : i32
    %129 = tpu.dynamic_rotate %128 by %c64_i32_80 dim 1 {stride = 1 : si32, stride_dimension = 0 : si32} : vector<64x128xf32>, i32 -> vector<64x128xf32>
    %130 = vector.extract_strided_slice %129 {offsets = [0, 0], sizes = [64, 64], strides = [1, 1]} : vector<64x128xf32> to vector<64x64xf32>
    %131 = arith.addf %127, %130 : vector<64x64xf32>
    %cst_81 = arith.constant 0.176776692 : f32
    %132 = vector.broadcast %cst_81 : f32 to vector<64x64xf32>
    %133 = arith.mulf %131, %132 : vector<64x64xf32>
    %134 = arith.addf %133, %2 : vector<64x64xf32>
    %cst_82 = arith.constant dense<0xFF800000> : vector<64xf32>
    %135 = vector.multi_reduction <maximumf>, %134, %cst_82 [1] : vector<64x64xf32> to vector<64xf32>
    %136 = vector.shape_cast %135 : vector<64xf32> to vector<64x1xf32>
    %137 = vector.broadcast %136 : vector<64x1xf32> to vector<64x64xf32>
    %138 = arith.subf %134, %137 : vector<64x64xf32>
    %139 = math.exp %138 : vector<64x64xf32>
    %cst_83 = arith.constant dense<0.000000e+00> : vector<64xf32>
    %140 = vector.multi_reduction <add>, %139, %cst_83 [1] : vector<64x64xf32> to vector<64xf32>
    %141 = vector.shape_cast %140 : vector<64xf32> to vector<64x1xf32>
    %142 = tpu.reciprocal %141 {approx = true} : vector<64x1xf32> -> vector<64x1xf32>
    %143 = vector.broadcast %142 : vector<64x1xf32> to vector<64x64xf32>
    %144 = arith.mulf %139, %143 : vector<64x64xf32>
    %145 = arith.truncf %144 : vector<64x64xf32> to vector<64x64xbf16>
    %cst_84 = arith.constant dense<0.000000e+00> : vector<64x32xf32>
    %146 = tpu.matmul %145, %117, %cst_84 {dimension_numbers = #tpu.dot_dimension_numbers<[1], [0], [0], [1], [0, 0, 1, 1], [], []>} : vector<64x64xbf16>, vector<64x32xbf16>, vector<64x32xf32> -> vector<64x32xf32>
    %147 = tpu.concatenate %38, %74, %110, %146 in 1 : vector<64x32xf32>, vector<64x32xf32>, vector<64x32xf32>, vector<64x32xf32> -> vector<64x128xf32>
    %148 = arith.truncf %147 : vector<64x128xf32> to vector<64x128xbf16>
    %c0_85 = arith.constant 0 : index
    %c0_86 = arith.constant 0 : index
    %c0_87 = arith.constant 0 : index
    %149 = vector.load %arg9[%c0_85, %c0_86, %c0_87] : memref<1x64x128xbf16, #tpu.memory_space<vmem>>, vector<1x64x128xbf16>
    %150 = vector.shape_cast %149 : vector<1x64x128xbf16> to vector<64x128xbf16>
    %151 = vector.shape_cast %148 : vector<64x128xbf16> to vector<1x64x128xbf16>
    tpu.vector_store %arg9[%c0_85, %c0_86, %c0_87], %151 {strides = array<i32>} : memref<1x64x128xbf16, #tpu.memory_space<vmem>>, vector<1x64x128xbf16>,
    return
  }
  func.func @transform_0(%arg0: i32, %arg1: i32) -> (i32, i32, i32) {
    %c0_i32 = arith.constant 0 : i32
    %c0_i32_0 = arith.constant 0 : i32
    return %arg0, %c0_i32, %arg1 : i32, i32, i32
  }
  func.func @transform_1(%arg0: i32, %arg1: i32) -> (i32, i32, i32) {
    %c1_i32 = arith.constant 1 : i32
    %0 = arith.addi %c1_i32, %arg1 : i32
    %c0_i32 = arith.constant 0 : i32
    %c0_i32_0 = arith.constant 0 : i32
    return %arg0, %c0_i32, %0 : i32, i32, i32
  }
  func.func @transform_2(%arg0: i32, %arg1: i32) -> (i32, i32, i32) {
    %c2_i32 = arith.constant 2 : i32
    %0 = arith.addi %c2_i32, %arg1 : i32
    %c0_i32 = arith.constant 0 : i32
    %c0_i32_0 = arith.constant 0 : i32
    return %arg0, %c0_i32, %0 : i32, i32, i32
  }
  func.func @transform_3(%arg0: i32, %arg1: i32) -> (i32, i32) {
    %c0_i32 = arith.constant 0 : i32
    %c0_i32_0 = arith.constant 0 : i32
    return %c0_i32, %arg1 : i32, i32
  }
  func.func @transform_4(%arg0: i32, %arg1: i32) -> (i32, i32) {
    %c0_i32 = arith.constant 0 : i32
    %c0_i32_0 = arith.constant 0 : i32
    return %c0_i32, %arg1 : i32, i32
  }
  func.func @transform_5(%arg0: i32, %arg1: i32) -> (i32, i32) {
    %c0_i32 = arith.constant 0 : i32
    %c0_i32_0 = arith.constant 0 : i32
    return %c0_i32, %arg1 : i32, i32
  }
  func.func @transform_6(%arg0: i32, %arg1: i32) -> (i32, i32, i32) {
    %c0_i32 = arith.constant 0 : i32
    %c0_i32_0 = arith.constant 0 : i32
    %c0_i32_1 = arith.constant 0 : i32
    return %arg0, %c0_i32, %c0_i32_0 : i32, i32, i32
  }
  func.func @transform_7(%arg0: i32, %arg1: i32) -> (i32, i32, i32) {
    %c0_i32 = arith.constant 0 : i32
    %c0_i32_0 = arith.constant 0 : i32
    return %arg0, %c0_i32, %arg1 : i32, i32, i32
  }
}

module attributes {stable_mosaic.version = 11 : i64} {
  func.func @_proj_res_ln_kernel(%arg0: i32, %arg1: memref<128x128xbf16, #tpu.memory_space<vmem>>, %arg2: memref<128x128xbf16, #tpu.memory_space<vmem>>, %arg3: memref<128x128xbf16, #tpu.memory_space<vmem>>, %arg4: memref<1x128xf32, #tpu.memory_space<vmem>>, %arg5: memref<1x128xf32, #tpu.memory_space<vmem>>, %arg6: memref<128x128xbf16, #tpu.memory_space<vmem>>) attributes {dimension_semantics = [#tpu.dimension_semantics<parallel>], iteration_bounds = array<i64: 1>, scalar_prefetch = 0 : i64, scratch_operands = 0 : i64, tpu.core_type = #tpu.core_type<tc>, window_params = [{transform_indices = @transform_0, window_bounds = array<i64: 128, 128>}, {pipeline_mode = #tpu.pipeline_mode<synchronous>, transform_indices = @transform_1, window_bounds = array<i64: 128, 128>}, {transform_indices = @transform_2, window_bounds = array<i64: 128, 128>}, {pipeline_mode = #tpu.pipeline_mode<synchronous>, transform_indices = @transform_3, window_bounds = array<i64: 1, 128>}, {pipeline_mode = #tpu.pipeline_mode<synchronous>, transform_indices = @transform_4, window_bounds = array<i64: 1, 128>}, {transform_indices = @transform_5, window_bounds = array<i64: 128, 128>}]} {
    %c0 = arith.constant 0 : index
    %c0_0 = arith.constant 0 : index
    %0 = vector.load %arg1[%c0, %c0_0] : memref<128x128xbf16, #tpu.memory_space<vmem>>, vector<128x128xbf16>
    %c0_1 = arith.constant 0 : index
    %c0_2 = arith.constant 0 : index
    %1 = vector.load %arg2[%c0_1, %c0_2] : memref<128x128xbf16, #tpu.memory_space<vmem>>, vector<128x128xbf16>
    %cst = arith.constant dense<0.000000e+00> : vector<128x128xf32>
    %2 = tpu.matmul %0, %1, %cst {dimension_numbers = #tpu.dot_dimension_numbers<[1], [0], [0], [1], [0, 0, 1, 1], [], []>} : vector<128x128xbf16>, vector<128x128xbf16>, vector<128x128xf32> -> vector<128x128xf32>
    %c0_3 = arith.constant 0 : index
    %c0_4 = arith.constant 0 : index
    %3 = vector.load %arg3[%c0_3, %c0_4] : memref<128x128xbf16, #tpu.memory_space<vmem>>, vector<128x128xbf16>
    %4 = arith.extf %3 : vector<128x128xbf16> to vector<128x128xf32>
    %5 = arith.addf %2, %4 : vector<128x128xf32>
    %cst_5 = arith.constant dense<0.000000e+00> : vector<128xf32>
    %6 = vector.multi_reduction <add>, %5, %cst_5 [1] : vector<128x128xf32> to vector<128xf32>
    %7 = vector.shape_cast %6 : vector<128xf32> to vector<128x1xf32>
    %cst_6 = arith.constant 1.280000e+02 : f32
    %8 = vector.broadcast %cst_6 : f32 to vector<128x1xf32>
    %9 = arith.divf %7, %8 : vector<128x1xf32>
    %10 = vector.broadcast %9 : vector<128x1xf32> to vector<128x128xf32>
    %11 = arith.subf %5, %10 : vector<128x128xf32>
    %12 = arith.mulf %11, %11 : vector<128x128xf32>
    %cst_7 = arith.constant dense<0.000000e+00> : vector<128xf32>
    %13 = vector.multi_reduction <add>, %12, %cst_7 [1] : vector<128x128xf32> to vector<128xf32>
    %14 = vector.shape_cast %13 : vector<128xf32> to vector<128x1xf32>
    %cst_8 = arith.constant 1.280000e+02 : f32
    %15 = vector.broadcast %cst_8 : f32 to vector<128x1xf32>
    %16 = arith.divf %14, %15 : vector<128x1xf32>
    %cst_9 = arith.constant 9.99999996E-13 : f32
    %17 = vector.broadcast %cst_9 : f32 to vector<128x1xf32>
    %18 = arith.addf %16, %17 : vector<128x1xf32>
    %19 = math.rsqrt %18 : vector<128x1xf32>
    %20 = vector.broadcast %19 : vector<128x1xf32> to vector<128x128xf32>
    %21 = arith.mulf %11, %20 : vector<128x128xf32>
    %c0_10 = arith.constant 0 : index
    %c0_11 = arith.constant 0 : index
    %22 = vector.load %arg4[%c0_10, %c0_11] : memref<1x128xf32, #tpu.memory_space<vmem>>, vector<1x128xf32>
    %23 = vector.broadcast %22 : vector<1x128xf32> to vector<128x128xf32>
    %24 = arith.mulf %21, %23 : vector<128x128xf32>
    %c0_12 = arith.constant 0 : index
    %c0_13 = arith.constant 0 : index
    %25 = vector.load %arg5[%c0_12, %c0_13] : memref<1x128xf32, #tpu.memory_space<vmem>>, vector<1x128xf32>
    %26 = vector.broadcast %25 : vector<1x128xf32> to vector<128x128xf32>
    %27 = arith.addf %24, %26 : vector<128x128xf32>
    %28 = arith.truncf %27 : vector<128x128xf32> to vector<128x128xbf16>
    %c0_14 = arith.constant 0 : index
    %c0_15 = arith.constant 0 : index
    %29 = vector.load %arg6[%c0_14, %c0_15] : memref<128x128xbf16, #tpu.memory_space<vmem>>, vector<128x128xbf16>
    tpu.vector_store %arg6[%c0_14, %c0_15], %28 {strides = array<i32>} : memref<128x128xbf16, #tpu.memory_space<vmem>>, vector<128x128xbf16>,
    return
  }
  func.func @transform_0(%arg0: i32) -> (i32, i32) {
    %c0_i32 = arith.constant 0 : i32
    %c0_i32_0 = arith.constant 0 : i32
    return %arg0, %c0_i32 : i32, i32
  }
  func.func @transform_1(%arg0: i32) -> (i32, i32) {
    %c0_i32 = arith.constant 0 : i32
    %c0_i32_0 = arith.constant 0 : i32
    %c0_i32_1 = arith.constant 0 : i32
    return %c0_i32, %c0_i32_0 : i32, i32
  }
  func.func @transform_2(%arg0: i32) -> (i32, i32) {
    %c0_i32 = arith.constant 0 : i32
    %c0_i32_0 = arith.constant 0 : i32
    return %arg0, %c0_i32 : i32, i32
  }
  func.func @transform_3(%arg0: i32) -> (i32, i32) {
    %c0_i32 = arith.constant 0 : i32
    %c0_i32_0 = arith.constant 0 : i32
    %c0_i32_1 = arith.constant 0 : i32
    return %c0_i32, %c0_i32_0 : i32, i32
  }
  func.func @transform_4(%arg0: i32) -> (i32, i32) {
    %c0_i32 = arith.constant 0 : i32
    %c0_i32_0 = arith.constant 0 : i32
    %c0_i32_1 = arith.constant 0 : i32
    return %c0_i32, %c0_i32_0 : i32, i32
  }
  func.func @transform_5(%arg0: i32) -> (i32, i32) {
    %c0_i32 = arith.constant 0 : i32
    %c0_i32_0 = arith.constant 0 : i32
    return %arg0, %c0_i32 : i32, i32
  }
}

module attributes {stable_mosaic.version = 11 : i64} {
  func.func @_ffn_res_ln_kernel(%arg0: i32, %arg1: i32, %arg2: memref<128x128xbf16, #tpu.memory_space<vmem>>, %arg3: memref<128x256xbf16, #tpu.memory_space<vmem>>, %arg4: memref<1x256xf32, #tpu.memory_space<vmem>>, %arg5: memref<256x128xbf16, #tpu.memory_space<vmem>>, %arg6: memref<1x128xf32, #tpu.memory_space<vmem>>, %arg7: memref<1x128xf32, #tpu.memory_space<vmem>>, %arg8: memref<1x128xf32, #tpu.memory_space<vmem>>, %arg9: memref<128x128xbf16, #tpu.memory_space<vmem>>, %arg10: memref<128x128xf32, #tpu.memory_space<vmem>>) attributes {dimension_semantics = [#tpu.dimension_semantics<parallel>, #tpu.dimension_semantics<arbitrary>], iteration_bounds = array<i64: 1, 1>, scalar_prefetch = 0 : i64, scratch_operands = 1 : i64, tpu.core_type = #tpu.core_type<tc>, window_params = [{transform_indices = @transform_0, window_bounds = array<i64: 128, 128>}, {transform_indices = @transform_1, window_bounds = array<i64: 128, 256>}, {transform_indices = @transform_2, window_bounds = array<i64: 1, 256>}, {transform_indices = @transform_3, window_bounds = array<i64: 256, 128>}, {pipeline_mode = #tpu.pipeline_mode<synchronous>, transform_indices = @transform_4, window_bounds = array<i64: 1, 128>}, {pipeline_mode = #tpu.pipeline_mode<synchronous>, transform_indices = @transform_5, window_bounds = array<i64: 1, 128>}, {pipeline_mode = #tpu.pipeline_mode<synchronous>, transform_indices = @transform_6, window_bounds = array<i64: 1, 128>}, {transform_indices = @transform_7, window_bounds = array<i64: 128, 128>}]} {
    %c0_i32 = arith.constant 0 : i32
    %0 = arith.cmpi eq, %arg1, %c0_i32 : i32
    %1 = arith.extui %0 : i1 to i32
    %c0_i32_0 = arith.constant 0 : i32
    %2 = arith.cmpi ne, %1, %c0_i32_0 : i32
    scf.if %2 {
      %cst_19 = arith.constant 0.000000e+00 : f32
      %31 = vector.broadcast %cst_19 : f32 to vector<128x128xf32>
      %c0_20 = arith.constant 0 : index
      %c0_21 = arith.constant 0 : index
      %32 = vector.load %arg10[%c0_20, %c0_21] : memref<128x128xf32, #tpu.memory_space<vmem>>, vector<128x128xf32>
      tpu.vector_store %arg10[%c0_20, %c0_21], %31 {strides = array<i32>} : memref<128x128xf32, #tpu.memory_space<vmem>>, vector<128x128xf32>,
    } else {
    }
    %c0 = arith.constant 0 : index
    %c0_1 = arith.constant 0 : index
    %3 = vector.load %arg2[%c0, %c0_1] : memref<128x128xbf16, #tpu.memory_space<vmem>>, vector<128x128xbf16>
    %c0_2 = arith.constant 0 : index
    %c0_3 = arith.constant 0 : index
    %4 = vector.load %arg3[%c0_2, %c0_3] : memref<128x256xbf16, #tpu.memory_space<vmem>>, vector<128x256xbf16>
    %cst = arith.constant dense<0.000000e+00> : vector<128x256xf32>
    %5 = tpu.matmul %3, %4, %cst {dimension_numbers = #tpu.dot_dimension_numbers<[1], [0], [0], [1], [0, 0, 1, 1], [], []>} : vector<128x128xbf16>, vector<128x256xbf16>, vector<128x256xf32> -> vector<128x256xf32>
    %c0_4 = arith.constant 0 : index
    %c0_5 = arith.constant 0 : index
    %6 = vector.load %arg4[%c0_4, %c0_5] : memref<1x256xf32, #tpu.memory_space<vmem>>, vector<1x256xf32>
    %7 = vector.broadcast %6 : vector<1x256xf32> to vector<128x256xf32>
    %8 = arith.addf %5, %7 : vector<128x256xf32>
    %9 = arith.mulf %8, %8 : vector<128x256xf32>
    %10 = arith.mulf %8, %9 : vector<128x256xf32>
    %cst_6 = arith.constant 4.471500e-02 : f32
    %11 = vector.broadcast %cst_6 : f32 to vector<128x256xf32>
    %12 = arith.mulf %11, %10 : vector<128x256xf32>
    %13 = arith.addf %8, %12 : vector<128x256xf32>
    %cst_7 = arith.constant 0.797884583 : f32
    %14 = vector.broadcast %cst_7 : f32 to vector<128x256xf32>
    %15 = arith.mulf %14, %13 : vector<128x256xf32>
    %16 = math.tanh %15 : vector<128x256xf32>
    %cst_8 = arith.constant 1.000000e+00 : f32
    %17 = vector.broadcast %cst_8 : f32 to vector<128x256xf32>
    %18 = arith.addf %17, %16 : vector<128x256xf32>
    %cst_9 = arith.constant 5.000000e-01 : f32
    %19 = vector.broadcast %cst_9 : f32 to vector<128x256xf32>
    %20 = arith.mulf %19, %18 : vector<128x256xf32>
    %21 = arith.mulf %8, %20 : vector<128x256xf32>
    %c0_10 = arith.constant 0 : index
    %c0_11 = arith.constant 0 : index
    %22 = vector.load %arg10[%c0_10, %c0_11] : memref<128x128xf32, #tpu.memory_space<vmem>>, vector<128x128xf32>
    %23 = arith.truncf %21 : vector<128x256xf32> to vector<128x256xbf16>
    %c0_12 = arith.constant 0 : index
    %c0_13 = arith.constant 0 : index
    %24 = vector.load %arg5[%c0_12, %c0_13] : memref<256x128xbf16, #tpu.memory_space<vmem>>, vector<256x128xbf16>
    %cst_14 = arith.constant dense<0.000000e+00> : vector<128x128xf32>
    %25 = tpu.matmul %23, %24, %cst_14 {dimension_numbers = #tpu.dot_dimension_numbers<[1], [0], [0], [1], [0, 0, 1, 1], [], []>} : vector<128x256xbf16>, vector<256x128xbf16>, vector<128x128xf32> -> vector<128x128xf32>
    %26 = arith.addf %22, %25 : vector<128x128xf32>
    %c0_15 = arith.constant 0 : index
    %c0_16 = arith.constant 0 : index
    %27 = vector.load %arg10[%c0_15, %c0_16] : memref<128x128xf32, #tpu.memory_space<vmem>>, vector<128x128xf32>
    tpu.vector_store %arg10[%c0_15, %c0_16], %26 {strides = array<i32>} : memref<128x128xf32, #tpu.memory_space<vmem>>, vector<128x128xf32>,
    %c0_i32_17 = arith.constant 0 : i32
    %28 = arith.cmpi eq, %arg1, %c0_i32_17 : i32
    %29 = arith.extui %28 : i1 to i32
    %c0_i32_18 = arith.constant 0 : i32
    %30 = arith.cmpi ne, %29, %c0_i32_18 : i32
    scf.if %30 {
      %c0_19 = arith.constant 0 : index
      %c0_20 = arith.constant 0 : index
      %31 = vector.load %arg10[%c0_19, %c0_20] : memref<128x128xf32, #tpu.memory_space<vmem>>, vector<128x128xf32>
      %c0_21 = arith.constant 0 : index
      %c0_22 = arith.constant 0 : index
      %32 = vector.load %arg6[%c0_21, %c0_22] : memref<1x128xf32, #tpu.memory_space<vmem>>, vector<1x128xf32>
      %33 = vector.broadcast %32 : vector<1x128xf32> to vector<128x128xf32>
      %34 = arith.addf %31, %33 : vector<128x128xf32>
      %c0_23 = arith.constant 0 : index
      %c0_24 = arith.constant 0 : index
      %35 = vector.load %arg2[%c0_23, %c0_24] : memref<128x128xbf16, #tpu.memory_space<vmem>>, vector<128x128xbf16>
      %36 = arith.extf %35 : vector<128x128xbf16> to vector<128x128xf32>
      %37 = arith.addf %34, %36 : vector<128x128xf32>
      %cst_25 = arith.constant dense<0.000000e+00> : vector<128xf32>
      %38 = vector.multi_reduction <add>, %37, %cst_25 [1] : vector<128x128xf32> to vector<128xf32>
      %39 = vector.shape_cast %38 : vector<128xf32> to vector<128x1xf32>
      %cst_26 = arith.constant 1.280000e+02 : f32
      %40 = vector.broadcast %cst_26 : f32 to vector<128x1xf32>
      %41 = arith.divf %39, %40 : vector<128x1xf32>
      %42 = vector.broadcast %41 : vector<128x1xf32> to vector<128x128xf32>
      %43 = arith.subf %37, %42 : vector<128x128xf32>
      %44 = arith.mulf %43, %43 : vector<128x128xf32>
      %cst_27 = arith.constant dense<0.000000e+00> : vector<128xf32>
      %45 = vector.multi_reduction <add>, %44, %cst_27 [1] : vector<128x128xf32> to vector<128xf32>
      %46 = vector.shape_cast %45 : vector<128xf32> to vector<128x1xf32>
      %cst_28 = arith.constant 1.280000e+02 : f32
      %47 = vector.broadcast %cst_28 : f32 to vector<128x1xf32>
      %48 = arith.divf %46, %47 : vector<128x1xf32>
      %cst_29 = arith.constant 9.99999996E-13 : f32
      %49 = vector.broadcast %cst_29 : f32 to vector<128x1xf32>
      %50 = arith.addf %48, %49 : vector<128x1xf32>
      %51 = math.rsqrt %50 : vector<128x1xf32>
      %52 = vector.broadcast %51 : vector<128x1xf32> to vector<128x128xf32>
      %53 = arith.mulf %43, %52 : vector<128x128xf32>
      %c0_30 = arith.constant 0 : index
      %c0_31 = arith.constant 0 : index
      %54 = vector.load %arg7[%c0_30, %c0_31] : memref<1x128xf32, #tpu.memory_space<vmem>>, vector<1x128xf32>
      %55 = vector.broadcast %54 : vector<1x128xf32> to vector<128x128xf32>
      %56 = arith.mulf %53, %55 : vector<128x128xf32>
      %c0_32 = arith.constant 0 : index
      %c0_33 = arith.constant 0 : index
      %57 = vector.load %arg8[%c0_32, %c0_33] : memref<1x128xf32, #tpu.memory_space<vmem>>, vector<1x128xf32>
      %58 = vector.broadcast %57 : vector<1x128xf32> to vector<128x128xf32>
      %59 = arith.addf %56, %58 : vector<128x128xf32>
      %60 = arith.truncf %59 : vector<128x128xf32> to vector<128x128xbf16>
      %c0_34 = arith.constant 0 : index
      %c0_35 = arith.constant 0 : index
      %61 = vector.load %arg9[%c0_34, %c0_35] : memref<128x128xbf16, #tpu.memory_space<vmem>>, vector<128x128xbf16>
      tpu.vector_store %arg9[%c0_34, %c0_35], %60 {strides = array<i32>} : memref<128x128xbf16, #tpu.memory_space<vmem>>, vector<128x128xbf16>,
    } else {
    }
    return
  }
  func.func @transform_0(%arg0: i32, %arg1: i32) -> (i32, i32) {
    %c0_i32 = arith.constant 0 : i32
    %c0_i32_0 = arith.constant 0 : i32
    return %arg0, %c0_i32 : i32, i32
  }
  func.func @transform_1(%arg0: i32, %arg1: i32) -> (i32, i32) {
    %c0_i32 = arith.constant 0 : i32
    %c0_i32_0 = arith.constant 0 : i32
    return %c0_i32, %arg1 : i32, i32
  }
  func.func @transform_2(%arg0: i32, %arg1: i32) -> (i32, i32) {
    %c0_i32 = arith.constant 0 : i32
    %c0_i32_0 = arith.constant 0 : i32
    return %c0_i32, %arg1 : i32, i32
  }
  func.func @transform_3(%arg0: i32, %arg1: i32) -> (i32, i32) {
    %c0_i32 = arith.constant 0 : i32
    %c0_i32_0 = arith.constant 0 : i32
    return %arg1, %c0_i32 : i32, i32
  }
  func.func @transform_4(%arg0: i32, %arg1: i32) -> (i32, i32) {
    %c0_i32 = arith.constant 0 : i32
    %c0_i32_0 = arith.constant 0 : i32
    %c0_i32_1 = arith.constant 0 : i32
    return %c0_i32, %c0_i32_0 : i32, i32
  }
  func.func @transform_5(%arg0: i32, %arg1: i32) -> (i32, i32) {
    %c0_i32 = arith.constant 0 : i32
    %c0_i32_0 = arith.constant 0 : i32
    %c0_i32_1 = arith.constant 0 : i32
    return %c0_i32, %c0_i32_0 : i32, i32
  }
  func.func @transform_6(%arg0: i32, %arg1: i32) -> (i32, i32) {
    %c0_i32 = arith.constant 0 : i32
    %c0_i32_0 = arith.constant 0 : i32
    %c0_i32_1 = arith.constant 0 : i32
    return %c0_i32, %c0_i32_0 : i32, i32
  }
  func.func @transform_7(%arg0: i32, %arg1: i32) -> (i32, i32) {
    %c0_i32 = arith.constant 0 : i32
    %c0_i32_0 = arith.constant 0 : i32
    return %arg0, %c0_i32 : i32, i32
  }
}

module attributes {stable_mosaic.version = 11 : i64} {
  func.func @_proj_res_ln_kernel(%arg0: i32, %arg1: memref<128x128xbf16, #tpu.memory_space<vmem>>, %arg2: memref<128x128xbf16, #tpu.memory_space<vmem>>, %arg3: memref<128x128xbf16, #tpu.memory_space<vmem>>, %arg4: memref<1x128xf32, #tpu.memory_space<vmem>>, %arg5: memref<1x128xf32, #tpu.memory_space<vmem>>, %arg6: memref<128x128xbf16, #tpu.memory_space<vmem>>) attributes {dimension_semantics = [#tpu.dimension_semantics<parallel>], iteration_bounds = array<i64: 1>, scalar_prefetch = 0 : i64, scratch_operands = 0 : i64, tpu.core_type = #tpu.core_type<tc>, window_params = [{transform_indices = @transform_0, window_bounds = array<i64: 128, 128>}, {pipeline_mode = #tpu.pipeline_mode<synchronous>, transform_indices = @transform_1, window_bounds = array<i64: 128, 128>}, {transform_indices = @transform_2, window_bounds = array<i64: 128, 128>}, {pipeline_mode = #tpu.pipeline_mode<synchronous>, transform_indices = @transform_3, window_bounds = array<i64: 1, 128>}, {pipeline_mode = #tpu.pipeline_mode<synchronous>, transform_indices = @transform_4, window_bounds = array<i64: 1, 128>}, {transform_indices = @transform_5, window_bounds = array<i64: 128, 128>}]} {
    %c0 = arith.constant 0 : index
    %c0_0 = arith.constant 0 : index
    %0 = vector.load %arg1[%c0, %c0_0] : memref<128x128xbf16, #tpu.memory_space<vmem>>, vector<128x128xbf16>
    %c0_1 = arith.constant 0 : index
    %c0_2 = arith.constant 0 : index
    %1 = vector.load %arg2[%c0_1, %c0_2] : memref<128x128xbf16, #tpu.memory_space<vmem>>, vector<128x128xbf16>
    %cst = arith.constant dense<0.000000e+00> : vector<128x128xf32>
    %2 = tpu.matmul %0, %1, %cst {dimension_numbers = #tpu.dot_dimension_numbers<[1], [0], [0], [1], [0, 0, 1, 1], [], []>} : vector<128x128xbf16>, vector<128x128xbf16>, vector<128x128xf32> -> vector<128x128xf32>
    %c0_3 = arith.constant 0 : index
    %c0_4 = arith.constant 0 : index
    %3 = vector.load %arg3[%c0_3, %c0_4] : memref<128x128xbf16, #tpu.memory_space<vmem>>, vector<128x128xbf16>
    %4 = arith.extf %3 : vector<128x128xbf16> to vector<128x128xf32>
    %5 = arith.addf %2, %4 : vector<128x128xf32>
    %cst_5 = arith.constant dense<0.000000e+00> : vector<128xf32>
    %6 = vector.multi_reduction <add>, %5, %cst_5 [1] : vector<128x128xf32> to vector<128xf32>
    %7 = vector.shape_cast %6 : vector<128xf32> to vector<128x1xf32>
    %cst_6 = arith.constant 1.280000e+02 : f32
    %8 = vector.broadcast %cst_6 : f32 to vector<128x1xf32>
    %9 = arith.divf %7, %8 : vector<128x1xf32>
    %10 = vector.broadcast %9 : vector<128x1xf32> to vector<128x128xf32>
    %11 = arith.subf %5, %10 : vector<128x128xf32>
    %12 = arith.mulf %11, %11 : vector<128x128xf32>
    %cst_7 = arith.constant dense<0.000000e+00> : vector<128xf32>
    %13 = vector.multi_reduction <add>, %12, %cst_7 [1] : vector<128x128xf32> to vector<128xf32>
    %14 = vector.shape_cast %13 : vector<128xf32> to vector<128x1xf32>
    %cst_8 = arith.constant 1.280000e+02 : f32
    %15 = vector.broadcast %cst_8 : f32 to vector<128x1xf32>
    %16 = arith.divf %14, %15 : vector<128x1xf32>
    %cst_9 = arith.constant 9.99999996E-13 : f32
    %17 = vector.broadcast %cst_9 : f32 to vector<128x1xf32>
    %18 = arith.addf %16, %17 : vector<128x1xf32>
    %19 = math.rsqrt %18 : vector<128x1xf32>
    %20 = vector.broadcast %19 : vector<128x1xf32> to vector<128x128xf32>
    %21 = arith.mulf %11, %20 : vector<128x128xf32>
    %c0_10 = arith.constant 0 : index
    %c0_11 = arith.constant 0 : index
    %22 = vector.load %arg4[%c0_10, %c0_11] : memref<1x128xf32, #tpu.memory_space<vmem>>, vector<1x128xf32>
    %23 = vector.broadcast %22 : vector<1x128xf32> to vector<128x128xf32>
    %24 = arith.mulf %21, %23 : vector<128x128xf32>
    %c0_12 = arith.constant 0 : index
    %c0_13 = arith.constant 0 : index
    %25 = vector.load %arg5[%c0_12, %c0_13] : memref<1x128xf32, #tpu.memory_space<vmem>>, vector<1x128xf32>
    %26 = vector.broadcast %25 : vector<1x128xf32> to vector<128x128xf32>
    %27 = arith.addf %24, %26 : vector<128x128xf32>
    %28 = arith.truncf %27 : vector<128x128xf32> to vector<128x128xbf16>
    %c0_14 = arith.constant 0 : index
    %c0_15 = arith.constant 0 : index
    %29 = vector.load %arg6[%c0_14, %c0_15] : memref<128x128xbf16, #tpu.memory_space<vmem>>, vector<128x128xbf16>
    tpu.vector_store %arg6[%c0_14, %c0_15], %28 {strides = array<i32>} : memref<128x128xbf16, #tpu.memory_space<vmem>>, vector<128x128xbf16>,
    return
  }
  func.func @transform_0(%arg0: i32) -> (i32, i32) {
    %c0_i32 = arith.constant 0 : i32
    %c0_i32_0 = arith.constant 0 : i32
    return %arg0, %c0_i32 : i32, i32
  }
  func.func @transform_1(%arg0: i32) -> (i32, i32) {
    %c0_i32 = arith.constant 0 : i32
    %c0_i32_0 = arith.constant 0 : i32
    %c0_i32_1 = arith.constant 0 : i32
    return %c0_i32, %c0_i32_0 : i32, i32
  }
  func.func @transform_2(%arg0: i32) -> (i32, i32) {
    %c0_i32 = arith.constant 0 : i32
    %c0_i32_0 = arith.constant 0 : i32
    return %arg0, %c0_i32 : i32, i32
  }
  func.func @transform_3(%arg0: i32) -> (i32, i32) {
    %c0_i32 = arith.constant 0 : i32
    %c0_i32_0 = arith.constant 0 : i32
    %c0_i32_1 = arith.constant 0 : i32
    return %c0_i32, %c0_i32_0 : i32, i32
  }
  func.func @transform_4(%arg0: i32) -> (i32, i32) {
    %c0_i32 = arith.constant 0 : i32
    %c0_i32_0 = arith.constant 0 : i32
    %c0_i32_1 = arith.constant 0 : i32
    return %c0_i32, %c0_i32_0 : i32, i32
  }
  func.func @transform_5(%arg0: i32) -> (i32, i32) {
    %c0_i32 = arith.constant 0 : i32
    %c0_i32_0 = arith.constant 0 : i32
    return %arg0, %c0_i32 : i32, i32
  }
}

</mosaic_0001>

<llo_original>
// kernel: _lambda_.10
$region0: #{_lambda_.10}
  #allocation0 [shape = 'u32[]', space=smem, size = 0x4, offset = 0x4, fixed_abs, tag = 'smem constant byte address 0x4 - core index']
  #allocation1 [shape = 'u32[72,128]{1,0:T(1,128)}', space=vmem, size = 0x9000, scoped, tag = 'internal scratch']
  %s0 = inlined_call_operand.vmem [shape: bf16[128,128], index: 0, kind: input, shape index: {}]
  %s1 = inlined_call_operand.vmem [shape: bf16[128,384], index: 1, kind: input, shape index: {}]
  %s2 = inlined_call_operand.vmem [shape: bf16[128,384], index: 2, kind: output, shape index: {}]
  %s3 = sld [smem:[#allocation0]]
  $region119: #{_lambda_.10} parent=0
    _
  %s5 = ssub.s32 1, %s3
  %s6 = scalar_select 0, %s5, %s3
  $region1: #{_lambda_.10} parent=0
    #allocation2 [shape = 'u8[65536]{0}', space=vmem, size = 0x10000, scoped, tag = 'input window, operand 1']
    #allocation3 [shape = 'u8[65536]{0}', space=vmem, size = 0x10000, scoped, tag = 'output window, operand 0']
    loop: start=0, step=1, limit=5
    $region2: #{_lambda_.10} parent=1 // loop_pre_header
      _
    $region3: #{_lambda_.10} parent=1 // loop_header
      %s8 = sphi 0, %s12
      %p9 = scmp.ge.s32.totalorder %s8, 5
      %s15 = sphi 0, %s27
      %s16 = sphi 0, %s23
      %s17 = sphi 0, %s15
      %s18 = sphi 0, %s16
      %s19 = sphi 0, %s17
      %s20 = sphi 0, %s18
      %s30 = sphi 0, %s32
      %s33 = sphi 0, %s30
      %s34 = sphi 0, %s33
      %s50 = sphi 0, %s34
      %s56 = sphi 0, %s58
      %s59 = sphi 0, %s56
      %s60 = sphi 0, %s59
      %s76 = sphi 0, %s60
      %s84 = sphi 0, %s86
      %s87 = sphi 0, %s84
      %s88 = sphi 0, %s87
      %s104 = sphi 0, %s88
    $region4: #{_lambda_.10} parent=1 // loop_header_branch
      %11 = sbr.rel (%p9) target = $region8
    $region5: #{_lambda_.10} parent=1 // loop_body
      %s13 = ssub.s32 %s8, 1
      %s14 = ssub.s32 %s8, 2
      %s21 = sadd.s32 1, %s16
      %p22 = scmp.ge.s32.totalorder %s21, 3
      %s23 = scalar_select %p22, 0, %s21
      %s24 = sadd.s32 1, %s15
      %s25 = scalar_select %p22, %s24, %s15
      %p26 = scmp.ge.s32.totalorder %s25, 1
      %s27 = scalar_select %p26, 0, %s25
      %s28 = ssub.s32 %s15, %s27
      %p29 = scmp.eq.s32.totalorder %s28, 0
      %s31 = sadd.s32 %s30, 1
      %s32 = scalar_select %p29, %s30, %s31
      %p35 = pneg %p29
      %p36 = scmp.eq.s32.totalorder %s8, 2
      %p37 = por %p35, %p36
      %p38 = scmp.ne.s32.totalorder %s30, %s33
      %p39 = scmp.eq.s32.totalorder %s8, 0
      %p40 = por %p38, %p39
      %p41 = scmp.ne.s32.totalorder %s30, %s33
      %p42 = scmp.eq.s32.totalorder %s13, 2
      %p43 = por %p41, %p42
      %p44 = scmp.ne.s32.totalorder %s33, %s34
      %p45 = scmp.eq.s32.totalorder %s13, 0
      %p46 = por %p44, %p45
      %p47 = scmp.ne.s32.totalorder %s33, %s34
      %p48 = scmp.eq.s32.totalorder %s14, 2
      %p49 = por %p47, %p48
      %p51 = scmp.ne.s32.totalorder %s34, %s50
      %p52 = scmp.eq.s32.totalorder %s14, 0
      %p53 = por %p51, %p52
      %s54 = ssub.s32 %s16, %s23
      %p55 = scmp.eq.s32.totalorder %s54, 0
      %s57 = sadd.s32 %s56, 1
      %s58 = scalar_select %p55, %s56, %s57
      %p61 = pneg %p55
      %p62 = scmp.eq.s32.totalorder %s8, 2
      %p63 = por %p61, %p62
      %p64 = scmp.ne.s32.totalorder %s56, %s59
      %p65 = scmp.eq.s32.totalorder %s8, 0
      %p66 = por %p64, %p65
      %p67 = scmp.ne.s32.totalorder %s56, %s59
      %p68 = scmp.eq.s32.totalorder %s13, 2
      %p69 = por %p67, %p68
      %p70 = scmp.ne.s32.totalorder %s59, %s60
      %p71 = scmp.eq.s32.totalorder %s13, 0
      %p72 = por %p70, %p71
      %p73 = scmp.ne.s32.totalorder %s59, %s60
      %p74 = scmp.eq.s32.totalorder %s14, 2
      %p75 = por %p73, %p74
      %p77 = scmp.ne.s32.totalorder %s60, %s76
      %p78 = scmp.eq.s32.totalorder %s14, 0
      %p79 = por %p77, %p78
      %s80 = ssub.s32 %s15, %s27
      %s81 = ssub.s32 %s16, %s23
      %s82 = sor.u32 %s80, %s81
      %p83 = scmp.eq.s32.totalorder %s82, 0
      %s85 = sadd.s32 %s84, 1
      %s86 = scalar_select %p83, %s84, %s85
      %p89 = pneg %p83
      %p90 = scmp.eq.s32.totalorder %s8, 2
      %p91 = por %p89, %p90
      %p92 = scmp.ne.s32.totalorder %s84, %s87
      %p93 = scmp.eq.s32.totalorder %s8, 0
      %p94 = por %p92, %p93
      %p95 = scmp.ne.s32.totalorder %s84, %s87
      %p96 = scmp.eq.s32.totalorder %s13, 2
      %p97 = por %p95, %p96
      %p98 = scmp.ne.s32.totalorder %s87, %s88
      %p99 = scmp.eq.s32.totalorder %s13, 0
      %p100 = por %p98, %p99
      %p101 = scmp.ne.s32.totalorder %s87, %s88
      %p102 = scmp.eq.s32.totalorder %s14, 2
      %p103 = por %p101, %p102
      %p105 = scmp.ne.s32.totalorder %s88, %s104
      %p106 = scmp.eq.s32.totalorder %s14, 0
      %p107 = por %p105, %p106
      %p108 = scmp.le.s32.totalorder 1, %s8
      %p109 = scmp.lt.s32.totalorder %s8, 4
      %p110 = pnand %p108, %p109
      %p111 = pneg %p110
      // Predicated region
      $region9: #{_lambda_.10} parent=5 // pred_check
        _
      $region10: #{_lambda_.10} parent=5 // pred_check_branch
        %113 = sbr.rel (%p110) target = $region12
      $region11: #{_lambda_.10} parent=5 // pred_region
        %s114 = ssub.s32 %s8, 1
        // Predicated region
        $region13: #{_lambda_.10} parent=11 // pred_check
          %p115 = pneg %p46
        $region14: #{_lambda_.10} parent=11 // pred_check_branch
          %117 = sbr.rel (%p115) target = $region16
        $region15: #{_lambda_.10} parent=11 // pred_region
          %s118 = smul.u32 16, %s17
          %p119 = scmp.lt.s32.totalorder %s118, 15
          %s120 = scalar_select %p119, %s118, 15
          %s121 = smul.addr %s120, 4
          %s122 = scalar_lea.vmem %s0, %s121
          %s123 = smul.u32 16, %s17
        $region16: #{_lambda_.10} parent=11 // pred_fallthru
          _
      $region12: #{_lambda_.10} parent=5 // pred_fallthru
        _
      %p124 = scmp.lt.s32.totalorder %s8, 3
      // Predicated region
      $region17: #{_lambda_.10} parent=5 // pred_check
        %p125 = pneg %p124
      $region18: #{_lambda_.10} parent=5 // pred_check_branch
        %127 = sbr.rel (%p125) target = $region20
      $region19: #{_lambda_.10} parent=5 // pred_region
        // Predicated region
        $region21: #{_lambda_.10} parent=19 // pred_check
          %p128 = pneg %p66
        $region22: #{_lambda_.10} parent=19 // pred_check_branch
          %130 = sbr.rel (%p128) target = $region24
        $region23: #{_lambda_.10} parent=19 // pred_region
          %s131 = sand.u32 %s56, 1
          %s132 = sand.u32 %s56, 1
          %s133 = smul.addr %s132, 64
          %s134 = scalar_lea.vmem [#allocation2], %s133
          %s135 = smul.addr %s16, 4
          %s136 = scalar_lea.vmem %s1, %s135
          // Predicated region
          $region25: #{_lambda_.10} parent=23 // pred_check
            _
          $region26: #{_lambda_.10} parent=23 // pred_check_branch
            %138 = sbr.rel (0) target = $region28
          $region27: #{_lambda_.10} parent=23 // pred_region
            // Predicated region
            $region29: #{_lambda_.10} parent=27 // pred_check
              _
            $region30: #{_lambda_.10} parent=27 // pred_check_branch
              %140 = sbr.rel target = $region32
            $region31: #{_lambda_.10} parent=27 // pred_region
              // Predicated region
              $region44: #{_lambda_.10} parent=31 // pred_check
                _
              $region45: #{_lambda_.10} parent=31 // pred_check_branch
                %186 = sbr.rel (0) target = $region47
              $region46: #{_lambda_.10} parent=31 // pred_region
                loop: start=0, step=1, limit=1
                $region48: #{_lambda_.10} parent=46 // loop_pre_header
                  _
                $region49: #{_lambda_.10} parent=46 // loop_header
                  %s188 = sphi 0, %s192
                  %p189 = scmp.ge.s32.totalorder %s188, 1
                  %s193 = sphi %s136, %s136
                  %s194 = sphi %s134, %s134
                $region50: #{_lambda_.10} parent=46 // loop_header_branch
                  %191 = sbr.rel (%p189) target = $region54
                $region51: #{_lambda_.10} parent=46 // loop_body
                  _
                $region52: #{_lambda_.10} parent=46 // loop_footer
                  %s192 = sadd.s32 1, %s188
                $region53: #{_lambda_.10} parent=46 // loop_footer_branch
                  %187 = sbr.rel target = $region49
                $region54: #{_lambda_.10} parent=46 // loop_exit
                  _
                %s196 = ssub.s32 16, 1
                loop: start=0, step=1, limit=1
                $region55: #{_lambda_.10} parent=46 // loop_pre_header
                  _
                $region56: #{_lambda_.10} parent=46 // loop_header
                  %s198 = sphi 0, %s202
                  %p199 = scmp.ge.s32.totalorder %s198, 1
                  %s203 = sphi %s136, %s136
                  %s204 = sphi %s134, %s134
                $region57: #{_lambda_.10} parent=46 // loop_header_branch
                  %201 = sbr.rel (%p199) target = $region61
                $region58: #{_lambda_.10} parent=46 // loop_body
                  %v205 = vld [vmem:[%s203] sm:%s196]
                  %206 = vst [vmem:[%s204] sm:%s196] %v205
                  %v207 = vld [vmem:[%s203 + $0xc] sm:%s196]
                  %208 = vst [vmem:[%s204 + $0x4] sm:%s196] %v207
                  %v209 = vld [vmem:[%s203 + $0x18] sm:%s196]
                  %210 = vst [vmem:[%s204 + $0x8] sm:%s196] %v209
                  %v211 = vld [vmem:[%s203 + $0x24] sm:%s196]
                  %212 = vst [vmem:[%s204 + $0xc] sm:%s196] %v211
                  %v213 = vld [vmem:[%s203 + $0x30] sm:%s196]
                  %214 = vst [vmem:[%s204 + $0x10] sm:%s196] %v213
                  %v215 = vld [vmem:[%s203 + $0x3c] sm:%s196]
                  %216 = vst [vmem:[%s204 + $0x14] sm:%s196] %v215
                  %v217 = vld [vmem:[%s203 + $0x48] sm:%s196]
                  %218 = vst [vmem:[%s204 + $0x18] sm:%s196] %v217
                  %v219 = vld [vmem:[%s203 + $0x54] sm:%s196]
                  %220 = vst [vmem:[%s204 + $0x1c] sm:%s196] %v219
                  %v221 = vld [vmem:[%s203 + $0x60] sm:%s196]
                  %222 = vst [vmem:[%s204 + $0x20] sm:%s196] %v221
                  %v223 = vld [vmem:[%s203 + $0x6c] sm:%s196]
                  %224 = vst [vmem:[%s204 + $0x24] sm:%s196] %v223
                  %v225 = vld [vmem:[%s203 + $0x78] sm:%s196]
                  %226 = vst [vmem:[%s204 + $0x28] sm:%s196] %v225
                  %v227 = vld [vmem:[%s203 + $0x84] sm:%s196]
                  %228 = vst [vmem:[%s204 + $0x2c] sm:%s196] %v227
                  %v229 = vld [vmem:[%s203 + $0x90] sm:%s196]
                  %230 = vst [vmem:[%s204 + $0x30] sm:%s196] %v229
                  %v231 = vld [vmem:[%s203 + $0x9c] sm:%s196]
                  %232 = vst [vmem:[%s204 + $0x34] sm:%s196] %v231
                  %v233 = vld [vmem:[%s203 + $0xa8] sm:%s196]
                  %234 = vst [vmem:[%s204 + $0x38] sm:%s196] %v233
                  %v235 = vld [vmem:[%s203 + $0xb4] sm:%s196]
                  %236 = vst [vmem:[%s204 + $0x3c] sm:%s196] %v235
                $region59: #{_lambda_.10} parent=46 // loop_footer
                  %s202 = sadd.s32 1, %s198
                $region60: #{_lambda_.10} parent=46 // loop_footer_branch
                  %197 = sbr.rel target = $region56
                $region61: #{_lambda_.10} parent=46 // loop_exit
                  _
              $region47: #{_lambda_.10} parent=31 // pred_fallthru
                _
            $region32: #{_lambda_.10} parent=27 // pred_fallthru
              _
            // Predicated region
            $region33: #{_lambda_.10} parent=27 // pred_check
              _
            $region34: #{_lambda_.10} parent=27 // pred_check_branch
              %142 = sbr.rel (0) target = $region36
            $region35: #{_lambda_.10} parent=27 // pred_region
              %s144 = ssub.s32 16, 1
              loop: start=0, step=1, limit=1
              $region37: #{_lambda_.10} parent=35 // loop_pre_header
                _
              $region38: #{_lambda_.10} parent=35 // loop_header
                %s146 = sphi 0, %s150
                %p147 = scmp.ge.s32.totalorder %s146, 1
                %s151 = sphi %s136, %s136
                %s152 = sphi %s134, %s134
              $region39: #{_lambda_.10} parent=35 // loop_header_branch
                %149 = sbr.rel (%p147) target = $region43
              $region40: #{_lambda_.10} parent=35 // loop_body
                %v153 = vld [vmem:[%s151] sm:%s144]
                %154 = vst [vmem:[%s152] sm:%s144] %v153
                %v155 = vld [vmem:[%s151 + $0xc] sm:%s144]
                %156 = vst [vmem:[%s152 + $0x4] sm:%s144] %v155
                %v157 = vld [vmem:[%s151 + $0x18] sm:%s144]
                %158 = vst [vmem:[%s152 + $0x8] sm:%s144] %v157
                %v159 = vld [vmem:[%s151 + $0x24] sm:%s144]
                %160 = vst [vmem:[%s152 + $0xc] sm:%s144] %v159
                %v161 = vld [vmem:[%s151 + $0x30] sm:%s144]
                %162 = vst [vmem:[%s152 + $0x10] sm:%s144] %v161
                %v163 = vld [vmem:[%s151 + $0x3c] sm:%s144]
                %164 = vst [vmem:[%s152 + $0x14] sm:%s144] %v163
                %v165 = vld [vmem:[%s151 + $0x48] sm:%s144]
                %166 = vst [vmem:[%s152 + $0x18] sm:%s144] %v165
                %v167 = vld [vmem:[%s151 + $0x54] sm:%s144]
                %168 = vst [vmem:[%s152 + $0x1c] sm:%s144] %v167
                %v169 = vld [vmem:[%s151 + $0x60] sm:%s144]
                %170 = vst [vmem:[%s152 + $0x20] sm:%s144] %v169
                %v171 = vld [vmem:[%s151 + $0x6c] sm:%s144]
                %172 = vst [vmem:[%s152 + $0x24] sm:%s144] %v171
                %v173 = vld [vmem:[%s151 + $0x78] sm:%s144]
                %174 = vst [vmem:[%s152 + $0x28] sm:%s144] %v173
                %v175 = vld [vmem:[%s151 + $0x84] sm:%s144]
                %176 = vst [vmem:[%s152 + $0x2c] sm:%s144] %v175
                %v177 = vld [vmem:[%s151 + $0x90] sm:%s144]
                %178 = vst [vmem:[%s152 + $0x30] sm:%s144] %v177
                %v179 = vld [vmem:[%s151 + $0x9c] sm:%s144]
                %180 = vst [vmem:[%s152 + $0x34] sm:%s144] %v179
                %v181 = vld [vmem:[%s151 + $0xa8] sm:%s144]
                %182 = vst [vmem:[%s152 + $0x38] sm:%s144] %v181
                %v183 = vld [vmem:[%s151 + $0xb4] sm:%s144]
                %184 = vst [vmem:[%s152 + $0x3c] sm:%s144] %v183
              $region41: #{_lambda_.10} parent=35 // loop_footer
                %s150 = sadd.s32 1, %s146
              $region42: #{_lambda_.10} parent=35 // loop_footer_branch
                %145 = sbr.rel target = $region38
              $region43: #{_lambda_.10} parent=35 // loop_exit
                _
            $region36: #{_lambda_.10} parent=27 // pred_fallthru
              _
          $region28: #{_lambda_.10} parent=23 // pred_fallthru
            _
          %237 = vnop
        $region24: #{_lambda_.10} parent=19 // pred_fallthru
          _
      $region20: #{_lambda_.10} parent=5 // pred_fallthru
        _
      %p238 = scmp.le.s32.totalorder 1, %s8
      %p239 = scmp.lt.s32.totalorder %s8, 4
      %p240 = pnand %p238, %p239
      %p241 = pneg %p240
      // Predicated region
      $region62: #{_lambda_.10} parent=5 // pred_check
        _
      $region63: #{_lambda_.10} parent=5 // pred_check_branch
        %243 = sbr.rel (%p240) target = $region65
      $region64: #{_lambda_.10} parent=5 // pred_region
        %s244 = ssub.s32 %s8, 1
        %s245 = sand.u32 %s59, 1
        %s246 = sand.u32 %s59, 1
        %s247 = smul.addr %s246, 64
        %s248 = scalar_lea.vmem [#allocation2], %s247
        // Predicated region
        $region66: #{_lambda_.10} parent=64 // pred_check
          %p249 = pneg %p72
        $region67: #{_lambda_.10} parent=64 // pred_check_branch
          %251 = sbr.rel (%p249) target = $region69
        $region68: #{_lambda_.10} parent=64 // pred_region
          _
        $region69: #{_lambda_.10} parent=64 // pred_fallthru
          _
        %s252 = smul.u32 16, %s17
        %p253 = scmp.lt.s32.totalorder %s252, 15
        %s254 = scalar_select %p253, %s252, 15
        %s255 = smul.addr %s254, 4
        %s256 = scalar_lea.vmem %s0, %s255
        %p257 = pneg %p46
        %p258 = pneg %p43
        %s259 = sand.u32 %s59, 1
        %s260 = sand.u32 %s59, 1
        %s261 = smul.addr %s260, 64
        %s262 = scalar_lea.vmem [#allocation2], %s261
        %p263 = pneg %p72
        %p264 = pneg %p69
        %p265 = pneg %p100
        %p266 = pneg %p97
        %s267 = sand.u32 %s87, 1
        %s268 = sand.u32 %s87, 1
        %s269 = smul.addr %s268, 64
        %s270 = scalar_lea.vmem [#allocation3], %s269
        %s271 = smul.u32 16, %s17
        %p272 = scmp.lt.s32.totalorder %s271, 15
        %s273 = scalar_select %p272, %s271, 15
        %s274 = smul.addr %s273, 4
        %s275 = scalar_lea.vmem %s0, %s274
        %s276 = smul.u32 16, %s17
        %s277 = smul.u32 16, %s17
        %v278 = vld [vmem:[%s275] sm:$0xf]
        %v279 = vld [vmem:[%s275 + $0x4] sm:$0xf]
        %v280 = vld [vmem:[%s275 + $0x8] sm:$0xf]
        %v281 = vld [vmem:[%s275 + $0xc] sm:$0xf]
        %v282 = vld [vmem:[%s275 + $0x10] sm:$0xf]
        %v283 = vld [vmem:[%s275 + $0x14] sm:$0xf]
        %v284 = vld [vmem:[%s275 + $0x18] sm:$0xf]
        %v285 = vld [vmem:[%s275 + $0x1c] sm:$0xf]
        %v286 = vld [vmem:[%s275 + $0x20] sm:$0xf]
        %v287 = vld [vmem:[%s275 + $0x24] sm:$0xf]
        %v288 = vld [vmem:[%s275 + $0x28] sm:$0xf]
        %v289 = vld [vmem:[%s275 + $0x2c] sm:$0xf]
        %v290 = vld [vmem:[%s275 + $0x30] sm:$0xf]
        %v291 = vld [vmem:[%s275 + $0x34] sm:$0xf]
        %v292 = vld [vmem:[%s275 + $0x38] sm:$0xf]
        %v293 = vld [vmem:[%s275 + $0x3c] sm:$0xf]
        %v294 = vld [vmem:[%s248] sm:$0xf]
        %v295 = vld [vmem:[%s248 + $0x4] sm:$0xf]
        %v296 = vld [vmem:[%s248 + $0x8] sm:$0xf]
        %v297 = vld [vmem:[%s248 + $0xc] sm:$0xf]
        %v298 = vld [vmem:[%s248 + $0x10] sm:$0xf]
        %v299 = vld [vmem:[%s248 + $0x14] sm:$0xf]
        %v300 = vld [vmem:[%s248 + $0x18] sm:$0xf]
        %v301 = vld [vmem:[%s248 + $0x1c] sm:$0xf]
        %v302 = vld [vmem:[%s248 + $0x20] sm:$0xf]
        %v303 = vld [vmem:[%s248 + $0x24] sm:$0xf]
        %v304 = vld [vmem:[%s248 + $0x28] sm:$0xf]
        %v305 = vld [vmem:[%s248 + $0x2c] sm:$0xf]
        %v306 = vld [vmem:[%s248 + $0x30] sm:$0xf]
        %v307 = vld [vmem:[%s248 + $0x34] sm:$0xf]
        %v308 = vld [vmem:[%s248 + $0x38] sm:$0xf]
        %v309 = vld [vmem:[%s248 + $0x3c] sm:$0xf]
        %v326 = vunpack.c.l.b16 %v278
        %v327 = vunpack.c.l.b16 %v279
        %v328 = vunpack.c.l.b16 %v280
        %v329 = vunpack.c.l.b16 %v281
        %v330 = vunpack.c.l.b16 %v282
        %v331 = vunpack.c.l.b16 %v283
        %v332 = vunpack.c.l.b16 %v284
        %v333 = vunpack.c.l.b16 %v285
        %v334 = vunpack.c.l.b16 %v286
        %v335 = vunpack.c.l.b16 %v287
        %v336 = vunpack.c.l.b16 %v288
        %v337 = vunpack.c.l.b16 %v289
        %v338 = vunpack.c.l.b16 %v290
        %v339 = vunpack.c.l.b16 %v291
        %v340 = vunpack.c.l.b16 %v292
        %v341 = vunpack.c.l.b16 %v293
        %v342 = vpack.c.b16 %v327, %v326
        %v343 = vpack.c.b16 %v329, %v328
        %v344 = vpack.c.b16 %v331, %v330
        %v345 = vpack.c.b16 %v333, %v332
        %v346 = vpack.c.b16 %v335, %v334
        %v347 = vpack.c.b16 %v337, %v336
        %v348 = vpack.c.b16 %v339, %v338
        %v349 = vpack.c.b16 %v341, %v340
        %v374 = vunpack.c.l.b16 %v294
        %v375 = vunpack.c.l.b16 %v295
        %v376 = vunpack.c.l.b16 %v296
        %v377 = vunpack.c.l.b16 %v297
        %v378 = vunpack.c.l.b16 %v298
        %v379 = vunpack.c.l.b16 %v299
        %v380 = vunpack.c.l.b16 %v300
        %v381 = vunpack.c.l.b16 %v301
        %v382 = vunpack.c.l.b16 %v302
        %v383 = vunpack.c.l.b16 %v303
        %v384 = vunpack.c.l.b16 %v304
        %v385 = vunpack.c.l.b16 %v305
        %v386 = vunpack.c.l.b16 %v306
        %v387 = vunpack.c.l.b16 %v307
        %v388 = vunpack.c.l.b16 %v308
        %v389 = vunpack.c.l.b16 %v309
        %v390 = vpack.c.b16 %v375, %v374
        %v391 = vpack.c.b16 %v377, %v376
        %v392 = vpack.c.b16 %v379, %v378
        %v393 = vpack.c.b16 %v381, %v380
        %v394 = vpack.c.b16 %v383, %v382
        %v395 = vpack.c.b16 %v385, %v384
        %v396 = vpack.c.b16 %v387, %v386
        %v397 = vpack.c.b16 %v389, %v388
        %406 = vmatpush.bf16.msra.mxu0 %v397
        %407 = vmatpush.bf16.msra.mxu0 %v396
        %408 = vmatpush.bf16.msra.mxu0 %v395
        %409 = vmatpush.bf16.msra.mxu0 %v394
        %410 = vmatpush.bf16.msra.mxu0 %v393
        %411 = vmatpush.bf16.msra.mxu0 %v392
        %412 = vmatpush.bf16.msra.mxu0 %v391
        %413 = vmatpush.bf16.msra.mxu0 %v390
        %414 = vmatmul.bf16.gmra.mxu0 %v342
        %v415 = vpop.f32.mrf.mxu0
        %v416 = vadd.f32 0.0, %v415
        %v417 = vpop.f32.mrf.mxu0
        %v418 = vadd.f32 0.0, %v417
        %419 = vmatmul.bf16.gmra.mxu0 %v343
        %v420 = vpop.f32.mrf.mxu0
        %v421 = vadd.f32 0.0, %v420
        %v422 = vpop.f32.mrf.mxu0
        %v423 = vadd.f32 0.0, %v422
        %424 = vmatmul.bf16.gmra.mxu0 %v344
        %v425 = vpop.f32.mrf.mxu0
        %v426 = vadd.f32 0.0, %v425
        %v427 = vpop.f32.mrf.mxu0
        %v428 = vadd.f32 0.0, %v427
        %429 = vmatmul.bf16.gmra.mxu0 %v345
        %v430 = vpop.f32.mrf.mxu0
        %v431 = vadd.f32 0.0, %v430
        %v432 = vpop.f32.mrf.mxu0
        %v433 = vadd.f32 0.0, %v432
        %434 = vmatmul.bf16.gmra.mxu0 %v346
        %v435 = vpop.f32.mrf.mxu0
        %v436 = vadd.f32 0.0, %v435
        %v437 = vpop.f32.mrf.mxu0
        %v438 = vadd.f32 0.0, %v437
        %439 = vmatmul.bf16.gmra.mxu0 %v347
        %v440 = vpop.f32.mrf.mxu0
        %v441 = vadd.f32 0.0, %v440
        %v442 = vpop.f32.mrf.mxu0
        %v443 = vadd.f32 0.0, %v442
        %444 = vmatmul.bf16.gmra.mxu0 %v348
        %v445 = vpop.f32.mrf.mxu0
        %v446 = vadd.f32 0.0, %v445
        %v447 = vpop.f32.mrf.mxu0
        %v448 = vadd.f32 0.0, %v447
        %449 = vmatmul.bf16.gmra.mxu0 %v349
        %v450 = vpop.f32.mrf.mxu0
        %v451 = vadd.f32 0.0, %v450
        %v452 = vpop.f32.mrf.mxu0
        %v453 = vadd.f32 0.0, %v452
        %454 = vdwg.mxu0
        %v455 = vpack.c.bf16 %v416, %v416
        %v456 = vpack.c.bf16 %v418, %v418
        %v457 = vpack.c.bf16 %v421, %v421
        %v458 = vpack.c.bf16 %v423, %v423
        %v459 = vpack.c.bf16 %v426, %v426
        %v460 = vpack.c.bf16 %v428, %v428
        %v461 = vpack.c.bf16 %v431, %v431
        %v462 = vpack.c.bf16 %v433, %v433
        %v463 = vpack.c.bf16 %v436, %v436
        %v464 = vpack.c.bf16 %v438, %v438
        %v465 = vpack.c.bf16 %v441, %v441
        %v466 = vpack.c.bf16 %v443, %v443
        %v467 = vpack.c.bf16 %v446, %v446
        %v468 = vpack.c.bf16 %v448, %v448
        %v469 = vpack.c.bf16 %v451, %v451
        %v470 = vpack.c.bf16 %v453, %v453
        %471 = vst [vmem:[%s270] sm:$0xf] %v455
        %472 = vst [vmem:[%s270 + $0x4] sm:$0xf] %v456
        %473 = vst [vmem:[%s270 + $0x8] sm:$0xf] %v457
        %474 = vst [vmem:[%s270 + $0xc] sm:$0xf] %v458
        %475 = vst [vmem:[%s270 + $0x10] sm:$0xf] %v459
        %476 = vst [vmem:[%s270 + $0x14] sm:$0xf] %v460
        %477 = vst [vmem:[%s270 + $0x18] sm:$0xf] %v461
        %478 = vst [vmem:[%s270 + $0x1c] sm:$0xf] %v462
        %479 = vst [vmem:[%s270 + $0x20] sm:$0xf] %v463
        %480 = vst [vmem:[%s270 + $0x24] sm:$0xf] %v464
        %481 = vst [vmem:[%s270 + $0x28] sm:$0xf] %v465
        %482 = vst [vmem:[%s270 + $0x2c] sm:$0xf] %v466
        %483 = vst [vmem:[%s270 + $0x30] sm:$0xf] %v467
        %484 = vst [vmem:[%s270 + $0x34] sm:$0xf] %v468
        %485 = vst [vmem:[%s270 + $0x38] sm:$0xf] %v469
        %486 = vst [vmem:[%s270 + $0x3c] sm:$0xf] %v470
        %s487 = sand.u32 %s87, 1
        %s488 = sand.u32 %s87, 1
        %s489 = smul.addr %s488, 64
        %s490 = scalar_lea.vmem [#allocation3], %s489
        // Predicated region
        $region70: #{_lambda_.10} parent=64 // pred_check
          %p491 = pneg %p97
        $region71: #{_lambda_.10} parent=64 // pred_check_branch
          %493 = sbr.rel (%p491) target = $region73
        $region72: #{_lambda_.10} parent=64 // pred_region
          %s494 = smul.u32 16, %s17
          %s495 = smul.addr %s494, 3
          %s496 = sadd.s32 %s18, %s495
          %s497 = smul.addr %s496, 4
          %s498 = scalar_lea.vmem %s2, %s497
          // Predicated region
          $region74: #{_lambda_.10} parent=72 // pred_check
            _
          $region75: #{_lambda_.10} parent=72 // pred_check_branch
            %500 = sbr.rel (0) target = $region77
          $region76: #{_lambda_.10} parent=72 // pred_region
            // Predicated region
            $region78: #{_lambda_.10} parent=76 // pred_check
              _
            $region79: #{_lambda_.10} parent=76 // pred_check_branch
              %502 = sbr.rel target = $region81
            $region80: #{_lambda_.10} parent=76 // pred_region
              // Predicated region
              $region93: #{_lambda_.10} parent=80 // pred_check
                _
              $region94: #{_lambda_.10} parent=80 // pred_check_branch
                %548 = sbr.rel (0) target = $region96
              $region95: #{_lambda_.10} parent=80 // pred_region
                loop: start=0, step=1, limit=1
                $region97: #{_lambda_.10} parent=95 // loop_pre_header
                  _
                $region98: #{_lambda_.10} parent=95 // loop_header
                  %s550 = sphi 0, %s554
                  %p551 = scmp.ge.s32.totalorder %s550, 1
                  %s555 = sphi %s490, %s490
                  %s556 = sphi %s498, %s498
                $region99: #{_lambda_.10} parent=95 // loop_header_branch
                  %553 = sbr.rel (%p551) target = $region103
                $region100: #{_lambda_.10} parent=95 // loop_body
                  _
                $region101: #{_lambda_.10} parent=95 // loop_footer
                  %s554 = sadd.s32 1, %s550
                $region102: #{_lambda_.10} parent=95 // loop_footer_branch
                  %549 = sbr.rel target = $region98
                $region103: #{_lambda_.10} parent=95 // loop_exit
                  _
                %s558 = ssub.s32 16, 1
                loop: start=0, step=1, limit=1
                $region104: #{_lambda_.10} parent=95 // loop_pre_header
                  _
                $region105: #{_lambda_.10} parent=95 // loop_header
                  %s560 = sphi 0, %s564
                  %p561 = scmp.ge.s32.totalorder %s560, 1
                  %s565 = sphi %s490, %s490
                  %s566 = sphi %s498, %s498
                $region106: #{_lambda_.10} parent=95 // loop_header_branch
                  %563 = sbr.rel (%p561) target = $region110
                $region107: #{_lambda_.10} parent=95 // loop_body
                  %v567 = vld [vmem:[%s565] sm:%s558]
                  %568 = vst [vmem:[%s566] sm:%s558] %v567
                  %v569 = vld [vmem:[%s565 + $0x4] sm:%s558]
                  %570 = vst [vmem:[%s566 + $0xc] sm:%s558] %v569
                  %v571 = vld [vmem:[%s565 + $0x8] sm:%s558]
                  %572 = vst [vmem:[%s566 + $0x18] sm:%s558] %v571
                  %v573 = vld [vmem:[%s565 + $0xc] sm:%s558]
                  %574 = vst [vmem:[%s566 + $0x24] sm:%s558] %v573
                  %v575 = vld [vmem:[%s565 + $0x10] sm:%s558]
                  %576 = vst [vmem:[%s566 + $0x30] sm:%s558] %v575
                  %v577 = vld [vmem:[%s565 + $0x14] sm:%s558]
                  %578 = vst [vmem:[%s566 + $0x3c] sm:%s558] %v577
                  %v579 = vld [vmem:[%s565 + $0x18] sm:%s558]
                  %580 = vst [vmem:[%s566 + $0x48] sm:%s558] %v579
                  %v581 = vld [vmem:[%s565 + $0x1c] sm:%s558]
                  %582 = vst [vmem:[%s566 + $0x54] sm:%s558] %v581
                  %v583 = vld [vmem:[%s565 + $0x20] sm:%s558]
                  %584 = vst [vmem:[%s566 + $0x60] sm:%s558] %v583
                  %v585 = vld [vmem:[%s565 + $0x24] sm:%s558]
                  %586 = vst [vmem:[%s566 + $0x6c] sm:%s558] %v585
                  %v587 = vld [vmem:[%s565 + $0x28] sm:%s558]
                  %588 = vst [vmem:[%s566 + $0x78] sm:%s558] %v587
                  %v589 = vld [vmem:[%s565 + $0x2c] sm:%s558]
                  %590 = vst [vmem:[%s566 + $0x84] sm:%s558] %v589
                  %v591 = vld [vmem:[%s565 + $0x30] sm:%s558]
                  %592 = vst [vmem:[%s566 + $0x90] sm:%s558] %v591
                  %v593 = vld [vmem:[%s565 + $0x34] sm:%s558]
                  %594 = vst [vmem:[%s566 + $0x9c] sm:%s558] %v593
                  %v595 = vld [vmem:[%s565 + $0x38] sm:%s558]
                  %596 = vst [vmem:[%s566 + $0xa8] sm:%s558] %v595
                  %v597 = vld [vmem:[%s565 + $0x3c] sm:%s558]
                  %598 = vst [vmem:[%s566 + $0xb4] sm:%s558] %v597
                $region108: #{_lambda_.10} parent=95 // loop_footer
                  %s564 = sadd.s32 1, %s560
                $region109: #{_lambda_.10} parent=95 // loop_footer_branch
                  %559 = sbr.rel target = $region105
                $region110: #{_lambda_.10} parent=95 // loop_exit
                  _
              $region96: #{_lambda_.10} parent=80 // pred_fallthru
                _
            $region81: #{_lambda_.10} parent=76 // pred_fallthru
              _
            // Predicated region
            $region82: #{_lambda_.10} parent=76 // pred_check
              _
            $region83: #{_lambda_.10} parent=76 // pred_check_branch
              %504 = sbr.rel (0) target = $region85
            $region84: #{_lambda_.10} parent=76 // pred_region
              %s506 = ssub.s32 16, 1
              loop: start=0, step=1, limit=1
              $region86: #{_lambda_.10} parent=84 // loop_pre_header
                _
              $region87: #{_lambda_.10} parent=84 // loop_header
                %s508 = sphi 0, %s512
                %p509 = scmp.ge.s32.totalorder %s508, 1
                %s513 = sphi %s490, %s490
                %s514 = sphi %s498, %s498
              $region88: #{_lambda_.10} parent=84 // loop_header_branch
                %511 = sbr.rel (%p509) target = $region92
              $region89: #{_lambda_.10} parent=84 // loop_body
                %v515 = vld [vmem:[%s513] sm:%s506]
                %516 = vst [vmem:[%s514] sm:%s506] %v515
                %v517 = vld [vmem:[%s513 + $0x4] sm:%s506]
                %518 = vst [vmem:[%s514 + $0xc] sm:%s506] %v517
                %v519 = vld [vmem:[%s513 + $0x8] sm:%s506]
                %520 = vst [vmem:[%s514 + $0x18] sm:%s506] %v519
                %v521 = vld [vmem:[%s513 + $0xc] sm:%s506]
                %522 = vst [vmem:[%s514 + $0x24] sm:%s506] %v521
                %v523 = vld [vmem:[%s513 + $0x10] sm:%s506]
                %524 = vst [vmem:[%s514 + $0x30] sm:%s506] %v523
                %v525 = vld [vmem:[%s513 + $0x14] sm:%s506]
                %526 = vst [vmem:[%s514 + $0x3c] sm:%s506] %v525
                %v527 = vld [vmem:[%s513 + $0x18] sm:%s506]
                %528 = vst [vmem:[%s514 + $0x48] sm:%s506] %v527
                %v529 = vld [vmem:[%s513 + $0x1c] sm:%s506]
                %530 = vst [vmem:[%s514 + $0x54] sm:%s506] %v529
                %v531 = vld [vmem:[%s513 + $0x20] sm:%s506]
                %532 = vst [vmem:[%s514 + $0x60] sm:%s506] %v531
                %v533 = vld [vmem:[%s513 + $0x24] sm:%s506]
                %534 = vst [vmem:[%s514 + $0x6c] sm:%s506] %v533
                %v535 = vld [vmem:[%s513 + $0x28] sm:%s506]
                %536 = vst [vmem:[%s514 + $0x78] sm:%s506] %v535
                %v537 = vld [vmem:[%s513 + $0x2c] sm:%s506]
                %538 = vst [vmem:[%s514 + $0x84] sm:%s506] %v537
                %v539 = vld [vmem:[%s513 + $0x30] sm:%s506]
                %540 = vst [vmem:[%s514 + $0x90] sm:%s506] %v539
                %v541 = vld [vmem:[%s513 + $0x34] sm:%s506]
                %542 = vst [vmem:[%s514 + $0x9c] sm:%s506] %v541
                %v543 = vld [vmem:[%s513 + $0x38] sm:%s506]
                %544 = vst [vmem:[%s514 + $0xa8] sm:%s506] %v543
                %v545 = vld [vmem:[%s513 + $0x3c] sm:%s506]
                %546 = vst [vmem:[%s514 + $0xb4] sm:%s506] %v545
              $region90: #{_lambda_.10} parent=84 // loop_footer
                %s512 = sadd.s32 1, %s508
              $region91: #{_lambda_.10} parent=84 // loop_footer_branch
                %507 = sbr.rel target = $region87
              $region92: #{_lambda_.10} parent=84 // loop_exit
                _
            $region85: #{_lambda_.10} parent=76 // pred_fallthru
              _
          $region77: #{_lambda_.10} parent=72 // pred_fallthru
            _
          %599 = vnop
        $region73: #{_lambda_.10} parent=64 // pred_fallthru
          _
      $region65: #{_lambda_.10} parent=5 // pred_fallthru
        _
      %p600 = scmp.le.s32.totalorder 2, %s8
      // Predicated region
      $region111: #{_lambda_.10} parent=5 // pred_check
        %p601 = pneg %p600
      $region112: #{_lambda_.10} parent=5 // pred_check_branch
        %603 = sbr.rel (%p601) target = $region114
      $region113: #{_lambda_.10} parent=5 // pred_region
        %s604 = ssub.s32 %s8, 2
        // Predicated region
        $region115: #{_lambda_.10} parent=113 // pred_check
          %p605 = pneg %p103
        $region116: #{_lambda_.10} parent=113 // pred_check_branch
          %607 = sbr.rel (%p605) target = $region118
        $region117: #{_lambda_.10} parent=113 // pred_region
          %s608 = sand.u32 %s88, 1
          %s609 = sand.u32 %s88, 1
          %s610 = smul.addr %s609, 64
          %s611 = scalar_lea.vmem [#allocation3], %s610
        $region118: #{_lambda_.10} parent=113 // pred_fallthru
          _
      $region114: #{_lambda_.10} parent=5 // pred_fallthru
        _
    $region6: #{_lambda_.10} parent=1 // loop_footer
      %s12 = sadd.s32 1, %s8
    $region7: #{_lambda_.10} parent=1 // loop_footer_branch
      %7 = sbr.rel target = $region3
    $region8: #{_lambda_.10} parent=1 // loop_exit
      _

// kernel: _lambda_.11
$region0: #{_lambda_.11}
  #allocation0 [shape = 'u32[]', space=smem, size = 0x4, offset = 0x4, fixed_abs, tag = 'smem constant byte address 0x4 - core index']
  #allocation1 [shape = 'u32[72,128]{1,0:T(1,128)}', space=vmem, size = 0x9000, scoped, tag = 'internal scratch']
  %s0 = inlined_call_operand.vmem [shape: bf16[128,128], index: 0, kind: input, shape index: {}]
  %s1 = inlined_call_operand.hbm [shape: bf16[128,128], index: 1, kind: input, shape index: {}]
  %s2 = inlined_call_operand.vmem [shape: bf16[128,128], index: 2, kind: output, shape index: {}]
  %s3 = sld [smem:[#allocation0]]
  $region22: #{_lambda_.11} parent=0
    _
  %s5 = ssub.s32 1, %s3
  %s6 = scalar_select 0, %s5, %s3
  $region1: #{_lambda_.11} parent=0
    #allocation2 [shape = 'u8[32768]{0}', space=vmem, size = 0x8000, scoped, tag = 'input window, operand 1, single buffered']
    #allocation3 [shape = 's32[1]{0}', space=sflag, size = 0x4, scoped, tag = 'scoped memory for _lambda_.11']
    %7 = vsyncpa [#allocation3], 0
    // Predicated region
    $region2: #{_lambda_.11} parent=1 // pred_check
      _
    $region3: #{_lambda_.11} parent=1 // pred_check_branch
      %9 = sbr.rel (0) target = $region5
    $region4: #{_lambda_.11} parent=1 // pred_region
      _
    $region5: #{_lambda_.11} parent=1 // pred_fallthru
      _
    // Predicated region
    $region6: #{_lambda_.11} parent=1 // pred_check
      _
    $region7: #{_lambda_.11} parent=1 // pred_check_branch
      %11 = sbr.rel (0) target = $region9
    $region8: #{_lambda_.11} parent=1 // pred_region
      %13 = vsyncadd [#allocation3], 0
      %s14 = sshll.u32 %s1, 4
      %s15 = int_to_ptr.hbm [resolvable:$true] %s14
      %s16 = sshll.u32 [#allocation2], 4
      %s17 = int_to_ptr.vmem [resolvable:$true] %s16
      %22 = dma.hbm_to_vmem [thread:$0]  %s15, 1024, %s17, [#allocation3], 64, 64, 4
    $region9: #{_lambda_.11} parent=1 // pred_fallthru
      _
    // Predicated region
    $region10: #{_lambda_.11} parent=1 // pred_check
      _
    $region11: #{_lambda_.11} parent=1 // pred_check_branch
      %24 = sbr.rel (0) target = $region13
    $region12: #{_lambda_.11} parent=1 // pred_region
      %26 = dma.done [#allocation3], 1024
    $region13: #{_lambda_.11} parent=1 // pred_fallthru
      _
    %v27 = vld [vmem:[%s0] sm:$0xf]
    %v28 = vld [vmem:[%s0 + $0x4] sm:$0xf]
    %v29 = vld [vmem:[%s0 + $0x8] sm:$0xf]
    %v30 = vld [vmem:[%s0 + $0xc] sm:$0xf]
    %v31 = vld [vmem:[%s0 + $0x10] sm:$0xf]
    %v32 = vld [vmem:[%s0 + $0x14] sm:$0xf]
    %v33 = vld [vmem:[%s0 + $0x18] sm:$0xf]
    %v34 = vld [vmem:[%s0 + $0x1c] sm:$0xf]
    %v35 = vld [vmem:[%s0 + $0x20] sm:$0xf]
    %v36 = vld [vmem:[%s0 + $0x24] sm:$0xf]
    %v37 = vld [vmem:[%s0 + $0x28] sm:$0xf]
    %v38 = vld [vmem:[%s0 + $0x2c] sm:$0xf]
    %v39 = vld [vmem:[%s0 + $0x30] sm:$0xf]
    %v40 = vld [vmem:[%s0 + $0x34] sm:$0xf]
    %v41 = vld [vmem:[%s0 + $0x38] sm:$0xf]
    %v42 = vld [vmem:[%s0 + $0x3c] sm:$0xf]
    %v43 = vld [vmem:[#allocation2] sm:$0xf]
    %v44 = vld [vmem:[#allocation2 + $0x4] sm:$0xf]
    %v45 = vld [vmem:[#allocation2 + $0x8] sm:$0xf]
    %v46 = vld [vmem:[#allocation2 + $0xc] sm:$0xf]
    %v47 = vld [vmem:[#allocation2 + $0x10] sm:$0xf]
    %v48 = vld [vmem:[#allocation2 + $0x14] sm:$0xf]
    %v49 = vld [vmem:[#allocation2 + $0x18] sm:$0xf]
    %v50 = vld [vmem:[#allocation2 + $0x1c] sm:$0xf]
    %v51 = vld [vmem:[#allocation2 + $0x20] sm:$0xf]
    %v52 = vld [vmem:[#allocation2 + $0x24] sm:$0xf]
    %v53 = vld [vmem:[#allocation2 + $0x28] sm:$0xf]
    %v54 = vld [vmem:[#allocation2 + $0x2c] sm:$0xf]
    %v55 = vld [vmem:[#allocation2 + $0x30] sm:$0xf]
    %v56 = vld [vmem:[#allocation2 + $0x34] sm:$0xf]
    %v57 = vld [vmem:[#allocation2 + $0x38] sm:$0xf]
    %v58 = vld [vmem:[#allocation2 + $0x3c] sm:$0xf]
    %v75 = vunpack.c.l.b16 %v27
    %v76 = vunpack.c.l.b16 %v28
    %v77 = vunpack.c.l.b16 %v29
    %v78 = vunpack.c.l.b16 %v30
    %v79 = vunpack.c.l.b16 %v31
    %v80 = vunpack.c.l.b16 %v32
    %v81 = vunpack.c.l.b16 %v33
    %v82 = vunpack.c.l.b16 %v34
    %v83 = vunpack.c.l.b16 %v35
    %v84 = vunpack.c.l.b16 %v36
    %v85 = vunpack.c.l.b16 %v37
    %v86 = vunpack.c.l.b16 %v38
    %v87 = vunpack.c.l.b16 %v39
    %v88 = vunpack.c.l.b16 %v40
    %v89 = vunpack.c.l.b16 %v41
    %v90 = vunpack.c.l.b16 %v42
    %v91 = vpack.c.b16 %v76, %v75
    %v92 = vpack.c.b16 %v78, %v77
    %v93 = vpack.c.b16 %v80, %v79
    %v94 = vpack.c.b16 %v82, %v81
    %v95 = vpack.c.b16 %v84, %v83
    %v96 = vpack.c.b16 %v86, %v85
    %v97 = vpack.c.b16 %v88, %v87
    %v98 = vpack.c.b16 %v90, %v89
    %v123 = vunpack.c.l.b16 %v43
    %v124 = vunpack.c.l.b16 %v44
    %v125 = vunpack.c.l.b16 %v45
    %v126 = vunpack.c.l.b16 %v46
    %v127 = vunpack.c.l.b16 %v47
    %v128 = vunpack.c.l.b16 %v48
    %v129 = vunpack.c.l.b16 %v49
    %v130 = vunpack.c.l.b16 %v50
    %v131 = vunpack.c.l.b16 %v51
    %v132 = vunpack.c.l.b16 %v52
    %v133 = vunpack.c.l.b16 %v53
    %v134 = vunpack.c.l.b16 %v54
    %v135 = vunpack.c.l.b16 %v55
    %v136 = vunpack.c.l.b16 %v56
    %v137 = vunpack.c.l.b16 %v57
    %v138 = vunpack.c.l.b16 %v58
    %v139 = vpack.c.b16 %v124, %v123
    %v140 = vpack.c.b16 %v126, %v125
    %v141 = vpack.c.b16 %v128, %v127
    %v142 = vpack.c.b16 %v130, %v129
    %v143 = vpack.c.b16 %v132, %v131
    %v144 = vpack.c.b16 %v134, %v133
    %v145 = vpack.c.b16 %v136, %v135
    %v146 = vpack.c.b16 %v138, %v137
    %155 = vmatpush.bf16.msra.mxu0 %v146
    %156 = vmatpush.bf16.msra.mxu0 %v145
    %157 = vmatpush.bf16.msra.mxu0 %v144
    %158 = vmatpush.bf16.msra.mxu0 %v143
    %159 = vmatpush.bf16.msra.mxu0 %v142
    %160 = vmatpush.bf16.msra.mxu0 %v141
    %161 = vmatpush.bf16.msra.mxu0 %v140
    %162 = vmatpush.bf16.msra.mxu0 %v139
    %163 = vmatmul.bf16.gmra.mxu0 %v91
    %v164 = vpop.f32.mrf.mxu0
    %v165 = vadd.f32 0.0, %v164
    %v166 = vpop.f32.mrf.mxu0
    %v167 = vadd.f32 0.0, %v166
    %168 = vmatmul.bf16.gmra.mxu0 %v92
    %v169 = vpop.f32.mrf.mxu0
    %v170 = vadd.f32 0.0, %v169
    %v171 = vpop.f32.mrf.mxu0
    %v172 = vadd.f32 0.0, %v171
    %173 = vmatmul.bf16.gmra.mxu0 %v93
    %v174 = vpop.f32.mrf.mxu0
    %v175 = vadd.f32 0.0, %v174
    %v176 = vpop.f32.mrf.mxu0
    %v177 = vadd.f32 0.0, %v176
    %178 = vmatmul.bf16.gmra.mxu0 %v94
    %v179 = vpop.f32.mrf.mxu0
    %v180 = vadd.f32 0.0, %v179
    %v181 = vpop.f32.mrf.mxu0
    %v182 = vadd.f32 0.0, %v181
    %183 = vmatmul.bf16.gmra.mxu0 %v95
    %v184 = vpop.f32.mrf.mxu0
    %v185 = vadd.f32 0.0, %v184
    %v186 = vpop.f32.mrf.mxu0
    %v187 = vadd.f32 0.0, %v186
    %188 = vmatmul.bf16.gmra.mxu0 %v96
    %v189 = vpop.f32.mrf.mxu0
    %v190 = vadd.f32 0.0, %v189
    %v191 = vpop.f32.mrf.mxu0
    %v192 = vadd.f32 0.0, %v191
    %193 = vmatmul.bf16.gmra.mxu0 %v97
    %v194 = vpop.f32.mrf.mxu0
    %v195 = vadd.f32 0.0, %v194
    %v196 = vpop.f32.mrf.mxu0
    %v197 = vadd.f32 0.0, %v196
    %198 = vmatmul.bf16.gmra.mxu0 %v98
    %v199 = vpop.f32.mrf.mxu0
    %v200 = vadd.f32 0.0, %v199
    %v201 = vpop.f32.mrf.mxu0
    %v202 = vadd.f32 0.0, %v201
    %203 = vdwg.mxu0
    %v204 = vpack.c.bf16 %v165, %v165
    %v205 = vpack.c.bf16 %v167, %v167
    %v206 = vpack.c.bf16 %v170, %v170
    %v207 = vpack.c.bf16 %v172, %v172
    %v208 = vpack.c.bf16 %v175, %v175
    %v209 = vpack.c.bf16 %v177, %v177
    %v210 = vpack.c.bf16 %v180, %v180
    %v211 = vpack.c.bf16 %v182, %v182
    %v212 = vpack.c.bf16 %v185, %v185
    %v213 = vpack.c.bf16 %v187, %v187
    %v214 = vpack.c.bf16 %v190, %v190
    %v215 = vpack.c.bf16 %v192, %v192
    %v216 = vpack.c.bf16 %v195, %v195
    %v217 = vpack.c.bf16 %v197, %v197
    %v218 = vpack.c.bf16 %v200, %v200
    %v219 = vpack.c.bf16 %v202, %v202
    %220 = vst [vmem:[%s2] sm:$0xf] %v204
    %221 = vst [vmem:[%s2 + $0x4] sm:$0xf] %v205
    %222 = vst [vmem:[%s2 + $0x8] sm:$0xf] %v206
    %223 = vst [vmem:[%s2 + $0xc] sm:$0xf] %v207
    %224 = vst [vmem:[%s2 + $0x10] sm:$0xf] %v208
    %225 = vst [vmem:[%s2 + $0x14] sm:$0xf] %v209
    %226 = vst [vmem:[%s2 + $0x18] sm:$0xf] %v210
    %227 = vst [vmem:[%s2 + $0x1c] sm:$0xf] %v211
    %228 = vst [vmem:[%s2 + $0x20] sm:$0xf] %v212
    %229 = vst [vmem:[%s2 + $0x24] sm:$0xf] %v213
    %230 = vst [vmem:[%s2 + $0x28] sm:$0xf] %v214
    %231 = vst [vmem:[%s2 + $0x2c] sm:$0xf] %v215
    %232 = vst [vmem:[%s2 + $0x30] sm:$0xf] %v216
    %233 = vst [vmem:[%s2 + $0x34] sm:$0xf] %v217
    %234 = vst [vmem:[%s2 + $0x38] sm:$0xf] %v218
    %235 = vst [vmem:[%s2 + $0x3c] sm:$0xf] %v219
    // Predicated region
    $region14: #{_lambda_.11} parent=1 // pred_check
      _
    $region15: #{_lambda_.11} parent=1 // pred_check_branch
      %237 = sbr.rel (0) target = $region17
    $region16: #{_lambda_.11} parent=1 // pred_region
      _
    $region17: #{_lambda_.11} parent=1 // pred_fallthru
      _
    // Predicated region
    $region18: #{_lambda_.11} parent=1 // pred_check
      _
    $region19: #{_lambda_.11} parent=1 // pred_check_branch
      %239 = sbr.rel (0) target = $region21
    $region20: #{_lambda_.11} parent=1 // pred_region
      _
    $region21: #{_lambda_.11} parent=1 // pred_fallthru
      _
    %240 = vsyncpa [#allocation3], 1

// kernel: _lambda_.13
$region0: #{_lambda_.13}
  #allocation0 [shape = 'u32[]', space=smem, size = 0x4, offset = 0x4, fixed_abs, tag = 'smem constant byte address 0x4 - core index']
  #allocation1 [shape = 'u32[72,128]{1,0:T(1,128)}', space=vmem, size = 0x9000, scoped, tag = 'internal scratch']
  %s0 = inlined_call_operand.vmem [shape: bf16[128,128], index: 0, kind: input, shape index: {}]
  %s1 = inlined_call_operand.hbm [shape: bf16[128,128], index: 1, kind: input, shape index: {}]
  %s2 = inlined_call_operand.vmem [shape: bf16[128,128], index: 2, kind: input, shape index: {}]
  %s3 = inlined_call_operand.vmem [shape: f32[1,128], index: 3, kind: input, shape index: {}]
  %s4 = inlined_call_operand.vmem [shape: f32[1,128], index: 4, kind: input, shape index: {}]
  %s5 = inlined_call_operand.vmem [shape: bf16[128,128], index: 5, kind: output, shape index: {}]
  %s6 = sld [smem:[#allocation0]]
  $region34: #{_lambda_.13} parent=0
    _
  %s8 = ssub.s32 1, %s6
  %s9 = scalar_select 0, %s8, %s6
  $region1: #{_lambda_.13} parent=0
    #allocation2 [shape = 'u8[32768]{0}', space=vmem, size = 0x8000, scoped, tag = 'input window, operand 1, single buffered']
    #allocation3 [shape = 's32[1]{0}', space=sflag, size = 0x4, scoped, tag = 'scoped memory for _lambda_.13']
    %10 = vsyncpa [#allocation3], 0
    // Predicated region
    $region2: #{_lambda_.13} parent=1 // pred_check
      _
    $region3: #{_lambda_.13} parent=1 // pred_check_branch
      %12 = sbr.rel (0) target = $region5
    $region4: #{_lambda_.13} parent=1 // pred_region
      _
    $region5: #{_lambda_.13} parent=1 // pred_fallthru
      _
    // Predicated region
    $region6: #{_lambda_.13} parent=1 // pred_check
      _
    $region7: #{_lambda_.13} parent=1 // pred_check_branch
      %14 = sbr.rel (0) target = $region9
    $region8: #{_lambda_.13} parent=1 // pred_region
      %16 = vsyncadd [#allocation3], 0
      %s17 = sshll.u32 %s1, 4
      %s18 = int_to_ptr.hbm [resolvable:$true] %s17
      %s19 = sshll.u32 [#allocation2], 4
      %s20 = int_to_ptr.vmem [resolvable:$true] %s19
      %25 = dma.hbm_to_vmem [thread:$0]  %s18, 1024, %s20, [#allocation3], 64, 64, 4
    $region9: #{_lambda_.13} parent=1 // pred_fallthru
      _
    // Predicated region
    $region10: #{_lambda_.13} parent=1 // pred_check
      _
    $region11: #{_lambda_.13} parent=1 // pred_check_branch
      %27 = sbr.rel (0) target = $region13
    $region12: #{_lambda_.13} parent=1 // pred_region
      _
    $region13: #{_lambda_.13} parent=1 // pred_fallthru
      _
    // Predicated region
    $region14: #{_lambda_.13} parent=1 // pred_check
      _
    $region15: #{_lambda_.13} parent=1 // pred_check_branch
      %29 = sbr.rel (0) target = $region17
    $region16: #{_lambda_.13} parent=1 // pred_region
      _
    $region17: #{_lambda_.13} parent=1 // pred_fallthru
      _
    // Predicated region
    $region18: #{_lambda_.13} parent=1 // pred_check
      _
    $region19: #{_lambda_.13} parent=1 // pred_check_branch
      %31 = sbr.rel (0) target = $region21
    $region20: #{_lambda_.13} parent=1 // pred_region
      _
    $region21: #{_lambda_.13} parent=1 // pred_fallthru
      _
    // Predicated region
    $region22: #{_lambda_.13} parent=1 // pred_check
      _
    $region23: #{_lambda_.13} parent=1 // pred_check_branch
      %33 = sbr.rel (0) target = $region25
    $region24: #{_lambda_.13} parent=1 // pred_region
      %35 = dma.done [#allocation3], 1024
    $region25: #{_lambda_.13} parent=1 // pred_fallthru
      _
    %v36 = vld [vmem:[%s0] sm:$0xf]
    %v37 = vld [vmem:[%s0 + $0x4] sm:$0xf]
    %v38 = vld [vmem:[%s0 + $0x8] sm:$0xf]
    %v39 = vld [vmem:[%s0 + $0xc] sm:$0xf]
    %v40 = vld [vmem:[%s0 + $0x10] sm:$0xf]
    %v41 = vld [vmem:[%s0 + $0x14] sm:$0xf]
    %v42 = vld [vmem:[%s0 + $0x18] sm:$0xf]
    %v43 = vld [vmem:[%s0 + $0x1c] sm:$0xf]
    %v44 = vld [vmem:[%s0 + $0x20] sm:$0xf]
    %v45 = vld [vmem:[%s0 + $0x24] sm:$0xf]
    %v46 = vld [vmem:[%s0 + $0x28] sm:$0xf]
    %v47 = vld [vmem:[%s0 + $0x2c] sm:$0xf]
    %v48 = vld [vmem:[%s0 + $0x30] sm:$0xf]
    %v49 = vld [vmem:[%s0 + $0x34] sm:$0xf]
    %v50 = vld [vmem:[%s0 + $0x38] sm:$0xf]
    %v51 = vld [vmem:[%s0 + $0x3c] sm:$0xf]
    %v52 = vld [vmem:[#allocation2] sm:$0xf]
    %v53 = vld [vmem:[#allocation2 + $0x4] sm:$0xf]
    %v54 = vld [vmem:[#allocation2 + $0x8] sm:$0xf]
    %v55 = vld [vmem:[#allocation2 + $0xc] sm:$0xf]
    %v56 = vld [vmem:[#allocation2 + $0x10] sm:$0xf]
    %v57 = vld [vmem:[#allocation2 + $0x14] sm:$0xf]
    %v58 = vld [vmem:[#allocation2 + $0x18] sm:$0xf]
    %v59 = vld [vmem:[#allocation2 + $0x1c] sm:$0xf]
    %v60 = vld [vmem:[#allocation2 + $0x20] sm:$0xf]
    %v61 = vld [vmem:[#allocation2 + $0x24] sm:$0xf]
    %v62 = vld [vmem:[#allocation2 + $0x28] sm:$0xf]
    %v63 = vld [vmem:[#allocation2 + $0x2c] sm:$0xf]
    %v64 = vld [vmem:[#allocation2 + $0x30] sm:$0xf]
    %v65 = vld [vmem:[#allocation2 + $0x34] sm:$0xf]
    %v66 = vld [vmem:[#allocation2 + $0x38] sm:$0xf]
    %v67 = vld [vmem:[#allocation2 + $0x3c] sm:$0xf]
    %v68 = vld [vmem:[%s2] sm:$0xf]
    %v69 = vld [vmem:[%s2 + $0x4] sm:$0xf]
    %v70 = vld [vmem:[%s2 + $0x8] sm:$0xf]
    %v71 = vld [vmem:[%s2 + $0xc] sm:$0xf]
    %v72 = vld [vmem:[%s2 + $0x10] sm:$0xf]
    %v73 = vld [vmem:[%s2 + $0x14] sm:$0xf]
    %v74 = vld [vmem:[%s2 + $0x18] sm:$0xf]
    %v75 = vld [vmem:[%s2 + $0x1c] sm:$0xf]
    %v76 = vld [vmem:[%s2 + $0x20] sm:$0xf]
    %v77 = vld [vmem:[%s2 + $0x24] sm:$0xf]
    %v78 = vld [vmem:[%s2 + $0x28] sm:$0xf]
    %v79 = vld [vmem:[%s2 + $0x2c] sm:$0xf]
    %v80 = vld [vmem:[%s2 + $0x30] sm:$0xf]
    %v81 = vld [vmem:[%s2 + $0x34] sm:$0xf]
    %v82 = vld [vmem:[%s2 + $0x38] sm:$0xf]
    %v83 = vld [vmem:[%s2 + $0x3c] sm:$0xf]
    %v84 = vunpack.c.l.bf16 %v68
    %v85 = vunpack.c.l.bf16 %v69
    %v86 = vunpack.c.l.bf16 %v70
    %v87 = vunpack.c.l.bf16 %v71
    %v88 = vunpack.c.l.bf16 %v72
    %v89 = vunpack.c.l.bf16 %v73
    %v90 = vunpack.c.l.bf16 %v74
    %v91 = vunpack.c.l.bf16 %v75
    %v92 = vunpack.c.l.bf16 %v76
    %v93 = vunpack.c.l.bf16 %v77
    %v94 = vunpack.c.l.bf16 %v78
    %v95 = vunpack.c.l.bf16 %v79
    %v96 = vunpack.c.l.bf16 %v80
    %v97 = vunpack.c.l.bf16 %v81
    %v98 = vunpack.c.l.bf16 %v82
    %v99 = vunpack.c.l.bf16 %v83
    %v116 = vunpack.c.l.b16 %v36
    %v117 = vunpack.c.l.b16 %v37
    %v118 = vunpack.c.l.b16 %v38
    %v119 = vunpack.c.l.b16 %v39
    %v120 = vunpack.c.l.b16 %v40
    %v121 = vunpack.c.l.b16 %v41
    %v122 = vunpack.c.l.b16 %v42
    %v123 = vunpack.c.l.b16 %v43
    %v124 = vunpack.c.l.b16 %v44
    %v125 = vunpack.c.l.b16 %v45
    %v126 = vunpack.c.l.b16 %v46
    %v127 = vunpack.c.l.b16 %v47
    %v128 = vunpack.c.l.b16 %v48
    %v129 = vunpack.c.l.b16 %v49
    %v130 = vunpack.c.l.b16 %v50
    %v131 = vunpack.c.l.b16 %v51
    %v132 = vpack.c.b16 %v117, %v116
    %v133 = vpack.c.b16 %v119, %v118
    %v134 = vpack.c.b16 %v121, %v120
    %v135 = vpack.c.b16 %v123, %v122
    %v136 = vpack.c.b16 %v125, %v124
    %v137 = vpack.c.b16 %v127, %v126
    %v138 = vpack.c.b16 %v129, %v128
    %v139 = vpack.c.b16 %v131, %v130
    %v164 = vunpack.c.l.b16 %v52
    %v165 = vunpack.c.l.b16 %v53
    %v166 = vunpack.c.l.b16 %v54
    %v167 = vunpack.c.l.b16 %v55
    %v168 = vunpack.c.l.b16 %v56
    %v169 = vunpack.c.l.b16 %v57
    %v170 = vunpack.c.l.b16 %v58
    %v171 = vunpack.c.l.b16 %v59
    %v172 = vunpack.c.l.b16 %v60
    %v173 = vunpack.c.l.b16 %v61
    %v174 = vunpack.c.l.b16 %v62
    %v175 = vunpack.c.l.b16 %v63
    %v176 = vunpack.c.l.b16 %v64
    %v177 = vunpack.c.l.b16 %v65
    %v178 = vunpack.c.l.b16 %v66
    %v179 = vunpack.c.l.b16 %v67
    %v180 = vpack.c.b16 %v165, %v164
    %v181 = vpack.c.b16 %v167, %v166
    %v182 = vpack.c.b16 %v169, %v168
    %v183 = vpack.c.b16 %v171, %v170
    %v184 = vpack.c.b16 %v173, %v172
    %v185 = vpack.c.b16 %v175, %v174
    %v186 = vpack.c.b16 %v177, %v176
    %v187 = vpack.c.b16 %v179, %v178
    %196 = vmatpush.bf16.msra.mxu0 %v187
    %197 = vmatpush.bf16.msra.mxu0 %v186
    %198 = vmatpush.bf16.msra.mxu0 %v185
    %199 = vmatpush.bf16.msra.mxu0 %v184
    %200 = vmatpush.bf16.msra.mxu0 %v183
    %201 = vmatpush.bf16.msra.mxu0 %v182
    %202 = vmatpush.bf16.msra.mxu0 %v181
    %203 = vmatpush.bf16.msra.mxu0 %v180
    %204 = vmatmul.bf16.gmra.mxu0 %v132
    %v205 = vpop.f32.mrf.mxu0
    %v206 = vadd.f32 %v84, %v205
    %v207 = vpop.f32.mrf.mxu0
    %v208 = vadd.f32 %v85, %v207
    %209 = vmatmul.bf16.gmra.mxu0 %v133
    %v210 = vpop.f32.mrf.mxu0
    %v211 = vadd.f32 %v86, %v210
    %v212 = vpop.f32.mrf.mxu0
    %v213 = vadd.f32 %v87, %v212
    %214 = vmatmul.bf16.gmra.mxu0 %v134
    %v215 = vpop.f32.mrf.mxu0
    %v216 = vadd.f32 %v88, %v215
    %v217 = vpop.f32.mrf.mxu0
    %v218 = vadd.f32 %v89, %v217
    %219 = vmatmul.bf16.gmra.mxu0 %v135
    %v220 = vpop.f32.mrf.mxu0
    %v221 = vadd.f32 %v90, %v220
    %v222 = vpop.f32.mrf.mxu0
    %v223 = vadd.f32 %v91, %v222
    %224 = vmatmul.bf16.gmra.mxu0 %v136
    %v225 = vpop.f32.mrf.mxu0
    %v226 = vadd.f32 %v92, %v225
    %v227 = vpop.f32.mrf.mxu0
    %v228 = vadd.f32 %v93, %v227
    %229 = vmatmul.bf16.gmra.mxu0 %v137
    %v230 = vpop.f32.mrf.mxu0
    %v231 = vadd.f32 %v94, %v230
    %v232 = vpop.f32.mrf.mxu0
    %v233 = vadd.f32 %v95, %v232
    %234 = vmatmul.bf16.gmra.mxu0 %v138
    %v235 = vpop.f32.mrf.mxu0
    %v236 = vadd.f32 %v96, %v235
    %v237 = vpop.f32.mrf.mxu0
    %v238 = vadd.f32 %v97, %v237
    %239 = vmatmul.bf16.gmra.mxu0 %v139
    %v240 = vpop.f32.mrf.mxu0
    %v241 = vadd.f32 %v98, %v240
    %v242 = vpop.f32.mrf.mxu0
    %v243 = vadd.f32 %v99, %v242
    %244 = vdwg.mxu0
    %245 = vadd.xlane.f32.xlu0 %v206
    %v246 = vpop.xlane.xlu0 %245
    %247 = vadd.xlane.f32.xlu0 %v208
    %v248 = vpop.xlane.xlu0 %247
    %249 = vadd.xlane.f32.xlu0 %v211
    %v250 = vpop.xlane.xlu0 %249
    %251 = vadd.xlane.f32.xlu0 %v213
    %v252 = vpop.xlane.xlu0 %251
    %253 = vadd.xlane.f32.xlu0 %v216
    %v254 = vpop.xlane.xlu0 %253
    %255 = vadd.xlane.f32.xlu0 %v218
    %v256 = vpop.xlane.xlu0 %255
    %257 = vadd.xlane.f32.xlu0 %v221
    %v258 = vpop.xlane.xlu0 %257
    %259 = vadd.xlane.f32.xlu0 %v223
    %v260 = vpop.xlane.xlu0 %259
    %261 = vadd.xlane.f32.xlu0 %v226
    %v262 = vpop.xlane.xlu0 %261
    %263 = vadd.xlane.f32.xlu0 %v228
    %v264 = vpop.xlane.xlu0 %263
    %265 = vadd.xlane.f32.xlu0 %v231
    %v266 = vpop.xlane.xlu0 %265
    %267 = vadd.xlane.f32.xlu0 %v233
    %v268 = vpop.xlane.xlu0 %267
    %269 = vadd.xlane.f32.xlu0 %v236
    %v270 = vpop.xlane.xlu0 %269
    %271 = vadd.xlane.f32.xlu0 %v238
    %v272 = vpop.xlane.xlu0 %271
    %273 = vadd.xlane.f32.xlu0 %v241
    %v274 = vpop.xlane.xlu0 %273
    %275 = vadd.xlane.f32.xlu0 %v243
    %v276 = vpop.xlane.xlu0 %275
    %v277 = vrcp.pop 128.0
    %v278 = vmul.f32 128.0, %v277
    %v279 = vsub.f32 1.0, %v278
    %v280 = vmul.f32 %v277, %v279
    %v281 = vadd.f32 %v277, %v280
    %vm282 = vweird.f32 %v277
    %v283 = vsel %vm282, %v277, %v281
    %v284 = vmul.f32 %v246, %v283
    %v285 = vmul.f32 %v248, %v283
    %v286 = vmul.f32 %v250, %v283
    %v287 = vmul.f32 %v252, %v283
    %v288 = vmul.f32 %v254, %v283
    %v289 = vmul.f32 %v256, %v283
    %v290 = vmul.f32 %v258, %v283
    %v291 = vmul.f32 %v260, %v283
    %v292 = vmul.f32 %v262, %v283
    %v293 = vmul.f32 %v264, %v283
    %v294 = vmul.f32 %v266, %v283
    %v295 = vmul.f32 %v268, %v283
    %v296 = vmul.f32 %v270, %v283
    %v297 = vmul.f32 %v272, %v283
    %v298 = vmul.f32 %v274, %v283
    %v299 = vmul.f32 %v276, %v283
    %v300 = vsub.f32 %v206, %v284
    %v301 = vsub.f32 %v208, %v285
    %v302 = vsub.f32 %v211, %v286
    %v303 = vsub.f32 %v213, %v287
    %v304 = vsub.f32 %v216, %v288
    %v305 = vsub.f32 %v218, %v289
    %v306 = vsub.f32 %v221, %v290
    %v307 = vsub.f32 %v223, %v291
    %v308 = vsub.f32 %v226, %v292
    %v309 = vsub.f32 %v228, %v293
    %v310 = vsub.f32 %v231, %v294
    %v311 = vsub.f32 %v233, %v295
    %v312 = vsub.f32 %v236, %v296
    %v313 = vsub.f32 %v238, %v297
    %v314 = vsub.f32 %v241, %v298
    %v315 = vsub.f32 %v243, %v299
    %v316 = vmul.f32 %v300, %v300
    %v317 = vmul.f32 %v301, %v301
    %v318 = vmul.f32 %v302, %v302
    %v319 = vmul.f32 %v303, %v303
    %v320 = vmul.f32 %v304, %v304
    %v321 = vmul.f32 %v305, %v305
    %v322 = vmul.f32 %v306, %v306
    %v323 = vmul.f32 %v307, %v307
    %v324 = vmul.f32 %v308, %v308
    %v325 = vmul.f32 %v309, %v309
    %v326 = vmul.f32 %v310, %v310
    %v327 = vmul.f32 %v311, %v311
    %v328 = vmul.f32 %v312, %v312
    %v329 = vmul.f32 %v313, %v313
    %v330 = vmul.f32 %v314, %v314
    %v331 = vmul.f32 %v315, %v315
    %332 = vadd.xlane.f32.xlu0 %v316
    %v333 = vpop.xlane.xlu0 %332
    %334 = vadd.xlane.f32.xlu0 %v317
    %v335 = vpop.xlane.xlu0 %334
    %336 = vadd.xlane.f32.xlu0 %v318
    %v337 = vpop.xlane.xlu0 %336
    %338 = vadd.xlane.f32.xlu0 %v319
    %v339 = vpop.xlane.xlu0 %338
    %340 = vadd.xlane.f32.xlu0 %v320
    %v341 = vpop.xlane.xlu0 %340
    %342 = vadd.xlane.f32.xlu0 %v321
    %v343 = vpop.xlane.xlu0 %342
    %344 = vadd.xlane.f32.xlu0 %v322
    %v345 = vpop.xlane.xlu0 %344
    %346 = vadd.xlane.f32.xlu0 %v323
    %v347 = vpop.xlane.xlu0 %346
    %348 = vadd.xlane.f32.xlu0 %v324
    %v349 = vpop.xlane.xlu0 %348
    %350 = vadd.xlane.f32.xlu0 %v325
    %v351 = vpop.xlane.xlu0 %350
    %352 = vadd.xlane.f32.xlu0 %v326
    %v353 = vpop.xlane.xlu0 %352
    %354 = vadd.xlane.f32.xlu0 %v327
    %v355 = vpop.xlane.xlu0 %354
    %356 = vadd.xlane.f32.xlu0 %v328
    %v357 = vpop.xlane.xlu0 %356
    %358 = vadd.xlane.f32.xlu0 %v329
    %v359 = vpop.xlane.xlu0 %358
    %360 = vadd.xlane.f32.xlu0 %v330
    %v361 = vpop.xlane.xlu0 %360
    %362 = vadd.xlane.f32.xlu0 %v331
    %v363 = vpop.xlane.xlu0 %362
    %v364 = vmul.f32 %v333, %v283
    %v365 = vmul.f32 %v335, %v283
    %v366 = vmul.f32 %v337, %v283
    %v367 = vmul.f32 %v339, %v283
    %v368 = vmul.f32 %v341, %v283
    %v369 = vmul.f32 %v343, %v283
    %v370 = vmul.f32 %v345, %v283
    %v371 = vmul.f32 %v347, %v283
    %v372 = vmul.f32 %v349, %v283
    %v373 = vmul.f32 %v351, %v283
    %v374 = vmul.f32 %v353, %v283
    %v375 = vmul.f32 %v355, %v283
    %v376 = vmul.f32 %v357, %v283
    %v377 = vmul.f32 %v359, %v283
    %v378 = vmul.f32 %v361, %v283
    %v379 = vmul.f32 %v363, %v283
    %v380 = vadd.f32 %v364, 1e-12
    %v381 = vadd.f32 %v365, 1e-12
    %v382 = vadd.f32 %v366, 1e-12
    %v383 = vadd.f32 %v367, 1e-12
    %v384 = vadd.f32 %v368, 1e-12
    %v385 = vadd.f32 %v369, 1e-12
    %v386 = vadd.f32 %v370, 1e-12
    %v387 = vadd.f32 %v371, 1e-12
    %v388 = vadd.f32 %v372, 1e-12
    %v389 = vadd.f32 %v373, 1e-12
    %v390 = vadd.f32 %v374, 1e-12
    %v391 = vadd.f32 %v375, 1e-12
    %v392 = vadd.f32 %v376, 1e-12
    %v393 = vadd.f32 %v377, 1e-12
    %v394 = vadd.f32 %v378, 1e-12
    %v395 = vadd.f32 %v379, 1e-12
    %v396 = vrsqrt.pop %v380
    %v397 = vmul.f32 %v396, %v380
    %v398 = vmul.f32 %v397, %v396
    %v399 = vmul.f32 0.5, %v398
    %v400 = vsub.f32 1.5, %v399
    %v401 = vmul.f32 %v396, %v400
    %vm402 = vweird.f32 %v380
    %vm403 = vweird.f32 %v396
    %vm404 = vmor %vm402, %vm403
    %v405 = vsel %vm404, %v396, %v401
    %v406 = vrsqrt.pop %v381
    %v407 = vmul.f32 %v406, %v381
    %v408 = vmul.f32 %v407, %v406
    %v409 = vmul.f32 0.5, %v408
    %v410 = vsub.f32 1.5, %v409
    %v411 = vmul.f32 %v406, %v410
    %vm412 = vweird.f32 %v381
    %vm413 = vweird.f32 %v406
    %vm414 = vmor %vm412, %vm413
    %v415 = vsel %vm414, %v406, %v411
    %v416 = vrsqrt.pop %v382
    %v417 = vmul.f32 %v416, %v382
    %v418 = vmul.f32 %v417, %v416
    %v419 = vmul.f32 0.5, %v418
    %v420 = vsub.f32 1.5, %v419
    %v421 = vmul.f32 %v416, %v420
    %vm422 = vweird.f32 %v382
    %vm423 = vweird.f32 %v416
    %vm424 = vmor %vm422, %vm423
    %v425 = vsel %vm424, %v416, %v421
    %v426 = vrsqrt.pop %v383
    %v427 = vmul.f32 %v426, %v383
    %v428 = vmul.f32 %v427, %v426
    %v429 = vmul.f32 0.5, %v428
    %v430 = vsub.f32 1.5, %v429
    %v431 = vmul.f32 %v426, %v430
    %vm432 = vweird.f32 %v383
    %vm433 = vweird.f32 %v426
    %vm434 = vmor %vm432, %vm433
    %v435 = vsel %vm434, %v426, %v431
    %v436 = vrsqrt.pop %v384
    %v437 = vmul.f32 %v436, %v384
    %v438 = vmul.f32 %v437, %v436
    %v439 = vmul.f32 0.5, %v438
    %v440 = vsub.f32 1.5, %v439
    %v441 = vmul.f32 %v436, %v440
    %vm442 = vweird.f32 %v384
    %vm443 = vweird.f32 %v436
    %vm444 = vmor %vm442, %vm443
    %v445 = vsel %vm444, %v436, %v441
    %v446 = vrsqrt.pop %v385
    %v447 = vmul.f32 %v446, %v385
    %v448 = vmul.f32 %v447, %v446
    %v449 = vmul.f32 0.5, %v448
    %v450 = vsub.f32 1.5, %v449
    %v451 = vmul.f32 %v446, %v450
    %vm452 = vweird.f32 %v385
    %vm453 = vweird.f32 %v446
    %vm454 = vmor %vm452, %vm453
    %v455 = vsel %vm454, %v446, %v451
    %v456 = vrsqrt.pop %v386
    %v457 = vmul.f32 %v456, %v386
    %v458 = vmul.f32 %v457, %v456
    %v459 = vmul.f32 0.5, %v458
    %v460 = vsub.f32 1.5, %v459
    %v461 = vmul.f32 %v456, %v460
    %vm462 = vweird.f32 %v386
    %vm463 = vweird.f32 %v456
    %vm464 = vmor %vm462, %vm463
    %v465 = vsel %vm464, %v456, %v461
    %v466 = vrsqrt.pop %v387
    %v467 = vmul.f32 %v466, %v387
    %v468 = vmul.f32 %v467, %v466
    %v469 = vmul.f32 0.5, %v468
    %v470 = vsub.f32 1.5, %v469
    %v471 = vmul.f32 %v466, %v470
    %vm472 = vweird.f32 %v387
    %vm473 = vweird.f32 %v466
    %vm474 = vmor %vm472, %vm473
    %v475 = vsel %vm474, %v466, %v471
    %v476 = vrsqrt.pop %v388
    %v477 = vmul.f32 %v476, %v388
    %v478 = vmul.f32 %v477, %v476
    %v479 = vmul.f32 0.5, %v478
    %v480 = vsub.f32 1.5, %v479
    %v481 = vmul.f32 %v476, %v480
    %vm482 = vweird.f32 %v388
    %vm483 = vweird.f32 %v476
    %vm484 = vmor %vm482, %vm483
    %v485 = vsel %vm484, %v476, %v481
    %v486 = vrsqrt.pop %v389
    %v487 = vmul.f32 %v486, %v389
    %v488 = vmul.f32 %v487, %v486
    %v489 = vmul.f32 0.5, %v488
    %v490 = vsub.f32 1.5, %v489
    %v491 = vmul.f32 %v486, %v490
    %vm492 = vweird.f32 %v389
    %vm493 = vweird.f32 %v486
    %vm494 = vmor %vm492, %vm493
    %v495 = vsel %vm494, %v486, %v491
    %v496 = vrsqrt.pop %v390
    %v497 = vmul.f32 %v496, %v390
    %v498 = vmul.f32 %v497, %v496
    %v499 = vmul.f32 0.5, %v498
    %v500 = vsub.f32 1.5, %v499
    %v501 = vmul.f32 %v496, %v500
    %vm502 = vweird.f32 %v390
    %vm503 = vweird.f32 %v496
    %vm504 = vmor %vm502, %vm503
    %v505 = vsel %vm504, %v496, %v501
    %v506 = vrsqrt.pop %v391
    %v507 = vmul.f32 %v506, %v391
    %v508 = vmul.f32 %v507, %v506
    %v509 = vmul.f32 0.5, %v508
    %v510 = vsub.f32 1.5, %v509
    %v511 = vmul.f32 %v506, %v510
    %vm512 = vweird.f32 %v391
    %vm513 = vweird.f32 %v506
    %vm514 = vmor %vm512, %vm513
    %v515 = vsel %vm514, %v506, %v511
    %v516 = vrsqrt.pop %v392
    %v517 = vmul.f32 %v516, %v392
    %v518 = vmul.f32 %v517, %v516
    %v519 = vmul.f32 0.5, %v518
    %v520 = vsub.f32 1.5, %v519
    %v521 = vmul.f32 %v516, %v520
    %vm522 = vweird.f32 %v392
    %vm523 = vweird.f32 %v516
    %vm524 = vmor %vm522, %vm523
    %v525 = vsel %vm524, %v516, %v521
    %v526 = vrsqrt.pop %v393
    %v527 = vmul.f32 %v526, %v393
    %v528 = vmul.f32 %v527, %v526
    %v529 = vmul.f32 0.5, %v528
    %v530 = vsub.f32 1.5, %v529
    %v531 = vmul.f32 %v526, %v530
    %vm532 = vweird.f32 %v393
    %vm533 = vweird.f32 %v526
    %vm534 = vmor %vm532, %vm533
    %v535 = vsel %vm534, %v526, %v531
    %v536 = vrsqrt.pop %v394
    %v537 = vmul.f32 %v536, %v394
    %v538 = vmul.f32 %v537, %v536
    %v539 = vmul.f32 0.5, %v538
    %v540 = vsub.f32 1.5, %v539
    %v541 = vmul.f32 %v536, %v540
    %vm542 = vweird.f32 %v394
    %vm543 = vweird.f32 %v536
    %vm544 = vmor %vm542, %vm543
    %v545 = vsel %vm544, %v536, %v541
    %v546 = vrsqrt.pop %v395
    %v547 = vmul.f32 %v546, %v395
    %v548 = vmul.f32 %v547, %v546
    %v549 = vmul.f32 0.5, %v548
    %v550 = vsub.f32 1.5, %v549
    %v551 = vmul.f32 %v546, %v550
    %vm552 = vweird.f32 %v395
    %vm553 = vweird.f32 %v546
    %vm554 = vmor %vm552, %vm553
    %v555 = vsel %vm554, %v546, %v551
    %v556 = vmul.f32 %v300, %v405
    %v557 = vmul.f32 %v301, %v415
    %v558 = vmul.f32 %v302, %v425
    %v559 = vmul.f32 %v303, %v435
    %v560 = vmul.f32 %v304, %v445
    %v561 = vmul.f32 %v305, %v455
    %v562 = vmul.f32 %v306, %v465
    %v563 = vmul.f32 %v307, %v475
    %v564 = vmul.f32 %v308, %v485
    %v565 = vmul.f32 %v309, %v495
    %v566 = vmul.f32 %v310, %v505
    %v567 = vmul.f32 %v311, %v515
    %v568 = vmul.f32 %v312, %v525
    %v569 = vmul.f32 %v313, %v535
    %v570 = vmul.f32 %v314, %v545
    %v571 = vmul.f32 %v315, %v555
    %v572 = vld [vmem:[%s3] sm:$0x1]
    %v574 = vperm.slane %v572, 0
    %v576 = vmul.f32 %v556, %v574
    %v577 = vmul.f32 %v557, %v574
    %v578 = vmul.f32 %v558, %v574
    %v579 = vmul.f32 %v559, %v574
    %v580 = vmul.f32 %v560, %v574
    %v581 = vmul.f32 %v561, %v574
    %v582 = vmul.f32 %v562, %v574
    %v583 = vmul.f32 %v563, %v574
    %v584 = vmul.f32 %v564, %v574
    %v585 = vmul.f32 %v565, %v574
    %v586 = vmul.f32 %v566, %v574
    %v587 = vmul.f32 %v567, %v574
    %v588 = vmul.f32 %v568, %v574
    %v589 = vmul.f32 %v569, %v574
    %v590 = vmul.f32 %v570, %v574
    %v591 = vmul.f32 %v571, %v574
    %v592 = vld [vmem:[%s4] sm:$0x1]
    %v594 = vperm.slane %v592, 0
    %v596 = vadd.f32 %v576, %v594
    %v597 = vadd.f32 %v577, %v594
    %v598 = vadd.f32 %v578, %v594
    %v599 = vadd.f32 %v579, %v594
    %v600 = vadd.f32 %v580, %v594
    %v601 = vadd.f32 %v581, %v594
    %v602 = vadd.f32 %v582, %v594
    %v603 = vadd.f32 %v583, %v594
    %v604 = vadd.f32 %v584, %v594
    %v605 = vadd.f32 %v585, %v594
    %v606 = vadd.f32 %v586, %v594
    %v607 = vadd.f32 %v587, %v594
    %v608 = vadd.f32 %v588, %v594
    %v609 = vadd.f32 %v589, %v594
    %v610 = vadd.f32 %v590, %v594
    %v611 = vadd.f32 %v591, %v594
    %v612 = vpack.c.bf16 %v596, %v596
    %v613 = vpack.c.bf16 %v597, %v597
    %v614 = vpack.c.bf16 %v598, %v598
    %v615 = vpack.c.bf16 %v599, %v599
    %v616 = vpack.c.bf16 %v600, %v600
    %v617 = vpack.c.bf16 %v601, %v601
    %v618 = vpack.c.bf16 %v602, %v602
    %v619 = vpack.c.bf16 %v603, %v603
    %v620 = vpack.c.bf16 %v604, %v604
    %v621 = vpack.c.bf16 %v605, %v605
    %v622 = vpack.c.bf16 %v606, %v606
    %v623 = vpack.c.bf16 %v607, %v607
    %v624 = vpack.c.bf16 %v608, %v608
    %v625 = vpack.c.bf16 %v609, %v609
    %v626 = vpack.c.bf16 %v610, %v610
    %v627 = vpack.c.bf16 %v611, %v611
    %628 = vst [vmem:[%s5] sm:$0xf] %v612
    %629 = vst [vmem:[%s5 + $0x4] sm:$0xf] %v613
    %630 = vst [vmem:[%s5 + $0x8] sm:$0xf] %v614
    %631 = vst [vmem:[%s5 + $0xc] sm:$0xf] %v615
    %632 = vst [vmem:[%s5 + $0x10] sm:$0xf] %v616
    %633 = vst [vmem:[%s5 + $0x14] sm:$0xf] %v617
    %634 = vst [vmem:[%s5 + $0x18] sm:$0xf] %v618
    %635 = vst [vmem:[%s5 + $0x1c] sm:$0xf] %v619
    %636 = vst [vmem:[%s5 + $0x20] sm:$0xf] %v620
    %637 = vst [vmem:[%s5 + $0x24] sm:$0xf] %v621
    %638 = vst [vmem:[%s5 + $0x28] sm:$0xf] %v622
    %639 = vst [vmem:[%s5 + $0x2c] sm:$0xf] %v623
    %640 = vst [vmem:[%s5 + $0x30] sm:$0xf] %v624
    %641 = vst [vmem:[%s5 + $0x34] sm:$0xf] %v625
    %642 = vst [vmem:[%s5 + $0x38] sm:$0xf] %v626
    %643 = vst [vmem:[%s5 + $0x3c] sm:$0xf] %v627
    // Predicated region
    $region26: #{_lambda_.13} parent=1 // pred_check
      _
    $region27: #{_lambda_.13} parent=1 // pred_check_branch
      %645 = sbr.rel (0) target = $region29
    $region28: #{_lambda_.13} parent=1 // pred_region
      _
    $region29: #{_lambda_.13} parent=1 // pred_fallthru
      _
    // Predicated region
    $region30: #{_lambda_.13} parent=1 // pred_check
      _
    $region31: #{_lambda_.13} parent=1 // pred_check_branch
      %647 = sbr.rel (0) target = $region33
    $region32: #{_lambda_.13} parent=1 // pred_region
      _
    $region33: #{_lambda_.13} parent=1 // pred_fallthru
      _
    %648 = vsyncpa [#allocation3], 1

// kernel: _lambda_.18
$region0: #{_lambda_.18}
  #allocation0 [shape = 'u32[]', space=smem, size = 0x4, offset = 0x4, fixed_abs, tag = 'smem constant byte address 0x4 - core index']
  #allocation1 [shape = 'u32[72,128]{1,0:T(1,128)}', space=vmem, size = 0x9000, scoped, tag = 'internal scratch']
  %s0 = inlined_call_operand.vmem [shape: bf16[128,128], index: 0, kind: input, shape index: {}]
  %s1 = inlined_call_operand.vmem [shape: bf16[128,128], index: 1, kind: input, shape index: {}]
  %s2 = inlined_call_operand.vmem [shape: bf16[128,128], index: 2, kind: input, shape index: {}]
  %s3 = inlined_call_operand.vmem [shape: f32[1,128], index: 3, kind: input, shape index: {}]
  %s4 = inlined_call_operand.vmem [shape: f32[1,128], index: 4, kind: input, shape index: {}]
  %s5 = inlined_call_operand.vmem [shape: bf16[128,128], index: 5, kind: output, shape index: {}]
  %s6 = sld [smem:[#allocation0]]
  $region30: #{_lambda_.18} parent=0
    _
  %s8 = ssub.s32 1, %s6
  %s9 = scalar_select 0, %s8, %s6
  // Predicated region
  $region2: #{_lambda_.18} parent=0 // pred_check
    _
  $region3: #{_lambda_.18} parent=0 // pred_check_branch
    %11 = sbr.rel (0) target = $region5
  $region4: #{_lambda_.18} parent=0 // pred_region
    _
  $region5: #{_lambda_.18} parent=0 // pred_fallthru
    _
  // Predicated region
  $region6: #{_lambda_.18} parent=0 // pred_check
    _
  $region7: #{_lambda_.18} parent=0 // pred_check_branch
    %13 = sbr.rel (0) target = $region9
  $region8: #{_lambda_.18} parent=0 // pred_region
    _
  $region9: #{_lambda_.18} parent=0 // pred_fallthru
    _
  // Predicated region
  $region10: #{_lambda_.18} parent=0 // pred_check
    _
  $region11: #{_lambda_.18} parent=0 // pred_check_branch
    %15 = sbr.rel (0) target = $region13
  $region12: #{_lambda_.18} parent=0 // pred_region
    _
  $region13: #{_lambda_.18} parent=0 // pred_fallthru
    _
  // Predicated region
  $region14: #{_lambda_.18} parent=0 // pred_check
    _
  $region15: #{_lambda_.18} parent=0 // pred_check_branch
    %17 = sbr.rel (0) target = $region17
  $region16: #{_lambda_.18} parent=0 // pred_region
    _
  $region17: #{_lambda_.18} parent=0 // pred_fallthru
    _
  // Predicated region
  $region18: #{_lambda_.18} parent=0 // pred_check
    _
  $region19: #{_lambda_.18} parent=0 // pred_check_branch
    %19 = sbr.rel (0) target = $region21
  $region20: #{_lambda_.18} parent=0 // pred_region
    _
  $region21: #{_lambda_.18} parent=0 // pred_fallthru
    _
  %v20 = vld [vmem:[%s0] sm:$0xf]
  %v21 = vld [vmem:[%s0 + $0x4] sm:$0xf]
  %v22 = vld [vmem:[%s0 + $0x8] sm:$0xf]
  %v23 = vld [vmem:[%s0 + $0xc] sm:$0xf]
  %v24 = vld [vmem:[%s0 + $0x10] sm:$0xf]
  %v25 = vld [vmem:[%s0 + $0x14] sm:$0xf]
  %v26 = vld [vmem:[%s0 + $0x18] sm:$0xf]
  %v27 = vld [vmem:[%s0 + $0x1c] sm:$0xf]
  %v28 = vld [vmem:[%s0 + $0x20] sm:$0xf]
  %v29 = vld [vmem:[%s0 + $0x24] sm:$0xf]
  %v30 = vld [vmem:[%s0 + $0x28] sm:$0xf]
  %v31 = vld [vmem:[%s0 + $0x2c] sm:$0xf]
  %v32 = vld [vmem:[%s0 + $0x30] sm:$0xf]
  %v33 = vld [vmem:[%s0 + $0x34] sm:$0xf]
  %v34 = vld [vmem:[%s0 + $0x38] sm:$0xf]
  %v35 = vld [vmem:[%s0 + $0x3c] sm:$0xf]
  %v36 = vld [vmem:[%s1] sm:$0xf]
  %v37 = vld [vmem:[%s1 + $0x4] sm:$0xf]
  %v38 = vld [vmem:[%s1 + $0x8] sm:$0xf]
  %v39 = vld [vmem:[%s1 + $0xc] sm:$0xf]
  %v40 = vld [vmem:[%s1 + $0x10] sm:$0xf]
  %v41 = vld [vmem:[%s1 + $0x14] sm:$0xf]
  %v42 = vld [vmem:[%s1 + $0x18] sm:$0xf]
  %v43 = vld [vmem:[%s1 + $0x1c] sm:$0xf]
  %v44 = vld [vmem:[%s1 + $0x20] sm:$0xf]
  %v45 = vld [vmem:[%s1 + $0x24] sm:$0xf]
  %v46 = vld [vmem:[%s1 + $0x28] sm:$0xf]
  %v47 = vld [vmem:[%s1 + $0x2c] sm:$0xf]
  %v48 = vld [vmem:[%s1 + $0x30] sm:$0xf]
  %v49 = vld [vmem:[%s1 + $0x34] sm:$0xf]
  %v50 = vld [vmem:[%s1 + $0x38] sm:$0xf]
  %v51 = vld [vmem:[%s1 + $0x3c] sm:$0xf]
  %v52 = vld [vmem:[%s2] sm:$0xf]
  %v53 = vld [vmem:[%s2 + $0x4] sm:$0xf]
  %v54 = vld [vmem:[%s2 + $0x8] sm:$0xf]
  %v55 = vld [vmem:[%s2 + $0xc] sm:$0xf]
  %v56 = vld [vmem:[%s2 + $0x10] sm:$0xf]
  %v57 = vld [vmem:[%s2 + $0x14] sm:$0xf]
  %v58 = vld [vmem:[%s2 + $0x18] sm:$0xf]
  %v59 = vld [vmem:[%s2 + $0x1c] sm:$0xf]
  %v60 = vld [vmem:[%s2 + $0x20] sm:$0xf]
  %v61 = vld [vmem:[%s2 + $0x24] sm:$0xf]
  %v62 = vld [vmem:[%s2 + $0x28] sm:$0xf]
  %v63 = vld [vmem:[%s2 + $0x2c] sm:$0xf]
  %v64 = vld [vmem:[%s2 + $0x30] sm:$0xf]
  %v65 = vld [vmem:[%s2 + $0x34] sm:$0xf]
  %v66 = vld [vmem:[%s2 + $0x38] sm:$0xf]
  %v67 = vld [vmem:[%s2 + $0x3c] sm:$0xf]
  %v68 = vunpack.c.l.bf16 %v52
  %v69 = vunpack.c.l.bf16 %v53
  %v70 = vunpack.c.l.bf16 %v54
  %v71 = vunpack.c.l.bf16 %v55
  %v72 = vunpack.c.l.bf16 %v56
  %v73 = vunpack.c.l.bf16 %v57
  %v74 = vunpack.c.l.bf16 %v58
  %v75 = vunpack.c.l.bf16 %v59
  %v76 = vunpack.c.l.bf16 %v60
  %v77 = vunpack.c.l.bf16 %v61
  %v78 = vunpack.c.l.bf16 %v62
  %v79 = vunpack.c.l.bf16 %v63
  %v80 = vunpack.c.l.bf16 %v64
  %v81 = vunpack.c.l.bf16 %v65
  %v82 = vunpack.c.l.bf16 %v66
  %v83 = vunpack.c.l.bf16 %v67
  %v100 = vunpack.c.l.b16 %v20
  %v101 = vunpack.c.l.b16 %v21
  %v102 = vunpack.c.l.b16 %v22
  %v103 = vunpack.c.l.b16 %v23
  %v104 = vunpack.c.l.b16 %v24
  %v105 = vunpack.c.l.b16 %v25
  %v106 = vunpack.c.l.b16 %v26
  %v107 = vunpack.c.l.b16 %v27
  %v108 = vunpack.c.l.b16 %v28
  %v109 = vunpack.c.l.b16 %v29
  %v110 = vunpack.c.l.b16 %v30
  %v111 = vunpack.c.l.b16 %v31
  %v112 = vunpack.c.l.b16 %v32
  %v113 = vunpack.c.l.b16 %v33
  %v114 = vunpack.c.l.b16 %v34
  %v115 = vunpack.c.l.b16 %v35
  %v116 = vpack.c.b16 %v101, %v100
  %v117 = vpack.c.b16 %v103, %v102
  %v118 = vpack.c.b16 %v105, %v104
  %v119 = vpack.c.b16 %v107, %v106
  %v120 = vpack.c.b16 %v109, %v108
  %v121 = vpack.c.b16 %v111, %v110
  %v122 = vpack.c.b16 %v113, %v112
  %v123 = vpack.c.b16 %v115, %v114
  %v148 = vunpack.c.l.b16 %v36
  %v149 = vunpack.c.l.b16 %v37
  %v150 = vunpack.c.l.b16 %v38
  %v151 = vunpack.c.l.b16 %v39
  %v152 = vunpack.c.l.b16 %v40
  %v153 = vunpack.c.l.b16 %v41
  %v154 = vunpack.c.l.b16 %v42
  %v155 = vunpack.c.l.b16 %v43
  %v156 = vunpack.c.l.b16 %v44
  %v157 = vunpack.c.l.b16 %v45
  %v158 = vunpack.c.l.b16 %v46
  %v159 = vunpack.c.l.b16 %v47
  %v160 = vunpack.c.l.b16 %v48
  %v161 = vunpack.c.l.b16 %v49
  %v162 = vunpack.c.l.b16 %v50
  %v163 = vunpack.c.l.b16 %v51
  %v164 = vpack.c.b16 %v149, %v148
  %v165 = vpack.c.b16 %v151, %v150
  %v166 = vpack.c.b16 %v153, %v152
  %v167 = vpack.c.b16 %v155, %v154
  %v168 = vpack.c.b16 %v157, %v156
  %v169 = vpack.c.b16 %v159, %v158
  %v170 = vpack.c.b16 %v161, %v160
  %v171 = vpack.c.b16 %v163, %v162
  %180 = vmatpush.bf16.msra.mxu0 %v171
  %181 = vmatpush.bf16.msra.mxu0 %v170
  %182 = vmatpush.bf16.msra.mxu0 %v169
  %183 = vmatpush.bf16.msra.mxu0 %v168
  %184 = vmatpush.bf16.msra.mxu0 %v167
  %185 = vmatpush.bf16.msra.mxu0 %v166
  %186 = vmatpush.bf16.msra.mxu0 %v165
  %187 = vmatpush.bf16.msra.mxu0 %v164
  %188 = vmatmul.bf16.gmra.mxu0 %v116
  %v189 = vpop.f32.mrf.mxu0
  %v190 = vadd.f32 %v68, %v189
  %v191 = vpop.f32.mrf.mxu0
  %v192 = vadd.f32 %v69, %v191
  %193 = vmatmul.bf16.gmra.mxu0 %v117
  %v194 = vpop.f32.mrf.mxu0
  %v195 = vadd.f32 %v70, %v194
  %v196 = vpop.f32.mrf.mxu0
  %v197 = vadd.f32 %v71, %v196
  %198 = vmatmul.bf16.gmra.mxu0 %v118
  %v199 = vpop.f32.mrf.mxu0
  %v200 = vadd.f32 %v72, %v199
  %v201 = vpop.f32.mrf.mxu0
  %v202 = vadd.f32 %v73, %v201
  %203 = vmatmul.bf16.gmra.mxu0 %v119
  %v204 = vpop.f32.mrf.mxu0
  %v205 = vadd.f32 %v74, %v204
  %v206 = vpop.f32.mrf.mxu0
  %v207 = vadd.f32 %v75, %v206
  %208 = vmatmul.bf16.gmra.mxu0 %v120
  %v209 = vpop.f32.mrf.mxu0
  %v210 = vadd.f32 %v76, %v209
  %v211 = vpop.f32.mrf.mxu0
  %v212 = vadd.f32 %v77, %v211
  %213 = vmatmul.bf16.gmra.mxu0 %v121
  %v214 = vpop.f32.mrf.mxu0
  %v215 = vadd.f32 %v78, %v214
  %v216 = vpop.f32.mrf.mxu0
  %v217 = vadd.f32 %v79, %v216
  %218 = vmatmul.bf16.gmra.mxu0 %v122
  %v219 = vpop.f32.mrf.mxu0
  %v220 = vadd.f32 %v80, %v219
  %v221 = vpop.f32.mrf.mxu0
  %v222 = vadd.f32 %v81, %v221
  %223 = vmatmul.bf16.gmra.mxu0 %v123
  %v224 = vpop.f32.mrf.mxu0
  %v225 = vadd.f32 %v82, %v224
  %v226 = vpop.f32.mrf.mxu0
  %v227 = vadd.f32 %v83, %v226
  %228 = vdwg.mxu0
  %229 = vadd.xlane.f32.xlu0 %v190
  %v230 = vpop.xlane.xlu0 %229
  %231 = vadd.xlane.f32.xlu0 %v192
  %v232 = vpop.xlane.xlu0 %231
  %233 = vadd.xlane.f32.xlu0 %v195
  %v234 = vpop.xlane.xlu0 %233
  %235 = vadd.xlane.f32.xlu0 %v197
  %v236 = vpop.xlane.xlu0 %235
  %237 = vadd.xlane.f32.xlu0 %v200
  %v238 = vpop.xlane.xlu0 %237
  %239 = vadd.xlane.f32.xlu0 %v202
  %v240 = vpop.xlane.xlu0 %239
  %241 = vadd.xlane.f32.xlu0 %v205
  %v242 = vpop.xlane.xlu0 %241
  %243 = vadd.xlane.f32.xlu0 %v207
  %v244 = vpop.xlane.xlu0 %243
  %245 = vadd.xlane.f32.xlu0 %v210
  %v246 = vpop.xlane.xlu0 %245
  %247 = vadd.xlane.f32.xlu0 %v212
  %v248 = vpop.xlane.xlu0 %247
  %249 = vadd.xlane.f32.xlu0 %v215
  %v250 = vpop.xlane.xlu0 %249
  %251 = vadd.xlane.f32.xlu0 %v217
  %v252 = vpop.xlane.xlu0 %251
  %253 = vadd.xlane.f32.xlu0 %v220
  %v254 = vpop.xlane.xlu0 %253
  %255 = vadd.xlane.f32.xlu0 %v222
  %v256 = vpop.xlane.xlu0 %255
  %257 = vadd.xlane.f32.xlu0 %v225
  %v258 = vpop.xlane.xlu0 %257
  %259 = vadd.xlane.f32.xlu0 %v227
  %v260 = vpop.xlane.xlu0 %259
  %v261 = vrcp.pop 128.0
  %v262 = vmul.f32 128.0, %v261
  %v263 = vsub.f32 1.0, %v262
  %v264 = vmul.f32 %v261, %v263
  %v265 = vadd.f32 %v261, %v264
  %vm266 = vweird.f32 %v261
  %v267 = vsel %vm266, %v261, %v265
  %v268 = vmul.f32 %v230, %v267
  %v269 = vmul.f32 %v232, %v267
  %v270 = vmul.f32 %v234, %v267
  %v271 = vmul.f32 %v236, %v267
  %v272 = vmul.f32 %v238, %v267
  %v273 = vmul.f32 %v240, %v267
  %v274 = vmul.f32 %v242, %v267
  %v275 = vmul.f32 %v244, %v267
  %v276 = vmul.f32 %v246, %v267
  %v277 = vmul.f32 %v248, %v267
  %v278 = vmul.f32 %v250, %v267
  %v279 = vmul.f32 %v252, %v267
  %v280 = vmul.f32 %v254, %v267
  %v281 = vmul.f32 %v256, %v267
  %v282 = vmul.f32 %v258, %v267
  %v283 = vmul.f32 %v260, %v267
  %v284 = vsub.f32 %v190, %v268
  %v285 = vsub.f32 %v192, %v269
  %v286 = vsub.f32 %v195, %v270
  %v287 = vsub.f32 %v197, %v271
  %v288 = vsub.f32 %v200, %v272
  %v289 = vsub.f32 %v202, %v273
  %v290 = vsub.f32 %v205, %v274
  %v291 = vsub.f32 %v207, %v275
  %v292 = vsub.f32 %v210, %v276
  %v293 = vsub.f32 %v212, %v277
  %v294 = vsub.f32 %v215, %v278
  %v295 = vsub.f32 %v217, %v279
  %v296 = vsub.f32 %v220, %v280
  %v297 = vsub.f32 %v222, %v281
  %v298 = vsub.f32 %v225, %v282
  %v299 = vsub.f32 %v227, %v283
  %v300 = vmul.f32 %v284, %v284
  %v301 = vmul.f32 %v285, %v285
  %v302 = vmul.f32 %v286, %v286
  %v303 = vmul.f32 %v287, %v287
  %v304 = vmul.f32 %v288, %v288
  %v305 = vmul.f32 %v289, %v289
  %v306 = vmul.f32 %v290, %v290
  %v307 = vmul.f32 %v291, %v291
  %v308 = vmul.f32 %v292, %v292
  %v309 = vmul.f32 %v293, %v293
  %v310 = vmul.f32 %v294, %v294
  %v311 = vmul.f32 %v295, %v295
  %v312 = vmul.f32 %v296, %v296
  %v313 = vmul.f32 %v297, %v297
  %v314 = vmul.f32 %v298, %v298
  %v315 = vmul.f32 %v299, %v299
  %316 = vadd.xlane.f32.xlu0 %v300
  %v317 = vpop.xlane.xlu0 %316
  %318 = vadd.xlane.f32.xlu0 %v301
  %v319 = vpop.xlane.xlu0 %318
  %320 = vadd.xlane.f32.xlu0 %v302
  %v321 = vpop.xlane.xlu0 %320
  %322 = vadd.xlane.f32.xlu0 %v303
  %v323 = vpop.xlane.xlu0 %322
  %324 = vadd.xlane.f32.xlu0 %v304
  %v325 = vpop.xlane.xlu0 %324
  %326 = vadd.xlane.f32.xlu0 %v305
  %v327 = vpop.xlane.xlu0 %326
  %328 = vadd.xlane.f32.xlu0 %v306
  %v329 = vpop.xlane.xlu0 %328
  %330 = vadd.xlane.f32.xlu0 %v307
  %v331 = vpop.xlane.xlu0 %330
  %332 = vadd.xlane.f32.xlu0 %v308
  %v333 = vpop.xlane.xlu0 %332
  %334 = vadd.xlane.f32.xlu0 %v309
  %v335 = vpop.xlane.xlu0 %334
  %336 = vadd.xlane.f32.xlu0 %v310
  %v337 = vpop.xlane.xlu0 %336
  %338 = vadd.xlane.f32.xlu0 %v311
  %v339 = vpop.xlane.xlu0 %338
  %340 = vadd.xlane.f32.xlu0 %v312
  %v341 = vpop.xlane.xlu0 %340
  %342 = vadd.xlane.f32.xlu0 %v313
  %v343 = vpop.xlane.xlu0 %342
  %344 = vadd.xlane.f32.xlu0 %v314
  %v345 = vpop.xlane.xlu0 %344
  %346 = vadd.xlane.f32.xlu0 %v315
  %v347 = vpop.xlane.xlu0 %346
  %v348 = vmul.f32 %v317, %v267
  %v349 = vmul.f32 %v319, %v267
  %v350 = vmul.f32 %v321, %v267
  %v351 = vmul.f32 %v323, %v267
  %v352 = vmul.f32 %v325, %v267
  %v353 = vmul.f32 %v327, %v267
  %v354 = vmul.f32 %v329, %v267
  %v355 = vmul.f32 %v331, %v267
  %v356 = vmul.f32 %v333, %v267
  %v357 = vmul.f32 %v335, %v267
  %v358 = vmul.f32 %v337, %v267
  %v359 = vmul.f32 %v339, %v267
  %v360 = vmul.f32 %v341, %v267
  %v361 = vmul.f32 %v343, %v267
  %v362 = vmul.f32 %v345, %v267
  %v363 = vmul.f32 %v347, %v267
  %v364 = vadd.f32 %v348, 1e-12
  %v365 = vadd.f32 %v349, 1e-12
  %v366 = vadd.f32 %v350, 1e-12
  %v367 = vadd.f32 %v351, 1e-12
  %v368 = vadd.f32 %v352, 1e-12
  %v369 = vadd.f32 %v353, 1e-12
  %v370 = vadd.f32 %v354, 1e-12
  %v371 = vadd.f32 %v355, 1e-12
  %v372 = vadd.f32 %v356, 1e-12
  %v373 = vadd.f32 %v357, 1e-12
  %v374 = vadd.f32 %v358, 1e-12
  %v375 = vadd.f32 %v359, 1e-12
  %v376 = vadd.f32 %v360, 1e-12
  %v377 = vadd.f32 %v361, 1e-12
  %v378 = vadd.f32 %v362, 1e-12
  %v379 = vadd.f32 %v363, 1e-12
  %v380 = vrsqrt.pop %v364
  %v381 = vmul.f32 %v380, %v364
  %v382 = vmul.f32 %v381, %v380
  %v383 = vmul.f32 0.5, %v382
  %v384 = vsub.f32 1.5, %v383
  %v385 = vmul.f32 %v380, %v384
  %vm386 = vweird.f32 %v364
  %vm387 = vweird.f32 %v380
  %vm388 = vmor %vm386, %vm387
  %v389 = vsel %vm388, %v380, %v385
  %v390 = vrsqrt.pop %v365
  %v391 = vmul.f32 %v390, %v365
  %v392 = vmul.f32 %v391, %v390
  %v393 = vmul.f32 0.5, %v392
  %v394 = vsub.f32 1.5, %v393
  %v395 = vmul.f32 %v390, %v394
  %vm396 = vweird.f32 %v365
  %vm397 = vweird.f32 %v390
  %vm398 = vmor %vm396, %vm397
  %v399 = vsel %vm398, %v390, %v395
  %v400 = vrsqrt.pop %v366
  %v401 = vmul.f32 %v400, %v366
  %v402 = vmul.f32 %v401, %v400
  %v403 = vmul.f32 0.5, %v402
  %v404 = vsub.f32 1.5, %v403
  %v405 = vmul.f32 %v400, %v404
  %vm406 = vweird.f32 %v366
  %vm407 = vweird.f32 %v400
  %vm408 = vmor %vm406, %vm407
  %v409 = vsel %vm408, %v400, %v405
  %v410 = vrsqrt.pop %v367
  %v411 = vmul.f32 %v410, %v367
  %v412 = vmul.f32 %v411, %v410
  %v413 = vmul.f32 0.5, %v412
  %v414 = vsub.f32 1.5, %v413
  %v415 = vmul.f32 %v410, %v414
  %vm416 = vweird.f32 %v367
  %vm417 = vweird.f32 %v410
  %vm418 = vmor %vm416, %vm417
  %v419 = vsel %vm418, %v410, %v415
  %v420 = vrsqrt.pop %v368
  %v421 = vmul.f32 %v420, %v368
  %v422 = vmul.f32 %v421, %v420
  %v423 = vmul.f32 0.5, %v422
  %v424 = vsub.f32 1.5, %v423
  %v425 = vmul.f32 %v420, %v424
  %vm426 = vweird.f32 %v368
  %vm427 = vweird.f32 %v420
  %vm428 = vmor %vm426, %vm427
  %v429 = vsel %vm428, %v420, %v425
  %v430 = vrsqrt.pop %v369
  %v431 = vmul.f32 %v430, %v369
  %v432 = vmul.f32 %v431, %v430
  %v433 = vmul.f32 0.5, %v432
  %v434 = vsub.f32 1.5, %v433
  %v435 = vmul.f32 %v430, %v434
  %vm436 = vweird.f32 %v369
  %vm437 = vweird.f32 %v430
  %vm438 = vmor %vm436, %vm437
  %v439 = vsel %vm438, %v430, %v435
  %v440 = vrsqrt.pop %v370
  %v441 = vmul.f32 %v440, %v370
  %v442 = vmul.f32 %v441, %v440
  %v443 = vmul.f32 0.5, %v442
  %v444 = vsub.f32 1.5, %v443
  %v445 = vmul.f32 %v440, %v444
  %vm446 = vweird.f32 %v370
  %vm447 = vweird.f32 %v440
  %vm448 = vmor %vm446, %vm447
  %v449 = vsel %vm448, %v440, %v445
  %v450 = vrsqrt.pop %v371
  %v451 = vmul.f32 %v450, %v371
  %v452 = vmul.f32 %v451, %v450
  %v453 = vmul.f32 0.5, %v452
  %v454 = vsub.f32 1.5, %v453
  %v455 = vmul.f32 %v450, %v454
  %vm456 = vweird.f32 %v371
  %vm457 = vweird.f32 %v450
  %vm458 = vmor %vm456, %vm457
  %v459 = vsel %vm458, %v450, %v455
  %v460 = vrsqrt.pop %v372
  %v461 = vmul.f32 %v460, %v372
  %v462 = vmul.f32 %v461, %v460
  %v463 = vmul.f32 0.5, %v462
  %v464 = vsub.f32 1.5, %v463
  %v465 = vmul.f32 %v460, %v464
  %vm466 = vweird.f32 %v372
  %vm467 = vweird.f32 %v460
  %vm468 = vmor %vm466, %vm467
  %v469 = vsel %vm468, %v460, %v465
  %v470 = vrsqrt.pop %v373
  %v471 = vmul.f32 %v470, %v373
  %v472 = vmul.f32 %v471, %v470
  %v473 = vmul.f32 0.5, %v472
  %v474 = vsub.f32 1.5, %v473
  %v475 = vmul.f32 %v470, %v474
  %vm476 = vweird.f32 %v373
  %vm477 = vweird.f32 %v470
  %vm478 = vmor %vm476, %vm477
  %v479 = vsel %vm478, %v470, %v475
  %v480 = vrsqrt.pop %v374
  %v481 = vmul.f32 %v480, %v374
  %v482 = vmul.f32 %v481, %v480
  %v483 = vmul.f32 0.5, %v482
  %v484 = vsub.f32 1.5, %v483
  %v485 = vmul.f32 %v480, %v484
  %vm486 = vweird.f32 %v374
  %vm487 = vweird.f32 %v480
  %vm488 = vmor %vm486, %vm487
  %v489 = vsel %vm488, %v480, %v485
  %v490 = vrsqrt.pop %v375
  %v491 = vmul.f32 %v490, %v375
  %v492 = vmul.f32 %v491, %v490
  %v493 = vmul.f32 0.5, %v492
  %v494 = vsub.f32 1.5, %v493
  %v495 = vmul.f32 %v490, %v494
  %vm496 = vweird.f32 %v375
  %vm497 = vweird.f32 %v490
  %vm498 = vmor %vm496, %vm497
  %v499 = vsel %vm498, %v490, %v495
  %v500 = vrsqrt.pop %v376
  %v501 = vmul.f32 %v500, %v376
  %v502 = vmul.f32 %v501, %v500
  %v503 = vmul.f32 0.5, %v502
  %v504 = vsub.f32 1.5, %v503
  %v505 = vmul.f32 %v500, %v504
  %vm506 = vweird.f32 %v376
  %vm507 = vweird.f32 %v500
  %vm508 = vmor %vm506, %vm507
  %v509 = vsel %vm508, %v500, %v505
  %v510 = vrsqrt.pop %v377
  %v511 = vmul.f32 %v510, %v377
  %v512 = vmul.f32 %v511, %v510
  %v513 = vmul.f32 0.5, %v512
  %v514 = vsub.f32 1.5, %v513
  %v515 = vmul.f32 %v510, %v514
  %vm516 = vweird.f32 %v377
  %vm517 = vweird.f32 %v510
  %vm518 = vmor %vm516, %vm517
  %v519 = vsel %vm518, %v510, %v515
  %v520 = vrsqrt.pop %v378
  %v521 = vmul.f32 %v520, %v378
  %v522 = vmul.f32 %v521, %v520
  %v523 = vmul.f32 0.5, %v522
  %v524 = vsub.f32 1.5, %v523
  %v525 = vmul.f32 %v520, %v524
  %vm526 = vweird.f32 %v378
  %vm527 = vweird.f32 %v520
  %vm528 = vmor %vm526, %vm527
  %v529 = vsel %vm528, %v520, %v525
  %v530 = vrsqrt.pop %v379
  %v531 = vmul.f32 %v530, %v379
  %v532 = vmul.f32 %v531, %v530
  %v533 = vmul.f32 0.5, %v532
  %v534 = vsub.f32 1.5, %v533
  %v535 = vmul.f32 %v530, %v534
  %vm536 = vweird.f32 %v379
  %vm537 = vweird.f32 %v530
  %vm538 = vmor %vm536, %vm537
  %v539 = vsel %vm538, %v530, %v535
  %v540 = vmul.f32 %v284, %v389
  %v541 = vmul.f32 %v285, %v399
  %v542 = vmul.f32 %v286, %v409
  %v543 = vmul.f32 %v287, %v419
  %v544 = vmul.f32 %v288, %v429
  %v545 = vmul.f32 %v289, %v439
  %v546 = vmul.f32 %v290, %v449
  %v547 = vmul.f32 %v291, %v459
  %v548 = vmul.f32 %v292, %v469
  %v549 = vmul.f32 %v293, %v479
  %v550 = vmul.f32 %v294, %v489
  %v551 = vmul.f32 %v295, %v499
  %v552 = vmul.f32 %v296, %v509
  %v553 = vmul.f32 %v297, %v519
  %v554 = vmul.f32 %v298, %v529
  %v555 = vmul.f32 %v299, %v539
  %v556 = vld [vmem:[%s3] sm:$0x1]
  %v558 = vperm.slane %v556, 0
  %v560 = vmul.f32 %v540, %v558
  %v561 = vmul.f32 %v541, %v558
  %v562 = vmul.f32 %v542, %v558
  %v563 = vmul.f32 %v543, %v558
  %v564 = vmul.f32 %v544, %v558
  %v565 = vmul.f32 %v545, %v558
  %v566 = vmul.f32 %v546, %v558
  %v567 = vmul.f32 %v547, %v558
  %v568 = vmul.f32 %v548, %v558
  %v569 = vmul.f32 %v549, %v558
  %v570 = vmul.f32 %v550, %v558
  %v571 = vmul.f32 %v551, %v558
  %v572 = vmul.f32 %v552, %v558
  %v573 = vmul.f32 %v553, %v558
  %v574 = vmul.f32 %v554, %v558
  %v575 = vmul.f32 %v555, %v558
  %v576 = vld [vmem:[%s4] sm:$0x1]
  %v578 = vperm.slane %v576, 0
  %v580 = vadd.f32 %v560, %v578
  %v581 = vadd.f32 %v561, %v578
  %v582 = vadd.f32 %v562, %v578
  %v583 = vadd.f32 %v563, %v578
  %v584 = vadd.f32 %v564, %v578
  %v585 = vadd.f32 %v565, %v578
  %v586 = vadd.f32 %v566, %v578
  %v587 = vadd.f32 %v567, %v578
  %v588 = vadd.f32 %v568, %v578
  %v589 = vadd.f32 %v569, %v578
  %v590 = vadd.f32 %v570, %v578
  %v591 = vadd.f32 %v571, %v578
  %v592 = vadd.f32 %v572, %v578
  %v593 = vadd.f32 %v573, %v578
  %v594 = vadd.f32 %v574, %v578
  %v595 = vadd.f32 %v575, %v578
  %v596 = vpack.c.bf16 %v580, %v580
  %v597 = vpack.c.bf16 %v581, %v581
  %v598 = vpack.c.bf16 %v582, %v582
  %v599 = vpack.c.bf16 %v583, %v583
  %v600 = vpack.c.bf16 %v584, %v584
  %v601 = vpack.c.bf16 %v585, %v585
  %v602 = vpack.c.bf16 %v586, %v586
  %v603 = vpack.c.bf16 %v587, %v587
  %v604 = vpack.c.bf16 %v588, %v588
  %v605 = vpack.c.bf16 %v589, %v589
  %v606 = vpack.c.bf16 %v590, %v590
  %v607 = vpack.c.bf16 %v591, %v591
  %v608 = vpack.c.bf16 %v592, %v592
  %v609 = vpack.c.bf16 %v593, %v593
  %v610 = vpack.c.bf16 %v594, %v594
  %v611 = vpack.c.bf16 %v595, %v595
  %612 = vst [vmem:[%s5] sm:$0xf] %v596
  %613 = vst [vmem:[%s5 + $0x4] sm:$0xf] %v597
  %614 = vst [vmem:[%s5 + $0x8] sm:$0xf] %v598
  %615 = vst [vmem:[%s5 + $0xc] sm:$0xf] %v599
  %616 = vst [vmem:[%s5 + $0x10] sm:$0xf] %v600
  %617 = vst [vmem:[%s5 + $0x14] sm:$0xf] %v601
  %618 = vst [vmem:[%s5 + $0x18] sm:$0xf] %v602
  %619 = vst [vmem:[%s5 + $0x1c] sm:$0xf] %v603
  %620 = vst [vmem:[%s5 + $0x20] sm:$0xf] %v604
  %621 = vst [vmem:[%s5 + $0x24] sm:$0xf] %v605
  %622 = vst [vmem:[%s5 + $0x28] sm:$0xf] %v606
  %623 = vst [vmem:[%s5 + $0x2c] sm:$0xf] %v607
  %624 = vst [vmem:[%s5 + $0x30] sm:$0xf] %v608
  %625 = vst [vmem:[%s5 + $0x34] sm:$0xf] %v609
  %626 = vst [vmem:[%s5 + $0x38] sm:$0xf] %v610
  %627 = vst [vmem:[%s5 + $0x3c] sm:$0xf] %v611
  // Predicated region
  $region22: #{_lambda_.18} parent=0 // pred_check
    _
  $region23: #{_lambda_.18} parent=0 // pred_check_branch
    %629 = sbr.rel (0) target = $region25
  $region24: #{_lambda_.18} parent=0 // pred_region
    _
  $region25: #{_lambda_.18} parent=0 // pred_fallthru
    _
  // Predicated region
  $region26: #{_lambda_.18} parent=0 // pred_check
    _
  $region27: #{_lambda_.18} parent=0 // pred_check_branch
    %631 = sbr.rel (0) target = $region29
  $region28: #{_lambda_.18} parent=0 // pred_region
    _
  $region29: #{_lambda_.18} parent=0 // pred_fallthru
    _

// kernel: _lambda_.14
$region0: #{_lambda_.14}
  #allocation0 [shape = 'u32[]', space=smem, size = 0x4, offset = 0x4, fixed_abs, tag = 'smem constant byte address 0x4 - core index']
  #allocation1 [shape = 'u32[72,128]{1,0:T(1,128)}', space=vmem, size = 0x9000, scoped, tag = 'internal scratch']
  #allocation2 [shape = 'f32[128,128]{1,0:T(8,128)}', space=vmem, size = 0x10000, scoped, tag = 'scratch operand']
  %s0 = inlined_call_operand.vmem [shape: bf16[128,128], index: 0, kind: input, shape index: {}]
  %s1 = inlined_call_operand.vmem [shape: bf16[128,256], index: 1, kind: input, shape index: {}]
  %s2 = inlined_call_operand.vmem [shape: f32[1,256], index: 2, kind: input, shape index: {}]
  %s3 = inlined_call_operand.vmem [shape: bf16[256,128], index: 3, kind: input, shape index: {}]
  %s4 = inlined_call_operand.vmem [shape: f32[1,128], index: 4, kind: input, shape index: {}, may-alias: {4,6}]
  %s5 = inlined_call_operand.vmem [shape: f32[1,128], index: 5, kind: input, shape index: {}]
  %s6 = inlined_call_operand.vmem [shape: f32[1,128], index: 6, kind: input, shape index: {}, may-alias: {4,6}]
  %s7 = inlined_call_operand.vmem [shape: bf16[128,128], index: 7, kind: output, shape index: {}]
  %s8 = sld [smem:[#allocation0]]
  $region46: #{_lambda_.14} parent=0
    _
  %s10 = ssub.s32 1, %s8
  %s11 = scalar_select 0, %s10, %s8
  // Predicated region
  $region2: #{_lambda_.14} parent=0 // pred_check
    _
  $region3: #{_lambda_.14} parent=0 // pred_check_branch
    %13 = sbr.rel (0) target = $region5
  $region4: #{_lambda_.14} parent=0 // pred_region
    _
  $region5: #{_lambda_.14} parent=0 // pred_fallthru
    _
  // Predicated region
  $region6: #{_lambda_.14} parent=0 // pred_check
    _
  $region7: #{_lambda_.14} parent=0 // pred_check_branch
    %15 = sbr.rel (0) target = $region9
  $region8: #{_lambda_.14} parent=0 // pred_region
    _
  $region9: #{_lambda_.14} parent=0 // pred_fallthru
    _
  // Predicated region
  $region10: #{_lambda_.14} parent=0 // pred_check
    _
  $region11: #{_lambda_.14} parent=0 // pred_check_branch
    %17 = sbr.rel (0) target = $region13
  $region12: #{_lambda_.14} parent=0 // pred_region
    _
  $region13: #{_lambda_.14} parent=0 // pred_fallthru
    _
  // Predicated region
  $region14: #{_lambda_.14} parent=0 // pred_check
    _
  $region15: #{_lambda_.14} parent=0 // pred_check_branch
    %19 = sbr.rel (0) target = $region17
  $region16: #{_lambda_.14} parent=0 // pred_region
    _
  $region17: #{_lambda_.14} parent=0 // pred_fallthru
    _
  // Predicated region
  $region18: #{_lambda_.14} parent=0 // pred_check
    _
  $region19: #{_lambda_.14} parent=0 // pred_check_branch
    %21 = sbr.rel (0) target = $region21
  $region20: #{_lambda_.14} parent=0 // pred_region
    _
  $region21: #{_lambda_.14} parent=0 // pred_fallthru
    _
  // Predicated region
  $region22: #{_lambda_.14} parent=0 // pred_check
    _
  $region23: #{_lambda_.14} parent=0 // pred_check_branch
    %23 = sbr.rel (0) target = $region25
  $region24: #{_lambda_.14} parent=0 // pred_region
    _
  $region25: #{_lambda_.14} parent=0 // pred_fallthru
    _
  // Predicated region
  $region26: #{_lambda_.14} parent=0 // pred_check
    _
  $region27: #{_lambda_.14} parent=0 // pred_check_branch
    %25 = sbr.rel (0) target = $region29
  $region28: #{_lambda_.14} parent=0 // pred_region
    _
  $region29: #{_lambda_.14} parent=0 // pred_fallthru
    _
  %p26 = scmp.eq.s32.totalorder 0, 0
  // Predicated region
  $region30: #{_lambda_.14} parent=0 // pred_check
    %p27 = pneg %p26
  $region31: #{_lambda_.14} parent=0 // pred_check_branch
    %29 = sbr.rel (%p27) target = $region33
  $region32: #{_lambda_.14} parent=0 // pred_region
    %30 = vst [vmem:[#allocation2] sm:$0xff] 0.0
    %31 = vst [vmem:[#allocation2 + $0x8] sm:$0xff] 0.0
    %32 = vst [vmem:[#allocation2 + $0x10] sm:$0xff] 0.0
    %33 = vst [vmem:[#allocation2 + $0x18] sm:$0xff] 0.0
    %34 = vst [vmem:[#allocation2 + $0x20] sm:$0xff] 0.0
    %35 = vst [vmem:[#allocation2 + $0x28] sm:$0xff] 0.0
    %36 = vst [vmem:[#allocation2 + $0x30] sm:$0xff] 0.0
    %37 = vst [vmem:[#allocation2 + $0x38] sm:$0xff] 0.0
    %38 = vst [vmem:[#allocation2 + $0x40] sm:$0xff] 0.0
    %39 = vst [vmem:[#allocation2 + $0x48] sm:$0xff] 0.0
    %40 = vst [vmem:[#allocation2 + $0x50] sm:$0xff] 0.0
    %41 = vst [vmem:[#allocation2 + $0x58] sm:$0xff] 0.0
    %42 = vst [vmem:[#allocation2 + $0x60] sm:$0xff] 0.0
    %43 = vst [vmem:[#allocation2 + $0x68] sm:$0xff] 0.0
    %44 = vst [vmem:[#allocation2 + $0x70] sm:$0xff] 0.0
    %45 = vst [vmem:[#allocation2 + $0x78] sm:$0xff] 0.0
  $region33: #{_lambda_.14} parent=0 // pred_fallthru
    _
  %v46 = vld [vmem:[%s0] sm:$0xf]
  %v47 = vld [vmem:[%s0 + $0x4] sm:$0xf]
  %v48 = vld [vmem:[%s0 + $0x8] sm:$0xf]
  %v49 = vld [vmem:[%s0 + $0xc] sm:$0xf]
  %v50 = vld [vmem:[%s0 + $0x10] sm:$0xf]
  %v51 = vld [vmem:[%s0 + $0x14] sm:$0xf]
  %v52 = vld [vmem:[%s0 + $0x18] sm:$0xf]
  %v53 = vld [vmem:[%s0 + $0x1c] sm:$0xf]
  %v54 = vld [vmem:[%s0 + $0x20] sm:$0xf]
  %v55 = vld [vmem:[%s0 + $0x24] sm:$0xf]
  %v56 = vld [vmem:[%s0 + $0x28] sm:$0xf]
  %v57 = vld [vmem:[%s0 + $0x2c] sm:$0xf]
  %v58 = vld [vmem:[%s0 + $0x30] sm:$0xf]
  %v59 = vld [vmem:[%s0 + $0x34] sm:$0xf]
  %v60 = vld [vmem:[%s0 + $0x38] sm:$0xf]
  %v61 = vld [vmem:[%s0 + $0x3c] sm:$0xf]
  %v62 = vld [vmem:[%s1] sm:$0xff]
  %v63 = vld [vmem:[%s1 + $0x8] sm:$0xff]
  %v64 = vld [vmem:[%s1 + $0x10] sm:$0xff]
  %v65 = vld [vmem:[%s1 + $0x18] sm:$0xff]
  %v66 = vld [vmem:[%s1 + $0x20] sm:$0xff]
  %v67 = vld [vmem:[%s1 + $0x28] sm:$0xff]
  %v68 = vld [vmem:[%s1 + $0x30] sm:$0xff]
  %v69 = vld [vmem:[%s1 + $0x38] sm:$0xff]
  %v70 = vld [vmem:[%s1 + $0x40] sm:$0xff]
  %v71 = vld [vmem:[%s1 + $0x48] sm:$0xff]
  %v72 = vld [vmem:[%s1 + $0x50] sm:$0xff]
  %v73 = vld [vmem:[%s1 + $0x58] sm:$0xff]
  %v74 = vld [vmem:[%s1 + $0x60] sm:$0xff]
  %v75 = vld [vmem:[%s1 + $0x68] sm:$0xff]
  %v76 = vld [vmem:[%s1 + $0x70] sm:$0xff]
  %v77 = vld [vmem:[%s1 + $0x78] sm:$0xff]
  %v78 = vld [vmem:[%s2] sm:$0x3]
  %v80 = vperm.slane %v78, 0
  %v81 = vperm.slane %v78, 1
  %v100 = vunpack.c.l.b16 %v46
  %v101 = vunpack.c.l.b16 %v47
  %v102 = vunpack.c.l.b16 %v48
  %v103 = vunpack.c.l.b16 %v49
  %v104 = vunpack.c.l.b16 %v50
  %v105 = vunpack.c.l.b16 %v51
  %v106 = vunpack.c.l.b16 %v52
  %v107 = vunpack.c.l.b16 %v53
  %v108 = vunpack.c.l.b16 %v54
  %v109 = vunpack.c.l.b16 %v55
  %v110 = vunpack.c.l.b16 %v56
  %v111 = vunpack.c.l.b16 %v57
  %v112 = vunpack.c.l.b16 %v58
  %v113 = vunpack.c.l.b16 %v59
  %v114 = vunpack.c.l.b16 %v60
  %v115 = vunpack.c.l.b16 %v61
  %v116 = vpack.c.b16 %v101, %v100
  %v117 = vpack.c.b16 %v103, %v102
  %v118 = vpack.c.b16 %v105, %v104
  %v119 = vpack.c.b16 %v107, %v106
  %v120 = vpack.c.b16 %v109, %v108
  %v121 = vpack.c.b16 %v111, %v110
  %v122 = vpack.c.b16 %v113, %v112
  %v123 = vpack.c.b16 %v115, %v114
  %v148 = vunpack.c.l.b16 %v62
  %v149 = vunpack.c.h.b16 %v62
  %v150 = vunpack.c.l.b16 %v63
  %v151 = vunpack.c.h.b16 %v63
  %v152 = vunpack.c.l.b16 %v64
  %v153 = vunpack.c.h.b16 %v64
  %v154 = vunpack.c.l.b16 %v65
  %v155 = vunpack.c.h.b16 %v65
  %v156 = vunpack.c.l.b16 %v66
  %v157 = vunpack.c.h.b16 %v66
  %v158 = vunpack.c.l.b16 %v67
  %v159 = vunpack.c.h.b16 %v67
  %v160 = vunpack.c.l.b16 %v68
  %v161 = vunpack.c.h.b16 %v68
  %v162 = vunpack.c.l.b16 %v69
  %v163 = vunpack.c.h.b16 %v69
  %v164 = vunpack.c.l.b16 %v70
  %v165 = vunpack.c.h.b16 %v70
  %v166 = vunpack.c.l.b16 %v71
  %v167 = vunpack.c.h.b16 %v71
  %v168 = vunpack.c.l.b16 %v72
  %v169 = vunpack.c.h.b16 %v72
  %v170 = vunpack.c.l.b16 %v73
  %v171 = vunpack.c.h.b16 %v73
  %v172 = vunpack.c.l.b16 %v74
  %v173 = vunpack.c.h.b16 %v74
  %v174 = vunpack.c.l.b16 %v75
  %v175 = vunpack.c.h.b16 %v75
  %v176 = vunpack.c.l.b16 %v76
  %v177 = vunpack.c.h.b16 %v76
  %v178 = vunpack.c.l.b16 %v77
  %v179 = vunpack.c.h.b16 %v77
  %v180 = vpack.c.b16 %v150, %v148
  %v181 = vpack.c.b16 %v151, %v149
  %v182 = vpack.c.b16 %v154, %v152
  %v183 = vpack.c.b16 %v155, %v153
  %v184 = vpack.c.b16 %v158, %v156
  %v185 = vpack.c.b16 %v159, %v157
  %v186 = vpack.c.b16 %v162, %v160
  %v187 = vpack.c.b16 %v163, %v161
  %v188 = vpack.c.b16 %v166, %v164
  %v189 = vpack.c.b16 %v167, %v165
  %v190 = vpack.c.b16 %v170, %v168
  %v191 = vpack.c.b16 %v171, %v169
  %v192 = vpack.c.b16 %v174, %v172
  %v193 = vpack.c.b16 %v175, %v173
  %v194 = vpack.c.b16 %v178, %v176
  %v195 = vpack.c.b16 %v179, %v177
  %212 = vmatpush.bf16.msra.mxu0 %v194
  %213 = vmatpush.bf16.msra.mxu0 %v192
  %214 = vmatpush.bf16.msra.mxu0 %v190
  %215 = vmatpush.bf16.msra.mxu0 %v188
  %216 = vmatpush.bf16.msra.mxu0 %v186
  %217 = vmatpush.bf16.msra.mxu0 %v184
  %218 = vmatpush.bf16.msra.mxu0 %v182
  %219 = vmatpush.bf16.msra.mxu0 %v180
  %220 = vmatmul.bf16.gmra.mxu0 %v116
  %v221 = vpop.f32.mrf.mxu0
  %v222 = vadd.f32 %v80, %v221
  %v223 = vpop.f32.mrf.mxu0
  %v224 = vadd.f32 %v80, %v223
  %225 = vmatmul.bf16.gmra.mxu0 %v117
  %v226 = vpop.f32.mrf.mxu0
  %v227 = vadd.f32 %v80, %v226
  %v228 = vpop.f32.mrf.mxu0
  %v229 = vadd.f32 %v80, %v228
  %230 = vmatmul.bf16.gmra.mxu0 %v118
  %v231 = vpop.f32.mrf.mxu0
  %v232 = vadd.f32 %v80, %v231
  %v233 = vpop.f32.mrf.mxu0
  %v234 = vadd.f32 %v80, %v233
  %235 = vmatmul.bf16.gmra.mxu0 %v119
  %v236 = vpop.f32.mrf.mxu0
  %v237 = vadd.f32 %v80, %v236
  %v238 = vpop.f32.mrf.mxu0
  %v239 = vadd.f32 %v80, %v238
  %240 = vmatmul.bf16.gmra.mxu0 %v120
  %v241 = vpop.f32.mrf.mxu0
  %v242 = vadd.f32 %v80, %v241
  %v243 = vpop.f32.mrf.mxu0
  %v244 = vadd.f32 %v80, %v243
  %245 = vmatmul.bf16.gmra.mxu0 %v121
  %v246 = vpop.f32.mrf.mxu0
  %v247 = vadd.f32 %v80, %v246
  %v248 = vpop.f32.mrf.mxu0
  %v249 = vadd.f32 %v80, %v248
  %250 = vmatmul.bf16.gmra.mxu0 %v122
  %v251 = vpop.f32.mrf.mxu0
  %v252 = vadd.f32 %v80, %v251
  %v253 = vpop.f32.mrf.mxu0
  %v254 = vadd.f32 %v80, %v253
  %255 = vmatmul.bf16.gmra.mxu0 %v123
  %v256 = vpop.f32.mrf.mxu0
  %v257 = vadd.f32 %v80, %v256
  %v258 = vpop.f32.mrf.mxu0
  %v259 = vadd.f32 %v80, %v258
  %260 = vdwg.mxu0
  %261 = vmatpush.bf16.msra.mxu0 %v195
  %262 = vmatpush.bf16.msra.mxu0 %v193
  %263 = vmatpush.bf16.msra.mxu0 %v191
  %264 = vmatpush.bf16.msra.mxu0 %v189
  %265 = vmatpush.bf16.msra.mxu0 %v187
  %266 = vmatpush.bf16.msra.mxu0 %v185
  %267 = vmatpush.bf16.msra.mxu0 %v183
  %268 = vmatpush.bf16.msra.mxu0 %v181
  %269 = vmatmul.bf16.gmra.mxu0 %v116
  %v270 = vpop.f32.mrf.mxu0
  %v271 = vadd.f32 %v81, %v270
  %v272 = vpop.f32.mrf.mxu0
  %v273 = vadd.f32 %v81, %v272
  %274 = vmatmul.bf16.gmra.mxu0 %v117
  %v275 = vpop.f32.mrf.mxu0
  %v276 = vadd.f32 %v81, %v275
  %v277 = vpop.f32.mrf.mxu0
  %v278 = vadd.f32 %v81, %v277
  %279 = vmatmul.bf16.gmra.mxu0 %v118
  %v280 = vpop.f32.mrf.mxu0
  %v281 = vadd.f32 %v81, %v280
  %v282 = vpop.f32.mrf.mxu0
  %v283 = vadd.f32 %v81, %v282
  %284 = vmatmul.bf16.gmra.mxu0 %v119
  %v285 = vpop.f32.mrf.mxu0
  %v286 = vadd.f32 %v81, %v285
  %v287 = vpop.f32.mrf.mxu0
  %v288 = vadd.f32 %v81, %v287
  %289 = vmatmul.bf16.gmra.mxu0 %v120
  %v290 = vpop.f32.mrf.mxu0
  %v291 = vadd.f32 %v81, %v290
  %v292 = vpop.f32.mrf.mxu0
  %v293 = vadd.f32 %v81, %v292
  %294 = vmatmul.bf16.gmra.mxu0 %v121
  %v295 = vpop.f32.mrf.mxu0
  %v296 = vadd.f32 %v81, %v295
  %v297 = vpop.f32.mrf.mxu0
  %v298 = vadd.f32 %v81, %v297
  %299 = vmatmul.bf16.gmra.mxu0 %v122
  %v300 = vpop.f32.mrf.mxu0
  %v301 = vadd.f32 %v81, %v300
  %v302 = vpop.f32.mrf.mxu0
  %v303 = vadd.f32 %v81, %v302
  %304 = vmatmul.bf16.gmra.mxu0 %v123
  %v305 = vpop.f32.mrf.mxu0
  %v306 = vadd.f32 %v81, %v305
  %v307 = vpop.f32.mrf.mxu0
  %v308 = vadd.f32 %v81, %v307
  %309 = vdwg.mxu0
  %v310 = vmul.f32 %v222, %v222
  %v311 = vmul.f32 %v271, %v271
  %v312 = vmul.f32 %v224, %v224
  %v313 = vmul.f32 %v273, %v273
  %v314 = vmul.f32 %v227, %v227
  %v315 = vmul.f32 %v276, %v276
  %v316 = vmul.f32 %v229, %v229
  %v317 = vmul.f32 %v278, %v278
  %v318 = vmul.f32 %v232, %v232
  %v319 = vmul.f32 %v281, %v281
  %v320 = vmul.f32 %v234, %v234
  %v321 = vmul.f32 %v283, %v283
  %v322 = vmul.f32 %v237, %v237
  %v323 = vmul.f32 %v286, %v286
  %v324 = vmul.f32 %v239, %v239
  %v325 = vmul.f32 %v288, %v288
  %v326 = vmul.f32 %v242, %v242
  %v327 = vmul.f32 %v291, %v291
  %v328 = vmul.f32 %v244, %v244
  %v329 = vmul.f32 %v293, %v293
  %v330 = vmul.f32 %v247, %v247
  %v331 = vmul.f32 %v296, %v296
  %v332 = vmul.f32 %v249, %v249
  %v333 = vmul.f32 %v298, %v298
  %v334 = vmul.f32 %v252, %v252
  %v335 = vmul.f32 %v301, %v301
  %v336 = vmul.f32 %v254, %v254
  %v337 = vmul.f32 %v303, %v303
  %v338 = vmul.f32 %v257, %v257
  %v339 = vmul.f32 %v306, %v306
  %v340 = vmul.f32 %v259, %v259
  %v341 = vmul.f32 %v308, %v308
  %v342 = vmul.f32 %v222, %v310
  %v343 = vmul.f32 %v271, %v311
  %v344 = vmul.f32 %v224, %v312
  %v345 = vmul.f32 %v273, %v313
  %v346 = vmul.f32 %v227, %v314
  %v347 = vmul.f32 %v276, %v315
  %v348 = vmul.f32 %v229, %v316
  %v349 = vmul.f32 %v278, %v317
  %v350 = vmul.f32 %v232, %v318
  %v351 = vmul.f32 %v281, %v319
  %v352 = vmul.f32 %v234, %v320
  %v353 = vmul.f32 %v283, %v321
  %v354 = vmul.f32 %v237, %v322
  %v355 = vmul.f32 %v286, %v323
  %v356 = vmul.f32 %v239, %v324
  %v357 = vmul.f32 %v288, %v325
  %v358 = vmul.f32 %v242, %v326
  %v359 = vmul.f32 %v291, %v327
  %v360 = vmul.f32 %v244, %v328
  %v361 = vmul.f32 %v293, %v329
  %v362 = vmul.f32 %v247, %v330
  %v363 = vmul.f32 %v296, %v331
  %v364 = vmul.f32 %v249, %v332
  %v365 = vmul.f32 %v298, %v333
  %v366 = vmul.f32 %v252, %v334
  %v367 = vmul.f32 %v301, %v335
  %v368 = vmul.f32 %v254, %v336
  %v369 = vmul.f32 %v303, %v337
  %v370 = vmul.f32 %v257, %v338
  %v371 = vmul.f32 %v306, %v339
  %v372 = vmul.f32 %v259, %v340
  %v373 = vmul.f32 %v308, %v341
  %v374 = vmul.f32 %v342, 0.044715
  %v375 = vmul.f32 %v343, 0.044715
  %v376 = vmul.f32 %v344, 0.044715
  %v377 = vmul.f32 %v345, 0.044715
  %v378 = vmul.f32 %v346, 0.044715
  %v379 = vmul.f32 %v347, 0.044715
  %v380 = vmul.f32 %v348, 0.044715
  %v381 = vmul.f32 %v349, 0.044715
  %v382 = vmul.f32 %v350, 0.044715
  %v383 = vmul.f32 %v351, 0.044715
  %v384 = vmul.f32 %v352, 0.044715
  %v385 = vmul.f32 %v353, 0.044715
  %v386 = vmul.f32 %v354, 0.044715
  %v387 = vmul.f32 %v355, 0.044715
  %v388 = vmul.f32 %v356, 0.044715
  %v389 = vmul.f32 %v357, 0.044715
  %v390 = vmul.f32 %v358, 0.044715
  %v391 = vmul.f32 %v359, 0.044715
  %v392 = vmul.f32 %v360, 0.044715
  %v393 = vmul.f32 %v361, 0.044715
  %v394 = vmul.f32 %v362, 0.044715
  %v395 = vmul.f32 %v363, 0.044715
  %v396 = vmul.f32 %v364, 0.044715
  %v397 = vmul.f32 %v365, 0.044715
  %v398 = vmul.f32 %v366, 0.044715
  %v399 = vmul.f32 %v367, 0.044715
  %v400 = vmul.f32 %v368, 0.044715
  %v401 = vmul.f32 %v369, 0.044715
  %v402 = vmul.f32 %v370, 0.044715
  %v403 = vmul.f32 %v371, 0.044715
  %v404 = vmul.f32 %v372, 0.044715
  %v405 = vmul.f32 %v373, 0.044715
  %v406 = vadd.f32 %v222, %v374
  %v407 = vadd.f32 %v271, %v375
  %v408 = vadd.f32 %v224, %v376
  %v409 = vadd.f32 %v273, %v377
  %v410 = vadd.f32 %v227, %v378
  %v411 = vadd.f32 %v276, %v379
  %v412 = vadd.f32 %v229, %v380
  %v413 = vadd.f32 %v278, %v381
  %v414 = vadd.f32 %v232, %v382
  %v415 = vadd.f32 %v281, %v383
  %v416 = vadd.f32 %v234, %v384
  %v417 = vadd.f32 %v283, %v385
  %v418 = vadd.f32 %v237, %v386
  %v419 = vadd.f32 %v286, %v387
  %v420 = vadd.f32 %v239, %v388
  %v421 = vadd.f32 %v288, %v389
  %v422 = vadd.f32 %v242, %v390
  %v423 = vadd.f32 %v291, %v391
  %v424 = vadd.f32 %v244, %v392
  %v425 = vadd.f32 %v293, %v393
  %v426 = vadd.f32 %v247, %v394
  %v427 = vadd.f32 %v296, %v395
  %v428 = vadd.f32 %v249, %v396
  %v429 = vadd.f32 %v298, %v397
  %v430 = vadd.f32 %v252, %v398
  %v431 = vadd.f32 %v301, %v399
  %v432 = vadd.f32 %v254, %v400
  %v433 = vadd.f32 %v303, %v401
  %v434 = vadd.f32 %v257, %v402
  %v435 = vadd.f32 %v306, %v403
  %v436 = vadd.f32 %v259, %v404
  %v437 = vadd.f32 %v308, %v405
  %v438 = vmul.f32 %v406, 0.7978846
  %v439 = vmul.f32 %v407, 0.7978846
  %v440 = vmul.f32 %v408, 0.7978846
  %v441 = vmul.f32 %v409, 0.7978846
  %v442 = vmul.f32 %v410, 0.7978846
  %v443 = vmul.f32 %v411, 0.7978846
  %v444 = vmul.f32 %v412, 0.7978846
  %v445 = vmul.f32 %v413, 0.7978846
  %v446 = vmul.f32 %v414, 0.7978846
  %v447 = vmul.f32 %v415, 0.7978846
  %v448 = vmul.f32 %v416, 0.7978846
  %v449 = vmul.f32 %v417, 0.7978846
  %v450 = vmul.f32 %v418, 0.7978846
  %v451 = vmul.f32 %v419, 0.7978846
  %v452 = vmul.f32 %v420, 0.7978846
  %v453 = vmul.f32 %v421, 0.7978846
  %v454 = vmul.f32 %v422, 0.7978846
  %v455 = vmul.f32 %v423, 0.7978846
  %v456 = vmul.f32 %v424, 0.7978846
  %v457 = vmul.f32 %v425, 0.7978846
  %v458 = vmul.f32 %v426, 0.7978846
  %v459 = vmul.f32 %v427, 0.7978846
  %v460 = vmul.f32 %v428, 0.7978846
  %v461 = vmul.f32 %v429, 0.7978846
  %v462 = vmul.f32 %v430, 0.7978846
  %v463 = vmul.f32 %v431, 0.7978846
  %v464 = vmul.f32 %v432, 0.7978846
  %v465 = vmul.f32 %v433, 0.7978846
  %v466 = vmul.f32 %v434, 0.7978846
  %v467 = vmul.f32 %v435, 0.7978846
  %v468 = vmul.f32 %v436, 0.7978846
  %v469 = vmul.f32 %v437, 0.7978846
  %v470 = vtanh.pop %v438
  %v471 = vtanh.pop %v439
  %v472 = vtanh.pop %v440
  %v473 = vtanh.pop %v441
  %v474 = vtanh.pop %v442
  %v475 = vtanh.pop %v443
  %v476 = vtanh.pop %v444
  %v477 = vtanh.pop %v445
  %v478 = vtanh.pop %v446
  %v479 = vtanh.pop %v447
  %v480 = vtanh.pop %v448
  %v481 = vtanh.pop %v449
  %v482 = vtanh.pop %v450
  %v483 = vtanh.pop %v451
  %v484 = vtanh.pop %v452
  %v485 = vtanh.pop %v453
  %v486 = vtanh.pop %v454
  %v487 = vtanh.pop %v455
  %v488 = vtanh.pop %v456
  %v489 = vtanh.pop %v457
  %v490 = vtanh.pop %v458
  %v491 = vtanh.pop %v459
  %v492 = vtanh.pop %v460
  %v493 = vtanh.pop %v461
  %v494 = vtanh.pop %v462
  %v495 = vtanh.pop %v463
  %v496 = vtanh.pop %v464
  %v497 = vtanh.pop %v465
  %v498 = vtanh.pop %v466
  %v499 = vtanh.pop %v467
  %v500 = vtanh.pop %v468
  %v501 = vtanh.pop %v469
  %v502 = vadd.f32 %v470, 1.0
  %v503 = vadd.f32 %v471, 1.0
  %v504 = vadd.f32 %v472, 1.0
  %v505 = vadd.f32 %v473, 1.0
  %v506 = vadd.f32 %v474, 1.0
  %v507 = vadd.f32 %v475, 1.0
  %v508 = vadd.f32 %v476, 1.0
  %v509 = vadd.f32 %v477, 1.0
  %v510 = vadd.f32 %v478, 1.0
  %v511 = vadd.f32 %v479, 1.0
  %v512 = vadd.f32 %v480, 1.0
  %v513 = vadd.f32 %v481, 1.0
  %v514 = vadd.f32 %v482, 1.0
  %v515 = vadd.f32 %v483, 1.0
  %v516 = vadd.f32 %v484, 1.0
  %v517 = vadd.f32 %v485, 1.0
  %v518 = vadd.f32 %v486, 1.0
  %v519 = vadd.f32 %v487, 1.0
  %v520 = vadd.f32 %v488, 1.0
  %v521 = vadd.f32 %v489, 1.0
  %v522 = vadd.f32 %v490, 1.0
  %v523 = vadd.f32 %v491, 1.0
  %v524 = vadd.f32 %v492, 1.0
  %v525 = vadd.f32 %v493, 1.0
  %v526 = vadd.f32 %v494, 1.0
  %v527 = vadd.f32 %v495, 1.0
  %v528 = vadd.f32 %v496, 1.0
  %v529 = vadd.f32 %v497, 1.0
  %v530 = vadd.f32 %v498, 1.0
  %v531 = vadd.f32 %v499, 1.0
  %v532 = vadd.f32 %v500, 1.0
  %v533 = vadd.f32 %v501, 1.0
  %v534 = vmul.f32 %v502, 0.5
  %v535 = vmul.f32 %v503, 0.5
  %v536 = vmul.f32 %v504, 0.5
  %v537 = vmul.f32 %v505, 0.5
  %v538 = vmul.f32 %v506, 0.5
  %v539 = vmul.f32 %v507, 0.5
  %v540 = vmul.f32 %v508, 0.5
  %v541 = vmul.f32 %v509, 0.5
  %v542 = vmul.f32 %v510, 0.5
  %v543 = vmul.f32 %v511, 0.5
  %v544 = vmul.f32 %v512, 0.5
  %v545 = vmul.f32 %v513, 0.5
  %v546 = vmul.f32 %v514, 0.5
  %v547 = vmul.f32 %v515, 0.5
  %v548 = vmul.f32 %v516, 0.5
  %v549 = vmul.f32 %v517, 0.5
  %v550 = vmul.f32 %v518, 0.5
  %v551 = vmul.f32 %v519, 0.5
  %v552 = vmul.f32 %v520, 0.5
  %v553 = vmul.f32 %v521, 0.5
  %v554 = vmul.f32 %v522, 0.5
  %v555 = vmul.f32 %v523, 0.5
  %v556 = vmul.f32 %v524, 0.5
  %v557 = vmul.f32 %v525, 0.5
  %v558 = vmul.f32 %v526, 0.5
  %v559 = vmul.f32 %v527, 0.5
  %v560 = vmul.f32 %v528, 0.5
  %v561 = vmul.f32 %v529, 0.5
  %v562 = vmul.f32 %v530, 0.5
  %v563 = vmul.f32 %v531, 0.5
  %v564 = vmul.f32 %v532, 0.5
  %v565 = vmul.f32 %v533, 0.5
  %v566 = vmul.f32 %v222, %v534
  %v567 = vmul.f32 %v271, %v535
  %v568 = vmul.f32 %v224, %v536
  %v569 = vmul.f32 %v273, %v537
  %v570 = vmul.f32 %v227, %v538
  %v571 = vmul.f32 %v276, %v539
  %v572 = vmul.f32 %v229, %v540
  %v573 = vmul.f32 %v278, %v541
  %v574 = vmul.f32 %v232, %v542
  %v575 = vmul.f32 %v281, %v543
  %v576 = vmul.f32 %v234, %v544
  %v577 = vmul.f32 %v283, %v545
  %v578 = vmul.f32 %v237, %v546
  %v579 = vmul.f32 %v286, %v547
  %v580 = vmul.f32 %v239, %v548
  %v581 = vmul.f32 %v288, %v549
  %v582 = vmul.f32 %v242, %v550
  %v583 = vmul.f32 %v291, %v551
  %v584 = vmul.f32 %v244, %v552
  %v585 = vmul.f32 %v293, %v553
  %v586 = vmul.f32 %v247, %v554
  %v587 = vmul.f32 %v296, %v555
  %v588 = vmul.f32 %v249, %v556
  %v589 = vmul.f32 %v298, %v557
  %v590 = vmul.f32 %v252, %v558
  %v591 = vmul.f32 %v301, %v559
  %v592 = vmul.f32 %v254, %v560
  %v593 = vmul.f32 %v303, %v561
  %v594 = vmul.f32 %v257, %v562
  %v595 = vmul.f32 %v306, %v563
  %v596 = vmul.f32 %v259, %v564
  %v597 = vmul.f32 %v308, %v565
  %v598 = vld [vmem:[#allocation2] sm:$0xff]
  %v599 = vld [vmem:[#allocation2 + $0x8] sm:$0xff]
  %v600 = vld [vmem:[#allocation2 + $0x10] sm:$0xff]
  %v601 = vld [vmem:[#allocation2 + $0x18] sm:$0xff]
  %v602 = vld [vmem:[#allocation2 + $0x20] sm:$0xff]
  %v603 = vld [vmem:[#allocation2 + $0x28] sm:$0xff]
  %v604 = vld [vmem:[#allocation2 + $0x30] sm:$0xff]
  %v605 = vld [vmem:[#allocation2 + $0x38] sm:$0xff]
  %v606 = vld [vmem:[#allocation2 + $0x40] sm:$0xff]
  %v607 = vld [vmem:[#allocation2 + $0x48] sm:$0xff]
  %v608 = vld [vmem:[#allocation2 + $0x50] sm:$0xff]
  %v609 = vld [vmem:[#allocation2 + $0x58] sm:$0xff]
  %v610 = vld [vmem:[#allocation2 + $0x60] sm:$0xff]
  %v611 = vld [vmem:[#allocation2 + $0x68] sm:$0xff]
  %v612 = vld [vmem:[#allocation2 + $0x70] sm:$0xff]
  %v613 = vld [vmem:[#allocation2 + $0x78] sm:$0xff]
  %v614 = vpack.c.bf16 %v568, %v566
  %v615 = vpack.c.bf16 %v569, %v567
  %v616 = vpack.c.bf16 %v572, %v570
  %v617 = vpack.c.bf16 %v573, %v571
  %v618 = vpack.c.bf16 %v576, %v574
  %v619 = vpack.c.bf16 %v577, %v575
  %v620 = vpack.c.bf16 %v580, %v578
  %v621 = vpack.c.bf16 %v581, %v579
  %v622 = vpack.c.bf16 %v584, %v582
  %v623 = vpack.c.bf16 %v585, %v583
  %v624 = vpack.c.bf16 %v588, %v586
  %v625 = vpack.c.bf16 %v589, %v587
  %v626 = vpack.c.bf16 %v592, %v590
  %v627 = vpack.c.bf16 %v593, %v591
  %v628 = vpack.c.bf16 %v596, %v594
  %v629 = vpack.c.bf16 %v597, %v595
  %v630 = vld [vmem:[%s3] sm:$0xf]
  %v631 = vld [vmem:[%s3 + $0x4] sm:$0xf]
  %v632 = vld [vmem:[%s3 + $0x8] sm:$0xf]
  %v633 = vld [vmem:[%s3 + $0xc] sm:$0xf]
  %v634 = vld [vmem:[%s3 + $0x10] sm:$0xf]
  %v635 = vld [vmem:[%s3 + $0x14] sm:$0xf]
  %v636 = vld [vmem:[%s3 + $0x18] sm:$0xf]
  %v637 = vld [vmem:[%s3 + $0x1c] sm:$0xf]
  %v638 = vld [vmem:[%s3 + $0x20] sm:$0xf]
  %v639 = vld [vmem:[%s3 + $0x24] sm:$0xf]
  %v640 = vld [vmem:[%s3 + $0x28] sm:$0xf]
  %v641 = vld [vmem:[%s3 + $0x2c] sm:$0xf]
  %v642 = vld [vmem:[%s3 + $0x30] sm:$0xf]
  %v643 = vld [vmem:[%s3 + $0x34] sm:$0xf]
  %v644 = vld [vmem:[%s3 + $0x38] sm:$0xf]
  %v645 = vld [vmem:[%s3 + $0x3c] sm:$0xf]
  %v646 = vld [vmem:[%s3 + $0x40] sm:$0xf]
  %v647 = vld [vmem:[%s3 + $0x44] sm:$0xf]
  %v648 = vld [vmem:[%s3 + $0x48] sm:$0xf]
  %v649 = vld [vmem:[%s3 + $0x4c] sm:$0xf]
  %v650 = vld [vmem:[%s3 + $0x50] sm:$0xf]
  %v651 = vld [vmem:[%s3 + $0x54] sm:$0xf]
  %v652 = vld [vmem:[%s3 + $0x58] sm:$0xf]
  %v653 = vld [vmem:[%s3 + $0x5c] sm:$0xf]
  %v654 = vld [vmem:[%s3 + $0x60] sm:$0xf]
  %v655 = vld [vmem:[%s3 + $0x64] sm:$0xf]
  %v656 = vld [vmem:[%s3 + $0x68] sm:$0xf]
  %v657 = vld [vmem:[%s3 + $0x6c] sm:$0xf]
  %v658 = vld [vmem:[%s3 + $0x70] sm:$0xf]
  %v659 = vld [vmem:[%s3 + $0x74] sm:$0xf]
  %v660 = vld [vmem:[%s3 + $0x78] sm:$0xf]
  %v661 = vld [vmem:[%s3 + $0x7c] sm:$0xf]
  %v694 = vunpack.c.l.b16 %v630
  %v695 = vunpack.c.l.b16 %v631
  %v696 = vunpack.c.l.b16 %v632
  %v697 = vunpack.c.l.b16 %v633
  %v698 = vunpack.c.l.b16 %v634
  %v699 = vunpack.c.l.b16 %v635
  %v700 = vunpack.c.l.b16 %v636
  %v701 = vunpack.c.l.b16 %v637
  %v702 = vunpack.c.l.b16 %v638
  %v703 = vunpack.c.l.b16 %v639
  %v704 = vunpack.c.l.b16 %v640
  %v705 = vunpack.c.l.b16 %v641
  %v706 = vunpack.c.l.b16 %v642
  %v707 = vunpack.c.l.b16 %v643
  %v708 = vunpack.c.l.b16 %v644
  %v709 = vunpack.c.l.b16 %v645
  %v710 = vunpack.c.l.b16 %v646
  %v711 = vunpack.c.l.b16 %v647
  %v712 = vunpack.c.l.b16 %v648
  %v713 = vunpack.c.l.b16 %v649
  %v714 = vunpack.c.l.b16 %v650
  %v715 = vunpack.c.l.b16 %v651
  %v716 = vunpack.c.l.b16 %v652
  %v717 = vunpack.c.l.b16 %v653
  %v718 = vunpack.c.l.b16 %v654
  %v719 = vunpack.c.l.b16 %v655
  %v720 = vunpack.c.l.b16 %v656
  %v721 = vunpack.c.l.b16 %v657
  %v722 = vunpack.c.l.b16 %v658
  %v723 = vunpack.c.l.b16 %v659
  %v724 = vunpack.c.l.b16 %v660
  %v725 = vunpack.c.l.b16 %v661
  %v726 = vpack.c.b16 %v695, %v694
  %v727 = vpack.c.b16 %v697, %v696
  %v728 = vpack.c.b16 %v699, %v698
  %v729 = vpack.c.b16 %v701, %v700
  %v730 = vpack.c.b16 %v703, %v702
  %v731 = vpack.c.b16 %v705, %v704
  %v732 = vpack.c.b16 %v707, %v706
  %v733 = vpack.c.b16 %v709, %v708
  %v734 = vpack.c.b16 %v711, %v710
  %v735 = vpack.c.b16 %v713, %v712
  %v736 = vpack.c.b16 %v715, %v714
  %v737 = vpack.c.b16 %v717, %v716
  %v738 = vpack.c.b16 %v719, %v718
  %v739 = vpack.c.b16 %v721, %v720
  %v740 = vpack.c.b16 %v723, %v722
  %v741 = vpack.c.b16 %v725, %v724
  %758 = vmatpush.bf16.msra.mxu0 %v733
  %759 = vmatpush.bf16.msra.mxu0 %v732
  %760 = vmatpush.bf16.msra.mxu0 %v731
  %761 = vmatpush.bf16.msra.mxu0 %v730
  %762 = vmatpush.bf16.msra.mxu0 %v729
  %763 = vmatpush.bf16.msra.mxu0 %v728
  %764 = vmatpush.bf16.msra.mxu0 %v727
  %765 = vmatpush.bf16.msra.mxu0 %v726
  %766 = vmatmul.bf16.gmra.mxu0 %v614
  %v767 = vpop.f32.mrf.mxu0
  %v768 = vadd.f32 0.0, %v767
  %v769 = vpop.f32.mrf.mxu0
  %v770 = vadd.f32 0.0, %v769
  %771 = vmatmul.bf16.gmra.mxu0 %v616
  %v772 = vpop.f32.mrf.mxu0
  %v773 = vadd.f32 0.0, %v772
  %v774 = vpop.f32.mrf.mxu0
  %v775 = vadd.f32 0.0, %v774
  %776 = vmatmul.bf16.gmra.mxu0 %v618
  %v777 = vpop.f32.mrf.mxu0
  %v778 = vadd.f32 0.0, %v777
  %v779 = vpop.f32.mrf.mxu0
  %v780 = vadd.f32 0.0, %v779
  %781 = vmatmul.bf16.gmra.mxu0 %v620
  %v782 = vpop.f32.mrf.mxu0
  %v783 = vadd.f32 0.0, %v782
  %v784 = vpop.f32.mrf.mxu0
  %v785 = vadd.f32 0.0, %v784
  %786 = vmatmul.bf16.gmra.mxu0 %v622
  %v787 = vpop.f32.mrf.mxu0
  %v788 = vadd.f32 0.0, %v787
  %v789 = vpop.f32.mrf.mxu0
  %v790 = vadd.f32 0.0, %v789
  %791 = vmatmul.bf16.gmra.mxu0 %v624
  %v792 = vpop.f32.mrf.mxu0
  %v793 = vadd.f32 0.0, %v792
  %v794 = vpop.f32.mrf.mxu0
  %v795 = vadd.f32 0.0, %v794
  %796 = vmatmul.bf16.gmra.mxu0 %v626
  %v797 = vpop.f32.mrf.mxu0
  %v798 = vadd.f32 0.0, %v797
  %v799 = vpop.f32.mrf.mxu0
  %v800 = vadd.f32 0.0, %v799
  %801 = vmatmul.bf16.gmra.mxu0 %v628
  %v802 = vpop.f32.mrf.mxu0
  %v803 = vadd.f32 0.0, %v802
  %v804 = vpop.f32.mrf.mxu0
  %v805 = vadd.f32 0.0, %v804
  %806 = vdwg.mxu0
  %807 = vmatpush.bf16.msra.mxu0 %v741
  %808 = vmatpush.bf16.msra.mxu0 %v740
  %809 = vmatpush.bf16.msra.mxu0 %v739
  %810 = vmatpush.bf16.msra.mxu0 %v738
  %811 = vmatpush.bf16.msra.mxu0 %v737
  %812 = vmatpush.bf16.msra.mxu0 %v736
  %813 = vmatpush.bf16.msra.mxu0 %v735
  %814 = vmatpush.bf16.msra.mxu0 %v734
  %815 = vmatmul.bf16.gmra.mxu0 %v615
  %v816 = vpop.f32.mrf.mxu0
  %v817 = vadd.f32 %v768, %v816
  %v818 = vpop.f32.mrf.mxu0
  %v819 = vadd.f32 %v770, %v818
  %820 = vmatmul.bf16.gmra.mxu0 %v617
  %v821 = vpop.f32.mrf.mxu0
  %v822 = vadd.f32 %v773, %v821
  %v823 = vpop.f32.mrf.mxu0
  %v824 = vadd.f32 %v775, %v823
  %825 = vmatmul.bf16.gmra.mxu0 %v619
  %v826 = vpop.f32.mrf.mxu0
  %v827 = vadd.f32 %v778, %v826
  %v828 = vpop.f32.mrf.mxu0
  %v829 = vadd.f32 %v780, %v828
  %830 = vmatmul.bf16.gmra.mxu0 %v621
  %v831 = vpop.f32.mrf.mxu0
  %v832 = vadd.f32 %v783, %v831
  %v833 = vpop.f32.mrf.mxu0
  %v834 = vadd.f32 %v785, %v833
  %835 = vmatmul.bf16.gmra.mxu0 %v623
  %v836 = vpop.f32.mrf.mxu0
  %v837 = vadd.f32 %v788, %v836
  %v838 = vpop.f32.mrf.mxu0
  %v839 = vadd.f32 %v790, %v838
  %840 = vmatmul.bf16.gmra.mxu0 %v625
  %v841 = vpop.f32.mrf.mxu0
  %v842 = vadd.f32 %v793, %v841
  %v843 = vpop.f32.mrf.mxu0
  %v844 = vadd.f32 %v795, %v843
  %845 = vmatmul.bf16.gmra.mxu0 %v627
  %v846 = vpop.f32.mrf.mxu0
  %v847 = vadd.f32 %v798, %v846
  %v848 = vpop.f32.mrf.mxu0
  %v849 = vadd.f32 %v800, %v848
  %850 = vmatmul.bf16.gmra.mxu0 %v629
  %v851 = vpop.f32.mrf.mxu0
  %v852 = vadd.f32 %v803, %v851
  %v853 = vpop.f32.mrf.mxu0
  %v854 = vadd.f32 %v805, %v853
  %855 = vdwg.mxu0
  %v856 = vadd.f32 %v598, %v817
  %v857 = vadd.f32 %v599, %v819
  %v858 = vadd.f32 %v600, %v822
  %v859 = vadd.f32 %v601, %v824
  %v860 = vadd.f32 %v602, %v827
  %v861 = vadd.f32 %v603, %v829
  %v862 = vadd.f32 %v604, %v832
  %v863 = vadd.f32 %v605, %v834
  %v864 = vadd.f32 %v606, %v837
  %v865 = vadd.f32 %v607, %v839
  %v866 = vadd.f32 %v608, %v842
  %v867 = vadd.f32 %v609, %v844
  %v868 = vadd.f32 %v610, %v847
  %v869 = vadd.f32 %v611, %v849
  %v870 = vadd.f32 %v612, %v852
  %v871 = vadd.f32 %v613, %v854
  %872 = vst [vmem:[#allocation2] sm:$0xff] %v856
  %873 = vst [vmem:[#allocation2 + $0x8] sm:$0xff] %v857
  %874 = vst [vmem:[#allocation2 + $0x10] sm:$0xff] %v858
  %875 = vst [vmem:[#allocation2 + $0x18] sm:$0xff] %v859
  %876 = vst [vmem:[#allocation2 + $0x20] sm:$0xff] %v860
  %877 = vst [vmem:[#allocation2 + $0x28] sm:$0xff] %v861
  %878 = vst [vmem:[#allocation2 + $0x30] sm:$0xff] %v862
  %879 = vst [vmem:[#allocation2 + $0x38] sm:$0xff] %v863
  %880 = vst [vmem:[#allocation2 + $0x40] sm:$0xff] %v864
  %881 = vst [vmem:[#allocation2 + $0x48] sm:$0xff] %v865
  %882 = vst [vmem:[#allocation2 + $0x50] sm:$0xff] %v866
  %883 = vst [vmem:[#allocation2 + $0x58] sm:$0xff] %v867
  %884 = vst [vmem:[#allocation2 + $0x60] sm:$0xff] %v868
  %885 = vst [vmem:[#allocation2 + $0x68] sm:$0xff] %v869
  %886 = vst [vmem:[#allocation2 + $0x70] sm:$0xff] %v870
  %887 = vst [vmem:[#allocation2 + $0x78] sm:$0xff] %v871
  // Predicated region
  $region34: #{_lambda_.14} parent=0 // pred_check
    %p888 = pneg %p26
  $region35: #{_lambda_.14} parent=0 // pred_check_branch
    %890 = sbr.rel (%p888) target = $region37
  $region36: #{_lambda_.14} parent=0 // pred_region
    %v891 = vld [vmem:[#allocation2] sm:$0xff]
    %v892 = vld [vmem:[#allocation2 + $0x8] sm:$0xff]
    %v893 = vld [vmem:[#allocation2 + $0x10] sm:$0xff]
    %v894 = vld [vmem:[#allocation2 + $0x18] sm:$0xff]
    %v895 = vld [vmem:[#allocation2 + $0x20] sm:$0xff]
    %v896 = vld [vmem:[#allocation2 + $0x28] sm:$0xff]
    %v897 = vld [vmem:[#allocation2 + $0x30] sm:$0xff]
    %v898 = vld [vmem:[#allocation2 + $0x38] sm:$0xff]
    %v899 = vld [vmem:[#allocation2 + $0x40] sm:$0xff]
    %v900 = vld [vmem:[#allocation2 + $0x48] sm:$0xff]
    %v901 = vld [vmem:[#allocation2 + $0x50] sm:$0xff]
    %v902 = vld [vmem:[#allocation2 + $0x58] sm:$0xff]
    %v903 = vld [vmem:[#allocation2 + $0x60] sm:$0xff]
    %v904 = vld [vmem:[#allocation2 + $0x68] sm:$0xff]
    %v905 = vld [vmem:[#allocation2 + $0x70] sm:$0xff]
    %v906 = vld [vmem:[#allocation2 + $0x78] sm:$0xff]
    %v907 = vld [vmem:[%s4] sm:$0x1]
    %v909 = vperm.slane %v907, 0
    %v911 = vadd.f32 %v891, %v909
    %v912 = vadd.f32 %v892, %v909
    %v913 = vadd.f32 %v893, %v909
    %v914 = vadd.f32 %v894, %v909
    %v915 = vadd.f32 %v895, %v909
    %v916 = vadd.f32 %v896, %v909
    %v917 = vadd.f32 %v897, %v909
    %v918 = vadd.f32 %v898, %v909
    %v919 = vadd.f32 %v899, %v909
    %v920 = vadd.f32 %v900, %v909
    %v921 = vadd.f32 %v901, %v909
    %v922 = vadd.f32 %v902, %v909
    %v923 = vadd.f32 %v903, %v909
    %v924 = vadd.f32 %v904, %v909
    %v925 = vadd.f32 %v905, %v909
    %v926 = vadd.f32 %v906, %v909
    %v927 = vld [vmem:[%s0] sm:$0xf]
    %v928 = vld [vmem:[%s0 + $0x4] sm:$0xf]
    %v929 = vld [vmem:[%s0 + $0x8] sm:$0xf]
    %v930 = vld [vmem:[%s0 + $0xc] sm:$0xf]
    %v931 = vld [vmem:[%s0 + $0x10] sm:$0xf]
    %v932 = vld [vmem:[%s0 + $0x14] sm:$0xf]
    %v933 = vld [vmem:[%s0 + $0x18] sm:$0xf]
    %v934 = vld [vmem:[%s0 + $0x1c] sm:$0xf]
    %v935 = vld [vmem:[%s0 + $0x20] sm:$0xf]
    %v936 = vld [vmem:[%s0 + $0x24] sm:$0xf]
    %v937 = vld [vmem:[%s0 + $0x28] sm:$0xf]
    %v938 = vld [vmem:[%s0 + $0x2c] sm:$0xf]
    %v939 = vld [vmem:[%s0 + $0x30] sm:$0xf]
    %v940 = vld [vmem:[%s0 + $0x34] sm:$0xf]
    %v941 = vld [vmem:[%s0 + $0x38] sm:$0xf]
    %v942 = vld [vmem:[%s0 + $0x3c] sm:$0xf]
    %v943 = vunpack.c.l.bf16 %v927
    %v944 = vunpack.c.l.bf16 %v928
    %v945 = vunpack.c.l.bf16 %v929
    %v946 = vunpack.c.l.bf16 %v930
    %v947 = vunpack.c.l.bf16 %v931
    %v948 = vunpack.c.l.bf16 %v932
    %v949 = vunpack.c.l.bf16 %v933
    %v950 = vunpack.c.l.bf16 %v934
    %v951 = vunpack.c.l.bf16 %v935
    %v952 = vunpack.c.l.bf16 %v936
    %v953 = vunpack.c.l.bf16 %v937
    %v954 = vunpack.c.l.bf16 %v938
    %v955 = vunpack.c.l.bf16 %v939
    %v956 = vunpack.c.l.bf16 %v940
    %v957 = vunpack.c.l.bf16 %v941
    %v958 = vunpack.c.l.bf16 %v942
    %v959 = vadd.f32 %v911, %v943
    %v960 = vadd.f32 %v912, %v944
    %v961 = vadd.f32 %v913, %v945
    %v962 = vadd.f32 %v914, %v946
    %v963 = vadd.f32 %v915, %v947
    %v964 = vadd.f32 %v916, %v948
    %v965 = vadd.f32 %v917, %v949
    %v966 = vadd.f32 %v918, %v950
    %v967 = vadd.f32 %v919, %v951
    %v968 = vadd.f32 %v920, %v952
    %v969 = vadd.f32 %v921, %v953
    %v970 = vadd.f32 %v922, %v954
    %v971 = vadd.f32 %v923, %v955
    %v972 = vadd.f32 %v924, %v956
    %v973 = vadd.f32 %v925, %v957
    %v974 = vadd.f32 %v926, %v958
    %975 = vadd.xlane.f32.xlu0 %v959
    %v976 = vpop.xlane.xlu0 %975
    %977 = vadd.xlane.f32.xlu0 %v960
    %v978 = vpop.xlane.xlu0 %977
    %979 = vadd.xlane.f32.xlu0 %v961
    %v980 = vpop.xlane.xlu0 %979
    %981 = vadd.xlane.f32.xlu0 %v962
    %v982 = vpop.xlane.xlu0 %981
    %983 = vadd.xlane.f32.xlu0 %v963
    %v984 = vpop.xlane.xlu0 %983
    %985 = vadd.xlane.f32.xlu0 %v964
    %v986 = vpop.xlane.xlu0 %985
    %987 = vadd.xlane.f32.xlu0 %v965
    %v988 = vpop.xlane.xlu0 %987
    %989 = vadd.xlane.f32.xlu0 %v966
    %v990 = vpop.xlane.xlu0 %989
    %991 = vadd.xlane.f32.xlu0 %v967
    %v992 = vpop.xlane.xlu0 %991
    %993 = vadd.xlane.f32.xlu0 %v968
    %v994 = vpop.xlane.xlu0 %993
    %995 = vadd.xlane.f32.xlu0 %v969
    %v996 = vpop.xlane.xlu0 %995
    %997 = vadd.xlane.f32.xlu0 %v970
    %v998 = vpop.xlane.xlu0 %997
    %999 = vadd.xlane.f32.xlu0 %v971
    %v1000 = vpop.xlane.xlu0 %999
    %1001 = vadd.xlane.f32.xlu0 %v972
    %v1002 = vpop.xlane.xlu0 %1001
    %1003 = vadd.xlane.f32.xlu0 %v973
    %v1004 = vpop.xlane.xlu0 %1003
    %1005 = vadd.xlane.f32.xlu0 %v974
    %v1006 = vpop.xlane.xlu0 %1005
    %v1007 = vrcp.pop 128.0
    %v1008 = vmul.f32 128.0, %v1007
    %v1009 = vsub.f32 1.0, %v1008
    %v1010 = vmul.f32 %v1007, %v1009
    %v1011 = vadd.f32 %v1007, %v1010
    %vm1012 = vweird.f32 %v1007
    %v1013 = vsel %vm1012, %v1007, %v1011
    %v1014 = vmul.f32 %v976, %v1013
    %v1015 = vmul.f32 %v978, %v1013
    %v1016 = vmul.f32 %v980, %v1013
    %v1017 = vmul.f32 %v982, %v1013
    %v1018 = vmul.f32 %v984, %v1013
    %v1019 = vmul.f32 %v986, %v1013
    %v1020 = vmul.f32 %v988, %v1013
    %v1021 = vmul.f32 %v990, %v1013
    %v1022 = vmul.f32 %v992, %v1013
    %v1023 = vmul.f32 %v994, %v1013
    %v1024 = vmul.f32 %v996, %v1013
    %v1025 = vmul.f32 %v998, %v1013
    %v1026 = vmul.f32 %v1000, %v1013
    %v1027 = vmul.f32 %v1002, %v1013
    %v1028 = vmul.f32 %v1004, %v1013
    %v1029 = vmul.f32 %v1006, %v1013
    %v1030 = vsub.f32 %v959, %v1014
    %v1031 = vsub.f32 %v960, %v1015
    %v1032 = vsub.f32 %v961, %v1016
    %v1033 = vsub.f32 %v962, %v1017
    %v1034 = vsub.f32 %v963, %v1018
    %v1035 = vsub.f32 %v964, %v1019
    %v1036 = vsub.f32 %v965, %v1020
    %v1037 = vsub.f32 %v966, %v1021
    %v1038 = vsub.f32 %v967, %v1022
    %v1039 = vsub.f32 %v968, %v1023
    %v1040 = vsub.f32 %v969, %v1024
    %v1041 = vsub.f32 %v970, %v1025
    %v1042 = vsub.f32 %v971, %v1026
    %v1043 = vsub.f32 %v972, %v1027
    %v1044 = vsub.f32 %v973, %v1028
    %v1045 = vsub.f32 %v974, %v1029
    %v1046 = vmul.f32 %v1030, %v1030
    %v1047 = vmul.f32 %v1031, %v1031
    %v1048 = vmul.f32 %v1032, %v1032
    %v1049 = vmul.f32 %v1033, %v1033
    %v1050 = vmul.f32 %v1034, %v1034
    %v1051 = vmul.f32 %v1035, %v1035
    %v1052 = vmul.f32 %v1036, %v1036
    %v1053 = vmul.f32 %v1037, %v1037
    %v1054 = vmul.f32 %v1038, %v1038
    %v1055 = vmul.f32 %v1039, %v1039
    %v1056 = vmul.f32 %v1040, %v1040
    %v1057 = vmul.f32 %v1041, %v1041
    %v1058 = vmul.f32 %v1042, %v1042
    %v1059 = vmul.f32 %v1043, %v1043
    %v1060 = vmul.f32 %v1044, %v1044
    %v1061 = vmul.f32 %v1045, %v1045
    %1062 = vadd.xlane.f32.xlu0 %v1046
    %v1063 = vpop.xlane.xlu0 %1062
    %1064 = vadd.xlane.f32.xlu0 %v1047
    %v1065 = vpop.xlane.xlu0 %1064
    %1066 = vadd.xlane.f32.xlu0 %v1048
    %v1067 = vpop.xlane.xlu0 %1066
    %1068 = vadd.xlane.f32.xlu0 %v1049
    %v1069 = vpop.xlane.xlu0 %1068
    %1070 = vadd.xlane.f32.xlu0 %v1050
    %v1071 = vpop.xlane.xlu0 %1070
    %1072 = vadd.xlane.f32.xlu0 %v1051
    %v1073 = vpop.xlane.xlu0 %1072
    %1074 = vadd.xlane.f32.xlu0 %v1052
    %v1075 = vpop.xlane.xlu0 %1074
    %1076 = vadd.xlane.f32.xlu0 %v1053
    %v1077 = vpop.xlane.xlu0 %1076
    %1078 = vadd.xlane.f32.xlu0 %v1054
    %v1079 = vpop.xlane.xlu0 %1078
    %1080 = vadd.xlane.f32.xlu0 %v1055
    %v1081 = vpop.xlane.xlu0 %1080
    %1082 = vadd.xlane.f32.xlu0 %v1056
    %v1083 = vpop.xlane.xlu0 %1082
    %1084 = vadd.xlane.f32.xlu0 %v1057
    %v1085 = vpop.xlane.xlu0 %1084
    %1086 = vadd.xlane.f32.xlu0 %v1058
    %v1087 = vpop.xlane.xlu0 %1086
    %1088 = vadd.xlane.f32.xlu0 %v1059
    %v1089 = vpop.xlane.xlu0 %1088
    %1090 = vadd.xlane.f32.xlu0 %v1060
    %v1091 = vpop.xlane.xlu0 %1090
    %1092 = vadd.xlane.f32.xlu0 %v1061
    %v1093 = vpop.xlane.xlu0 %1092
    %v1094 = vmul.f32 %v1063, %v1013
    %v1095 = vmul.f32 %v1065, %v1013
    %v1096 = vmul.f32 %v1067, %v1013
    %v1097 = vmul.f32 %v1069, %v1013
    %v1098 = vmul.f32 %v1071, %v1013
    %v1099 = vmul.f32 %v1073, %v1013
    %v1100 = vmul.f32 %v1075, %v1013
    %v1101 = vmul.f32 %v1077, %v1013
    %v1102 = vmul.f32 %v1079, %v1013
    %v1103 = vmul.f32 %v1081, %v1013
    %v1104 = vmul.f32 %v1083, %v1013
    %v1105 = vmul.f32 %v1085, %v1013
    %v1106 = vmul.f32 %v1087, %v1013
    %v1107 = vmul.f32 %v1089, %v1013
    %v1108 = vmul.f32 %v1091, %v1013
    %v1109 = vmul.f32 %v1093, %v1013
    %v1110 = vadd.f32 %v1094, 1e-12
    %v1111 = vadd.f32 %v1095, 1e-12
    %v1112 = vadd.f32 %v1096, 1e-12
    %v1113 = vadd.f32 %v1097, 1e-12
    %v1114 = vadd.f32 %v1098, 1e-12
    %v1115 = vadd.f32 %v1099, 1e-12
    %v1116 = vadd.f32 %v1100, 1e-12
    %v1117 = vadd.f32 %v1101, 1e-12
    %v1118 = vadd.f32 %v1102, 1e-12
    %v1119 = vadd.f32 %v1103, 1e-12
    %v1120 = vadd.f32 %v1104, 1e-12
    %v1121 = vadd.f32 %v1105, 1e-12
    %v1122 = vadd.f32 %v1106, 1e-12
    %v1123 = vadd.f32 %v1107, 1e-12
    %v1124 = vadd.f32 %v1108, 1e-12
    %v1125 = vadd.f32 %v1109, 1e-12
    %v1126 = vrsqrt.pop %v1110
    %v1127 = vmul.f32 %v1126, %v1110
    %v1128 = vmul.f32 %v1127, %v1126
    %v1129 = vmul.f32 0.5, %v1128
    %v1130 = vsub.f32 1.5, %v1129
    %v1131 = vmul.f32 %v1126, %v1130
    %vm1132 = vweird.f32 %v1110
    %vm1133 = vweird.f32 %v1126
    %vm1134 = vmor %vm1132, %vm1133
    %v1135 = vsel %vm1134, %v1126, %v1131
    %v1136 = vrsqrt.pop %v1111
    %v1137 = vmul.f32 %v1136, %v1111
    %v1138 = vmul.f32 %v1137, %v1136
    %v1139 = vmul.f32 0.5, %v1138
    %v1140 = vsub.f32 1.5, %v1139
    %v1141 = vmul.f32 %v1136, %v1140
    %vm1142 = vweird.f32 %v1111
    %vm1143 = vweird.f32 %v1136
    %vm1144 = vmor %vm1142, %vm1143
    %v1145 = vsel %vm1144, %v1136, %v1141
    %v1146 = vrsqrt.pop %v1112
    %v1147 = vmul.f32 %v1146, %v1112
    %v1148 = vmul.f32 %v1147, %v1146
    %v1149 = vmul.f32 0.5, %v1148
    %v1150 = vsub.f32 1.5, %v1149
    %v1151 = vmul.f32 %v1146, %v1150
    %vm1152 = vweird.f32 %v1112
    %vm1153 = vweird.f32 %v1146
    %vm1154 = vmor %vm1152, %vm1153
    %v1155 = vsel %vm1154, %v1146, %v1151
    %v1156 = vrsqrt.pop %v1113
    %v1157 = vmul.f32 %v1156, %v1113
    %v1158 = vmul.f32 %v1157, %v1156
    %v1159 = vmul.f32 0.5, %v1158
    %v1160 = vsub.f32 1.5, %v1159
    %v1161 = vmul.f32 %v1156, %v1160
    %vm1162 = vweird.f32 %v1113
    %vm1163 = vweird.f32 %v1156
    %vm1164 = vmor %vm1162, %vm1163
    %v1165 = vsel %vm1164, %v1156, %v1161
    %v1166 = vrsqrt.pop %v1114
    %v1167 = vmul.f32 %v1166, %v1114
    %v1168 = vmul.f32 %v1167, %v1166
    %v1169 = vmul.f32 0.5, %v1168
    %v1170 = vsub.f32 1.5, %v1169
    %v1171 = vmul.f32 %v1166, %v1170
    %vm1172 = vweird.f32 %v1114
    %vm1173 = vweird.f32 %v1166
    %vm1174 = vmor %vm1172, %vm1173
    %v1175 = vsel %vm1174, %v1166, %v1171
    %v1176 = vrsqrt.pop %v1115
    %v1177 = vmul.f32 %v1176, %v1115
    %v1178 = vmul.f32 %v1177, %v1176
    %v1179 = vmul.f32 0.5, %v1178
    %v1180 = vsub.f32 1.5, %v1179
    %v1181 = vmul.f32 %v1176, %v1180
    %vm1182 = vweird.f32 %v1115
    %vm1183 = vweird.f32 %v1176
    %vm1184 = vmor %vm1182, %vm1183
    %v1185 = vsel %vm1184, %v1176, %v1181
    %v1186 = vrsqrt.pop %v1116
    %v1187 = vmul.f32 %v1186, %v1116
    %v1188 = vmul.f32 %v1187, %v1186
    %v1189 = vmul.f32 0.5, %v1188
    %v1190 = vsub.f32 1.5, %v1189
    %v1191 = vmul.f32 %v1186, %v1190
    %vm1192 = vweird.f32 %v1116
    %vm1193 = vweird.f32 %v1186
    %vm1194 = vmor %vm1192, %vm1193
    %v1195 = vsel %vm1194, %v1186, %v1191
    %v1196 = vrsqrt.pop %v1117
    %v1197 = vmul.f32 %v1196, %v1117
    %v1198 = vmul.f32 %v1197, %v1196
    %v1199 = vmul.f32 0.5, %v1198
    %v1200 = vsub.f32 1.5, %v1199
    %v1201 = vmul.f32 %v1196, %v1200
    %vm1202 = vweird.f32 %v1117
    %vm1203 = vweird.f32 %v1196
    %vm1204 = vmor %vm1202, %vm1203
    %v1205 = vsel %vm1204, %v1196, %v1201
    %v1206 = vrsqrt.pop %v1118
    %v1207 = vmul.f32 %v1206, %v1118
    %v1208 = vmul.f32 %v1207, %v1206
    %v1209 = vmul.f32 0.5, %v1208
    %v1210 = vsub.f32 1.5, %v1209
    %v1211 = vmul.f32 %v1206, %v1210
    %vm1212 = vweird.f32 %v1118
    %vm1213 = vweird.f32 %v1206
    %vm1214 = vmor %vm1212, %vm1213
    %v1215 = vsel %vm1214, %v1206, %v1211
    %v1216 = vrsqrt.pop %v1119
    %v1217 = vmul.f32 %v1216, %v1119
    %v1218 = vmul.f32 %v1217, %v1216
    %v1219 = vmul.f32 0.5, %v1218
    %v1220 = vsub.f32 1.5, %v1219
    %v1221 = vmul.f32 %v1216, %v1220
    %vm1222 = vweird.f32 %v1119
    %vm1223 = vweird.f32 %v1216
    %vm1224 = vmor %vm1222, %vm1223
    %v1225 = vsel %vm1224, %v1216, %v1221
    %v1226 = vrsqrt.pop %v1120
    %v1227 = vmul.f32 %v1226, %v1120
    %v1228 = vmul.f32 %v1227, %v1226
    %v1229 = vmul.f32 0.5, %v1228
    %v1230 = vsub.f32 1.5, %v1229
    %v1231 = vmul.f32 %v1226, %v1230
    %vm1232 = vweird.f32 %v1120
    %vm1233 = vweird.f32 %v1226
    %vm1234 = vmor %vm1232, %vm1233
    %v1235 = vsel %vm1234, %v1226, %v1231
    %v1236 = vrsqrt.pop %v1121
    %v1237 = vmul.f32 %v1236, %v1121
    %v1238 = vmul.f32 %v1237, %v1236
    %v1239 = vmul.f32 0.5, %v1238
    %v1240 = vsub.f32 1.5, %v1239
    %v1241 = vmul.f32 %v1236, %v1240
    %vm1242 = vweird.f32 %v1121
    %vm1243 = vweird.f32 %v1236
    %vm1244 = vmor %vm1242, %vm1243
    %v1245 = vsel %vm1244, %v1236, %v1241
    %v1246 = vrsqrt.pop %v1122
    %v1247 = vmul.f32 %v1246, %v1122
    %v1248 = vmul.f32 %v1247, %v1246
    %v1249 = vmul.f32 0.5, %v1248
    %v1250 = vsub.f32 1.5, %v1249
    %v1251 = vmul.f32 %v1246, %v1250
    %vm1252 = vweird.f32 %v1122
    %vm1253 = vweird.f32 %v1246
    %vm1254 = vmor %vm1252, %vm1253
    %v1255 = vsel %vm1254, %v1246, %v1251
    %v1256 = vrsqrt.pop %v1123
    %v1257 = vmul.f32 %v1256, %v1123
    %v1258 = vmul.f32 %v1257, %v1256
    %v1259 = vmul.f32 0.5, %v1258
    %v1260 = vsub.f32 1.5, %v1259
    %v1261 = vmul.f32 %v1256, %v1260
    %vm1262 = vweird.f32 %v1123
    %vm1263 = vweird.f32 %v1256
    %vm1264 = vmor %vm1262, %vm1263
    %v1265 = vsel %vm1264, %v1256, %v1261
    %v1266 = vrsqrt.pop %v1124
    %v1267 = vmul.f32 %v1266, %v1124
    %v1268 = vmul.f32 %v1267, %v1266
    %v1269 = vmul.f32 0.5, %v1268
    %v1270 = vsub.f32 1.5, %v1269
    %v1271 = vmul.f32 %v1266, %v1270
    %vm1272 = vweird.f32 %v1124
    %vm1273 = vweird.f32 %v1266
    %vm1274 = vmor %vm1272, %vm1273
    %v1275 = vsel %vm1274, %v1266, %v1271
    %v1276 = vrsqrt.pop %v1125
    %v1277 = vmul.f32 %v1276, %v1125
    %v1278 = vmul.f32 %v1277, %v1276
    %v1279 = vmul.f32 0.5, %v1278
    %v1280 = vsub.f32 1.5, %v1279
    %v1281 = vmul.f32 %v1276, %v1280
    %vm1282 = vweird.f32 %v1125
    %vm1283 = vweird.f32 %v1276
    %vm1284 = vmor %vm1282, %vm1283
    %v1285 = vsel %vm1284, %v1276, %v1281
    %v1286 = vmul.f32 %v1030, %v1135
    %v1287 = vmul.f32 %v1031, %v1145
    %v1288 = vmul.f32 %v1032, %v1155
    %v1289 = vmul.f32 %v1033, %v1165
    %v1290 = vmul.f32 %v1034, %v1175
    %v1291 = vmul.f32 %v1035, %v1185
    %v1292 = vmul.f32 %v1036, %v1195
    %v1293 = vmul.f32 %v1037, %v1205
    %v1294 = vmul.f32 %v1038, %v1215
    %v1295 = vmul.f32 %v1039, %v1225
    %v1296 = vmul.f32 %v1040, %v1235
    %v1297 = vmul.f32 %v1041, %v1245
    %v1298 = vmul.f32 %v1042, %v1255
    %v1299 = vmul.f32 %v1043, %v1265
    %v1300 = vmul.f32 %v1044, %v1275
    %v1301 = vmul.f32 %v1045, %v1285
    %v1302 = vld [vmem:[%s5] sm:$0x1]
    %v1304 = vperm.slane %v1302, 0
    %v1306 = vmul.f32 %v1286, %v1304
    %v1307 = vmul.f32 %v1287, %v1304
    %v1308 = vmul.f32 %v1288, %v1304
    %v1309 = vmul.f32 %v1289, %v1304
    %v1310 = vmul.f32 %v1290, %v1304
    %v1311 = vmul.f32 %v1291, %v1304
    %v1312 = vmul.f32 %v1292, %v1304
    %v1313 = vmul.f32 %v1293, %v1304
    %v1314 = vmul.f32 %v1294, %v1304
    %v1315 = vmul.f32 %v1295, %v1304
    %v1316 = vmul.f32 %v1296, %v1304
    %v1317 = vmul.f32 %v1297, %v1304
    %v1318 = vmul.f32 %v1298, %v1304
    %v1319 = vmul.f32 %v1299, %v1304
    %v1320 = vmul.f32 %v1300, %v1304
    %v1321 = vmul.f32 %v1301, %v1304
    %v1322 = vld [vmem:[%s6] sm:$0x1]
    %v1324 = vperm.slane %v1322, 0
    %v1326 = vadd.f32 %v1306, %v1324
    %v1327 = vadd.f32 %v1307, %v1324
    %v1328 = vadd.f32 %v1308, %v1324
    %v1329 = vadd.f32 %v1309, %v1324
    %v1330 = vadd.f32 %v1310, %v1324
    %v1331 = vadd.f32 %v1311, %v1324
    %v1332 = vadd.f32 %v1312, %v1324
    %v1333 = vadd.f32 %v1313, %v1324
    %v1334 = vadd.f32 %v1314, %v1324
    %v1335 = vadd.f32 %v1315, %v1324
    %v1336 = vadd.f32 %v1316, %v1324
    %v1337 = vadd.f32 %v1317, %v1324
    %v1338 = vadd.f32 %v1318, %v1324
    %v1339 = vadd.f32 %v1319, %v1324
    %v1340 = vadd.f32 %v1320, %v1324
    %v1341 = vadd.f32 %v1321, %v1324
    %v1342 = vpack.c.bf16 %v1326, %v1326
    %v1343 = vpack.c.bf16 %v1327, %v1327
    %v1344 = vpack.c.bf16 %v1328, %v1328
    %v1345 = vpack.c.bf16 %v1329, %v1329
    %v1346 = vpack.c.bf16 %v1330, %v1330
    %v1347 = vpack.c.bf16 %v1331, %v1331
    %v1348 = vpack.c.bf16 %v1332, %v1332
    %v1349 = vpack.c.bf16 %v1333, %v1333
    %v1350 = vpack.c.bf16 %v1334, %v1334
    %v1351 = vpack.c.bf16 %v1335, %v1335
    %v1352 = vpack.c.bf16 %v1336, %v1336
    %v1353 = vpack.c.bf16 %v1337, %v1337
    %v1354 = vpack.c.bf16 %v1338, %v1338
    %v1355 = vpack.c.bf16 %v1339, %v1339
    %v1356 = vpack.c.bf16 %v1340, %v1340
    %v1357 = vpack.c.bf16 %v1341, %v1341
    %1358 = vst [vmem:[%s7] sm:$0xf] %v1342
    %1359 = vst [vmem:[%s7 + $0x4] sm:$0xf] %v1343
    %1360 = vst [vmem:[%s7 + $0x8] sm:$0xf] %v1344
    %1361 = vst [vmem:[%s7 + $0xc] sm:$0xf] %v1345
    %1362 = vst [vmem:[%s7 + $0x10] sm:$0xf] %v1346
    %1363 = vst [vmem:[%s7 + $0x14] sm:$0xf] %v1347
    %1364 = vst [vmem:[%s7 + $0x18] sm:$0xf] %v1348
    %1365 = vst [vmem:[%s7 + $0x1c] sm:$0xf] %v1349
    %1366 = vst [vmem:[%s7 + $0x20] sm:$0xf] %v1350
    %1367 = vst [vmem:[%s7 + $0x24] sm:$0xf] %v1351
    %1368 = vst [vmem:[%s7 + $0x28] sm:$0xf] %v1352
    %1369 = vst [vmem:[%s7 + $0x2c] sm:$0xf] %v1353
    %1370 = vst [vmem:[%s7 + $0x30] sm:$0xf] %v1354
    %1371 = vst [vmem:[%s7 + $0x34] sm:$0xf] %v1355
    %1372 = vst [vmem:[%s7 + $0x38] sm:$0xf] %v1356
    %1373 = vst [vmem:[%s7 + $0x3c] sm:$0xf] %v1357
  $region37: #{_lambda_.14} parent=0 // pred_fallthru
    _
  // Predicated region
  $region38: #{_lambda_.14} parent=0 // pred_check
    _
  $region39: #{_lambda_.14} parent=0 // pred_check_branch
    %1375 = sbr.rel (0) target = $region41
  $region40: #{_lambda_.14} parent=0 // pred_region
    _
  $region41: #{_lambda_.14} parent=0 // pred_fallthru
    _
  // Predicated region
  $region42: #{_lambda_.14} parent=0 // pred_check
    _
  $region43: #{_lambda_.14} parent=0 // pred_check_branch
    %1377 = sbr.rel (0) target = $region45
  $region44: #{_lambda_.14} parent=0 // pred_region
    _
  $region45: #{_lambda_.14} parent=0 // pred_fallthru
    _

// kernel: _lambda_.12
$region0: #{_lambda_.12}
  #allocation0 [shape = 'u32[]', space=smem, size = 0x4, offset = 0x4, fixed_abs, tag = 'smem constant byte address 0x4 - core index']
  #allocation1 [shape = 'u32[72,128]{1,0:T(1,128)}', space=vmem, size = 0x9000, scoped, tag = 'internal scratch']
  %s0 = inlined_call_operand.vmem [shape: bf16[2,64,384], index: 0, kind: input, shape index: {}, may-alias: {0,1,2}]
  %s1 = inlined_call_operand.vmem [shape: bf16[2,64,384], index: 1, kind: input, shape index: {}, may-alias: {0,1,2}]
  %s2 = inlined_call_operand.vmem [shape: bf16[2,64,384], index: 2, kind: input, shape index: {}, may-alias: {0,1,2}]
  %s3 = inlined_call_operand.vmem [shape: bf16[128,128], index: 3, kind: input, shape index: {}]
  %s4 = inlined_call_operand.vmem [shape: f32[1,128], index: 4, kind: input, shape index: {}]
  %s5 = inlined_call_operand.vmem [shape: f32[1,128], index: 5, kind: input, shape index: {}]
  %s6 = inlined_call_operand.vmem [shape: bf16[2,64,64], index: 6, kind: input, shape index: {}]
  %s7 = inlined_call_operand.vmem [shape: bf16[2,64,128], index: 7, kind: output, shape index: {}]
  %s8 = sld [smem:[#allocation0]]
  $region184: #{_lambda_.12} parent=0
    _
  %s10 = ssub.s32 1, %s8
  %s11 = scalar_select 0, %s10, %s8
  $region1: #{_lambda_.12} parent=0
    #allocation2 [shape = 'u8[32768]{0}', space=vmem, size = 0x8000, scoped, tag = 'input window, operand 0']
    #allocation3 [shape = 'u8[32768]{0}', space=vmem, size = 0x8000, scoped, tag = 'input window, operand 1']
    #allocation4 [shape = 'u8[32768]{0}', space=vmem, size = 0x8000, scoped, tag = 'input window, operand 2']
    loop: start=0, step=1, limit=4
    $region2: #{_lambda_.12} parent=1 // loop_pre_header
      _
    $region3: #{_lambda_.12} parent=1 // loop_header
      %s13 = sphi 0, %s17
      %p14 = scmp.ge.s32.totalorder %s13, 4
      %s20 = sphi 0, %s32
      %s21 = sphi 0, %s28
      %s22 = sphi 0, %s20
      %s23 = sphi 0, %s21
      %s24 = sphi 0, %s22
      %s25 = sphi 0, %s23
      %s37 = sphi 0, %s39
      %s40 = sphi 0, %s37
      %s41 = sphi 0, %s40
      %s57 = sphi 0, %s41
      %s67 = sphi 0, %s69
      %s70 = sphi 0, %s67
      %s71 = sphi 0, %s70
      %s87 = sphi 0, %s71
      %s97 = sphi 0, %s99
      %s100 = sphi 0, %s97
      %s101 = sphi 0, %s100
      %s117 = sphi 0, %s101
      %s123 = sphi 0, %s125
      %s126 = sphi 0, %s123
      %s127 = sphi 0, %s126
      %s143 = sphi 0, %s127
      %s149 = sphi 0, %s151
      %s152 = sphi 0, %s149
      %s153 = sphi 0, %s152
      %s169 = sphi 0, %s153
      %s175 = sphi 0, %s177
      %s178 = sphi 0, %s175
      %s179 = sphi 0, %s178
      %s195 = sphi 0, %s179
      %s201 = sphi 0, %s203
      %s204 = sphi 0, %s201
      %s205 = sphi 0, %s204
      %s221 = sphi 0, %s205
      %s229 = sphi 0, %s231
      %s232 = sphi 0, %s229
      %s233 = sphi 0, %s232
      %s249 = sphi 0, %s233
    $region4: #{_lambda_.12} parent=1 // loop_header_branch
      %16 = sbr.rel (%p14) target = $region8
    $region5: #{_lambda_.12} parent=1 // loop_body
      %s18 = ssub.s32 %s13, 1
      %s19 = ssub.s32 %s13, 2
      %s26 = sadd.s32 1, %s21
      %p27 = scmp.ge.s32.totalorder %s26, 1
      %s28 = scalar_select %p27, 0, %s26
      %s29 = sadd.s32 1, %s20
      %s30 = scalar_select %p27, %s29, %s20
      %p31 = scmp.ge.s32.totalorder %s30, 2
      %s32 = scalar_select %p31, 0, %s30
      %s33 = ssub.s32 %s20, %s32
      %s34 = ssub.s32 %s21, %s28
      %s35 = sor.u32 %s33, %s34
      %p36 = scmp.eq.s32.totalorder %s35, 0
      %s38 = sadd.s32 %s37, 1
      %s39 = scalar_select %p36, %s37, %s38
      %p42 = pneg %p36
      %p43 = scmp.eq.s32.totalorder %s13, 1
      %p44 = por %p42, %p43
      %p45 = scmp.ne.s32.totalorder %s37, %s40
      %p46 = scmp.eq.s32.totalorder %s13, 0
      %p47 = por %p45, %p46
      %p48 = scmp.ne.s32.totalorder %s37, %s40
      %p49 = scmp.eq.s32.totalorder %s18, 1
      %p50 = por %p48, %p49
      %p51 = scmp.ne.s32.totalorder %s40, %s41
      %p52 = scmp.eq.s32.totalorder %s18, 0
      %p53 = por %p51, %p52
      %p54 = scmp.ne.s32.totalorder %s40, %s41
      %p55 = scmp.eq.s32.totalorder %s19, 1
      %p56 = por %p54, %p55
      %p58 = scmp.ne.s32.totalorder %s41, %s57
      %p59 = scmp.eq.s32.totalorder %s19, 0
      %p60 = por %p58, %p59
      %s61 = sadd.s32 %s21, 1
      %s62 = sadd.s32 %s28, 1
      %s63 = ssub.s32 %s20, %s32
      %s64 = ssub.s32 %s61, %s62
      %s65 = sor.u32 %s63, %s64
      %p66 = scmp.eq.s32.totalorder %s65, 0
      %s68 = sadd.s32 %s67, 1
      %s69 = scalar_select %p66, %s67, %s68
      %p72 = pneg %p66
      %p73 = scmp.eq.s32.totalorder %s13, 1
      %p74 = por %p72, %p73
      %p75 = scmp.ne.s32.totalorder %s67, %s70
      %p76 = scmp.eq.s32.totalorder %s13, 0
      %p77 = por %p75, %p76
      %p78 = scmp.ne.s32.totalorder %s67, %s70
      %p79 = scmp.eq.s32.totalorder %s18, 1
      %p80 = por %p78, %p79
      %p81 = scmp.ne.s32.totalorder %s70, %s71
      %p82 = scmp.eq.s32.totalorder %s18, 0
      %p83 = por %p81, %p82
      %p84 = scmp.ne.s32.totalorder %s70, %s71
      %p85 = scmp.eq.s32.totalorder %s19, 1
      %p86 = por %p84, %p85
      %p88 = scmp.ne.s32.totalorder %s71, %s87
      %p89 = scmp.eq.s32.totalorder %s19, 0
      %p90 = por %p88, %p89
      %s91 = sadd.s32 %s21, 2
      %s92 = sadd.s32 %s28, 2
      %s93 = ssub.s32 %s20, %s32
      %s94 = ssub.s32 %s91, %s92
      %s95 = sor.u32 %s93, %s94
      %p96 = scmp.eq.s32.totalorder %s95, 0
      %s98 = sadd.s32 %s97, 1
      %s99 = scalar_select %p96, %s97, %s98
      %p102 = pneg %p96
      %p103 = scmp.eq.s32.totalorder %s13, 1
      %p104 = por %p102, %p103
      %p105 = scmp.ne.s32.totalorder %s97, %s100
      %p106 = scmp.eq.s32.totalorder %s13, 0
      %p107 = por %p105, %p106
      %p108 = scmp.ne.s32.totalorder %s97, %s100
      %p109 = scmp.eq.s32.totalorder %s18, 1
      %p110 = por %p108, %p109
      %p111 = scmp.ne.s32.totalorder %s100, %s101
      %p112 = scmp.eq.s32.totalorder %s18, 0
      %p113 = por %p111, %p112
      %p114 = scmp.ne.s32.totalorder %s100, %s101
      %p115 = scmp.eq.s32.totalorder %s19, 1
      %p116 = por %p114, %p115
      %p118 = scmp.ne.s32.totalorder %s101, %s117
      %p119 = scmp.eq.s32.totalorder %s19, 0
      %p120 = por %p118, %p119
      %s121 = ssub.s32 %s21, %s28
      %p122 = scmp.eq.s32.totalorder %s121, 0
      %s124 = sadd.s32 %s123, 1
      %s125 = scalar_select %p122, %s123, %s124
      %p128 = pneg %p122
      %p129 = scmp.eq.s32.totalorder %s13, 1
      %p130 = por %p128, %p129
      %p131 = scmp.ne.s32.totalorder %s123, %s126
      %p132 = scmp.eq.s32.totalorder %s13, 0
      %p133 = por %p131, %p132
      %p134 = scmp.ne.s32.totalorder %s123, %s126
      %p135 = scmp.eq.s32.totalorder %s18, 1
      %p136 = por %p134, %p135
      %p137 = scmp.ne.s32.totalorder %s126, %s127
      %p138 = scmp.eq.s32.totalorder %s18, 0
      %p139 = por %p137, %p138
      %p140 = scmp.ne.s32.totalorder %s126, %s127
      %p141 = scmp.eq.s32.totalorder %s19, 1
      %p142 = por %p140, %p141
      %p144 = scmp.ne.s32.totalorder %s127, %s143
      %p145 = scmp.eq.s32.totalorder %s19, 0
      %p146 = por %p144, %p145
      %s147 = ssub.s32 %s21, %s28
      %p148 = scmp.eq.s32.totalorder %s147, 0
      %s150 = sadd.s32 %s149, 1
      %s151 = scalar_select %p148, %s149, %s150
      %p154 = pneg %p148
      %p155 = scmp.eq.s32.totalorder %s13, 1
      %p156 = por %p154, %p155
      %p157 = scmp.ne.s32.totalorder %s149, %s152
      %p158 = scmp.eq.s32.totalorder %s13, 0
      %p159 = por %p157, %p158
      %p160 = scmp.ne.s32.totalorder %s149, %s152
      %p161 = scmp.eq.s32.totalorder %s18, 1
      %p162 = por %p160, %p161
      %p163 = scmp.ne.s32.totalorder %s152, %s153
      %p164 = scmp.eq.s32.totalorder %s18, 0
      %p165 = por %p163, %p164
      %p166 = scmp.ne.s32.totalorder %s152, %s153
      %p167 = scmp.eq.s32.totalorder %s19, 1
      %p168 = por %p166, %p167
      %p170 = scmp.ne.s32.totalorder %s153, %s169
      %p171 = scmp.eq.s32.totalorder %s19, 0
      %p172 = por %p170, %p171
      %s173 = ssub.s32 %s21, %s28
      %p174 = scmp.eq.s32.totalorder %s173, 0
      %s176 = sadd.s32 %s175, 1
      %s177 = scalar_select %p174, %s175, %s176
      %p180 = pneg %p174
      %p181 = scmp.eq.s32.totalorder %s13, 1
      %p182 = por %p180, %p181
      %p183 = scmp.ne.s32.totalorder %s175, %s178
      %p184 = scmp.eq.s32.totalorder %s13, 0
      %p185 = por %p183, %p184
      %p186 = scmp.ne.s32.totalorder %s175, %s178
      %p187 = scmp.eq.s32.totalorder %s18, 1
      %p188 = por %p186, %p187
      %p189 = scmp.ne.s32.totalorder %s178, %s179
      %p190 = scmp.eq.s32.totalorder %s18, 0
      %p191 = por %p189, %p190
      %p192 = scmp.ne.s32.totalorder %s178, %s179
      %p193 = scmp.eq.s32.totalorder %s19, 1
      %p194 = por %p192, %p193
      %p196 = scmp.ne.s32.totalorder %s179, %s195
      %p197 = scmp.eq.s32.totalorder %s19, 0
      %p198 = por %p196, %p197
      %s199 = ssub.s32 %s20, %s32
      %p200 = scmp.eq.s32.totalorder %s199, 0
      %s202 = sadd.s32 %s201, 1
      %s203 = scalar_select %p200, %s201, %s202
      %p206 = pneg %p200
      %p207 = scmp.eq.s32.totalorder %s13, 1
      %p208 = por %p206, %p207
      %p209 = scmp.ne.s32.totalorder %s201, %s204
      %p210 = scmp.eq.s32.totalorder %s13, 0
      %p211 = por %p209, %p210
      %p212 = scmp.ne.s32.totalorder %s201, %s204
      %p213 = scmp.eq.s32.totalorder %s18, 1
      %p214 = por %p212, %p213
      %p215 = scmp.ne.s32.totalorder %s204, %s205
      %p216 = scmp.eq.s32.totalorder %s18, 0
      %p217 = por %p215, %p216
      %p218 = scmp.ne.s32.totalorder %s204, %s205
      %p219 = scmp.eq.s32.totalorder %s19, 1
      %p220 = por %p218, %p219
      %p222 = scmp.ne.s32.totalorder %s205, %s221
      %p223 = scmp.eq.s32.totalorder %s19, 0
      %p224 = por %p222, %p223
      %s225 = ssub.s32 %s20, %s32
      %s226 = ssub.s32 %s21, %s28
      %s227 = sor.u32 %s225, %s226
      %p228 = scmp.eq.s32.totalorder %s227, 0
      %s230 = sadd.s32 %s229, 1
      %s231 = scalar_select %p228, %s229, %s230
      %p234 = pneg %p228
      %p235 = scmp.eq.s32.totalorder %s13, 1
      %p236 = por %p234, %p235
      %p237 = scmp.ne.s32.totalorder %s229, %s232
      %p238 = scmp.eq.s32.totalorder %s13, 0
      %p239 = por %p237, %p238
      %p240 = scmp.ne.s32.totalorder %s229, %s232
      %p241 = scmp.eq.s32.totalorder %s18, 1
      %p242 = por %p240, %p241
      %p243 = scmp.ne.s32.totalorder %s232, %s233
      %p244 = scmp.eq.s32.totalorder %s18, 0
      %p245 = por %p243, %p244
      %p246 = scmp.ne.s32.totalorder %s232, %s233
      %p247 = scmp.eq.s32.totalorder %s19, 1
      %p248 = por %p246, %p247
      %p250 = scmp.ne.s32.totalorder %s233, %s249
      %p251 = scmp.eq.s32.totalorder %s19, 0
      %p252 = por %p250, %p251
      %p253 = scmp.le.s32.totalorder 1, %s13
      %p254 = scmp.lt.s32.totalorder %s13, 3
      %p255 = pnand %p253, %p254
      %p256 = pneg %p255
      // Predicated region
      $region9: #{_lambda_.12} parent=5 // pred_check
        _
      $region10: #{_lambda_.12} parent=5 // pred_check_branch
        %258 = sbr.rel (%p255) target = $region12
      $region11: #{_lambda_.12} parent=5 // pred_region
        %s259 = ssub.s32 %s13, 1
        // Predicated region
        $region13: #{_lambda_.12} parent=11 // pred_check
          %p260 = pneg %p139
        $region14: #{_lambda_.12} parent=11 // pred_check_branch
          %262 = sbr.rel (%p260) target = $region16
        $region15: #{_lambda_.12} parent=11 // pred_region
          %p263 = scmp.lt.s32.totalorder %s23, 0
          %s264 = scalar_select %p263, %s23, 0
          %s265 = smul.addr %s264, 4
          %s266 = scalar_lea.vmem %s3, %s265
        $region16: #{_lambda_.12} parent=11 // pred_fallthru
          _
        // Predicated region
        $region17: #{_lambda_.12} parent=11 // pred_check
          %p267 = pneg %p165
        $region18: #{_lambda_.12} parent=11 // pred_check_branch
          %269 = sbr.rel (%p267) target = $region20
        $region19: #{_lambda_.12} parent=11 // pred_region
          %p270 = scmp.lt.s32.totalorder %s23, 0
          %s271 = scalar_select %p270, %s23, 0
          %s272 = scalar_lea.vmem %s4, %s271
        $region20: #{_lambda_.12} parent=11 // pred_fallthru
          _
        // Predicated region
        $region21: #{_lambda_.12} parent=11 // pred_check
          %p273 = pneg %p191
        $region22: #{_lambda_.12} parent=11 // pred_check_branch
          %275 = sbr.rel (%p273) target = $region24
        $region23: #{_lambda_.12} parent=11 // pred_region
          %p276 = scmp.lt.s32.totalorder %s23, 0
          %s277 = scalar_select %p276, %s23, 0
          %s278 = scalar_lea.vmem %s5, %s277
        $region24: #{_lambda_.12} parent=11 // pred_fallthru
          _
      $region12: #{_lambda_.12} parent=5 // pred_fallthru
        _
      %p279 = scmp.lt.s32.totalorder %s13, 2
      // Predicated region
      $region25: #{_lambda_.12} parent=5 // pred_check
        %p280 = pneg %p279
      $region26: #{_lambda_.12} parent=5 // pred_check_branch
        %282 = sbr.rel (%p280) target = $region28
      $region27: #{_lambda_.12} parent=5 // pred_region
        // Predicated region
        $region29: #{_lambda_.12} parent=27 // pred_check
          %p283 = pneg %p47
        $region30: #{_lambda_.12} parent=27 // pred_check_branch
          %285 = sbr.rel (%p283) target = $region32
        $region31: #{_lambda_.12} parent=27 // pred_region
          %s286 = sand.u32 %s37, 1
          %s287 = sand.u32 %s37, 1
          %s288 = smul.addr %s287, 32
          %s289 = scalar_lea.vmem [#allocation2], %s288
          %s290 = smul.addr %s20, 24
          %s291 = sadd.s32 %s21, %s290
          %s292 = smul.addr %s291, 4
          %s293 = scalar_lea.vmem %s0, %s292
          // Predicated region
          $region33: #{_lambda_.12} parent=31 // pred_check
            _
          $region34: #{_lambda_.12} parent=31 // pred_check_branch
            %295 = sbr.rel (0) target = $region36
          $region35: #{_lambda_.12} parent=31 // pred_region
            // Predicated region
            $region37: #{_lambda_.12} parent=35 // pred_check
              _
            $region38: #{_lambda_.12} parent=35 // pred_check_branch
              %297 = sbr.rel target = $region40
            $region39: #{_lambda_.12} parent=35 // pred_region
              // Predicated region
              $region52: #{_lambda_.12} parent=39 // pred_check
                _
              $region53: #{_lambda_.12} parent=39 // pred_check_branch
                %327 = sbr.rel (0) target = $region55
              $region54: #{_lambda_.12} parent=39 // pred_region
                loop: start=0, step=1, limit=1
                $region56: #{_lambda_.12} parent=54 // loop_pre_header
                  _
                $region57: #{_lambda_.12} parent=54 // loop_header
                  %s329 = sphi 0, %s333
                  %p330 = scmp.ge.s32.totalorder %s329, 1
                  %s334 = sphi %s293, %s293
                  %s335 = sphi %s289, %s289
                $region58: #{_lambda_.12} parent=54 // loop_header_branch
                  %332 = sbr.rel (%p330) target = $region62
                $region59: #{_lambda_.12} parent=54 // loop_body
                  _
                $region60: #{_lambda_.12} parent=54 // loop_footer
                  %s333 = sadd.s32 1, %s329
                $region61: #{_lambda_.12} parent=54 // loop_footer_branch
                  %328 = sbr.rel target = $region57
                $region62: #{_lambda_.12} parent=54 // loop_exit
                  _
                %s337 = ssub.s32 16, 1
                loop: start=0, step=1, limit=1
                $region63: #{_lambda_.12} parent=54 // loop_pre_header
                  _
                $region64: #{_lambda_.12} parent=54 // loop_header
                  %s339 = sphi 0, %s343
                  %p340 = scmp.ge.s32.totalorder %s339, 1
                  %s344 = sphi %s293, %s293
                  %s345 = sphi %s289, %s289
                $region65: #{_lambda_.12} parent=54 // loop_header_branch
                  %342 = sbr.rel (%p340) target = $region69
                $region66: #{_lambda_.12} parent=54 // loop_body
                  %v346 = vld [vmem:[%s344] sm:%s337]
                  %347 = vst [vmem:[%s345] sm:%s337] %v346
                  %v348 = vld [vmem:[%s344 + $0xc] sm:%s337]
                  %349 = vst [vmem:[%s345 + $0x4] sm:%s337] %v348
                  %v350 = vld [vmem:[%s344 + $0x18] sm:%s337]
                  %351 = vst [vmem:[%s345 + $0x8] sm:%s337] %v350
                  %v352 = vld [vmem:[%s344 + $0x24] sm:%s337]
                  %353 = vst [vmem:[%s345 + $0xc] sm:%s337] %v352
                  %v354 = vld [vmem:[%s344 + $0x30] sm:%s337]
                  %355 = vst [vmem:[%s345 + $0x10] sm:%s337] %v354
                  %v356 = vld [vmem:[%s344 + $0x3c] sm:%s337]
                  %357 = vst [vmem:[%s345 + $0x14] sm:%s337] %v356
                  %v358 = vld [vmem:[%s344 + $0x48] sm:%s337]
                  %359 = vst [vmem:[%s345 + $0x18] sm:%s337] %v358
                  %v360 = vld [vmem:[%s344 + $0x54] sm:%s337]
                  %361 = vst [vmem:[%s345 + $0x1c] sm:%s337] %v360
                $region67: #{_lambda_.12} parent=54 // loop_footer
                  %s343 = sadd.s32 1, %s339
                $region68: #{_lambda_.12} parent=54 // loop_footer_branch
                  %338 = sbr.rel target = $region64
                $region69: #{_lambda_.12} parent=54 // loop_exit
                  _
              $region55: #{_lambda_.12} parent=39 // pred_fallthru
                _
            $region40: #{_lambda_.12} parent=35 // pred_fallthru
              _
            // Predicated region
            $region41: #{_lambda_.12} parent=35 // pred_check
              _
            $region42: #{_lambda_.12} parent=35 // pred_check_branch
              %299 = sbr.rel (0) target = $region44
            $region43: #{_lambda_.12} parent=35 // pred_region
              %s301 = ssub.s32 16, 1
              loop: start=0, step=1, limit=1
              $region45: #{_lambda_.12} parent=43 // loop_pre_header
                _
              $region46: #{_lambda_.12} parent=43 // loop_header
                %s303 = sphi 0, %s307
                %p304 = scmp.ge.s32.totalorder %s303, 1
                %s308 = sphi %s293, %s293
                %s309 = sphi %s289, %s289
              $region47: #{_lambda_.12} parent=43 // loop_header_branch
                %306 = sbr.rel (%p304) target = $region51
              $region48: #{_lambda_.12} parent=43 // loop_body
                %v310 = vld [vmem:[%s308] sm:%s301]
                %311 = vst [vmem:[%s309] sm:%s301] %v310
                %v312 = vld [vmem:[%s308 + $0xc] sm:%s301]
                %313 = vst [vmem:[%s309 + $0x4] sm:%s301] %v312
                %v314 = vld [vmem:[%s308 + $0x18] sm:%s301]
                %315 = vst [vmem:[%s309 + $0x8] sm:%s301] %v314
                %v316 = vld [vmem:[%s308 + $0x24] sm:%s301]
                %317 = vst [vmem:[%s309 + $0xc] sm:%s301] %v316
                %v318 = vld [vmem:[%s308 + $0x30] sm:%s301]
                %319 = vst [vmem:[%s309 + $0x10] sm:%s301] %v318
                %v320 = vld [vmem:[%s308 + $0x3c] sm:%s301]
                %321 = vst [vmem:[%s309 + $0x14] sm:%s301] %v320
                %v322 = vld [vmem:[%s308 + $0x48] sm:%s301]
                %323 = vst [vmem:[%s309 + $0x18] sm:%s301] %v322
                %v324 = vld [vmem:[%s308 + $0x54] sm:%s301]
                %325 = vst [vmem:[%s309 + $0x1c] sm:%s301] %v324
              $region49: #{_lambda_.12} parent=43 // loop_footer
                %s307 = sadd.s32 1, %s303
              $region50: #{_lambda_.12} parent=43 // loop_footer_branch
                %302 = sbr.rel target = $region46
              $region51: #{_lambda_.12} parent=43 // loop_exit
                _
            $region44: #{_lambda_.12} parent=35 // pred_fallthru
              _
          $region36: #{_lambda_.12} parent=31 // pred_fallthru
            _
          %362 = vnop
        $region32: #{_lambda_.12} parent=27 // pred_fallthru
          _
        // Predicated region
        $region70: #{_lambda_.12} parent=27 // pred_check
          %p363 = pneg %p77
        $region71: #{_lambda_.12} parent=27 // pred_check_branch
          %365 = sbr.rel (%p363) target = $region73
        $region72: #{_lambda_.12} parent=27 // pred_region
          %s366 = sand.u32 %s67, 1
          %s367 = sand.u32 %s67, 1
          %s368 = smul.addr %s367, 32
          %s369 = scalar_lea.vmem [#allocation3], %s368
          %s370 = sadd.s32 %s21, 1
          %s371 = smul.addr %s20, 24
          %s372 = sadd.s32 %s370, %s371
          %s373 = smul.addr %s372, 4
          %s374 = scalar_lea.vmem %s1, %s373
          // Predicated region
          $region74: #{_lambda_.12} parent=72 // pred_check
            _
          $region75: #{_lambda_.12} parent=72 // pred_check_branch
            %376 = sbr.rel (0) target = $region77
          $region76: #{_lambda_.12} parent=72 // pred_region
            // Predicated region
            $region78: #{_lambda_.12} parent=76 // pred_check
              _
            $region79: #{_lambda_.12} parent=76 // pred_check_branch
              %378 = sbr.rel target = $region81
            $region80: #{_lambda_.12} parent=76 // pred_region
              // Predicated region
              $region93: #{_lambda_.12} parent=80 // pred_check
                _
              $region94: #{_lambda_.12} parent=80 // pred_check_branch
                %408 = sbr.rel (0) target = $region96
              $region95: #{_lambda_.12} parent=80 // pred_region
                loop: start=0, step=1, limit=1
                $region97: #{_lambda_.12} parent=95 // loop_pre_header
                  _
                $region98: #{_lambda_.12} parent=95 // loop_header
                  %s410 = sphi 0, %s414
                  %p411 = scmp.ge.s32.totalorder %s410, 1
                  %s415 = sphi %s374, %s374
                  %s416 = sphi %s369, %s369
                $region99: #{_lambda_.12} parent=95 // loop_header_branch
                  %413 = sbr.rel (%p411) target = $region103
                $region100: #{_lambda_.12} parent=95 // loop_body
                  _
                $region101: #{_lambda_.12} parent=95 // loop_footer
                  %s414 = sadd.s32 1, %s410
                $region102: #{_lambda_.12} parent=95 // loop_footer_branch
                  %409 = sbr.rel target = $region98
                $region103: #{_lambda_.12} parent=95 // loop_exit
                  _
                %s418 = ssub.s32 16, 1
                loop: start=0, step=1, limit=1
                $region104: #{_lambda_.12} parent=95 // loop_pre_header
                  _
                $region105: #{_lambda_.12} parent=95 // loop_header
                  %s420 = sphi 0, %s424
                  %p421 = scmp.ge.s32.totalorder %s420, 1
                  %s425 = sphi %s374, %s374
                  %s426 = sphi %s369, %s369
                $region106: #{_lambda_.12} parent=95 // loop_header_branch
                  %423 = sbr.rel (%p421) target = $region110
                $region107: #{_lambda_.12} parent=95 // loop_body
                  %v427 = vld [vmem:[%s425] sm:%s418]
                  %428 = vst [vmem:[%s426] sm:%s418] %v427
                  %v429 = vld [vmem:[%s425 + $0xc] sm:%s418]
                  %430 = vst [vmem:[%s426 + $0x4] sm:%s418] %v429
                  %v431 = vld [vmem:[%s425 + $0x18] sm:%s418]
                  %432 = vst [vmem:[%s426 + $0x8] sm:%s418] %v431
                  %v433 = vld [vmem:[%s425 + $0x24] sm:%s418]
                  %434 = vst [vmem:[%s426 + $0xc] sm:%s418] %v433
                  %v435 = vld [vmem:[%s425 + $0x30] sm:%s418]
                  %436 = vst [vmem:[%s426 + $0x10] sm:%s418] %v435
                  %v437 = vld [vmem:[%s425 + $0x3c] sm:%s418]
                  %438 = vst [vmem:[%s426 + $0x14] sm:%s418] %v437
                  %v439 = vld [vmem:[%s425 + $0x48] sm:%s418]
                  %440 = vst [vmem:[%s426 + $0x18] sm:%s418] %v439
                  %v441 = vld [vmem:[%s425 + $0x54] sm:%s418]
                  %442 = vst [vmem:[%s426 + $0x1c] sm:%s418] %v441
                $region108: #{_lambda_.12} parent=95 // loop_footer
                  %s424 = sadd.s32 1, %s420
                $region109: #{_lambda_.12} parent=95 // loop_footer_branch
                  %419 = sbr.rel target = $region105
                $region110: #{_lambda_.12} parent=95 // loop_exit
                  _
              $region96: #{_lambda_.12} parent=80 // pred_fallthru
                _
            $region81: #{_lambda_.12} parent=76 // pred_fallthru
              _
            // Predicated region
            $region82: #{_lambda_.12} parent=76 // pred_check
              _
            $region83: #{_lambda_.12} parent=76 // pred_check_branch
              %380 = sbr.rel (0) target = $region85
            $region84: #{_lambda_.12} parent=76 // pred_region
              %s382 = ssub.s32 16, 1
              loop: start=0, step=1, limit=1
              $region86: #{_lambda_.12} parent=84 // loop_pre_header
                _
              $region87: #{_lambda_.12} parent=84 // loop_header
                %s384 = sphi 0, %s388
                %p385 = scmp.ge.s32.totalorder %s384, 1
                %s389 = sphi %s374, %s374
                %s390 = sphi %s369, %s369
              $region88: #{_lambda_.12} parent=84 // loop_header_branch
                %387 = sbr.rel (%p385) target = $region92
              $region89: #{_lambda_.12} parent=84 // loop_body
                %v391 = vld [vmem:[%s389] sm:%s382]
                %392 = vst [vmem:[%s390] sm:%s382] %v391
                %v393 = vld [vmem:[%s389 + $0xc] sm:%s382]
                %394 = vst [vmem:[%s390 + $0x4] sm:%s382] %v393
                %v395 = vld [vmem:[%s389 + $0x18] sm:%s382]
                %396 = vst [vmem:[%s390 + $0x8] sm:%s382] %v395
                %v397 = vld [vmem:[%s389 + $0x24] sm:%s382]
                %398 = vst [vmem:[%s390 + $0xc] sm:%s382] %v397
                %v399 = vld [vmem:[%s389 + $0x30] sm:%s382]
                %400 = vst [vmem:[%s390 + $0x10] sm:%s382] %v399
                %v401 = vld [vmem:[%s389 + $0x3c] sm:%s382]
                %402 = vst [vmem:[%s390 + $0x14] sm:%s382] %v401
                %v403 = vld [vmem:[%s389 + $0x48] sm:%s382]
                %404 = vst [vmem:[%s390 + $0x18] sm:%s382] %v403
                %v405 = vld [vmem:[%s389 + $0x54] sm:%s382]
                %406 = vst [vmem:[%s390 + $0x1c] sm:%s382] %v405
              $region90: #{_lambda_.12} parent=84 // loop_footer
                %s388 = sadd.s32 1, %s384
              $region91: #{_lambda_.12} parent=84 // loop_footer_branch
                %383 = sbr.rel target = $region87
              $region92: #{_lambda_.12} parent=84 // loop_exit
                _
            $region85: #{_lambda_.12} parent=76 // pred_fallthru
              _
          $region77: #{_lambda_.12} parent=72 // pred_fallthru
            _
          %443 = vnop
        $region73: #{_lambda_.12} parent=27 // pred_fallthru
          _
        // Predicated region
        $region111: #{_lambda_.12} parent=27 // pred_check
          %p444 = pneg %p107
        $region112: #{_lambda_.12} parent=27 // pred_check_branch
          %446 = sbr.rel (%p444) target = $region114
        $region113: #{_lambda_.12} parent=27 // pred_region
          %s447 = sand.u32 %s97, 1
          %s448 = sand.u32 %s97, 1
          %s449 = smul.addr %s448, 32
          %s450 = scalar_lea.vmem [#allocation4], %s449
          %s451 = sadd.s32 %s21, 2
          %s452 = smul.addr %s20, 24
          %s453 = sadd.s32 %s451, %s452
          %s454 = smul.addr %s453, 4
          %s455 = scalar_lea.vmem %s2, %s454
          // Predicated region
          $region115: #{_lambda_.12} parent=113 // pred_check
            _
          $region116: #{_lambda_.12} parent=113 // pred_check_branch
            %457 = sbr.rel (0) target = $region118
          $region117: #{_lambda_.12} parent=113 // pred_region
            // Predicated region
            $region119: #{_lambda_.12} parent=117 // pred_check
              _
            $region120: #{_lambda_.12} parent=117 // pred_check_branch
              %459 = sbr.rel target = $region122
            $region121: #{_lambda_.12} parent=117 // pred_region
              // Predicated region
              $region134: #{_lambda_.12} parent=121 // pred_check
                _
              $region135: #{_lambda_.12} parent=121 // pred_check_branch
                %489 = sbr.rel (0) target = $region137
              $region136: #{_lambda_.12} parent=121 // pred_region
                loop: start=0, step=1, limit=1
                $region138: #{_lambda_.12} parent=136 // loop_pre_header
                  _
                $region139: #{_lambda_.12} parent=136 // loop_header
                  %s491 = sphi 0, %s495
                  %p492 = scmp.ge.s32.totalorder %s491, 1
                  %s496 = sphi %s455, %s455
                  %s497 = sphi %s450, %s450
                $region140: #{_lambda_.12} parent=136 // loop_header_branch
                  %494 = sbr.rel (%p492) target = $region144
                $region141: #{_lambda_.12} parent=136 // loop_body
                  _
                $region142: #{_lambda_.12} parent=136 // loop_footer
                  %s495 = sadd.s32 1, %s491
                $region143: #{_lambda_.12} parent=136 // loop_footer_branch
                  %490 = sbr.rel target = $region139
                $region144: #{_lambda_.12} parent=136 // loop_exit
                  _
                %s499 = ssub.s32 16, 1
                loop: start=0, step=1, limit=1
                $region145: #{_lambda_.12} parent=136 // loop_pre_header
                  _
                $region146: #{_lambda_.12} parent=136 // loop_header
                  %s501 = sphi 0, %s505
                  %p502 = scmp.ge.s32.totalorder %s501, 1
                  %s506 = sphi %s455, %s455
                  %s507 = sphi %s450, %s450
                $region147: #{_lambda_.12} parent=136 // loop_header_branch
                  %504 = sbr.rel (%p502) target = $region151
                $region148: #{_lambda_.12} parent=136 // loop_body
                  %v508 = vld [vmem:[%s506] sm:%s499]
                  %509 = vst [vmem:[%s507] sm:%s499] %v508
                  %v510 = vld [vmem:[%s506 + $0xc] sm:%s499]
                  %511 = vst [vmem:[%s507 + $0x4] sm:%s499] %v510
                  %v512 = vld [vmem:[%s506 + $0x18] sm:%s499]
                  %513 = vst [vmem:[%s507 + $0x8] sm:%s499] %v512
                  %v514 = vld [vmem:[%s506 + $0x24] sm:%s499]
                  %515 = vst [vmem:[%s507 + $0xc] sm:%s499] %v514
                  %v516 = vld [vmem:[%s506 + $0x30] sm:%s499]
                  %517 = vst [vmem:[%s507 + $0x10] sm:%s499] %v516
                  %v518 = vld [vmem:[%s506 + $0x3c] sm:%s499]
                  %519 = vst [vmem:[%s507 + $0x14] sm:%s499] %v518
                  %v520 = vld [vmem:[%s506 + $0x48] sm:%s499]
                  %521 = vst [vmem:[%s507 + $0x18] sm:%s499] %v520
                  %v522 = vld [vmem:[%s506 + $0x54] sm:%s499]
                  %523 = vst [vmem:[%s507 + $0x1c] sm:%s499] %v522
                $region149: #{_lambda_.12} parent=136 // loop_footer
                  %s505 = sadd.s32 1, %s501
                $region150: #{_lambda_.12} parent=136 // loop_footer_branch
                  %500 = sbr.rel target = $region146
                $region151: #{_lambda_.12} parent=136 // loop_exit
                  _
              $region137: #{_lambda_.12} parent=121 // pred_fallthru
                _
            $region122: #{_lambda_.12} parent=117 // pred_fallthru
              _
            // Predicated region
            $region123: #{_lambda_.12} parent=117 // pred_check
              _
            $region124: #{_lambda_.12} parent=117 // pred_check_branch
              %461 = sbr.rel (0) target = $region126
            $region125: #{_lambda_.12} parent=117 // pred_region
              %s463 = ssub.s32 16, 1
              loop: start=0, step=1, limit=1
              $region127: #{_lambda_.12} parent=125 // loop_pre_header
                _
              $region128: #{_lambda_.12} parent=125 // loop_header
                %s465 = sphi 0, %s469
                %p466 = scmp.ge.s32.totalorder %s465, 1
                %s470 = sphi %s455, %s455
                %s471 = sphi %s450, %s450
              $region129: #{_lambda_.12} parent=125 // loop_header_branch
                %468 = sbr.rel (%p466) target = $region133
              $region130: #{_lambda_.12} parent=125 // loop_body
                %v472 = vld [vmem:[%s470] sm:%s463]
                %473 = vst [vmem:[%s471] sm:%s463] %v472
                %v474 = vld [vmem:[%s470 + $0xc] sm:%s463]
                %475 = vst [vmem:[%s471 + $0x4] sm:%s463] %v474
                %v476 = vld [vmem:[%s470 + $0x18] sm:%s463]
                %477 = vst [vmem:[%s471 + $0x8] sm:%s463] %v476
                %v478 = vld [vmem:[%s470 + $0x24] sm:%s463]
                %479 = vst [vmem:[%s471 + $0xc] sm:%s463] %v478
                %v480 = vld [vmem:[%s470 + $0x30] sm:%s463]
                %481 = vst [vmem:[%s471 + $0x10] sm:%s463] %v480
                %v482 = vld [vmem:[%s470 + $0x3c] sm:%s463]
                %483 = vst [vmem:[%s471 + $0x14] sm:%s463] %v482
                %v484 = vld [vmem:[%s470 + $0x48] sm:%s463]
                %485 = vst [vmem:[%s471 + $0x18] sm:%s463] %v484
                %v486 = vld [vmem:[%s470 + $0x54] sm:%s463]
                %487 = vst [vmem:[%s471 + $0x1c] sm:%s463] %v486
              $region131: #{_lambda_.12} parent=125 // loop_footer
                %s469 = sadd.s32 1, %s465
              $region132: #{_lambda_.12} parent=125 // loop_footer_branch
                %464 = sbr.rel target = $region128
              $region133: #{_lambda_.12} parent=125 // loop_exit
                _
            $region126: #{_lambda_.12} parent=117 // pred_fallthru
              _
          $region118: #{_lambda_.12} parent=113 // pred_fallthru
            _
          %524 = vnop
        $region114: #{_lambda_.12} parent=27 // pred_fallthru
          _
        // Predicated region
        $region152: #{_lambda_.12} parent=27 // pred_check
          %p525 = pneg %p211
        $region153: #{_lambda_.12} parent=27 // pred_check_branch
          %527 = sbr.rel (%p525) target = $region155
        $region154: #{_lambda_.12} parent=27 // pred_region
          %p528 = scmp.lt.s32.totalorder %s20, 1
          %s529 = scalar_select %p528, %s20, 1
          %s530 = smul.addr %s529, 8
          %s531 = smul.addr %s530, 4
          %s532 = scalar_lea.vmem %s6, %s531
        $region155: #{_lambda_.12} parent=27 // pred_fallthru
          _
      $region28: #{_lambda_.12} parent=5 // pred_fallthru
        _
      %p533 = scmp.le.s32.totalorder 1, %s13
      %p534 = scmp.lt.s32.totalorder %s13, 3
      %p535 = pnand %p533, %p534
      %p536 = pneg %p535
      // Predicated region
      $region156: #{_lambda_.12} parent=5 // pred_check
        _
      $region157: #{_lambda_.12} parent=5 // pred_check_branch
        %538 = sbr.rel (%p535) target = $region159
      $region158: #{_lambda_.12} parent=5 // pred_region
        %s539 = ssub.s32 %s13, 1
        %s540 = sand.u32 %s40, 1
        %s541 = sand.u32 %s40, 1
        %s542 = smul.addr %s541, 32
        %s543 = scalar_lea.vmem [#allocation2], %s542
        // Predicated region
        $region160: #{_lambda_.12} parent=158 // pred_check
          %p544 = pneg %p53
        $region161: #{_lambda_.12} parent=158 // pred_check_branch
          %546 = sbr.rel (%p544) target = $region163
        $region162: #{_lambda_.12} parent=158 // pred_region
          _
        $region163: #{_lambda_.12} parent=158 // pred_fallthru
          _
        %s547 = sand.u32 %s70, 1
        %s548 = sand.u32 %s70, 1
        %s549 = smul.addr %s548, 32
        %s550 = scalar_lea.vmem [#allocation3], %s549
        // Predicated region
        $region164: #{_lambda_.12} parent=158 // pred_check
          %p551 = pneg %p83
        $region165: #{_lambda_.12} parent=158 // pred_check_branch
          %553 = sbr.rel (%p551) target = $region167
        $region166: #{_lambda_.12} parent=158 // pred_region
          _
        $region167: #{_lambda_.12} parent=158 // pred_fallthru
          _
        %s554 = sand.u32 %s100, 1
        %s555 = sand.u32 %s100, 1
        %s556 = smul.addr %s555, 32
        %s557 = scalar_lea.vmem [#allocation4], %s556
        // Predicated region
        $region168: #{_lambda_.12} parent=158 // pred_check
          %p558 = pneg %p113
        $region169: #{_lambda_.12} parent=158 // pred_check_branch
          %560 = sbr.rel (%p558) target = $region171
        $region170: #{_lambda_.12} parent=158 // pred_region
          _
        $region171: #{_lambda_.12} parent=158 // pred_fallthru
          _
        %s561 = sand.u32 %s40, 1
        %s562 = sand.u32 %s40, 1
        %s563 = smul.addr %s562, 32
        %s564 = scalar_lea.vmem [#allocation2], %s563
        %p565 = pneg %p53
        %p566 = pneg %p50
        %s567 = sand.u32 %s70, 1
        %s568 = sand.u32 %s70, 1
        %s569 = smul.addr %s568, 32
        %s570 = scalar_lea.vmem [#allocation3], %s569
        %p571 = pneg %p83
        %p572 = pneg %p80
        %s573 = sand.u32 %s100, 1
        %s574 = sand.u32 %s100, 1
        %s575 = smul.addr %s574, 32
        %s576 = scalar_lea.vmem [#allocation4], %s575
        %p577 = pneg %p113
        %p578 = pneg %p110
        %p579 = scmp.lt.s32.totalorder %s23, 0
        %s580 = scalar_select %p579, %s23, 0
        %s581 = smul.addr %s580, 4
        %s582 = scalar_lea.vmem %s3, %s581
        %p583 = pneg %p139
        %p584 = pneg %p136
        %p585 = scmp.lt.s32.totalorder %s23, 0
        %s586 = scalar_select %p585, %s23, 0
        %s587 = scalar_lea.vmem %s4, %s586
        %p588 = pneg %p165
        %p589 = pneg %p162
        %p590 = scmp.lt.s32.totalorder %s23, 0
        %s591 = scalar_select %p590, %s23, 0
        %s592 = scalar_lea.vmem %s5, %s591
        %p593 = pneg %p191
        %p594 = pneg %p188
        %p595 = scmp.lt.s32.totalorder %s22, 1
        %s596 = scalar_select %p595, %s22, 1
        %s597 = smul.addr %s596, 8
        %s598 = smul.addr %s597, 4
        %s599 = scalar_lea.vmem %s6, %s598
        %p600 = pneg %p217
        %p601 = pneg %p214
        %p602 = pneg %p245
        %p603 = pneg %p242
        %p604 = scmp.lt.s32.totalorder %s22, 1
        %s605 = scalar_select %p604, %s22, 1
        %p606 = scmp.lt.s32.totalorder %s23, 0
        %s607 = scalar_select %p606, %s23, 0
        %s608 = smul.addr %s605, 8
        %s609 = sadd.s32 %s607, %s608
        %s610 = smul.addr %s609, 4
        %s611 = scalar_lea.vmem %s7, %s610
        %s612 = sadd.s32 %s23, 1
        %s613 = sadd.s32 %s23, 2
        %p614 = scmp.lt.s32.totalorder %s23, 0
        %s615 = scalar_select %p614, %s23, 0
        %s616 = smul.addr %s615, 4
        %s617 = scalar_lea.vmem %s3, %s616
        %p618 = scmp.lt.s32.totalorder %s23, 0
        %s619 = scalar_select %p618, %s23, 0
        %s620 = scalar_lea.vmem %s4, %s619
        %p621 = scmp.lt.s32.totalorder %s23, 0
        %s622 = scalar_select %p621, %s23, 0
        %s623 = scalar_lea.vmem %s5, %s622
        %p624 = scmp.lt.s32.totalorder %s22, 1
        %s625 = scalar_select %p624, %s22, 1
        %s626 = smul.addr %s625, 8
        %s627 = smul.addr %s626, 4
        %s628 = scalar_lea.vmem %s6, %s627
        %p629 = scmp.lt.s32.totalorder %s22, 1
        %s630 = scalar_select %p629, %s22, 1
        %p631 = scmp.lt.s32.totalorder %s23, 0
        %s632 = scalar_select %p631, %s23, 0
        %s633 = smul.addr %s630, 8
        %s634 = sadd.s32 %s632, %s633
        %s635 = smul.addr %s634, 4
        %s636 = scalar_lea.vmem %s7, %s635
        %v638 = vld [vmem:[%s628] sm:$0xf]
        %v639 = vld [vmem:[%s628 + $0x4] sm:$0xf]
        %v640 = vld [vmem:[%s628 + $0x8] sm:$0xf]
        %v641 = vld [vmem:[%s628 + $0xc] sm:$0xf]
        %v642 = vld [vmem:[%s628 + $0x10] sm:$0xf]
        %v643 = vld [vmem:[%s628 + $0x14] sm:$0xf]
        %v644 = vld [vmem:[%s628 + $0x18] sm:$0xf]
        %v645 = vld [vmem:[%s628 + $0x1c] sm:$0xf]
        %v646 = vunpack.c.l.bf16 %v638
        %v647 = vunpack.c.l.bf16 %v639
        %v648 = vunpack.c.l.bf16 %v640
        %v649 = vunpack.c.l.bf16 %v641
        %v650 = vunpack.c.l.bf16 %v642
        %v651 = vunpack.c.l.bf16 %v643
        %v652 = vunpack.c.l.bf16 %v644
        %v653 = vunpack.c.l.bf16 %v645
        %v654 = vld [vmem:[%s543] sm:$0xf]
        %v655 = vld [vmem:[%s543 + $0x4] sm:$0xf]
        %v656 = vld [vmem:[%s543 + $0x8] sm:$0xf]
        %v657 = vld [vmem:[%s543 + $0xc] sm:$0xf]
        %v658 = vld [vmem:[%s543 + $0x10] sm:$0xf]
        %v659 = vld [vmem:[%s543 + $0x14] sm:$0xf]
        %v660 = vld [vmem:[%s543 + $0x18] sm:$0xf]
        %v661 = vld [vmem:[%s543 + $0x1c] sm:$0xf]
        %v662 = vunpack.c.l.bf16 %v654
        %v663 = vunpack.c.l.bf16 %v655
        %v664 = vunpack.c.l.bf16 %v656
        %v665 = vunpack.c.l.bf16 %v657
        %v666 = vunpack.c.l.bf16 %v658
        %v667 = vunpack.c.l.bf16 %v659
        %v668 = vunpack.c.l.bf16 %v660
        %v669 = vunpack.c.l.bf16 %v661
        %v670 = vld [vmem:[%s550] sm:$0xf]
        %v671 = vld [vmem:[%s550 + $0x4] sm:$0xf]
        %v672 = vld [vmem:[%s550 + $0x8] sm:$0xf]
        %v673 = vld [vmem:[%s550 + $0xc] sm:$0xf]
        %v674 = vld [vmem:[%s550 + $0x10] sm:$0xf]
        %v675 = vld [vmem:[%s550 + $0x14] sm:$0xf]
        %v676 = vld [vmem:[%s550 + $0x18] sm:$0xf]
        %v677 = vld [vmem:[%s550 + $0x1c] sm:$0xf]
        %v678 = vld [vmem:[%s557] sm:$0xf]
        %v679 = vld [vmem:[%s557 + $0x4] sm:$0xf]
        %v680 = vld [vmem:[%s557 + $0x8] sm:$0xf]
        %v681 = vld [vmem:[%s557 + $0xc] sm:$0xf]
        %v682 = vld [vmem:[%s557 + $0x10] sm:$0xf]
        %v683 = vld [vmem:[%s557 + $0x14] sm:$0xf]
        %v684 = vld [vmem:[%s557 + $0x18] sm:$0xf]
        %v685 = vld [vmem:[%s557 + $0x1c] sm:$0xf]
        %v686 = vld [vmem:[%s617] sm:$0xf]
        %v687 = vld [vmem:[%s617 + $0x4] sm:$0xf]
        %v688 = vld [vmem:[%s617 + $0x8] sm:$0xf]
        %v689 = vld [vmem:[%s617 + $0xc] sm:$0xf]
        %v690 = vld [vmem:[%s617 + $0x10] sm:$0xf]
        %v691 = vld [vmem:[%s617 + $0x14] sm:$0xf]
        %v692 = vld [vmem:[%s617 + $0x18] sm:$0xf]
        %v693 = vld [vmem:[%s617 + $0x1c] sm:$0xf]
        %v694 = vld [vmem:[%s617 + $0x20] sm:$0xf]
        %v695 = vld [vmem:[%s617 + $0x24] sm:$0xf]
        %v696 = vld [vmem:[%s617 + $0x28] sm:$0xf]
        %v697 = vld [vmem:[%s617 + $0x2c] sm:$0xf]
        %v698 = vld [vmem:[%s617 + $0x30] sm:$0xf]
        %v699 = vld [vmem:[%s617 + $0x34] sm:$0xf]
        %v700 = vld [vmem:[%s617 + $0x38] sm:$0xf]
        %v701 = vld [vmem:[%s617 + $0x3c] sm:$0xf]
        %v702 = vld [vmem:[%s620] sm:$0x1]
        %v703 = vld [vmem:[%s623] sm:$0x1]
        %v705 = vperm.slane %v702, 0
        %v707 = vadd.f32 %v662, %v705
        %v708 = vadd.f32 %v663, %v705
        %v709 = vadd.f32 %v664, %v705
        %v710 = vadd.f32 %v665, %v705
        %v711 = vadd.f32 %v666, %v705
        %v712 = vadd.f32 %v667, %v705
        %v713 = vadd.f32 %v668, %v705
        %v714 = vadd.f32 %v669, %v705
        %v715 = vpack.c.bf16 %v708, %v707
        %v716 = vpack.c.bf16 %v710, %v709
        %v717 = vpack.c.bf16 %v712, %v711
        %v718 = vpack.c.bf16 %v714, %v713
        %v720 = vperm.slane %v703, 0
        %v722 = vadd.f32 %v662, %v720
        %v723 = vadd.f32 %v663, %v720
        %v724 = vadd.f32 %v664, %v720
        %v725 = vadd.f32 %v665, %v720
        %v726 = vadd.f32 %v666, %v720
        %v727 = vadd.f32 %v667, %v720
        %v728 = vadd.f32 %v668, %v720
        %v729 = vadd.f32 %v669, %v720
        %v730 = vpack.c.bf16 %v723, %v722
        %v731 = vpack.c.bf16 %v725, %v724
        %v732 = vpack.c.bf16 %v727, %v726
        %v733 = vpack.c.bf16 %v729, %v728
        %v750 = vunpack.c.l.b16 %v686
        %v751 = vunpack.c.l.b16 %v687
        %v752 = vunpack.c.l.b16 %v688
        %v753 = vunpack.c.l.b16 %v689
        %v754 = vunpack.c.l.b16 %v690
        %v755 = vunpack.c.l.b16 %v691
        %v756 = vunpack.c.l.b16 %v692
        %v757 = vunpack.c.l.b16 %v693
        %v758 = vunpack.c.l.b16 %v694
        %v759 = vunpack.c.l.b16 %v695
        %v760 = vunpack.c.l.b16 %v696
        %v761 = vunpack.c.l.b16 %v697
        %v762 = vunpack.c.l.b16 %v698
        %v763 = vunpack.c.l.b16 %v699
        %v764 = vunpack.c.l.b16 %v700
        %v765 = vunpack.c.l.b16 %v701
        %v766 = vpack.c.b16 %v751, %v750
        %v767 = vpack.c.b16 %v753, %v752
        %v768 = vpack.c.b16 %v755, %v754
        %v769 = vpack.c.b16 %v757, %v756
        %v770 = vpack.c.b16 %v759, %v758
        %v771 = vpack.c.b16 %v761, %v760
        %v772 = vpack.c.b16 %v763, %v762
        %v773 = vpack.c.b16 %v765, %v764
        %vm774 = vcmask 261120
        %v776 = vsel %vm774, %v730, 0
        %v779 = vsel %vm774, %v731, 0
        %v782 = vsel %vm774, %v732, 0
        %v785 = vsel %vm774, %v733, 0
        %v788 = vsel %vm774, %v766, 0
        %v791 = vsel %vm774, %v767, 0
        %v794 = vsel %vm774, %v768, 0
        %v797 = vsel %vm774, %v769, 0
        %v800 = vsel %vm774, %v770, 0
        %v803 = vsel %vm774, %v771, 0
        %v806 = vsel %vm774, %v772, 0
        %v809 = vsel %vm774, %v773, 0
        %811 = vmatpush.bf16.xpose.msra.mxu0 %v809
        %812 = vmatpush.bf16.xpose.msra.mxu0 %v806
        %813 = vmatpush.bf16.xpose.msra.mxu0 %v803
        %814 = vmatpush.bf16.xpose.msra.mxu0 %v800
        %815 = vmatpush.bf16.xpose.msra.mxu0 %v797
        %816 = vmatpush.bf16.xpose.msra.mxu0 %v794
        %817 = vmatpush.bf16.xpose.msra.mxu0 %v791
        %818 = vmatpush.bf16.xpose.msra.mxu0 %v788
        %819 = vmatmul.bf16.gmra.mxu0 %v776
        %v820 = vpop.f32.mrf.mxu0
        %v821 = vadd.f32 0.0, %v820
        %v822 = vpop.f32.mrf.mxu0
        %v823 = vadd.f32 0.0, %v822
        %824 = vmatmul.bf16.gmra.mxu0 %v779
        %v825 = vpop.f32.mrf.mxu0
        %v826 = vadd.f32 0.0, %v825
        %v827 = vpop.f32.mrf.mxu0
        %v828 = vadd.f32 0.0, %v827
        %829 = vmatmul.bf16.gmra.mxu0 %v782
        %v830 = vpop.f32.mrf.mxu0
        %v831 = vadd.f32 0.0, %v830
        %v832 = vpop.f32.mrf.mxu0
        %v833 = vadd.f32 0.0, %v832
        %834 = vmatmul.bf16.gmra.mxu0 %v785
        %v835 = vpop.f32.mrf.mxu0
        %v836 = vadd.f32 0.0, %v835
        %v837 = vpop.f32.mrf.mxu0
        %v838 = vadd.f32 0.0, %v837
        %839 = vdwg.mxu0
        %s841 = sor.u32 256, 64
        %842 = vrot.lane.b32.xlu0 %v821, %s841
        %v843 = vpop.permute.xlu0 %842
        %s845 = sor.u32 256, 72
        %846 = vrot.lane.b32.xlu0 %v823, %s845
        %v847 = vpop.permute.xlu0 %846
        %s849 = sor.u32 256, 80
        %850 = vrot.lane.b32.xlu0 %v826, %s849
        %v851 = vpop.permute.xlu0 %850
        %s853 = sor.u32 256, 88
        %854 = vrot.lane.b32.xlu0 %v828, %s853
        %v855 = vpop.permute.xlu0 %854
        %s857 = sor.u32 256, 96
        %858 = vrot.lane.b32.xlu0 %v831, %s857
        %v859 = vpop.permute.xlu0 %858
        %s861 = sor.u32 256, 104
        %862 = vrot.lane.b32.xlu0 %v833, %s861
        %v863 = vpop.permute.xlu0 %862
        %s865 = sor.u32 256, 112
        %866 = vrot.lane.b32.xlu0 %v836, %s865
        %v867 = vpop.permute.xlu0 %866
        %s869 = sor.u32 256, 120
        %870 = vrot.lane.b32.xlu0 %v838, %s869
        %v871 = vpop.permute.xlu0 %870
        %v880 = vunpack.c.l.b16 %v670
        %v881 = vunpack.c.l.b16 %v671
        %v882 = vunpack.c.l.b16 %v672
        %v883 = vunpack.c.l.b16 %v673
        %v884 = vunpack.c.l.b16 %v674
        %v885 = vunpack.c.l.b16 %v675
        %v886 = vunpack.c.l.b16 %v676
        %v887 = vunpack.c.l.b16 %v677
        %v888 = vpack.c.b16 %v881, %v880
        %v889 = vpack.c.b16 %v883, %v882
        %v890 = vpack.c.b16 %v885, %v884
        %v891 = vpack.c.b16 %v887, %v886
        %v893 = vsel %vm774, %v715, 0
        %v896 = vsel %vm774, %v716, 0
        %v899 = vsel %vm774, %v717, 0
        %v902 = vsel %vm774, %v718, 0
        %v905 = vsel %vm774, %v888, 0
        %v908 = vsel %vm774, %v889, 0
        %v911 = vsel %vm774, %v890, 0
        %v914 = vsel %vm774, %v891, 0
        %916 = vmatpush.bf16.xpose.msra.mxu0 0
        %917 = vmatpush.bf16.xpose.msra.mxu0 0
        %918 = vmatpush.bf16.xpose.msra.mxu0 0
        %919 = vmatpush.bf16.xpose.msra.mxu0 0
        %920 = vmatpush.bf16.xpose.msra.mxu0 %v914
        %921 = vmatpush.bf16.xpose.msra.mxu0 %v911
        %922 = vmatpush.bf16.xpose.msra.mxu0 %v908
        %923 = vmatpush.bf16.xpose.msra.mxu0 %v905
        %924 = vmatmul.bf16.gmra.mxu0 %v893
        %v925 = vpop.f32.mrf.mxu0
        %v926 = vadd.f32 %v843, %v925
        %v927 = vpop.f32.mrf.mxu0
        %v928 = vadd.f32 %v847, %v927
        %929 = vmatmul.bf16.gmra.mxu0 %v896
        %v930 = vpop.f32.mrf.mxu0
        %v931 = vadd.f32 %v851, %v930
        %v932 = vpop.f32.mrf.mxu0
        %v933 = vadd.f32 %v855, %v932
        %934 = vmatmul.bf16.gmra.mxu0 %v899
        %v935 = vpop.f32.mrf.mxu0
        %v936 = vadd.f32 %v859, %v935
        %v937 = vpop.f32.mrf.mxu0
        %v938 = vadd.f32 %v863, %v937
        %939 = vmatmul.bf16.gmra.mxu0 %v902
        %v940 = vpop.f32.mrf.mxu0
        %v941 = vadd.f32 %v867, %v940
        %v942 = vpop.f32.mrf.mxu0
        %v943 = vadd.f32 %v871, %v942
        %944 = vdwg.mxu0
        %v945 = vmul.f32 %v926, 0.17677669
        %v946 = vmul.f32 %v928, 0.17677669
        %v947 = vmul.f32 %v931, 0.17677669
        %v948 = vmul.f32 %v933, 0.17677669
        %v949 = vmul.f32 %v936, 0.17677669
        %v950 = vmul.f32 %v938, 0.17677669
        %v951 = vmul.f32 %v941, 0.17677669
        %v952 = vmul.f32 %v943, 0.17677669
        %v953 = vadd.f32 %v945, %v646
        %v954 = vadd.f32 %v946, %v647
        %v955 = vadd.f32 %v947, %v648
        %v956 = vadd.f32 %v948, %v649
        %v957 = vadd.f32 %v949, %v650
        %v958 = vadd.f32 %v950, %v651
        %v959 = vadd.f32 %v951, %v652
        %v960 = vadd.f32 %v952, %v653
        %vm961 = vcmask 523264
        %v962 = vsel %vm961, %v953, -inf
        %963 = vmax.xlane.f32.xlu0 %v962
        %v964 = vpop.xlane.xlu0 %963
        %v965 = vsel %vm961, %v954, -inf
        %966 = vmax.xlane.f32.xlu0 %v965
        %v967 = vpop.xlane.xlu0 %966
        %v968 = vsel %vm961, %v955, -inf
        %969 = vmax.xlane.f32.xlu0 %v968
        %v970 = vpop.xlane.xlu0 %969
        %v971 = vsel %vm961, %v956, -inf
        %972 = vmax.xlane.f32.xlu0 %v971
        %v973 = vpop.xlane.xlu0 %972
        %v974 = vsel %vm961, %v957, -inf
        %975 = vmax.xlane.f32.xlu0 %v974
        %v976 = vpop.xlane.xlu0 %975
        %v977 = vsel %vm961, %v958, -inf
        %978 = vmax.xlane.f32.xlu0 %v977
        %v979 = vpop.xlane.xlu0 %978
        %v980 = vsel %vm961, %v959, -inf
        %981 = vmax.xlane.f32.xlu0 %v980
        %v982 = vpop.xlane.xlu0 %981
        %v983 = vsel %vm961, %v960, -inf
        %984 = vmax.xlane.f32.xlu0 %v983
        %v985 = vpop.xlane.xlu0 %984
        %v986 = vsub.f32 %v953, %v964
        %v987 = vsub.f32 %v954, %v967
        %v988 = vsub.f32 %v955, %v970
        %v989 = vsub.f32 %v956, %v973
        %v990 = vsub.f32 %v957, %v976
        %v991 = vsub.f32 %v958, %v979
        %v992 = vsub.f32 %v959, %v982
        %v993 = vsub.f32 %v960, %v985
        %v994 = vmul.f32 %v986, 1.442695
        %v995 = vpow.pop %v994
        %v996 = vmul.f32 %v987, 1.442695
        %v997 = vpow.pop %v996
        %v998 = vmul.f32 %v988, 1.442695
        %v999 = vpow.pop %v998
        %v1000 = vmul.f32 %v989, 1.442695
        %v1001 = vpow.pop %v1000
        %v1002 = vmul.f32 %v990, 1.442695
        %v1003 = vpow.pop %v1002
        %v1004 = vmul.f32 %v991, 1.442695
        %v1005 = vpow.pop %v1004
        %v1006 = vmul.f32 %v992, 1.442695
        %v1007 = vpow.pop %v1006
        %v1008 = vmul.f32 %v993, 1.442695
        %v1009 = vpow.pop %v1008
        %v1010 = vsel %vm961, %v995, 0.0
        %1011 = vadd.xlane.f32.xlu0 %v1010
        %v1012 = vpop.xlane.xlu0 %1011
        %v1013 = vsel %vm961, %v997, 0.0
        %1014 = vadd.xlane.f32.xlu0 %v1013
        %v1015 = vpop.xlane.xlu0 %1014
        %v1016 = vsel %vm961, %v999, 0.0
        %1017 = vadd.xlane.f32.xlu0 %v1016
        %v1018 = vpop.xlane.xlu0 %1017
        %v1019 = vsel %vm961, %v1001, 0.0
        %1020 = vadd.xlane.f32.xlu0 %v1019
        %v1021 = vpop.xlane.xlu0 %1020
        %v1022 = vsel %vm961, %v1003, 0.0
        %1023 = vadd.xlane.f32.xlu0 %v1022
        %v1024 = vpop.xlane.xlu0 %1023
        %v1025 = vsel %vm961, %v1005, 0.0
        %1026 = vadd.xlane.f32.xlu0 %v1025
        %v1027 = vpop.xlane.xlu0 %1026
        %v1028 = vsel %vm961, %v1007, 0.0
        %1029 = vadd.xlane.f32.xlu0 %v1028
        %v1030 = vpop.xlane.xlu0 %1029
        %v1031 = vsel %vm961, %v1009, 0.0
        %1032 = vadd.xlane.f32.xlu0 %v1031
        %v1033 = vpop.xlane.xlu0 %1032
        %v1034 = vrcp.pop %v1012
        %v1035 = vrcp.pop %v1015
        %v1036 = vrcp.pop %v1018
        %v1037 = vrcp.pop %v1021
        %v1038 = vrcp.pop %v1024
        %v1039 = vrcp.pop %v1027
        %v1040 = vrcp.pop %v1030
        %v1041 = vrcp.pop %v1033
        %v1042 = vmul.f32 %v995, %v1034
        %v1043 = vmul.f32 %v997, %v1035
        %v1044 = vmul.f32 %v999, %v1036
        %v1045 = vmul.f32 %v1001, %v1037
        %v1046 = vmul.f32 %v1003, %v1038
        %v1047 = vmul.f32 %v1005, %v1039
        %v1048 = vmul.f32 %v1007, %v1040
        %v1049 = vmul.f32 %v1009, %v1041
        %v1050 = vpack.c.bf16 %v1043, %v1042
        %v1051 = vpack.c.bf16 %v1045, %v1044
        %v1052 = vpack.c.bf16 %v1047, %v1046
        %v1053 = vpack.c.bf16 %v1049, %v1048
        %v1062 = vunpack.c.l.b16 %v678
        %v1063 = vunpack.c.l.b16 %v679
        %v1064 = vunpack.c.l.b16 %v680
        %v1065 = vunpack.c.l.b16 %v681
        %v1066 = vunpack.c.l.b16 %v682
        %v1067 = vunpack.c.l.b16 %v683
        %v1068 = vunpack.c.l.b16 %v684
        %v1069 = vunpack.c.l.b16 %v685
        %v1070 = vpack.c.b16 %v1063, %v1062
        %v1071 = vpack.c.b16 %v1065, %v1064
        %v1072 = vpack.c.b16 %v1067, %v1066
        %v1073 = vpack.c.b16 %v1069, %v1068
        %v1079 = vsel %vm961, %v1050, 0
        %v1082 = vsel %vm961, %v1051, 0
        %v1085 = vsel %vm961, %v1052, 0
        %v1088 = vsel %vm961, %v1053, 0
        %1090 = vmatpush.bf16.msra.mxu0 0
        %1091 = vmatpush.bf16.msra.mxu0 0
        %1092 = vmatpush.bf16.msra.mxu0 0
        %1093 = vmatpush.bf16.msra.mxu0 0
        %1094 = vmatpush.bf16.msra.mxu0 %v1073
        %1095 = vmatpush.bf16.msra.mxu0 %v1072
        %1096 = vmatpush.bf16.msra.mxu0 %v1071
        %1097 = vmatpush.bf16.msra.mxu0 %v1070
        %1098 = vmatmul.bf16.gmra.mxu0 %v1079
        %v1099 = vpop.f32.mrf.mxu0
        %v1100 = vadd.f32 0.0, %v1099
        %v1101 = vpop.f32.mrf.mxu0
        %v1102 = vadd.f32 0.0, %v1101
        %1103 = vmatmul.bf16.gmra.mxu0 %v1082
        %v1104 = vpop.f32.mrf.mxu0
        %v1105 = vadd.f32 0.0, %v1104
        %v1106 = vpop.f32.mrf.mxu0
        %v1107 = vadd.f32 0.0, %v1106
        %1108 = vmatmul.bf16.gmra.mxu0 %v1085
        %v1109 = vpop.f32.mrf.mxu0
        %v1110 = vadd.f32 0.0, %v1109
        %v1111 = vpop.f32.mrf.mxu0
        %v1112 = vadd.f32 0.0, %v1111
        %1113 = vmatmul.bf16.gmra.mxu0 %v1088
        %v1114 = vpop.f32.mrf.mxu0
        %v1115 = vadd.f32 0.0, %v1114
        %v1116 = vpop.f32.mrf.mxu0
        %v1117 = vadd.f32 0.0, %v1116
        %1118 = vdwg.mxu0
        %1123 = vrot.lane.b32.xlu0 %v730, 96
        %v1124 = vpop.permute.xlu0 %1123
        %1125 = vrot.lane.b32.xlu0 %v731, 96
        %v1126 = vpop.permute.xlu0 %1125
        %1127 = vrot.lane.b32.xlu0 %v732, 96
        %v1128 = vpop.permute.xlu0 %1127
        %1129 = vrot.lane.b32.xlu0 %v733, 96
        %v1130 = vpop.permute.xlu0 %1129
        %1131 = vrot.lane.b32.xlu0 %v766, 96
        %v1132 = vpop.permute.xlu0 %1131
        %1133 = vrot.lane.b32.xlu0 %v767, 96
        %v1134 = vpop.permute.xlu0 %1133
        %1135 = vrot.lane.b32.xlu0 %v768, 96
        %v1136 = vpop.permute.xlu0 %1135
        %1137 = vrot.lane.b32.xlu0 %v769, 96
        %v1138 = vpop.permute.xlu0 %1137
        %1139 = vrot.lane.b32.xlu0 %v770, 96
        %v1140 = vpop.permute.xlu0 %1139
        %1141 = vrot.lane.b32.xlu0 %v771, 96
        %v1142 = vpop.permute.xlu0 %1141
        %1143 = vrot.lane.b32.xlu0 %v772, 96
        %v1144 = vpop.permute.xlu0 %1143
        %1145 = vrot.lane.b32.xlu0 %v773, 96
        %v1146 = vpop.permute.xlu0 %1145
        %v1148 = vsel %vm774, %v1124, 0
        %v1151 = vsel %vm774, %v1126, 0
        %v1154 = vsel %vm774, %v1128, 0
        %v1157 = vsel %vm774, %v1130, 0
        %v1160 = vsel %vm774, %v1132, 0
        %v1163 = vsel %vm774, %v1134, 0
        %v1166 = vsel %vm774, %v1136, 0
        %v1169 = vsel %vm774, %v1138, 0
        %v1172 = vsel %vm774, %v1140, 0
        %v1175 = vsel %vm774, %v1142, 0
        %v1178 = vsel %vm774, %v1144, 0
        %v1181 = vsel %vm774, %v1146, 0
        %1183 = vmatpush.bf16.xpose.msra.mxu0 %v1181
        %1184 = vmatpush.bf16.xpose.msra.mxu0 %v1178
        %1185 = vmatpush.bf16.xpose.msra.mxu0 %v1175
        %1186 = vmatpush.bf16.xpose.msra.mxu0 %v1172
        %1187 = vmatpush.bf16.xpose.msra.mxu0 %v1169
        %1188 = vmatpush.bf16.xpose.msra.mxu0 %v1166
        %1189 = vmatpush.bf16.xpose.msra.mxu0 %v1163
        %1190 = vmatpush.bf16.xpose.msra.mxu0 %v1160
        %1191 = vmatmul.bf16.gmra.mxu0 %v1148
        %v1192 = vpop.f32.mrf.mxu0
        %v1193 = vadd.f32 0.0, %v1192
        %v1194 = vpop.f32.mrf.mxu0
        %v1195 = vadd.f32 0.0, %v1194
        %1196 = vmatmul.bf16.gmra.mxu0 %v1151
        %v1197 = vpop.f32.mrf.mxu0
        %v1198 = vadd.f32 0.0, %v1197
        %v1199 = vpop.f32.mrf.mxu0
        %v1200 = vadd.f32 0.0, %v1199
        %1201 = vmatmul.bf16.gmra.mxu0 %v1154
        %v1202 = vpop.f32.mrf.mxu0
        %v1203 = vadd.f32 0.0, %v1202
        %v1204 = vpop.f32.mrf.mxu0
        %v1205 = vadd.f32 0.0, %v1204
        %1206 = vmatmul.bf16.gmra.mxu0 %v1157
        %v1207 = vpop.f32.mrf.mxu0
        %v1208 = vadd.f32 0.0, %v1207
        %v1209 = vpop.f32.mrf.mxu0
        %v1210 = vadd.f32 0.0, %v1209
        %1211 = vdwg.mxu0
        %s1213 = sor.u32 256, 64
        %1214 = vrot.lane.b32.xlu0 %v1193, %s1213
        %v1215 = vpop.permute.xlu0 %1214
        %s1217 = sor.u32 256, 72
        %1218 = vrot.lane.b32.xlu0 %v1195, %s1217
        %v1219 = vpop.permute.xlu0 %1218
        %s1221 = sor.u32 256, 80
        %1222 = vrot.lane.b32.xlu0 %v1198, %s1221
        %v1223 = vpop.permute.xlu0 %1222
        %s1225 = sor.u32 256, 88
        %1226 = vrot.lane.b32.xlu0 %v1200, %s1225
        %v1227 = vpop.permute.xlu0 %1226
        %s1229 = sor.u32 256, 96
        %1230 = vrot.lane.b32.xlu0 %v1203, %s1229
        %v1231 = vpop.permute.xlu0 %1230
        %s1233 = sor.u32 256, 104
        %1234 = vrot.lane.b32.xlu0 %v1205, %s1233
        %v1235 = vpop.permute.xlu0 %1234
        %s1237 = sor.u32 256, 112
        %1238 = vrot.lane.b32.xlu0 %v1208, %s1237
        %v1239 = vpop.permute.xlu0 %1238
        %s1241 = sor.u32 256, 120
        %1242 = vrot.lane.b32.xlu0 %v1210, %s1241
        %v1243 = vpop.permute.xlu0 %1242
        %1248 = vrot.lane.b32.xlu0 %v715, 96
        %v1249 = vpop.permute.xlu0 %1248
        %1250 = vrot.lane.b32.xlu0 %v716, 96
        %v1251 = vpop.permute.xlu0 %1250
        %1252 = vrot.lane.b32.xlu0 %v717, 96
        %v1253 = vpop.permute.xlu0 %1252
        %1254 = vrot.lane.b32.xlu0 %v718, 96
        %v1255 = vpop.permute.xlu0 %1254
        %1256 = vrot.lane.b32.xlu0 %v888, 96
        %v1257 = vpop.permute.xlu0 %1256
        %1258 = vrot.lane.b32.xlu0 %v889, 96
        %v1259 = vpop.permute.xlu0 %1258
        %1260 = vrot.lane.b32.xlu0 %v890, 96
        %v1261 = vpop.permute.xlu0 %1260
        %1262 = vrot.lane.b32.xlu0 %v891, 96
        %v1263 = vpop.permute.xlu0 %1262
        %v1265 = vsel %vm774, %v1249, 0
        %v1268 = vsel %vm774, %v1251, 0
        %v1271 = vsel %vm774, %v1253, 0
        %v1274 = vsel %vm774, %v1255, 0
        %v1277 = vsel %vm774, %v1257, 0
        %v1280 = vsel %vm774, %v1259, 0
        %v1283 = vsel %vm774, %v1261, 0
        %v1286 = vsel %vm774, %v1263, 0
        %1288 = vmatpush.bf16.xpose.msra.mxu0 0
        %1289 = vmatpush.bf16.xpose.msra.mxu0 0
        %1290 = vmatpush.bf16.xpose.msra.mxu0 0
        %1291 = vmatpush.bf16.xpose.msra.mxu0 0
        %1292 = vmatpush.bf16.xpose.msra.mxu0 %v1286
        %1293 = vmatpush.bf16.xpose.msra.mxu0 %v1283
        %1294 = vmatpush.bf16.xpose.msra.mxu0 %v1280
        %1295 = vmatpush.bf16.xpose.msra.mxu0 %v1277
        %1296 = vmatmul.bf16.gmra.mxu0 %v1265
        %v1297 = vpop.f32.mrf.mxu0
        %v1298 = vadd.f32 %v1215, %v1297
        %v1299 = vpop.f32.mrf.mxu0
        %v1300 = vadd.f32 %v1219, %v1299
        %1301 = vmatmul.bf16.gmra.mxu0 %v1268
        %v1302 = vpop.f32.mrf.mxu0
        %v1303 = vadd.f32 %v1223, %v1302
        %v1304 = vpop.f32.mrf.mxu0
        %v1305 = vadd.f32 %v1227, %v1304
        %1306 = vmatmul.bf16.gmra.mxu0 %v1271
        %v1307 = vpop.f32.mrf.mxu0
        %v1308 = vadd.f32 %v1231, %v1307
        %v1309 = vpop.f32.mrf.mxu0
        %v1310 = vadd.f32 %v1235, %v1309
        %1311 = vmatmul.bf16.gmra.mxu0 %v1274
        %v1312 = vpop.f32.mrf.mxu0
        %v1313 = vadd.f32 %v1239, %v1312
        %v1314 = vpop.f32.mrf.mxu0
        %v1315 = vadd.f32 %v1243, %v1314
        %1316 = vdwg.mxu0
        %v1317 = vmul.f32 %v1298, 0.17677669
        %v1318 = vmul.f32 %v1300, 0.17677669
        %v1319 = vmul.f32 %v1303, 0.17677669
        %v1320 = vmul.f32 %v1305, 0.17677669
        %v1321 = vmul.f32 %v1308, 0.17677669
        %v1322 = vmul.f32 %v1310, 0.17677669
        %v1323 = vmul.f32 %v1313, 0.17677669
        %v1324 = vmul.f32 %v1315, 0.17677669
        %v1325 = vadd.f32 %v1317, %v646
        %v1326 = vadd.f32 %v1318, %v647
        %v1327 = vadd.f32 %v1319, %v648
        %v1328 = vadd.f32 %v1320, %v649
        %v1329 = vadd.f32 %v1321, %v650
        %v1330 = vadd.f32 %v1322, %v651
        %v1331 = vadd.f32 %v1323, %v652
        %v1332 = vadd.f32 %v1324, %v653
        %v1333 = vsel %vm961, %v1325, -inf
        %1334 = vmax.xlane.f32.xlu0 %v1333
        %v1335 = vpop.xlane.xlu0 %1334
        %v1336 = vsel %vm961, %v1326, -inf
        %1337 = vmax.xlane.f32.xlu0 %v1336
        %v1338 = vpop.xlane.xlu0 %1337
        %v1339 = vsel %vm961, %v1327, -inf
        %1340 = vmax.xlane.f32.xlu0 %v1339
        %v1341 = vpop.xlane.xlu0 %1340
        %v1342 = vsel %vm961, %v1328, -inf
        %1343 = vmax.xlane.f32.xlu0 %v1342
        %v1344 = vpop.xlane.xlu0 %1343
        %v1345 = vsel %vm961, %v1329, -inf
        %1346 = vmax.xlane.f32.xlu0 %v1345
        %v1347 = vpop.xlane.xlu0 %1346
        %v1348 = vsel %vm961, %v1330, -inf
        %1349 = vmax.xlane.f32.xlu0 %v1348
        %v1350 = vpop.xlane.xlu0 %1349
        %v1351 = vsel %vm961, %v1331, -inf
        %1352 = vmax.xlane.f32.xlu0 %v1351
        %v1353 = vpop.xlane.xlu0 %1352
        %v1354 = vsel %vm961, %v1332, -inf
        %1355 = vmax.xlane.f32.xlu0 %v1354
        %v1356 = vpop.xlane.xlu0 %1355
        %v1357 = vsub.f32 %v1325, %v1335
        %v1358 = vsub.f32 %v1326, %v1338
        %v1359 = vsub.f32 %v1327, %v1341
        %v1360 = vsub.f32 %v1328, %v1344
        %v1361 = vsub.f32 %v1329, %v1347
        %v1362 = vsub.f32 %v1330, %v1350
        %v1363 = vsub.f32 %v1331, %v1353
        %v1364 = vsub.f32 %v1332, %v1356
        %v1365 = vmul.f32 %v1357, 1.442695
        %v1366 = vpow.pop %v1365
        %v1367 = vmul.f32 %v1358, 1.442695
        %v1368 = vpow.pop %v1367
        %v1369 = vmul.f32 %v1359, 1.442695
        %v1370 = vpow.pop %v1369
        %v1371 = vmul.f32 %v1360, 1.442695
        %v1372 = vpow.pop %v1371
        %v1373 = vmul.f32 %v1361, 1.442695
        %v1374 = vpow.pop %v1373
        %v1375 = vmul.f32 %v1362, 1.442695
        %v1376 = vpow.pop %v1375
        %v1377 = vmul.f32 %v1363, 1.442695
        %v1378 = vpow.pop %v1377
        %v1379 = vmul.f32 %v1364, 1.442695
        %v1380 = vpow.pop %v1379
        %v1381 = vsel %vm961, %v1366, 0.0
        %1382 = vadd.xlane.f32.xlu0 %v1381
        %v1383 = vpop.xlane.xlu0 %1382
        %v1384 = vsel %vm961, %v1368, 0.0
        %1385 = vadd.xlane.f32.xlu0 %v1384
        %v1386 = vpop.xlane.xlu0 %1385
        %v1387 = vsel %vm961, %v1370, 0.0
        %1388 = vadd.xlane.f32.xlu0 %v1387
        %v1389 = vpop.xlane.xlu0 %1388
        %v1390 = vsel %vm961, %v1372, 0.0
        %1391 = vadd.xlane.f32.xlu0 %v1390
        %v1392 = vpop.xlane.xlu0 %1391
        %v1393 = vsel %vm961, %v1374, 0.0
        %1394 = vadd.xlane.f32.xlu0 %v1393
        %v1395 = vpop.xlane.xlu0 %1394
        %v1396 = vsel %vm961, %v1376, 0.0
        %1397 = vadd.xlane.f32.xlu0 %v1396
        %v1398 = vpop.xlane.xlu0 %1397
        %v1399 = vsel %vm961, %v1378, 0.0
        %1400 = vadd.xlane.f32.xlu0 %v1399
        %v1401 = vpop.xlane.xlu0 %1400
        %v1402 = vsel %vm961, %v1380, 0.0
        %1403 = vadd.xlane.f32.xlu0 %v1402
        %v1404 = vpop.xlane.xlu0 %1403
        %v1405 = vrcp.pop %v1383
        %v1406 = vrcp.pop %v1386
        %v1407 = vrcp.pop %v1389
        %v1408 = vrcp.pop %v1392
        %v1409 = vrcp.pop %v1395
        %v1410 = vrcp.pop %v1398
        %v1411 = vrcp.pop %v1401
        %v1412 = vrcp.pop %v1404
        %v1413 = vmul.f32 %v1366, %v1405
        %v1414 = vmul.f32 %v1368, %v1406
        %v1415 = vmul.f32 %v1370, %v1407
        %v1416 = vmul.f32 %v1372, %v1408
        %v1417 = vmul.f32 %v1374, %v1409
        %v1418 = vmul.f32 %v1376, %v1410
        %v1419 = vmul.f32 %v1378, %v1411
        %v1420 = vmul.f32 %v1380, %v1412
        %v1421 = vpack.c.bf16 %v1414, %v1413
        %v1422 = vpack.c.bf16 %v1416, %v1415
        %v1423 = vpack.c.bf16 %v1418, %v1417
        %v1424 = vpack.c.bf16 %v1420, %v1419
        %1425 = vrot.lane.b32.xlu0 %v1070, 96
        %v1426 = vpop.permute.xlu0 %1425
        %1427 = vrot.lane.b32.xlu0 %v1071, 96
        %v1428 = vpop.permute.xlu0 %1427
        %1429 = vrot.lane.b32.xlu0 %v1072, 96
        %v1430 = vpop.permute.xlu0 %1429
        %1431 = vrot.lane.b32.xlu0 %v1073, 96
        %v1432 = vpop.permute.xlu0 %1431
        %v1438 = vsel %vm961, %v1421, 0
        %v1441 = vsel %vm961, %v1422, 0
        %v1444 = vsel %vm961, %v1423, 0
        %v1447 = vsel %vm961, %v1424, 0
        %1449 = vmatpush.bf16.msra.mxu0 0
        %1450 = vmatpush.bf16.msra.mxu0 0
        %1451 = vmatpush.bf16.msra.mxu0 0
        %1452 = vmatpush.bf16.msra.mxu0 0
        %1453 = vmatpush.bf16.msra.mxu0 %v1432
        %1454 = vmatpush.bf16.msra.mxu0 %v1430
        %1455 = vmatpush.bf16.msra.mxu0 %v1428
        %1456 = vmatpush.bf16.msra.mxu0 %v1426
        %1457 = vmatmul.bf16.gmra.mxu0 %v1438
        %v1458 = vpop.f32.mrf.mxu0
        %v1459 = vadd.f32 0.0, %v1458
        %v1460 = vpop.f32.mrf.mxu0
        %v1461 = vadd.f32 0.0, %v1460
        %1462 = vmatmul.bf16.gmra.mxu0 %v1441
        %v1463 = vpop.f32.mrf.mxu0
        %v1464 = vadd.f32 0.0, %v1463
        %v1465 = vpop.f32.mrf.mxu0
        %v1466 = vadd.f32 0.0, %v1465
        %1467 = vmatmul.bf16.gmra.mxu0 %v1444
        %v1468 = vpop.f32.mrf.mxu0
        %v1469 = vadd.f32 0.0, %v1468
        %v1470 = vpop.f32.mrf.mxu0
        %v1471 = vadd.f32 0.0, %v1470
        %1472 = vmatmul.bf16.gmra.mxu0 %v1447
        %v1473 = vpop.f32.mrf.mxu0
        %v1474 = vadd.f32 0.0, %v1473
        %v1475 = vpop.f32.mrf.mxu0
        %v1476 = vadd.f32 0.0, %v1475
        %1477 = vdwg.mxu0
        %1478 = vrot.lane.b32.xlu0 %v730, 64
        %v1479 = vpop.permute.xlu0 %1478
        %1480 = vrot.lane.b32.xlu0 %v731, 64
        %v1481 = vpop.permute.xlu0 %1480
        %1482 = vrot.lane.b32.xlu0 %v732, 64
        %v1483 = vpop.permute.xlu0 %1482
        %1484 = vrot.lane.b32.xlu0 %v733, 64
        %v1485 = vpop.permute.xlu0 %1484
        %1486 = vrot.lane.b32.xlu0 %v766, 64
        %v1487 = vpop.permute.xlu0 %1486
        %1488 = vrot.lane.b32.xlu0 %v767, 64
        %v1489 = vpop.permute.xlu0 %1488
        %1490 = vrot.lane.b32.xlu0 %v768, 64
        %v1491 = vpop.permute.xlu0 %1490
        %1492 = vrot.lane.b32.xlu0 %v769, 64
        %v1493 = vpop.permute.xlu0 %1492
        %1494 = vrot.lane.b32.xlu0 %v770, 64
        %v1495 = vpop.permute.xlu0 %1494
        %1496 = vrot.lane.b32.xlu0 %v771, 64
        %v1497 = vpop.permute.xlu0 %1496
        %1498 = vrot.lane.b32.xlu0 %v772, 64
        %v1499 = vpop.permute.xlu0 %1498
        %1500 = vrot.lane.b32.xlu0 %v773, 64
        %v1501 = vpop.permute.xlu0 %1500
        %v1503 = vsel %vm774, %v1479, 0
        %v1506 = vsel %vm774, %v1481, 0
        %v1509 = vsel %vm774, %v1483, 0
        %v1512 = vsel %vm774, %v1485, 0
        %v1515 = vsel %vm774, %v1487, 0
        %v1518 = vsel %vm774, %v1489, 0
        %v1521 = vsel %vm774, %v1491, 0
        %v1524 = vsel %vm774, %v1493, 0
        %v1527 = vsel %vm774, %v1495, 0
        %v1530 = vsel %vm774, %v1497, 0
        %v1533 = vsel %vm774, %v1499, 0
        %v1536 = vsel %vm774, %v1501, 0
        %1538 = vmatpush.bf16.xpose.msra.mxu0 %v1536
        %1539 = vmatpush.bf16.xpose.msra.mxu0 %v1533
        %1540 = vmatpush.bf16.xpose.msra.mxu0 %v1530
        %1541 = vmatpush.bf16.xpose.msra.mxu0 %v1527
        %1542 = vmatpush.bf16.xpose.msra.mxu0 %v1524
        %1543 = vmatpush.bf16.xpose.msra.mxu0 %v1521
        %1544 = vmatpush.bf16.xpose.msra.mxu0 %v1518
        %1545 = vmatpush.bf16.xpose.msra.mxu0 %v1515
        %1546 = vmatmul.bf16.gmra.mxu0 %v1503
        %v1547 = vpop.f32.mrf.mxu0
        %v1548 = vadd.f32 0.0, %v1547
        %v1549 = vpop.f32.mrf.mxu0
        %v1550 = vadd.f32 0.0, %v1549
        %1551 = vmatmul.bf16.gmra.mxu0 %v1506
        %v1552 = vpop.f32.mrf.mxu0
        %v1553 = vadd.f32 0.0, %v1552
        %v1554 = vpop.f32.mrf.mxu0
        %v1555 = vadd.f32 0.0, %v1554
        %1556 = vmatmul.bf16.gmra.mxu0 %v1509
        %v1557 = vpop.f32.mrf.mxu0
        %v1558 = vadd.f32 0.0, %v1557
        %v1559 = vpop.f32.mrf.mxu0
        %v1560 = vadd.f32 0.0, %v1559
        %1561 = vmatmul.bf16.gmra.mxu0 %v1512
        %v1562 = vpop.f32.mrf.mxu0
        %v1563 = vadd.f32 0.0, %v1562
        %v1564 = vpop.f32.mrf.mxu0
        %v1565 = vadd.f32 0.0, %v1564
        %1566 = vdwg.mxu0
        %s1568 = sor.u32 256, 64
        %1569 = vrot.lane.b32.xlu0 %v1548, %s1568
        %v1570 = vpop.permute.xlu0 %1569
        %s1572 = sor.u32 256, 72
        %1573 = vrot.lane.b32.xlu0 %v1550, %s1572
        %v1574 = vpop.permute.xlu0 %1573
        %s1576 = sor.u32 256, 80
        %1577 = vrot.lane.b32.xlu0 %v1553, %s1576
        %v1578 = vpop.permute.xlu0 %1577
        %s1580 = sor.u32 256, 88
        %1581 = vrot.lane.b32.xlu0 %v1555, %s1580
        %v1582 = vpop.permute.xlu0 %1581
        %s1584 = sor.u32 256, 96
        %1585 = vrot.lane.b32.xlu0 %v1558, %s1584
        %v1586 = vpop.permute.xlu0 %1585
        %s1588 = sor.u32 256, 104
        %1589 = vrot.lane.b32.xlu0 %v1560, %s1588
        %v1590 = vpop.permute.xlu0 %1589
        %s1592 = sor.u32 256, 112
        %1593 = vrot.lane.b32.xlu0 %v1563, %s1592
        %v1594 = vpop.permute.xlu0 %1593
        %s1596 = sor.u32 256, 120
        %1597 = vrot.lane.b32.xlu0 %v1565, %s1596
        %v1598 = vpop.permute.xlu0 %1597
        %1599 = vrot.lane.b32.xlu0 %v715, 64
        %v1600 = vpop.permute.xlu0 %1599
        %1601 = vrot.lane.b32.xlu0 %v716, 64
        %v1602 = vpop.permute.xlu0 %1601
        %1603 = vrot.lane.b32.xlu0 %v717, 64
        %v1604 = vpop.permute.xlu0 %1603
        %1605 = vrot.lane.b32.xlu0 %v718, 64
        %v1606 = vpop.permute.xlu0 %1605
        %1607 = vrot.lane.b32.xlu0 %v888, 64
        %v1608 = vpop.permute.xlu0 %1607
        %1609 = vrot.lane.b32.xlu0 %v889, 64
        %v1610 = vpop.permute.xlu0 %1609
        %1611 = vrot.lane.b32.xlu0 %v890, 64
        %v1612 = vpop.permute.xlu0 %1611
        %1613 = vrot.lane.b32.xlu0 %v891, 64
        %v1614 = vpop.permute.xlu0 %1613
        %v1616 = vsel %vm774, %v1600, 0
        %v1619 = vsel %vm774, %v1602, 0
        %v1622 = vsel %vm774, %v1604, 0
        %v1625 = vsel %vm774, %v1606, 0
        %v1628 = vsel %vm774, %v1608, 0
        %v1631 = vsel %vm774, %v1610, 0
        %v1634 = vsel %vm774, %v1612, 0
        %v1637 = vsel %vm774, %v1614, 0
        %1639 = vmatpush.bf16.xpose.msra.mxu0 0
        %1640 = vmatpush.bf16.xpose.msra.mxu0 0
        %1641 = vmatpush.bf16.xpose.msra.mxu0 0
        %1642 = vmatpush.bf16.xpose.msra.mxu0 0
        %1643 = vmatpush.bf16.xpose.msra.mxu0 %v1637
        %1644 = vmatpush.bf16.xpose.msra.mxu0 %v1634
        %1645 = vmatpush.bf16.xpose.msra.mxu0 %v1631
        %1646 = vmatpush.bf16.xpose.msra.mxu0 %v1628
        %1647 = vmatmul.bf16.gmra.mxu0 %v1616
        %v1648 = vpop.f32.mrf.mxu0
        %v1649 = vadd.f32 %v1570, %v1648
        %v1650 = vpop.f32.mrf.mxu0
        %v1651 = vadd.f32 %v1574, %v1650
        %1652 = vmatmul.bf16.gmra.mxu0 %v1619
        %v1653 = vpop.f32.mrf.mxu0
        %v1654 = vadd.f32 %v1578, %v1653
        %v1655 = vpop.f32.mrf.mxu0
        %v1656 = vadd.f32 %v1582, %v1655
        %1657 = vmatmul.bf16.gmra.mxu0 %v1622
        %v1658 = vpop.f32.mrf.mxu0
        %v1659 = vadd.f32 %v1586, %v1658
        %v1660 = vpop.f32.mrf.mxu0
        %v1661 = vadd.f32 %v1590, %v1660
        %1662 = vmatmul.bf16.gmra.mxu0 %v1625
        %v1663 = vpop.f32.mrf.mxu0
        %v1664 = vadd.f32 %v1594, %v1663
        %v1665 = vpop.f32.mrf.mxu0
        %v1666 = vadd.f32 %v1598, %v1665
        %1667 = vdwg.mxu0
        %v1668 = vmul.f32 %v1649, 0.17677669
        %v1669 = vmul.f32 %v1651, 0.17677669
        %v1670 = vmul.f32 %v1654, 0.17677669
        %v1671 = vmul.f32 %v1656, 0.17677669
        %v1672 = vmul.f32 %v1659, 0.17677669
        %v1673 = vmul.f32 %v1661, 0.17677669
        %v1674 = vmul.f32 %v1664, 0.17677669
        %v1675 = vmul.f32 %v1666, 0.17677669
        %v1676 = vadd.f32 %v1668, %v646
        %v1677 = vadd.f32 %v1669, %v647
        %v1678 = vadd.f32 %v1670, %v648
        %v1679 = vadd.f32 %v1671, %v649
        %v1680 = vadd.f32 %v1672, %v650
        %v1681 = vadd.f32 %v1673, %v651
        %v1682 = vadd.f32 %v1674, %v652
        %v1683 = vadd.f32 %v1675, %v653
        %v1684 = vsel %vm961, %v1676, -inf
        %1685 = vmax.xlane.f32.xlu0 %v1684
        %v1686 = vpop.xlane.xlu0 %1685
        %v1687 = vsel %vm961, %v1677, -inf
        %1688 = vmax.xlane.f32.xlu0 %v1687
        %v1689 = vpop.xlane.xlu0 %1688
        %v1690 = vsel %vm961, %v1678, -inf
        %1691 = vmax.xlane.f32.xlu0 %v1690
        %v1692 = vpop.xlane.xlu0 %1691
        %v1693 = vsel %vm961, %v1679, -inf
        %1694 = vmax.xlane.f32.xlu0 %v1693
        %v1695 = vpop.xlane.xlu0 %1694
        %v1696 = vsel %vm961, %v1680, -inf
        %1697 = vmax.xlane.f32.xlu0 %v1696
        %v1698 = vpop.xlane.xlu0 %1697
        %v1699 = vsel %vm961, %v1681, -inf
        %1700 = vmax.xlane.f32.xlu0 %v1699
        %v1701 = vpop.xlane.xlu0 %1700
        %v1702 = vsel %vm961, %v1682, -inf
        %1703 = vmax.xlane.f32.xlu0 %v1702
        %v1704 = vpop.xlane.xlu0 %1703
        %v1705 = vsel %vm961, %v1683, -inf
        %1706 = vmax.xlane.f32.xlu0 %v1705
        %v1707 = vpop.xlane.xlu0 %1706
        %v1708 = vsub.f32 %v1676, %v1686
        %v1709 = vsub.f32 %v1677, %v1689
        %v1710 = vsub.f32 %v1678, %v1692
        %v1711 = vsub.f32 %v1679, %v1695
        %v1712 = vsub.f32 %v1680, %v1698
        %v1713 = vsub.f32 %v1681, %v1701
        %v1714 = vsub.f32 %v1682, %v1704
        %v1715 = vsub.f32 %v1683, %v1707
        %v1716 = vmul.f32 %v1708, 1.442695
        %v1717 = vpow.pop %v1716
        %v1718 = vmul.f32 %v1709, 1.442695
        %v1719 = vpow.pop %v1718
        %v1720 = vmul.f32 %v1710, 1.442695
        %v1721 = vpow.pop %v1720
        %v1722 = vmul.f32 %v1711, 1.442695
        %v1723 = vpow.pop %v1722
        %v1724 = vmul.f32 %v1712, 1.442695
        %v1725 = vpow.pop %v1724
        %v1726 = vmul.f32 %v1713, 1.442695
        %v1727 = vpow.pop %v1726
        %v1728 = vmul.f32 %v1714, 1.442695
        %v1729 = vpow.pop %v1728
        %v1730 = vmul.f32 %v1715, 1.442695
        %v1731 = vpow.pop %v1730
        %v1732 = vsel %vm961, %v1717, 0.0
        %1733 = vadd.xlane.f32.xlu0 %v1732
        %v1734 = vpop.xlane.xlu0 %1733
        %v1735 = vsel %vm961, %v1719, 0.0
        %1736 = vadd.xlane.f32.xlu0 %v1735
        %v1737 = vpop.xlane.xlu0 %1736
        %v1738 = vsel %vm961, %v1721, 0.0
        %1739 = vadd.xlane.f32.xlu0 %v1738
        %v1740 = vpop.xlane.xlu0 %1739
        %v1741 = vsel %vm961, %v1723, 0.0
        %1742 = vadd.xlane.f32.xlu0 %v1741
        %v1743 = vpop.xlane.xlu0 %1742
        %v1744 = vsel %vm961, %v1725, 0.0
        %1745 = vadd.xlane.f32.xlu0 %v1744
        %v1746 = vpop.xlane.xlu0 %1745
        %v1747 = vsel %vm961, %v1727, 0.0
        %1748 = vadd.xlane.f32.xlu0 %v1747
        %v1749 = vpop.xlane.xlu0 %1748
        %v1750 = vsel %vm961, %v1729, 0.0
        %1751 = vadd.xlane.f32.xlu0 %v1750
        %v1752 = vpop.xlane.xlu0 %1751
        %v1753 = vsel %vm961, %v1731, 0.0
        %1754 = vadd.xlane.f32.xlu0 %v1753
        %v1755 = vpop.xlane.xlu0 %1754
        %v1756 = vrcp.pop %v1734
        %v1757 = vrcp.pop %v1737
        %v1758 = vrcp.pop %v1740
        %v1759 = vrcp.pop %v1743
        %v1760 = vrcp.pop %v1746
        %v1761 = vrcp.pop %v1749
        %v1762 = vrcp.pop %v1752
        %v1763 = vrcp.pop %v1755
        %v1764 = vmul.f32 %v1717, %v1756
        %v1765 = vmul.f32 %v1719, %v1757
        %v1766 = vmul.f32 %v1721, %v1758
        %v1767 = vmul.f32 %v1723, %v1759
        %v1768 = vmul.f32 %v1725, %v1760
        %v1769 = vmul.f32 %v1727, %v1761
        %v1770 = vmul.f32 %v1729, %v1762
        %v1771 = vmul.f32 %v1731, %v1763
        %v1772 = vpack.c.bf16 %v1765, %v1764
        %v1773 = vpack.c.bf16 %v1767, %v1766
        %v1774 = vpack.c.bf16 %v1769, %v1768
        %v1775 = vpack.c.bf16 %v1771, %v1770
        %1776 = vrot.lane.b32.xlu0 %v1070, 64
        %v1777 = vpop.permute.xlu0 %1776
        %1778 = vrot.lane.b32.xlu0 %v1071, 64
        %v1779 = vpop.permute.xlu0 %1778
        %1780 = vrot.lane.b32.xlu0 %v1072, 64
        %v1781 = vpop.permute.xlu0 %1780
        %1782 = vrot.lane.b32.xlu0 %v1073, 64
        %v1783 = vpop.permute.xlu0 %1782
        %v1789 = vsel %vm961, %v1772, 0
        %v1792 = vsel %vm961, %v1773, 0
        %v1795 = vsel %vm961, %v1774, 0
        %v1798 = vsel %vm961, %v1775, 0
        %1800 = vmatpush.bf16.msra.mxu0 0
        %1801 = vmatpush.bf16.msra.mxu0 0
        %1802 = vmatpush.bf16.msra.mxu0 0
        %1803 = vmatpush.bf16.msra.mxu0 0
        %1804 = vmatpush.bf16.msra.mxu0 %v1783
        %1805 = vmatpush.bf16.msra.mxu0 %v1781
        %1806 = vmatpush.bf16.msra.mxu0 %v1779
        %1807 = vmatpush.bf16.msra.mxu0 %v1777
        %1808 = vmatmul.bf16.gmra.mxu0 %v1789
        %v1809 = vpop.f32.mrf.mxu0
        %v1810 = vadd.f32 0.0, %v1809
        %v1811 = vpop.f32.mrf.mxu0
        %v1812 = vadd.f32 0.0, %v1811
        %1813 = vmatmul.bf16.gmra.mxu0 %v1792
        %v1814 = vpop.f32.mrf.mxu0
        %v1815 = vadd.f32 0.0, %v1814
        %v1816 = vpop.f32.mrf.mxu0
        %v1817 = vadd.f32 0.0, %v1816
        %1818 = vmatmul.bf16.gmra.mxu0 %v1795
        %v1819 = vpop.f32.mrf.mxu0
        %v1820 = vadd.f32 0.0, %v1819
        %v1821 = vpop.f32.mrf.mxu0
        %v1822 = vadd.f32 0.0, %v1821
        %1823 = vmatmul.bf16.gmra.mxu0 %v1798
        %v1824 = vpop.f32.mrf.mxu0
        %v1825 = vadd.f32 0.0, %v1824
        %v1826 = vpop.f32.mrf.mxu0
        %v1827 = vadd.f32 0.0, %v1826
        %1828 = vdwg.mxu0
        %1829 = vrot.lane.b32.xlu0 %v730, 32
        %v1830 = vpop.permute.xlu0 %1829
        %1831 = vrot.lane.b32.xlu0 %v731, 32
        %v1832 = vpop.permute.xlu0 %1831
        %1833 = vrot.lane.b32.xlu0 %v732, 32
        %v1834 = vpop.permute.xlu0 %1833
        %1835 = vrot.lane.b32.xlu0 %v733, 32
        %v1836 = vpop.permute.xlu0 %1835
        %1837 = vrot.lane.b32.xlu0 %v766, 32
        %v1838 = vpop.permute.xlu0 %1837
        %1839 = vrot.lane.b32.xlu0 %v767, 32
        %v1840 = vpop.permute.xlu0 %1839
        %1841 = vrot.lane.b32.xlu0 %v768, 32
        %v1842 = vpop.permute.xlu0 %1841
        %1843 = vrot.lane.b32.xlu0 %v769, 32
        %v1844 = vpop.permute.xlu0 %1843
        %1845 = vrot.lane.b32.xlu0 %v770, 32
        %v1846 = vpop.permute.xlu0 %1845
        %1847 = vrot.lane.b32.xlu0 %v771, 32
        %v1848 = vpop.permute.xlu0 %1847
        %1849 = vrot.lane.b32.xlu0 %v772, 32
        %v1850 = vpop.permute.xlu0 %1849
        %1851 = vrot.lane.b32.xlu0 %v773, 32
        %v1852 = vpop.permute.xlu0 %1851
        %v1854 = vsel %vm774, %v1830, 0
        %v1857 = vsel %vm774, %v1832, 0
        %v1860 = vsel %vm774, %v1834, 0
        %v1863 = vsel %vm774, %v1836, 0
        %v1866 = vsel %vm774, %v1838, 0
        %v1869 = vsel %vm774, %v1840, 0
        %v1872 = vsel %vm774, %v1842, 0
        %v1875 = vsel %vm774, %v1844, 0
        %v1878 = vsel %vm774, %v1846, 0
        %v1881 = vsel %vm774, %v1848, 0
        %v1884 = vsel %vm774, %v1850, 0
        %v1887 = vsel %vm774, %v1852, 0
        %1889 = vmatpush.bf16.xpose.msra.mxu0 %v1887
        %1890 = vmatpush.bf16.xpose.msra.mxu0 %v1884
        %1891 = vmatpush.bf16.xpose.msra.mxu0 %v1881
        %1892 = vmatpush.bf16.xpose.msra.mxu0 %v1878
        %1893 = vmatpush.bf16.xpose.msra.mxu0 %v1875
        %1894 = vmatpush.bf16.xpose.msra.mxu0 %v1872
        %1895 = vmatpush.bf16.xpose.msra.mxu0 %v1869
        %1896 = vmatpush.bf16.xpose.msra.mxu0 %v1866
        %1897 = vmatmul.bf16.gmra.mxu0 %v1854
        %v1898 = vpop.f32.mrf.mxu0
        %v1899 = vadd.f32 0.0, %v1898
        %v1900 = vpop.f32.mrf.mxu0
        %v1901 = vadd.f32 0.0, %v1900
        %1902 = vmatmul.bf16.gmra.mxu0 %v1857
        %v1903 = vpop.f32.mrf.mxu0
        %v1904 = vadd.f32 0.0, %v1903
        %v1905 = vpop.f32.mrf.mxu0
        %v1906 = vadd.f32 0.0, %v1905
        %1907 = vmatmul.bf16.gmra.mxu0 %v1860
        %v1908 = vpop.f32.mrf.mxu0
        %v1909 = vadd.f32 0.0, %v1908
        %v1910 = vpop.f32.mrf.mxu0
        %v1911 = vadd.f32 0.0, %v1910
        %1912 = vmatmul.bf16.gmra.mxu0 %v1863
        %v1913 = vpop.f32.mrf.mxu0
        %v1914 = vadd.f32 0.0, %v1913
        %v1915 = vpop.f32.mrf.mxu0
        %v1916 = vadd.f32 0.0, %v1915
        %1917 = vdwg.mxu0
        %s1919 = sor.u32 256, 64
        %1920 = vrot.lane.b32.xlu0 %v1899, %s1919
        %v1921 = vpop.permute.xlu0 %1920
        %s1923 = sor.u32 256, 72
        %1924 = vrot.lane.b32.xlu0 %v1901, %s1923
        %v1925 = vpop.permute.xlu0 %1924
        %s1927 = sor.u32 256, 80
        %1928 = vrot.lane.b32.xlu0 %v1904, %s1927
        %v1929 = vpop.permute.xlu0 %1928
        %s1931 = sor.u32 256, 88
        %1932 = vrot.lane.b32.xlu0 %v1906, %s1931
        %v1933 = vpop.permute.xlu0 %1932
        %s1935 = sor.u32 256, 96
        %1936 = vrot.lane.b32.xlu0 %v1909, %s1935
        %v1937 = vpop.permute.xlu0 %1936
        %s1939 = sor.u32 256, 104
        %1940 = vrot.lane.b32.xlu0 %v1911, %s1939
        %v1941 = vpop.permute.xlu0 %1940
        %s1943 = sor.u32 256, 112
        %1944 = vrot.lane.b32.xlu0 %v1914, %s1943
        %v1945 = vpop.permute.xlu0 %1944
        %s1947 = sor.u32 256, 120
        %1948 = vrot.lane.b32.xlu0 %v1916, %s1947
        %v1949 = vpop.permute.xlu0 %1948
        %1950 = vrot.lane.b32.xlu0 %v715, 32
        %v1951 = vpop.permute.xlu0 %1950
        %1952 = vrot.lane.b32.xlu0 %v716, 32
        %v1953 = vpop.permute.xlu0 %1952
        %1954 = vrot.lane.b32.xlu0 %v717, 32
        %v1955 = vpop.permute.xlu0 %1954
        %1956 = vrot.lane.b32.xlu0 %v718, 32
        %v1957 = vpop.permute.xlu0 %1956
        %1958 = vrot.lane.b32.xlu0 %v888, 32
        %v1959 = vpop.permute.xlu0 %1958
        %1960 = vrot.lane.b32.xlu0 %v889, 32
        %v1961 = vpop.permute.xlu0 %1960
        %1962 = vrot.lane.b32.xlu0 %v890, 32
        %v1963 = vpop.permute.xlu0 %1962
        %1964 = vrot.lane.b32.xlu0 %v891, 32
        %v1965 = vpop.permute.xlu0 %1964
        %v1967 = vsel %vm774, %v1951, 0
        %v1970 = vsel %vm774, %v1953, 0
        %v1973 = vsel %vm774, %v1955, 0
        %v1976 = vsel %vm774, %v1957, 0
        %v1979 = vsel %vm774, %v1959, 0
        %v1982 = vsel %vm774, %v1961, 0
        %v1985 = vsel %vm774, %v1963, 0
        %v1988 = vsel %vm774, %v1965, 0
        %1990 = vmatpush.bf16.xpose.msra.mxu0 0
        %1991 = vmatpush.bf16.xpose.msra.mxu0 0
        %1992 = vmatpush.bf16.xpose.msra.mxu0 0
        %1993 = vmatpush.bf16.xpose.msra.mxu0 0
        %1994 = vmatpush.bf16.xpose.msra.mxu0 %v1988
        %1995 = vmatpush.bf16.xpose.msra.mxu0 %v1985
        %1996 = vmatpush.bf16.xpose.msra.mxu0 %v1982
        %1997 = vmatpush.bf16.xpose.msra.mxu0 %v1979
        %1998 = vmatmul.bf16.gmra.mxu0 %v1967
        %v1999 = vpop.f32.mrf.mxu0
        %v2000 = vadd.f32 %v1921, %v1999
        %v2001 = vpop.f32.mrf.mxu0
        %v2002 = vadd.f32 %v1925, %v2001
        %2003 = vmatmul.bf16.gmra.mxu0 %v1970
        %v2004 = vpop.f32.mrf.mxu0
        %v2005 = vadd.f32 %v1929, %v2004
        %v2006 = vpop.f32.mrf.mxu0
        %v2007 = vadd.f32 %v1933, %v2006
        %2008 = vmatmul.bf16.gmra.mxu0 %v1973
        %v2009 = vpop.f32.mrf.mxu0
        %v2010 = vadd.f32 %v1937, %v2009
        %v2011 = vpop.f32.mrf.mxu0
        %v2012 = vadd.f32 %v1941, %v2011
        %2013 = vmatmul.bf16.gmra.mxu0 %v1976
        %v2014 = vpop.f32.mrf.mxu0
        %v2015 = vadd.f32 %v1945, %v2014
        %v2016 = vpop.f32.mrf.mxu0
        %v2017 = vadd.f32 %v1949, %v2016
        %2018 = vdwg.mxu0
        %v2019 = vmul.f32 %v2000, 0.17677669
        %v2020 = vmul.f32 %v2002, 0.17677669
        %v2021 = vmul.f32 %v2005, 0.17677669
        %v2022 = vmul.f32 %v2007, 0.17677669
        %v2023 = vmul.f32 %v2010, 0.17677669
        %v2024 = vmul.f32 %v2012, 0.17677669
        %v2025 = vmul.f32 %v2015, 0.17677669
        %v2026 = vmul.f32 %v2017, 0.17677669
        %v2027 = vadd.f32 %v2019, %v646
        %v2028 = vadd.f32 %v2020, %v647
        %v2029 = vadd.f32 %v2021, %v648
        %v2030 = vadd.f32 %v2022, %v649
        %v2031 = vadd.f32 %v2023, %v650
        %v2032 = vadd.f32 %v2024, %v651
        %v2033 = vadd.f32 %v2025, %v652
        %v2034 = vadd.f32 %v2026, %v653
        %v2035 = vsel %vm961, %v2027, -inf
        %2036 = vmax.xlane.f32.xlu0 %v2035
        %v2037 = vpop.xlane.xlu0 %2036
        %v2038 = vsel %vm961, %v2028, -inf
        %2039 = vmax.xlane.f32.xlu0 %v2038
        %v2040 = vpop.xlane.xlu0 %2039
        %v2041 = vsel %vm961, %v2029, -inf
        %2042 = vmax.xlane.f32.xlu0 %v2041
        %v2043 = vpop.xlane.xlu0 %2042
        %v2044 = vsel %vm961, %v2030, -inf
        %2045 = vmax.xlane.f32.xlu0 %v2044
        %v2046 = vpop.xlane.xlu0 %2045
        %v2047 = vsel %vm961, %v2031, -inf
        %2048 = vmax.xlane.f32.xlu0 %v2047
        %v2049 = vpop.xlane.xlu0 %2048
        %v2050 = vsel %vm961, %v2032, -inf
        %2051 = vmax.xlane.f32.xlu0 %v2050
        %v2052 = vpop.xlane.xlu0 %2051
        %v2053 = vsel %vm961, %v2033, -inf
        %2054 = vmax.xlane.f32.xlu0 %v2053
        %v2055 = vpop.xlane.xlu0 %2054
        %v2056 = vsel %vm961, %v2034, -inf
        %2057 = vmax.xlane.f32.xlu0 %v2056
        %v2058 = vpop.xlane.xlu0 %2057
        %v2059 = vsub.f32 %v2027, %v2037
        %v2060 = vsub.f32 %v2028, %v2040
        %v2061 = vsub.f32 %v2029, %v2043
        %v2062 = vsub.f32 %v2030, %v2046
        %v2063 = vsub.f32 %v2031, %v2049
        %v2064 = vsub.f32 %v2032, %v2052
        %v2065 = vsub.f32 %v2033, %v2055
        %v2066 = vsub.f32 %v2034, %v2058
        %v2067 = vmul.f32 %v2059, 1.442695
        %v2068 = vpow.pop %v2067
        %v2069 = vmul.f32 %v2060, 1.442695
        %v2070 = vpow.pop %v2069
        %v2071 = vmul.f32 %v2061, 1.442695
        %v2072 = vpow.pop %v2071
        %v2073 = vmul.f32 %v2062, 1.442695
        %v2074 = vpow.pop %v2073
        %v2075 = vmul.f32 %v2063, 1.442695
        %v2076 = vpow.pop %v2075
        %v2077 = vmul.f32 %v2064, 1.442695
        %v2078 = vpow.pop %v2077
        %v2079 = vmul.f32 %v2065, 1.442695
        %v2080 = vpow.pop %v2079
        %v2081 = vmul.f32 %v2066, 1.442695
        %v2082 = vpow.pop %v2081
        %v2083 = vsel %vm961, %v2068, 0.0
        %2084 = vadd.xlane.f32.xlu0 %v2083
        %v2085 = vpop.xlane.xlu0 %2084
        %v2086 = vsel %vm961, %v2070, 0.0
        %2087 = vadd.xlane.f32.xlu0 %v2086
        %v2088 = vpop.xlane.xlu0 %2087
        %v2089 = vsel %vm961, %v2072, 0.0
        %2090 = vadd.xlane.f32.xlu0 %v2089
        %v2091 = vpop.xlane.xlu0 %2090
        %v2092 = vsel %vm961, %v2074, 0.0
        %2093 = vadd.xlane.f32.xlu0 %v2092
        %v2094 = vpop.xlane.xlu0 %2093
        %v2095 = vsel %vm961, %v2076, 0.0
        %2096 = vadd.xlane.f32.xlu0 %v2095
        %v2097 = vpop.xlane.xlu0 %2096
        %v2098 = vsel %vm961, %v2078, 0.0
        %2099 = vadd.xlane.f32.xlu0 %v2098
        %v2100 = vpop.xlane.xlu0 %2099
        %v2101 = vsel %vm961, %v2080, 0.0
        %2102 = vadd.xlane.f32.xlu0 %v2101
        %v2103 = vpop.xlane.xlu0 %2102
        %v2104 = vsel %vm961, %v2082, 0.0
        %2105 = vadd.xlane.f32.xlu0 %v2104
        %v2106 = vpop.xlane.xlu0 %2105
        %v2107 = vrcp.pop %v2085
        %v2108 = vrcp.pop %v2088
        %v2109 = vrcp.pop %v2091
        %v2110 = vrcp.pop %v2094
        %v2111 = vrcp.pop %v2097
        %v2112 = vrcp.pop %v2100
        %v2113 = vrcp.pop %v2103
        %v2114 = vrcp.pop %v2106
        %v2115 = vmul.f32 %v2068, %v2107
        %v2116 = vmul.f32 %v2070, %v2108
        %v2117 = vmul.f32 %v2072, %v2109
        %v2118 = vmul.f32 %v2074, %v2110
        %v2119 = vmul.f32 %v2076, %v2111
        %v2120 = vmul.f32 %v2078, %v2112
        %v2121 = vmul.f32 %v2080, %v2113
        %v2122 = vmul.f32 %v2082, %v2114
        %v2123 = vpack.c.bf16 %v2116, %v2115
        %v2124 = vpack.c.bf16 %v2118, %v2117
        %v2125 = vpack.c.bf16 %v2120, %v2119
        %v2126 = vpack.c.bf16 %v2122, %v2121
        %2127 = vrot.lane.b32.xlu0 %v1070, 32
        %v2128 = vpop.permute.xlu0 %2127
        %2129 = vrot.lane.b32.xlu0 %v1071, 32
        %v2130 = vpop.permute.xlu0 %2129
        %2131 = vrot.lane.b32.xlu0 %v1072, 32
        %v2132 = vpop.permute.xlu0 %2131
        %2133 = vrot.lane.b32.xlu0 %v1073, 32
        %v2134 = vpop.permute.xlu0 %2133
        %v2140 = vsel %vm961, %v2123, 0
        %v2143 = vsel %vm961, %v2124, 0
        %v2146 = vsel %vm961, %v2125, 0
        %v2149 = vsel %vm961, %v2126, 0
        %2151 = vmatpush.bf16.msra.mxu0 0
        %2152 = vmatpush.bf16.msra.mxu0 0
        %2153 = vmatpush.bf16.msra.mxu0 0
        %2154 = vmatpush.bf16.msra.mxu0 0
        %2155 = vmatpush.bf16.msra.mxu0 %v2134
        %2156 = vmatpush.bf16.msra.mxu0 %v2132
        %2157 = vmatpush.bf16.msra.mxu0 %v2130
        %2158 = vmatpush.bf16.msra.mxu0 %v2128
        %2159 = vmatmul.bf16.gmra.mxu0 %v2140
        %v2160 = vpop.f32.mrf.mxu0
        %v2161 = vadd.f32 0.0, %v2160
        %v2162 = vpop.f32.mrf.mxu0
        %v2163 = vadd.f32 0.0, %v2162
        %2164 = vmatmul.bf16.gmra.mxu0 %v2143
        %v2165 = vpop.f32.mrf.mxu0
        %v2166 = vadd.f32 0.0, %v2165
        %v2167 = vpop.f32.mrf.mxu0
        %v2168 = vadd.f32 0.0, %v2167
        %2169 = vmatmul.bf16.gmra.mxu0 %v2146
        %v2170 = vpop.f32.mrf.mxu0
        %v2171 = vadd.f32 0.0, %v2170
        %v2172 = vpop.f32.mrf.mxu0
        %v2173 = vadd.f32 0.0, %v2172
        %2174 = vmatmul.bf16.gmra.mxu0 %v2149
        %v2175 = vpop.f32.mrf.mxu0
        %v2176 = vadd.f32 0.0, %v2175
        %v2177 = vpop.f32.mrf.mxu0
        %v2178 = vadd.f32 0.0, %v2177
        %2179 = vdwg.mxu0
        %2188 = vrot.lane.b32.xlu0 %v1459, 32
        %v2189 = vpop.permute.xlu0 %2188
        %2190 = vrot.lane.b32.xlu0 %v1461, 32
        %v2191 = vpop.permute.xlu0 %2190
        %2192 = vrot.lane.b32.xlu0 %v1464, 32
        %v2193 = vpop.permute.xlu0 %2192
        %2194 = vrot.lane.b32.xlu0 %v1466, 32
        %v2195 = vpop.permute.xlu0 %2194
        %2196 = vrot.lane.b32.xlu0 %v1469, 32
        %v2197 = vpop.permute.xlu0 %2196
        %2198 = vrot.lane.b32.xlu0 %v1471, 32
        %v2199 = vpop.permute.xlu0 %2198
        %2200 = vrot.lane.b32.xlu0 %v1474, 32
        %v2201 = vpop.permute.xlu0 %2200
        %2202 = vrot.lane.b32.xlu0 %v1476, 32
        %v2203 = vpop.permute.xlu0 %2202
        %2220 = vrot.lane.b32.xlu0 %v1810, 64
        %v2221 = vpop.permute.xlu0 %2220
        %2222 = vrot.lane.b32.xlu0 %v1812, 64
        %v2223 = vpop.permute.xlu0 %2222
        %2224 = vrot.lane.b32.xlu0 %v1815, 64
        %v2225 = vpop.permute.xlu0 %2224
        %2226 = vrot.lane.b32.xlu0 %v1817, 64
        %v2227 = vpop.permute.xlu0 %2226
        %2228 = vrot.lane.b32.xlu0 %v1820, 64
        %v2229 = vpop.permute.xlu0 %2228
        %2230 = vrot.lane.b32.xlu0 %v1822, 64
        %v2231 = vpop.permute.xlu0 %2230
        %2232 = vrot.lane.b32.xlu0 %v1825, 64
        %v2233 = vpop.permute.xlu0 %2232
        %2234 = vrot.lane.b32.xlu0 %v1827, 64
        %v2235 = vpop.permute.xlu0 %2234
        %2252 = vrot.lane.b32.xlu0 %v2161, 96
        %v2253 = vpop.permute.xlu0 %2252
        %2254 = vrot.lane.b32.xlu0 %v2163, 96
        %v2255 = vpop.permute.xlu0 %2254
        %2256 = vrot.lane.b32.xlu0 %v2166, 96
        %v2257 = vpop.permute.xlu0 %2256
        %2258 = vrot.lane.b32.xlu0 %v2168, 96
        %v2259 = vpop.permute.xlu0 %2258
        %2260 = vrot.lane.b32.xlu0 %v2171, 96
        %v2261 = vpop.permute.xlu0 %2260
        %2262 = vrot.lane.b32.xlu0 %v2173, 96
        %v2263 = vpop.permute.xlu0 %2262
        %2264 = vrot.lane.b32.xlu0 %v2176, 96
        %v2265 = vpop.permute.xlu0 %2264
        %2266 = vrot.lane.b32.xlu0 %v2178, 96
        %v2267 = vpop.permute.xlu0 %2266
        %v2276 = vsel %vm774, %v1100, %v2189
        %v2277 = vsel %vm774, %v1102, %v2191
        %v2278 = vsel %vm774, %v1105, %v2193
        %v2279 = vsel %vm774, %v1107, %v2195
        %v2280 = vsel %vm774, %v1110, %v2197
        %v2281 = vsel %vm774, %v1112, %v2199
        %v2282 = vsel %vm774, %v1115, %v2201
        %v2283 = vsel %vm774, %v1117, %v2203
        %v2284 = vsel %vm961, %v2276, %v2221
        %v2285 = vsel %vm961, %v2277, %v2223
        %v2286 = vsel %vm961, %v2278, %v2225
        %v2287 = vsel %vm961, %v2279, %v2227
        %v2288 = vsel %vm961, %v2280, %v2229
        %v2289 = vsel %vm961, %v2281, %v2231
        %v2290 = vsel %vm961, %v2282, %v2233
        %v2291 = vsel %vm961, %v2283, %v2235
        %vm2292 = vcmask 785408
        %v2293 = vsel %vm2292, %v2284, %v2253
        %v2294 = vsel %vm2292, %v2285, %v2255
        %v2295 = vsel %vm2292, %v2286, %v2257
        %v2296 = vsel %vm2292, %v2287, %v2259
        %v2297 = vsel %vm2292, %v2288, %v2261
        %v2298 = vsel %vm2292, %v2289, %v2263
        %v2299 = vsel %vm2292, %v2290, %v2265
        %v2300 = vsel %vm2292, %v2291, %v2267
        %v2301 = vpack.c.bf16 %v2293, %v2293
        %v2302 = vpack.c.bf16 %v2294, %v2294
        %v2303 = vpack.c.bf16 %v2295, %v2295
        %v2304 = vpack.c.bf16 %v2296, %v2296
        %v2305 = vpack.c.bf16 %v2297, %v2297
        %v2306 = vpack.c.bf16 %v2298, %v2298
        %v2307 = vpack.c.bf16 %v2299, %v2299
        %v2308 = vpack.c.bf16 %v2300, %v2300
        %2309 = vst [vmem:[%s636] sm:$0xf] %v2301
        %2310 = vst [vmem:[%s636 + $0x4] sm:$0xf] %v2302
        %2311 = vst [vmem:[%s636 + $0x8] sm:$0xf] %v2303
        %2312 = vst [vmem:[%s636 + $0xc] sm:$0xf] %v2304
        %2313 = vst [vmem:[%s636 + $0x10] sm:$0xf] %v2305
        %2314 = vst [vmem:[%s636 + $0x14] sm:$0xf] %v2306
        %2315 = vst [vmem:[%s636 + $0x18] sm:$0xf] %v2307
        %2316 = vst [vmem:[%s636 + $0x1c] sm:$0xf] %v2308
        %p2317 = scmp.lt.s32.totalorder %s22, 1
        %s2318 = scalar_select %p2317, %s22, 1
        %p2319 = scmp.lt.s32.totalorder %s23, 0
        %s2320 = scalar_select %p2319, %s23, 0
        %s2321 = smul.addr %s2318, 8
        %s2322 = sadd.s32 %s2320, %s2321
        %s2323 = smul.addr %s2322, 4
        %s2324 = scalar_lea.vmem %s7, %s2323
        // Predicated region
        $region172: #{_lambda_.12} parent=158 // pred_check
          %p2325 = pneg %p242
        $region173: #{_lambda_.12} parent=158 // pred_check_branch
          %2327 = sbr.rel (%p2325) target = $region175
        $region174: #{_lambda_.12} parent=158 // pred_region
          _
        $region175: #{_lambda_.12} parent=158 // pred_fallthru
          _
      $region159: #{_lambda_.12} parent=5 // pred_fallthru
        _
      %p2328 = scmp.le.s32.totalorder 2, %s13
      // Predicated region
      $region176: #{_lambda_.12} parent=5 // pred_check
        %p2329 = pneg %p2328
      $region177: #{_lambda_.12} parent=5 // pred_check_branch
        %2331 = sbr.rel (%p2329) target = $region179
      $region178: #{_lambda_.12} parent=5 // pred_region
        %s2332 = ssub.s32 %s13, 2
        // Predicated region
        $region180: #{_lambda_.12} parent=178 // pred_check
          %p2333 = pneg %p248
        $region181: #{_lambda_.12} parent=178 // pred_check_branch
          %2335 = sbr.rel (%p2333) target = $region183
        $region182: #{_lambda_.12} parent=178 // pred_region
          %p2336 = scmp.lt.s32.totalorder %s24, 1
          %s2337 = scalar_select %p2336, %s24, 1
          %p2338 = scmp.lt.s32.totalorder %s25, 0
          %s2339 = scalar_select %p2338, %s25, 0
          %s2340 = smul.addr %s2337, 8
          %s2341 = sadd.s32 %s2339, %s2340
          %s2342 = smul.addr %s2341, 4
          %s2343 = scalar_lea.vmem %s7, %s2342
        $region183: #{_lambda_.12} parent=178 // pred_fallthru
          _
      $region179: #{_lambda_.12} parent=5 // pred_fallthru
        _
    $region6: #{_lambda_.12} parent=1 // loop_footer
      %s17 = sadd.s32 1, %s13
    $region7: #{_lambda_.12} parent=1 // loop_footer_branch
      %12 = sbr.rel target = $region3
    $region8: #{_lambda_.12} parent=1 // loop_exit
      _

</llo_original>
